<compile_context>
chip_gen: v7x
topology: tpu7x:2x2x1
jax: 0.10.0
libtpu: 0.0.40
codegen_flags: <defaults>
</compile_context>

<pallas_src>
import jax
import jax.numpy as jnp
from jax import lax
from jax.experimental import pallas as pl
from jax.experimental.pallas import tpu as pltpu

LN_EPS = 1e-5
NEG_BIG = -1e20


def _layernorm(x, g, b):
    mu = jnp.mean(x, axis=-1, keepdims=True)
    var = jnp.mean((x - mu) ** 2, axis=-1, keepdims=True)
    return (x - mu) * lax.rsqrt(var + LN_EPS) * g + b


# ----------------------------- Pallas kernel ------------------------------ #
def _make_block_kernel(heads, head_dim, q_tile):
    def kernel(xf_ref, bias_ref,
               wq_ref, wk_ref, wv_ref, wfc_ref, bfc_ref,
               g1_ref, b1_ref, wff1_ref, bff1_ref, wff2_ref, bff2_ref,
               g2_ref, b2_ref,
               out_ref,
               k_scr, v_scr, ctx_scr):
        qi = pl.program_id(1)

        # ---- K/V projections: once per batch element (qi == 0); results live
        # in persistent bf16 VMEM scratch and are reused by every query tile.
        @pl.when(qi == 0)
        def _():
            xf_b = xf_ref[0].astype(jnp.bfloat16)           # (S, E)
            wk = wk_ref[...]                                 # (Dh, Dh) bf16
            wv = wv_ref[...]
            for h in range(heads):
                lo = h * head_dim
                xh = xf_b[:, lo:lo + head_dim]
                k_scr[:, lo:lo + head_dim] = jnp.dot(
                    xh, wk, preferred_element_type=jnp.float32
                ).astype(jnp.bfloat16)
                v_scr[:, lo:lo + head_dim] = jnp.dot(
                    xh, wv, preferred_element_type=jnp.float32
                ).astype(jnp.bfloat16)

        # ---- Query rows sliced from the already-resident full-sequence slab.
        row0 = pl.multiple_of(qi * q_tile, q_tile)
        xq = xf_ref[0, pl.ds(row0, q_tile), :]               # (TQ, E) f32 residual
        xq_b = xq.astype(jnp.bfloat16)
        bias = bias_ref[0]                                    # (1, S) f32 (pre-scaled)

        wq = wq_ref[...]                                      # (Dh, Dh) bf16, 1/sqrt(E) folded
        for h in range(heads):
            lo = h * head_dim
            qh = jnp.dot(xq_b[:, lo:lo + head_dim], wq,
                         preferred_element_type=jnp.float32).astype(jnp.bfloat16)
            kh = k_scr[:, lo:lo + head_dim]                   # (S, Dh) bf16
            vh = v_scr[:, lo:lo + head_dim]
            energy = lax.dot_general(qh, kh, (((1,), (1,)), ((), ())),
                                     preferred_element_type=jnp.float32)
            energy = energy + bias                            # (TQ, S)
            m = jnp.max(energy, axis=-1, keepdims=True)
            p = jnp.exp(energy - m)
            inv_l = pl.reciprocal(jnp.sum(p, axis=-1, keepdims=True),
                                  approx=True)
            # Normalize AFTER the PV matmul: (TQ, Dh) elementwise, not (TQ, S).
            ctx = jnp.dot(p.astype(jnp.bfloat16), vh,
                          preferred_element_type=jnp.float32)
            ctx_scr[:, lo:lo + head_dim] = (ctx * inv_l).astype(jnp.bfloat16)

        attn = jnp.dot(ctx_scr[...], wfc_ref[...],
                       preferred_element_type=jnp.float32) + bfc_ref[...]

        # ---- residual + LN + feed-forward + residual + LN (f32 on VPU) ----
        x1 = _layernorm(attn + xq, g1_ref[...], b1_ref[...])
        hmid = jnp.maximum(
            jnp.dot(x1.astype(jnp.bfloat16), wff1_ref[...],
                    preferred_element_type=jnp.float32) + bff1_ref[...], 0.0)
        ff = jnp.dot(hmid.astype(jnp.bfloat16), wff2_ref[...],
                     preferred_element_type=jnp.float32) + bff2_ref[...]
        out_ref[0] = _layernorm(ff + x1, g2_ref[...], b2_ref[...])

    return kernel


def transformer_block_pallas(x, mask_bias, lp, heads, *, q_tile=None):
    N, S, E = x.shape
    Dh = E // heads
    if q_tile is None:
        # 256 fills the v6e/v7x MXU rows; demo S=16 -> q_tile = S (grid (N,1)).
        q_tile = min(S, 256)
    assert S % q_tile == 0, "q_tile must divide S"
    assert q_tile == S or q_tile % 8 == 0, "q_tile must be sublane-aligned"
    kernel = _make_block_kernel(heads, Dh, q_tile)

    weights = (lp["wq"], lp["wk"], lp["wv"], lp["wfc"], lp["bfc"],
               lp["g1"], lp["b1"], lp["wff1"], lp["bff1"],
               lp["wff2"], lp["bff2"], lp["g2"], lp["b2"])

    def full_spec(a):
        zeros = (0,) * a.ndim
        # TODO(synk): single-buffer these constant-index weight blocks
        # (pipeline_mode=pl.Buffered(1)) or DMA once into scratch to halve
        # weight VMEM at large E/F (matters for v7x's 64 MiB VMEM).
        return pl.BlockSpec(a.shape, lambda n, qi: zeros)

    in_specs = [
        pl.BlockSpec((1, S, E), lambda n, qi: (n, 0, 0)),     # full seq (Q src + K/V src)
        pl.BlockSpec((1, 1, S), lambda n, qi: (n, 0, 0)),     # additive mask bias
    ] + [full_spec(a) for a in weights]

    return pl.pallas_call(
        kernel,
        out_shape=jax.ShapeDtypeStruct((N, S, E), jnp.float32),
        grid=(N, S // q_tile),
        in_specs=in_specs,
        out_specs=pl.BlockSpec((1, q_tile, E), lambda n, qi: (n, qi, 0)),
        scratch_shapes=[pltpu.VMEM((S, E), jnp.bfloat16),       # K (persistent)
                        pltpu.VMEM((S, E), jnp.bfloat16),       # V (persistent)
                        pltpu.VMEM((q_tile, E), jnp.bfloat16)], # per-head ctx slab
        compiler_params=pltpu.CompilerParams(
            # qi axis MUST be "arbitrary": K/V scratch persists across qi and
            # is only initialized at qi == 0.
            dimension_semantics=("parallel", "arbitrary")),
    )(x, mask_bias, *weights)


# ------------------------ parameter prep (one-time) ------------------------ #
def prepare_kernel_params(params, heads):
    """Pre-transpose Linears to (in,out), fold 1/sqrt(E) into wq, cast matmul
    weights to bf16, reshape biases/LN params to (1, dim) -- done once."""
    E = params["word_emb"].shape[1]
    scale = 1.0 / (E ** 0.5)
    prepped = {"word_emb": params["word_emb"],
               "pos_emb": params["pos_emb"],
               "layers": []}
    for lp in params["layers"]:
        F = lp["wff1"].shape[0]
        prepped["layers"].append({
            "wq": (jnp.transpose(lp["wq"]) * scale).astype(jnp.bfloat16),
            "wk": jnp.transpose(lp["wk"]).astype(jnp.bfloat16),
            "wv": jnp.transpose(lp["wv"]).astype(jnp.bfloat16),
            "wfc": jnp.transpose(lp["wfc"]).astype(jnp.bfloat16),
            "bfc": lp["bfc"].reshape(1, E),
            "g1": lp["g1"].reshape(1, E),
            "b1": lp["b1"].reshape(1, E),
            "wff1": jnp.transpose(lp["wff1"]).astype(jnp.bfloat16),
            "bff1": lp["bff1"].reshape(1, F),
            "wff2": jnp.transpose(lp["wff2"]).astype(jnp.bfloat16),
            "bff2": lp["bff2"].reshape(1, E),
            "g2": lp["g2"].reshape(1, E),
            "b2": lp["b2"].reshape(1, E),
        })
    return prepped


# ------------------------------ glue / model ------------------------------ #
def encoder_forward(ids, mask, prepped, heads, *, q_tile=None):
    N, S = ids.shape
    E = prepped["word_emb"].shape[1]
    pos = jnp.arange(S)
    # embedding gather is plain-JAX glue
    x = prepped["word_emb"][ids] + prepped["pos_emb"][pos][None, :, :]
    scale = 1.0 / (E ** 0.5)
    # mask bias is pre-scaled because 1/sqrt(E) is folded into wq
    mask_bias = jnp.where(mask == 0, NEG_BIG * scale, 0.0).astype(
        jnp.float32).reshape(N, 1, S)
    for lp in prepped["layers"]:
        x = transformer_block_pallas(x, mask_bias, lp, heads, q_tile=q_tile)
    return x


def encoder_reference(ids, mask, params, heads):
    """Pure-JAX f32 reference mirroring the (intended) PyTorch forward."""
    N, S = ids.shape
    E = params["word_emb"].shape[1]
    Dh = E // heads
    hp = lax.Precision.HIGHEST
    x = params["word_emb"][ids] + params["pos_emb"][jnp.arange(S)][None]
    for lp in params["layers"]:
        xh = x.reshape(N, S, heads, Dh)
        q = jnp.einsum("nshd,od->nsho", xh, lp["wq"], precision=hp)
        k = jnp.einsum("nshd,od->nsho", xh, lp["wk"], precision=hp)
        v = jnp.einsum("nshd,od->nsho", xh, lp["wv"], precision=hp)
        energy = jnp.einsum("nqhd,nkhd->nhqk", q, k, precision=hp)
        energy = jnp.where(mask[:, None, None, :] == 0, NEG_BIG, energy)
        att = jax.nn.softmax(energy / (E ** 0.5), axis=3)
        out = jnp.einsum("nhqk,nkhd->nqhd", att, v,
                         precision=hp).reshape(N, S, E)
        out = jnp.dot(out, lp["wfc"].T, precision=hp) + lp["bfc"]
        x1 = _layernorm(out + x, lp["g1"], lp["b1"])
        hmid = jnp.maximum(
            jnp.dot(x1, lp["wff1"].T, precision=hp) + lp["bff1"], 0.0)
        ff = jnp.dot(hmid, lp["wff2"].T, precision=hp) + lp["bff2"]
        x = _layernorm(ff + x1, lp["g2"], lp["b2"])
    return x


def init_params(key, vocab, embed, num_layers, heads, forward_expansion,
                max_length):
    Dh = embed // heads
    F = forward_expansion * embed
    keys = jax.random.split(key, 2 + num_layers)

    def rnd(k, shape, scale=0.1):
        return jax.random.normal(k, shape, jnp.float32) * scale

    params = {
        "word_emb": rnd(keys[0], (vocab, embed), 1.0),
        "pos_emb": rnd(keys[1], (max_length, embed), 1.0),
        "layers": [],
    }
    for l in range(num_layers):
        lk = jax.random.split(keys[2 + l], 8)
        params["layers"].append({
            "wq": rnd(lk[0], (Dh, Dh)),
            "wk": rnd(lk[1], (Dh, Dh)),
            "wv": rnd(lk[2], (Dh, Dh)),
            "wfc": rnd(lk[3], (embed, embed)),
            "bfc": rnd(lk[4], (embed,)),
            "g1": jnp.ones((embed,), jnp.float32),
            "b1": jnp.zeros((embed,), jnp.float32),
            "wff1": rnd(lk[5], (F, embed)),
            "bff1": rnd(lk[6], (F,)),
            "wff2": rnd(lk[7], (embed, F)),
            "bff2": jnp.zeros((embed,), jnp.float32),
            "g2": jnp.ones((embed,), jnp.float32),
            "b2": jnp.zeros((embed,), jnp.float32),
        })
    return params


if __name__ == "__main__":
    # Lane-dense config: E=512, F=2048, head_dim=128 (multiples of 128).
    # q_tile defaults to S=16, so the grid is (N, 1): one fused step per batch
    # element, K/V projected exactly once.
    N, S = 2, 16
    vocab, embed, heads = 32, 512, 4
    num_layers, forward_expansion, max_length = 2, 4, 32

    key = jax.random.PRNGKey(0)
    kp, kx = jax.random.split(key)
    params = init_params(kp, vocab, embed, num_layers, heads,
                         forward_expansion, max_length)
    prepped = prepare_kernel_params(params, heads)

    ids = jax.random.randint(kx, (N, S), 0, vocab, dtype=jnp.int32)
    # src-style padding mask: last four key positions of batch 1 masked out
    mask = jnp.ones((N, S), jnp.int32).at[1, S - 4:].set(0)

    out = encoder_forward(ids, mask, prepped, heads)
    out = jax.block_until_ready(out)

    ref = encoder_reference(ids, mask, params, heads)
    assert out.shape == (N, S, embed)
    # bf16 MXU operands + approx reciprocal vs f32 reference -> bf16 tolerance.
    if not bool(jnp.allclose(out, ref, atol=5e-2, rtol=5e-2)):
        diff = float(jnp.max(jnp.abs(out - ref)))
        raise AssertionError(
            f"Pallas kernel output mismatch vs JAX reference (max|d|={diff})")
    print("KERNEL_OK")
</pallas_src>

<mosaic_0001>
module attributes {stable_mosaic.version = 11 : i64} {
  func.func @kernel(%arg0: i32, %arg1: i32, %arg2: memref<1x16x512xf32, #tpu.memory_space<vmem>>, %arg3: memref<1x1x16xf32, #tpu.memory_space<vmem>>, %arg4: memref<128x128xbf16, #tpu.memory_space<vmem>>, %arg5: memref<128x128xbf16, #tpu.memory_space<vmem>>, %arg6: memref<128x128xbf16, #tpu.memory_space<vmem>>, %arg7: memref<512x512xbf16, #tpu.memory_space<vmem>>, %arg8: memref<1x512xf32, #tpu.memory_space<vmem>>, %arg9: memref<1x512xf32, #tpu.memory_space<vmem>>, %arg10: memref<1x512xf32, #tpu.memory_space<vmem>>, %arg11: memref<512x2048xbf16, #tpu.memory_space<vmem>>, %arg12: memref<1x2048xf32, #tpu.memory_space<vmem>>, %arg13: memref<2048x512xbf16, #tpu.memory_space<vmem>>, %arg14: memref<1x512xf32, #tpu.memory_space<vmem>>, %arg15: memref<1x512xf32, #tpu.memory_space<vmem>>, %arg16: memref<1x512xf32, #tpu.memory_space<vmem>>, %arg17: memref<1x16x512xf32, #tpu.memory_space<vmem>>, %arg18: memref<16x512xbf16, #tpu.memory_space<vmem>>, %arg19: memref<16x512xbf16, #tpu.memory_space<vmem>>, %arg20: memref<16x512xbf16, #tpu.memory_space<vmem>>) attributes {dimension_semantics = [#tpu.dimension_semantics<parallel>, #tpu.dimension_semantics<arbitrary>], iteration_bounds = array<i64: 2, 1>, scalar_prefetch = 0 : i64, scratch_operands = 3 : i64, tpu.core_type = #tpu.core_type<tc>, window_params = [{transform_indices = @transform_0, window_bounds = array<i64: 1, 16, 512>}, {transform_indices = @transform_1, window_bounds = array<i64: 1, 1, 16>}, {pipeline_mode = #tpu.pipeline_mode<synchronous>, transform_indices = @transform_2, window_bounds = array<i64: 128, 128>}, {pipeline_mode = #tpu.pipeline_mode<synchronous>, transform_indices = @transform_3, window_bounds = array<i64: 128, 128>}, {pipeline_mode = #tpu.pipeline_mode<synchronous>, transform_indices = @transform_4, window_bounds = array<i64: 128, 128>}, {pipeline_mode = #tpu.pipeline_mode<synchronous>, transform_indices = @transform_5, window_bounds = array<i64: 512, 512>}, {pipeline_mode = #tpu.pipeline_mode<synchronous>, transform_indices = @transform_6, window_bounds = array<i64: 1, 512>}, {pipeline_mode = #tpu.pipeline_mode<synchronous>, transform_indices = @transform_7, window_bounds = array<i64: 1, 512>}, {pipeline_mode = #tpu.pipeline_mode<synchronous>, transform_indices = @transform_8, window_bounds = array<i64: 1, 512>}, {pipeline_mode = #tpu.pipeline_mode<synchronous>, transform_indices = @transform_9, window_bounds = array<i64: 512, 2048>}, {pipeline_mode = #tpu.pipeline_mode<synchronous>, transform_indices = @transform_10, window_bounds = array<i64: 1, 2048>}, {pipeline_mode = #tpu.pipeline_mode<synchronous>, transform_indices = @transform_11, window_bounds = array<i64: 2048, 512>}, {pipeline_mode = #tpu.pipeline_mode<synchronous>, transform_indices = @transform_12, window_bounds = array<i64: 1, 512>}, {pipeline_mode = #tpu.pipeline_mode<synchronous>, transform_indices = @transform_13, window_bounds = array<i64: 1, 512>}, {pipeline_mode = #tpu.pipeline_mode<synchronous>, transform_indices = @transform_14, window_bounds = array<i64: 1, 512>}, {transform_indices = @transform_15, window_bounds = array<i64: 1, 16, 512>}]} {
    %c0_i32 = arith.constant 0 : i32
    %0 = arith.cmpi eq, %arg1, %c0_i32 : i32
    %1 = arith.extui %0 : i1 to i32
    %c0_i32_0 = arith.constant 0 : i32
    %2 = arith.cmpi ne, %1, %c0_i32_0 : i32
    scf.if %2 {
      %c0_86 = arith.constant 0 : index
      %c0_87 = arith.constant 0 : index
      %c0_88 = arith.constant 0 : index
      %173 = vector.load %arg2[%c0_86, %c0_87, %c0_88] : memref<1x16x512xf32, #tpu.memory_space<vmem>>, vector<1x16x512xf32>
      %174 = vector.shape_cast %173 : vector<1x16x512xf32> to vector<16x512xf32>
      %175 = arith.truncf %174 : vector<16x512xf32> to vector<16x512xbf16>
      %c0_89 = arith.constant 0 : index
      %c0_90 = arith.constant 0 : index
      %176 = vector.load %arg5[%c0_89, %c0_90] : memref<128x128xbf16, #tpu.memory_space<vmem>>, vector<128x128xbf16>
      %c0_91 = arith.constant 0 : index
      %c0_92 = arith.constant 0 : index
      %177 = vector.load %arg6[%c0_91, %c0_92] : memref<128x128xbf16, #tpu.memory_space<vmem>>, vector<128x128xbf16>
      %178 = vector.extract_strided_slice %175 {offsets = [0, 0], sizes = [16, 128], strides = [1, 1]} : vector<16x512xbf16> to vector<16x128xbf16>
      %cst_93 = arith.constant dense<0.000000e+00> : vector<16x128xf32>
      %179 = tpu.matmul %178, %176, %cst_93 {dimension_numbers = #tpu.dot_dimension_numbers<[1], [0], [0], [1], [0, 0, 1, 1], [], []>} : vector<16x128xbf16>, vector<128x128xbf16>, vector<16x128xf32> -> vector<16x128xf32>
      %180 = arith.truncf %179 : vector<16x128xf32> to vector<16x128xbf16>
      %c0_94 = arith.constant 0 : index
      %c0_95 = arith.constant 0 : index
      %181 = vector.load %arg18[%c0_94, %c0_95] : memref<16x512xbf16, #tpu.memory_space<vmem>>, vector<16x128xbf16>
      tpu.vector_store %arg18[%c0_94, %c0_95], %180 {strides = array<i32>} : memref<16x512xbf16, #tpu.memory_space<vmem>>, vector<16x128xbf16>,
      %cst_96 = arith.constant dense<0.000000e+00> : vector<16x128xf32>
      %182 = tpu.matmul %178, %177, %cst_96 {dimension_numbers = #tpu.dot_dimension_numbers<[1], [0], [0], [1], [0, 0, 1, 1], [], []>} : vector<16x128xbf16>, vector<128x128xbf16>, vector<16x128xf32> -> vector<16x128xf32>
      %183 = arith.truncf %182 : vector<16x128xf32> to vector<16x128xbf16>
      %c0_97 = arith.constant 0 : index
      %c0_98 = arith.constant 0 : index
      %184 = vector.load %arg19[%c0_97, %c0_98] : memref<16x512xbf16, #tpu.memory_space<vmem>>, vector<16x128xbf16>
      tpu.vector_store %arg19[%c0_97, %c0_98], %183 {strides = array<i32>} : memref<16x512xbf16, #tpu.memory_space<vmem>>, vector<16x128xbf16>,
      %185 = vector.extract_strided_slice %175 {offsets = [0, 128], sizes = [16, 128], strides = [1, 1]} : vector<16x512xbf16> to vector<16x128xbf16>
      %cst_99 = arith.constant dense<0.000000e+00> : vector<16x128xf32>
      %186 = tpu.matmul %185, %176, %cst_99 {dimension_numbers = #tpu.dot_dimension_numbers<[1], [0], [0], [1], [0, 0, 1, 1], [], []>} : vector<16x128xbf16>, vector<128x128xbf16>, vector<16x128xf32> -> vector<16x128xf32>
      %187 = arith.truncf %186 : vector<16x128xf32> to vector<16x128xbf16>
      %c0_100 = arith.constant 0 : index
      %c128_101 = arith.constant 128 : index
      %188 = vector.load %arg18[%c0_100, %c128_101] : memref<16x512xbf16, #tpu.memory_space<vmem>>, vector<16x128xbf16>
      tpu.vector_store %arg18[%c0_100, %c128_101], %187 {strides = array<i32>} : memref<16x512xbf16, #tpu.memory_space<vmem>>, vector<16x128xbf16>,
      %cst_102 = arith.constant dense<0.000000e+00> : vector<16x128xf32>
      %189 = tpu.matmul %185, %177, %cst_102 {dimension_numbers = #tpu.dot_dimension_numbers<[1], [0], [0], [1], [0, 0, 1, 1], [], []>} : vector<16x128xbf16>, vector<128x128xbf16>, vector<16x128xf32> -> vector<16x128xf32>
      %190 = arith.truncf %189 : vector<16x128xf32> to vector<16x128xbf16>
      %c0_103 = arith.constant 0 : index
      %c128_104 = arith.constant 128 : index
      %191 = vector.load %arg19[%c0_103, %c128_104] : memref<16x512xbf16, #tpu.memory_space<vmem>>, vector<16x128xbf16>
      tpu.vector_store %arg19[%c0_103, %c128_104], %190 {strides = array<i32>} : memref<16x512xbf16, #tpu.memory_space<vmem>>, vector<16x128xbf16>,
      %192 = vector.extract_strided_slice %175 {offsets = [0, 256], sizes = [16, 128], strides = [1, 1]} : vector<16x512xbf16> to vector<16x128xbf16>
      %cst_105 = arith.constant dense<0.000000e+00> : vector<16x128xf32>
      %193 = tpu.matmul %192, %176, %cst_105 {dimension_numbers = #tpu.dot_dimension_numbers<[1], [0], [0], [1], [0, 0, 1, 1], [], []>} : vector<16x128xbf16>, vector<128x128xbf16>, vector<16x128xf32> -> vector<16x128xf32>
      %194 = arith.truncf %193 : vector<16x128xf32> to vector<16x128xbf16>
      %c0_106 = arith.constant 0 : index
      %c256_107 = arith.constant 256 : index
      %195 = vector.load %arg18[%c0_106, %c256_107] : memref<16x512xbf16, #tpu.memory_space<vmem>>, vector<16x128xbf16>
      tpu.vector_store %arg18[%c0_106, %c256_107], %194 {strides = array<i32>} : memref<16x512xbf16, #tpu.memory_space<vmem>>, vector<16x128xbf16>,
      %cst_108 = arith.constant dense<0.000000e+00> : vector<16x128xf32>
      %196 = tpu.matmul %192, %177, %cst_108 {dimension_numbers = #tpu.dot_dimension_numbers<[1], [0], [0], [1], [0, 0, 1, 1], [], []>} : vector<16x128xbf16>, vector<128x128xbf16>, vector<16x128xf32> -> vector<16x128xf32>
      %197 = arith.truncf %196 : vector<16x128xf32> to vector<16x128xbf16>
      %c0_109 = arith.constant 0 : index
      %c256_110 = arith.constant 256 : index
      %198 = vector.load %arg19[%c0_109, %c256_110] : memref<16x512xbf16, #tpu.memory_space<vmem>>, vector<16x128xbf16>
      tpu.vector_store %arg19[%c0_109, %c256_110], %197 {strides = array<i32>} : memref<16x512xbf16, #tpu.memory_space<vmem>>, vector<16x128xbf16>,
      %199 = vector.extract_strided_slice %175 {offsets = [0, 384], sizes = [16, 128], strides = [1, 1]} : vector<16x512xbf16> to vector<16x128xbf16>
      %cst_111 = arith.constant dense<0.000000e+00> : vector<16x128xf32>
      %200 = tpu.matmul %199, %176, %cst_111 {dimension_numbers = #tpu.dot_dimension_numbers<[1], [0], [0], [1], [0, 0, 1, 1], [], []>} : vector<16x128xbf16>, vector<128x128xbf16>, vector<16x128xf32> -> vector<16x128xf32>
      %201 = arith.truncf %200 : vector<16x128xf32> to vector<16x128xbf16>
      %c0_112 = arith.constant 0 : index
      %c384_113 = arith.constant 384 : index
      %202 = vector.load %arg18[%c0_112, %c384_113] : memref<16x512xbf16, #tpu.memory_space<vmem>>, vector<16x128xbf16>
      tpu.vector_store %arg18[%c0_112, %c384_113], %201 {strides = array<i32>} : memref<16x512xbf16, #tpu.memory_space<vmem>>, vector<16x128xbf16>,
      %cst_114 = arith.constant dense<0.000000e+00> : vector<16x128xf32>
      %203 = tpu.matmul %199, %177, %cst_114 {dimension_numbers = #tpu.dot_dimension_numbers<[1], [0], [0], [1], [0, 0, 1, 1], [], []>} : vector<16x128xbf16>, vector<128x128xbf16>, vector<16x128xf32> -> vector<16x128xf32>
      %204 = arith.truncf %203 : vector<16x128xf32> to vector<16x128xbf16>
      %c0_115 = arith.constant 0 : index
      %c384_116 = arith.constant 384 : index
      %205 = vector.load %arg19[%c0_115, %c384_116] : memref<16x512xbf16, #tpu.memory_space<vmem>>, vector<16x128xbf16>
      tpu.vector_store %arg19[%c0_115, %c384_116], %204 {strides = array<i32>} : memref<16x512xbf16, #tpu.memory_space<vmem>>, vector<16x128xbf16>,
    } else {
    }
    %c16_i32 = arith.constant 16 : i32
    %3 = arith.muli %arg1, %c16_i32 : i32
    %4 = tpu.assume_multiple %3, 16 : i32
    %c0 = arith.constant 0 : index
    %5 = arith.index_cast %4 : i32 to index
    %c0_1 = arith.constant 0 : index
    %6 = vector.load %arg2[%c0, %5, %c0_1] : memref<1x16x512xf32, #tpu.memory_space<vmem>>, vector<1x16x512xf32>
    %7 = vector.shape_cast %6 : vector<1x16x512xf32> to vector<16x512xf32>
    %8 = arith.truncf %7 : vector<16x512xf32> to vector<16x512xbf16>
    %c0_2 = arith.constant 0 : index
    %c0_3 = arith.constant 0 : index
    %c0_4 = arith.constant 0 : index
    %9 = vector.load %arg3[%c0_2, %c0_3, %c0_4] : memref<1x1x16xf32, #tpu.memory_space<vmem>>, vector<1x1x16xf32>
    %10 = vector.shape_cast %9 : vector<1x1x16xf32> to vector<1x16xf32>
    %c0_5 = arith.constant 0 : index
    %c0_6 = arith.constant 0 : index
    %11 = vector.load %arg4[%c0_5, %c0_6] : memref<128x128xbf16, #tpu.memory_space<vmem>>, vector<128x128xbf16>
    %12 = vector.extract_strided_slice %8 {offsets = [0, 0], sizes = [16, 128], strides = [1, 1]} : vector<16x512xbf16> to vector<16x128xbf16>
    %cst = arith.constant dense<0.000000e+00> : vector<16x128xf32>
    %13 = tpu.matmul %12, %11, %cst {dimension_numbers = #tpu.dot_dimension_numbers<[1], [0], [0], [1], [0, 0, 1, 1], [], []>} : vector<16x128xbf16>, vector<128x128xbf16>, vector<16x128xf32> -> vector<16x128xf32>
    %14 = arith.truncf %13 : vector<16x128xf32> to vector<16x128xbf16>
    %c0_7 = arith.constant 0 : index
    %c0_8 = arith.constant 0 : index
    %15 = vector.load %arg18[%c0_7, %c0_8] : memref<16x512xbf16, #tpu.memory_space<vmem>>, vector<16x128xbf16>
    %c0_9 = arith.constant 0 : index
    %c0_10 = arith.constant 0 : index
    %16 = vector.load %arg19[%c0_9, %c0_10] : memref<16x512xbf16, #tpu.memory_space<vmem>>, vector<16x128xbf16>
    %cst_11 = arith.constant dense<0.000000e+00> : vector<16x16xf32>
    %17 = tpu.matmul %14, %15, %cst_11 {dimension_numbers = #tpu.dot_dimension_numbers<[1], [1], [0], [0], [0, 0, 1, 0], [], []>} : vector<16x128xbf16>, vector<16x128xbf16>, vector<16x16xf32> -> vector<16x16xf32>
    %18 = vector.broadcast %10 : vector<1x16xf32> to vector<16x16xf32>
    %19 = arith.addf %17, %18 : vector<16x16xf32>
    %cst_12 = arith.constant dense<0xFF800000> : vector<16xf32>
    %20 = vector.multi_reduction <maximumf>, %19, %cst_12 [1] : vector<16x16xf32> to vector<16xf32>
    %21 = vector.shape_cast %20 : vector<16xf32> to vector<16x1xf32>
    %22 = vector.broadcast %21 : vector<16x1xf32> to vector<16x16xf32>
    %23 = arith.subf %19, %22 : vector<16x16xf32>
    %24 = math.exp %23 : vector<16x16xf32>
    %cst_13 = arith.constant dense<0.000000e+00> : vector<16xf32>
    %25 = vector.multi_reduction <add>, %24, %cst_13 [1] : vector<16x16xf32> to vector<16xf32>
    %26 = vector.shape_cast %25 : vector<16xf32> to vector<16x1xf32>
    %27 = tpu.reciprocal %26 {approx = true} : vector<16x1xf32> -> vector<16x1xf32>
    %28 = arith.truncf %24 : vector<16x16xf32> to vector<16x16xbf16>
    %cst_14 = arith.constant dense<0.000000e+00> : vector<16x128xf32>
    %29 = tpu.matmul %28, %16, %cst_14 {dimension_numbers = #tpu.dot_dimension_numbers<[1], [0], [0], [1], [0, 0, 1, 1], [], []>} : vector<16x16xbf16>, vector<16x128xbf16>, vector<16x128xf32> -> vector<16x128xf32>
    %30 = vector.broadcast %27 : vector<16x1xf32> to vector<16x128xf32>
    %31 = arith.mulf %29, %30 : vector<16x128xf32>
    %32 = arith.truncf %31 : vector<16x128xf32> to vector<16x128xbf16>
    %c0_15 = arith.constant 0 : index
    %c0_16 = arith.constant 0 : index
    %33 = vector.load %arg20[%c0_15, %c0_16] : memref<16x512xbf16, #tpu.memory_space<vmem>>, vector<16x128xbf16>
    tpu.vector_store %arg20[%c0_15, %c0_16], %32 {strides = array<i32>} : memref<16x512xbf16, #tpu.memory_space<vmem>>, vector<16x128xbf16>,
    %34 = vector.extract_strided_slice %8 {offsets = [0, 128], sizes = [16, 128], strides = [1, 1]} : vector<16x512xbf16> to vector<16x128xbf16>
    %cst_17 = arith.constant dense<0.000000e+00> : vector<16x128xf32>
    %35 = tpu.matmul %34, %11, %cst_17 {dimension_numbers = #tpu.dot_dimension_numbers<[1], [0], [0], [1], [0, 0, 1, 1], [], []>} : vector<16x128xbf16>, vector<128x128xbf16>, vector<16x128xf32> -> vector<16x128xf32>
    %36 = arith.truncf %35 : vector<16x128xf32> to vector<16x128xbf16>
    %c0_18 = arith.constant 0 : index
    %c128 = arith.constant 128 : index
    %37 = vector.load %arg18[%c0_18, %c128] : memref<16x512xbf16, #tpu.memory_space<vmem>>, vector<16x128xbf16>
    %c0_19 = arith.constant 0 : index
    %c128_20 = arith.constant 128 : index
    %38 = vector.load %arg19[%c0_19, %c128_20] : memref<16x512xbf16, #tpu.memory_space<vmem>>, vector<16x128xbf16>
    %cst_21 = arith.constant dense<0.000000e+00> : vector<16x16xf32>
    %39 = tpu.matmul %36, %37, %cst_21 {dimension_numbers = #tpu.dot_dimension_numbers<[1], [1], [0], [0], [0, 0, 1, 0], [], []>} : vector<16x128xbf16>, vector<16x128xbf16>, vector<16x16xf32> -> vector<16x16xf32>
    %40 = vector.broadcast %10 : vector<1x16xf32> to vector<16x16xf32>
    %41 = arith.addf %39, %40 : vector<16x16xf32>
    %cst_22 = arith.constant dense<0xFF800000> : vector<16xf32>
    %42 = vector.multi_reduction <maximumf>, %41, %cst_22 [1] : vector<16x16xf32> to vector<16xf32>
    %43 = vector.shape_cast %42 : vector<16xf32> to vector<16x1xf32>
    %44 = vector.broadcast %43 : vector<16x1xf32> to vector<16x16xf32>
    %45 = arith.subf %41, %44 : vector<16x16xf32>
    %46 = math.exp %45 : vector<16x16xf32>
    %cst_23 = arith.constant dense<0.000000e+00> : vector<16xf32>
    %47 = vector.multi_reduction <add>, %46, %cst_23 [1] : vector<16x16xf32> to vector<16xf32>
    %48 = vector.shape_cast %47 : vector<16xf32> to vector<16x1xf32>
    %49 = tpu.reciprocal %48 {approx = true} : vector<16x1xf32> -> vector<16x1xf32>
    %50 = arith.truncf %46 : vector<16x16xf32> to vector<16x16xbf16>
    %cst_24 = arith.constant dense<0.000000e+00> : vector<16x128xf32>
    %51 = tpu.matmul %50, %38, %cst_24 {dimension_numbers = #tpu.dot_dimension_numbers<[1], [0], [0], [1], [0, 0, 1, 1], [], []>} : vector<16x16xbf16>, vector<16x128xbf16>, vector<16x128xf32> -> vector<16x128xf32>
    %52 = vector.broadcast %49 : vector<16x1xf32> to vector<16x128xf32>
    %53 = arith.mulf %51, %52 : vector<16x128xf32>
    %54 = arith.truncf %53 : vector<16x128xf32> to vector<16x128xbf16>
    %c0_25 = arith.constant 0 : index
    %c128_26 = arith.constant 128 : index
    %55 = vector.load %arg20[%c0_25, %c128_26] : memref<16x512xbf16, #tpu.memory_space<vmem>>, vector<16x128xbf16>
    tpu.vector_store %arg20[%c0_25, %c128_26], %54 {strides = array<i32>} : memref<16x512xbf16, #tpu.memory_space<vmem>>, vector<16x128xbf16>,
    %56 = vector.extract_strided_slice %8 {offsets = [0, 256], sizes = [16, 128], strides = [1, 1]} : vector<16x512xbf16> to vector<16x128xbf16>
    %cst_27 = arith.constant dense<0.000000e+00> : vector<16x128xf32>
    %57 = tpu.matmul %56, %11, %cst_27 {dimension_numbers = #tpu.dot_dimension_numbers<[1], [0], [0], [1], [0, 0, 1, 1], [], []>} : vector<16x128xbf16>, vector<128x128xbf16>, vector<16x128xf32> -> vector<16x128xf32>
    %58 = arith.truncf %57 : vector<16x128xf32> to vector<16x128xbf16>
    %c0_28 = arith.constant 0 : index
    %c256 = arith.constant 256 : index
    %59 = vector.load %arg18[%c0_28, %c256] : memref<16x512xbf16, #tpu.memory_space<vmem>>, vector<16x128xbf16>
    %c0_29 = arith.constant 0 : index
    %c256_30 = arith.constant 256 : index
    %60 = vector.load %arg19[%c0_29, %c256_30] : memref<16x512xbf16, #tpu.memory_space<vmem>>, vector<16x128xbf16>
    %cst_31 = arith.constant dense<0.000000e+00> : vector<16x16xf32>
    %61 = tpu.matmul %58, %59, %cst_31 {dimension_numbers = #tpu.dot_dimension_numbers<[1], [1], [0], [0], [0, 0, 1, 0], [], []>} : vector<16x128xbf16>, vector<16x128xbf16>, vector<16x16xf32> -> vector<16x16xf32>
    %62 = vector.broadcast %10 : vector<1x16xf32> to vector<16x16xf32>
    %63 = arith.addf %61, %62 : vector<16x16xf32>
    %cst_32 = arith.constant dense<0xFF800000> : vector<16xf32>
    %64 = vector.multi_reduction <maximumf>, %63, %cst_32 [1] : vector<16x16xf32> to vector<16xf32>
    %65 = vector.shape_cast %64 : vector<16xf32> to vector<16x1xf32>
    %66 = vector.broadcast %65 : vector<16x1xf32> to vector<16x16xf32>
    %67 = arith.subf %63, %66 : vector<16x16xf32>
    %68 = math.exp %67 : vector<16x16xf32>
    %cst_33 = arith.constant dense<0.000000e+00> : vector<16xf32>
    %69 = vector.multi_reduction <add>, %68, %cst_33 [1] : vector<16x16xf32> to vector<16xf32>
    %70 = vector.shape_cast %69 : vector<16xf32> to vector<16x1xf32>
    %71 = tpu.reciprocal %70 {approx = true} : vector<16x1xf32> -> vector<16x1xf32>
    %72 = arith.truncf %68 : vector<16x16xf32> to vector<16x16xbf16>
    %cst_34 = arith.constant dense<0.000000e+00> : vector<16x128xf32>
    %73 = tpu.matmul %72, %60, %cst_34 {dimension_numbers = #tpu.dot_dimension_numbers<[1], [0], [0], [1], [0, 0, 1, 1], [], []>} : vector<16x16xbf16>, vector<16x128xbf16>, vector<16x128xf32> -> vector<16x128xf32>
    %74 = vector.broadcast %71 : vector<16x1xf32> to vector<16x128xf32>
    %75 = arith.mulf %73, %74 : vector<16x128xf32>
    %76 = arith.truncf %75 : vector<16x128xf32> to vector<16x128xbf16>
    %c0_35 = arith.constant 0 : index
    %c256_36 = arith.constant 256 : index
    %77 = vector.load %arg20[%c0_35, %c256_36] : memref<16x512xbf16, #tpu.memory_space<vmem>>, vector<16x128xbf16>
    tpu.vector_store %arg20[%c0_35, %c256_36], %76 {strides = array<i32>} : memref<16x512xbf16, #tpu.memory_space<vmem>>, vector<16x128xbf16>,
    %78 = vector.extract_strided_slice %8 {offsets = [0, 384], sizes = [16, 128], strides = [1, 1]} : vector<16x512xbf16> to vector<16x128xbf16>
    %cst_37 = arith.constant dense<0.000000e+00> : vector<16x128xf32>
    %79 = tpu.matmul %78, %11, %cst_37 {dimension_numbers = #tpu.dot_dimension_numbers<[1], [0], [0], [1], [0, 0, 1, 1], [], []>} : vector<16x128xbf16>, vector<128x128xbf16>, vector<16x128xf32> -> vector<16x128xf32>
    %80 = arith.truncf %79 : vector<16x128xf32> to vector<16x128xbf16>
    %c0_38 = arith.constant 0 : index
    %c384 = arith.constant 384 : index
    %81 = vector.load %arg18[%c0_38, %c384] : memref<16x512xbf16, #tpu.memory_space<vmem>>, vector<16x128xbf16>
    %c0_39 = arith.constant 0 : index
    %c384_40 = arith.constant 384 : index
    %82 = vector.load %arg19[%c0_39, %c384_40] : memref<16x512xbf16, #tpu.memory_space<vmem>>, vector<16x128xbf16>
    %cst_41 = arith.constant dense<0.000000e+00> : vector<16x16xf32>
    %83 = tpu.matmul %80, %81, %cst_41 {dimension_numbers = #tpu.dot_dimension_numbers<[1], [1], [0], [0], [0, 0, 1, 0], [], []>} : vector<16x128xbf16>, vector<16x128xbf16>, vector<16x16xf32> -> vector<16x16xf32>
    %84 = vector.broadcast %10 : vector<1x16xf32> to vector<16x16xf32>
    %85 = arith.addf %83, %84 : vector<16x16xf32>
    %cst_42 = arith.constant dense<0xFF800000> : vector<16xf32>
    %86 = vector.multi_reduction <maximumf>, %85, %cst_42 [1] : vector<16x16xf32> to vector<16xf32>
    %87 = vector.shape_cast %86 : vector<16xf32> to vector<16x1xf32>
    %88 = vector.broadcast %87 : vector<16x1xf32> to vector<16x16xf32>
    %89 = arith.subf %85, %88 : vector<16x16xf32>
    %90 = math.exp %89 : vector<16x16xf32>
    %cst_43 = arith.constant dense<0.000000e+00> : vector<16xf32>
    %91 = vector.multi_reduction <add>, %90, %cst_43 [1] : vector<16x16xf32> to vector<16xf32>
    %92 = vector.shape_cast %91 : vector<16xf32> to vector<16x1xf32>
    %93 = tpu.reciprocal %92 {approx = true} : vector<16x1xf32> -> vector<16x1xf32>
    %94 = arith.truncf %90 : vector<16x16xf32> to vector<16x16xbf16>
    %cst_44 = arith.constant dense<0.000000e+00> : vector<16x128xf32>
    %95 = tpu.matmul %94, %82, %cst_44 {dimension_numbers = #tpu.dot_dimension_numbers<[1], [0], [0], [1], [0, 0, 1, 1], [], []>} : vector<16x16xbf16>, vector<16x128xbf16>, vector<16x128xf32> -> vector<16x128xf32>
    %96 = vector.broadcast %93 : vector<16x1xf32> to vector<16x128xf32>
    %97 = arith.mulf %95, %96 : vector<16x128xf32>
    %98 = arith.truncf %97 : vector<16x128xf32> to vector<16x128xbf16>
    %c0_45 = arith.constant 0 : index
    %c384_46 = arith.constant 384 : index
    %99 = vector.load %arg20[%c0_45, %c384_46] : memref<16x512xbf16, #tpu.memory_space<vmem>>, vector<16x128xbf16>
    tpu.vector_store %arg20[%c0_45, %c384_46], %98 {strides = array<i32>} : memref<16x512xbf16, #tpu.memory_space<vmem>>, vector<16x128xbf16>,
    %c0_47 = arith.constant 0 : index
    %c0_48 = arith.constant 0 : index
    %100 = vector.load %arg20[%c0_47, %c0_48] : memref<16x512xbf16, #tpu.memory_space<vmem>>, vector<16x512xbf16>
    %c0_49 = arith.constant 0 : index
    %c0_50 = arith.constant 0 : index
    %101 = vector.load %arg7[%c0_49, %c0_50] : memref<512x512xbf16, #tpu.memory_space<vmem>>, vector<512x512xbf16>
    %cst_51 = arith.constant dense<0.000000e+00> : vector<16x512xf32>
    %102 = tpu.matmul %100, %101, %cst_51 {dimension_numbers = #tpu.dot_dimension_numbers<[1], [0], [0], [1], [0, 0, 1, 1], [], []>} : vector<16x512xbf16>, vector<512x512xbf16>, vector<16x512xf32> -> vector<16x512xf32>
    %c0_52 = arith.constant 0 : index
    %c0_53 = arith.constant 0 : index
    %103 = vector.load %arg8[%c0_52, %c0_53] : memref<1x512xf32, #tpu.memory_space<vmem>>, vector<1x512xf32>
    %104 = vector.broadcast %103 : vector<1x512xf32> to vector<16x512xf32>
    %105 = arith.addf %102, %104 : vector<16x512xf32>
    %106 = arith.addf %105, %7 : vector<16x512xf32>
    %c0_54 = arith.constant 0 : index
    %c0_55 = arith.constant 0 : index
    %107 = vector.load %arg9[%c0_54, %c0_55] : memref<1x512xf32, #tpu.memory_space<vmem>>, vector<1x512xf32>
    %c0_56 = arith.constant 0 : index
    %c0_57 = arith.constant 0 : index
    %108 = vector.load %arg10[%c0_56, %c0_57] : memref<1x512xf32, #tpu.memory_space<vmem>>, vector<1x512xf32>
    %cst_58 = arith.constant dense<0.000000e+00> : vector<16xf32>
    %109 = vector.multi_reduction <add>, %106, %cst_58 [1] : vector<16x512xf32> to vector<16xf32>
    %110 = vector.shape_cast %109 : vector<16xf32> to vector<16x1xf32>
    %cst_59 = arith.constant 5.120000e+02 : f32
    %111 = vector.broadcast %cst_59 : f32 to vector<16x1xf32>
    %112 = arith.divf %110, %111 : vector<16x1xf32>
    %113 = vector.broadcast %112 : vector<16x1xf32> to vector<16x512xf32>
    %114 = arith.subf %106, %113 : vector<16x512xf32>
    %115 = arith.mulf %114, %114 : vector<16x512xf32>
    %cst_60 = arith.constant dense<0.000000e+00> : vector<16xf32>
    %116 = vector.multi_reduction <add>, %115, %cst_60 [1] : vector<16x512xf32> to vector<16xf32>
    %117 = vector.shape_cast %116 : vector<16xf32> to vector<16x1xf32>
    %cst_61 = arith.constant 5.120000e+02 : f32
    %118 = vector.broadcast %cst_61 : f32 to vector<16x1xf32>
    %119 = arith.divf %117, %118 : vector<16x1xf32>
    %120 = vector.broadcast %112 : vector<16x1xf32> to vector<16x512xf32>
    %121 = arith.subf %106, %120 : vector<16x512xf32>
    %cst_62 = arith.constant 9.99999974E-6 : f32
    %122 = vector.broadcast %cst_62 : f32 to vector<16x1xf32>
    %123 = arith.addf %119, %122 : vector<16x1xf32>
    %124 = math.rsqrt %123 : vector<16x1xf32>
    %125 = vector.broadcast %124 : vector<16x1xf32> to vector<16x512xf32>
    %126 = arith.mulf %121, %125 : vector<16x512xf32>
    %127 = vector.broadcast %107 : vector<1x512xf32> to vector<16x512xf32>
    %128 = arith.mulf %126, %127 : vector<16x512xf32>
    %129 = vector.broadcast %108 : vector<1x512xf32> to vector<16x512xf32>
    %130 = arith.addf %128, %129 : vector<16x512xf32>
    %131 = arith.truncf %130 : vector<16x512xf32> to vector<16x512xbf16>
    %c0_63 = arith.constant 0 : index
    %c0_64 = arith.constant 0 : index
    %132 = vector.load %arg11[%c0_63, %c0_64] : memref<512x2048xbf16, #tpu.memory_space<vmem>>, vector<512x2048xbf16>
    %cst_65 = arith.constant dense<0.000000e+00> : vector<16x2048xf32>
    %133 = tpu.matmul %131, %132, %cst_65 {dimension_numbers = #tpu.dot_dimension_numbers<[1], [0], [0], [1], [0, 0, 1, 1], [], []>} : vector<16x512xbf16>, vector<512x2048xbf16>, vector<16x2048xf32> -> vector<16x2048xf32>
    %c0_66 = arith.constant 0 : index
    %c0_67 = arith.constant 0 : index
    %134 = vector.load %arg12[%c0_66, %c0_67] : memref<1x2048xf32, #tpu.memory_space<vmem>>, vector<1x2048xf32>
    %135 = vector.broadcast %134 : vector<1x2048xf32> to vector<16x2048xf32>
    %136 = arith.addf %133, %135 : vector<16x2048xf32>
    %cst_68 = arith.constant 0.000000e+00 : f32
    %137 = vector.broadcast %cst_68 : f32 to vector<16x2048xf32>
    %138 = arith.maximumf %136, %137 : vector<16x2048xf32>
    %139 = arith.truncf %138 : vector<16x2048xf32> to vector<16x2048xbf16>
    %c0_69 = arith.constant 0 : index
    %c0_70 = arith.constant 0 : index
    %140 = vector.load %arg13[%c0_69, %c0_70] : memref<2048x512xbf16, #tpu.memory_space<vmem>>, vector<2048x512xbf16>
    %cst_71 = arith.constant dense<0.000000e+00> : vector<16x512xf32>
    %141 = tpu.matmul %139, %140, %cst_71 {dimension_numbers = #tpu.dot_dimension_numbers<[1], [0], [0], [1], [0, 0, 1, 1], [], []>} : vector<16x2048xbf16>, vector<2048x512xbf16>, vector<16x512xf32> -> vector<16x512xf32>
    %c0_72 = arith.constant 0 : index
    %c0_73 = arith.constant 0 : index
    %142 = vector.load %arg14[%c0_72, %c0_73] : memref<1x512xf32, #tpu.memory_space<vmem>>, vector<1x512xf32>
    %143 = vector.broadcast %142 : vector<1x512xf32> to vector<16x512xf32>
    %144 = arith.addf %141, %143 : vector<16x512xf32>
    %145 = arith.addf %144, %130 : vector<16x512xf32>
    %c0_74 = arith.constant 0 : index
    %c0_75 = arith.constant 0 : index
    %146 = vector.load %arg15[%c0_74, %c0_75] : memref<1x512xf32, #tpu.memory_space<vmem>>, vector<1x512xf32>
    %c0_76 = arith.constant 0 : index
    %c0_77 = arith.constant 0 : index
    %147 = vector.load %arg16[%c0_76, %c0_77] : memref<1x512xf32, #tpu.memory_space<vmem>>, vector<1x512xf32>
    %cst_78 = arith.constant dense<0.000000e+00> : vector<16xf32>
    %148 = vector.multi_reduction <add>, %145, %cst_78 [1] : vector<16x512xf32> to vector<16xf32>
    %149 = vector.shape_cast %148 : vector<16xf32> to vector<16x1xf32>
    %cst_79 = arith.constant 5.120000e+02 : f32
    %150 = vector.broadcast %cst_79 : f32 to vector<16x1xf32>
    %151 = arith.divf %149, %150 : vector<16x1xf32>
    %152 = vector.broadcast %151 : vector<16x1xf32> to vector<16x512xf32>
    %153 = arith.subf %145, %152 : vector<16x512xf32>
    %154 = arith.mulf %153, %153 : vector<16x512xf32>
    %cst_80 = arith.constant dense<0.000000e+00> : vector<16xf32>
    %155 = vector.multi_reduction <add>, %154, %cst_80 [1] : vector<16x512xf32> to vector<16xf32>
    %156 = vector.shape_cast %155 : vector<16xf32> to vector<16x1xf32>
    %cst_81 = arith.constant 5.120000e+02 : f32
    %157 = vector.broadcast %cst_81 : f32 to vector<16x1xf32>
    %158 = arith.divf %156, %157 : vector<16x1xf32>
    %159 = vector.broadcast %151 : vector<16x1xf32> to vector<16x512xf32>
    %160 = arith.subf %145, %159 : vector<16x512xf32>
    %cst_82 = arith.constant 9.99999974E-6 : f32
    %161 = vector.broadcast %cst_82 : f32 to vector<16x1xf32>
    %162 = arith.addf %158, %161 : vector<16x1xf32>
    %163 = math.rsqrt %162 : vector<16x1xf32>
    %164 = vector.broadcast %163 : vector<16x1xf32> to vector<16x512xf32>
    %165 = arith.mulf %160, %164 : vector<16x512xf32>
    %166 = vector.broadcast %146 : vector<1x512xf32> to vector<16x512xf32>
    %167 = arith.mulf %165, %166 : vector<16x512xf32>
    %168 = vector.broadcast %147 : vector<1x512xf32> to vector<16x512xf32>
    %169 = arith.addf %167, %168 : vector<16x512xf32>
    %c0_83 = arith.constant 0 : index
    %c0_84 = arith.constant 0 : index
    %c0_85 = arith.constant 0 : index
    %170 = vector.load %arg17[%c0_83, %c0_84, %c0_85] : memref<1x16x512xf32, #tpu.memory_space<vmem>>, vector<1x16x512xf32>
    %171 = vector.shape_cast %170 : vector<1x16x512xf32> to vector<16x512xf32>
    %172 = vector.shape_cast %169 : vector<16x512xf32> to vector<1x16x512xf32>
    tpu.vector_store %arg17[%c0_83, %c0_84, %c0_85], %172 {strides = array<i32>} : memref<1x16x512xf32, #tpu.memory_space<vmem>>, vector<1x16x512xf32>,
    return
  }
  func.func @transform_0(%arg0: i32, %arg1: i32) -> (i32, i32, i32) {
    %c0_i32 = arith.constant 0 : i32
    %c0_i32_0 = arith.constant 0 : i32
    %c0_i32_1 = arith.constant 0 : i32
    return %arg0, %c0_i32, %c0_i32_0 : i32, i32, i32
  }
  func.func @transform_1(%arg0: i32, %arg1: i32) -> (i32, i32, i32) {
    %c0_i32 = arith.constant 0 : i32
    %c0_i32_0 = arith.constant 0 : i32
    %c0_i32_1 = arith.constant 0 : i32
    return %arg0, %c0_i32, %c0_i32_0 : i32, i32, i32
  }
  func.func @transform_2(%arg0: i32, %arg1: i32) -> (i32, i32) {
    %c0_i32 = arith.constant 0 : i32
    %c0_i32_0 = arith.constant 0 : i32
    %c0_i32_1 = arith.constant 0 : i32
    return %c0_i32, %c0_i32_0 : i32, i32
  }
  func.func @transform_3(%arg0: i32, %arg1: i32) -> (i32, i32) {
    %c0_i32 = arith.constant 0 : i32
    %c0_i32_0 = arith.constant 0 : i32
    %c0_i32_1 = arith.constant 0 : i32
    return %c0_i32, %c0_i32_0 : i32, i32
  }
  func.func @transform_4(%arg0: i32, %arg1: i32) -> (i32, i32) {
    %c0_i32 = arith.constant 0 : i32
    %c0_i32_0 = arith.constant 0 : i32
    %c0_i32_1 = arith.constant 0 : i32
    return %c0_i32, %c0_i32_0 : i32, i32
  }
  func.func @transform_5(%arg0: i32, %arg1: i32) -> (i32, i32) {
    %c0_i32 = arith.constant 0 : i32
    %c0_i32_0 = arith.constant 0 : i32
    %c0_i32_1 = arith.constant 0 : i32
    return %c0_i32, %c0_i32_0 : i32, i32
  }
  func.func @transform_6(%arg0: i32, %arg1: i32) -> (i32, i32) {
    %c0_i32 = arith.constant 0 : i32
    %c0_i32_0 = arith.constant 0 : i32
    %c0_i32_1 = arith.constant 0 : i32
    return %c0_i32, %c0_i32_0 : i32, i32
  }
  func.func @transform_7(%arg0: i32, %arg1: i32) -> (i32, i32) {
    %c0_i32 = arith.constant 0 : i32
    %c0_i32_0 = arith.constant 0 : i32
    %c0_i32_1 = arith.constant 0 : i32
    return %c0_i32, %c0_i32_0 : i32, i32
  }
  func.func @transform_8(%arg0: i32, %arg1: i32) -> (i32, i32) {
    %c0_i32 = arith.constant 0 : i32
    %c0_i32_0 = arith.constant 0 : i32
    %c0_i32_1 = arith.constant 0 : i32
    return %c0_i32, %c0_i32_0 : i32, i32
  }
  func.func @transform_9(%arg0: i32, %arg1: i32) -> (i32, i32) {
    %c0_i32 = arith.constant 0 : i32
    %c0_i32_0 = arith.constant 0 : i32
    %c0_i32_1 = arith.constant 0 : i32
    return %c0_i32, %c0_i32_0 : i32, i32
  }
  func.func @transform_10(%arg0: i32, %arg1: i32) -> (i32, i32) {
    %c0_i32 = arith.constant 0 : i32
    %c0_i32_0 = arith.constant 0 : i32
    %c0_i32_1 = arith.constant 0 : i32
    return %c0_i32, %c0_i32_0 : i32, i32
  }
  func.func @transform_11(%arg0: i32, %arg1: i32) -> (i32, i32) {
    %c0_i32 = arith.constant 0 : i32
    %c0_i32_0 = arith.constant 0 : i32
    %c0_i32_1 = arith.constant 0 : i32
    return %c0_i32, %c0_i32_0 : i32, i32
  }
  func.func @transform_12(%arg0: i32, %arg1: i32) -> (i32, i32) {
    %c0_i32 = arith.constant 0 : i32
    %c0_i32_0 = arith.constant 0 : i32
    %c0_i32_1 = arith.constant 0 : i32
    return %c0_i32, %c0_i32_0 : i32, i32
  }
  func.func @transform_13(%arg0: i32, %arg1: i32) -> (i32, i32) {
    %c0_i32 = arith.constant 0 : i32
    %c0_i32_0 = arith.constant 0 : i32
    %c0_i32_1 = arith.constant 0 : i32
    return %c0_i32, %c0_i32_0 : i32, i32
  }
  func.func @transform_14(%arg0: i32, %arg1: i32) -> (i32, i32) {
    %c0_i32 = arith.constant 0 : i32
    %c0_i32_0 = arith.constant 0 : i32
    %c0_i32_1 = arith.constant 0 : i32
    return %c0_i32, %c0_i32_0 : i32, i32
  }
  func.func @transform_15(%arg0: i32, %arg1: i32) -> (i32, i32, i32) {
    %c0_i32 = arith.constant 0 : i32
    %c0_i32_0 = arith.constant 0 : i32
    return %arg0, %arg1, %c0_i32 : i32, i32, i32
  }
}

</mosaic_0001>

<llo_original>
// kernel: tpu_custom_call.1
$region0: #{tpu_custom_call.1}
  #allocation0 [shape = 'u32[]', space=smem, size = 0x4, offset = 0x4, fixed_abs, tag = 'smem constant byte address 0x4 - core index']
  #allocation1 [shape = 'u32[144,128]{1,0:T(1,128)}', space=vmem, size = 0x12000, scoped, tag = 'internal scratch']
  #allocation2 [shape = 'bf16[16,512]{1,0:T(16,128)(2,1)}', space=vmem, size = 0x4000, scoped, tag = 'scratch operand']
  #allocation3 [shape = 'bf16[16,512]{1,0:T(16,128)(2,1)}', space=vmem, size = 0x4000, scoped, tag = 'scratch operand']
  #allocation4 [shape = 'bf16[16,512]{1,0:T(16,128)(2,1)}', space=vmem, size = 0x4000, scoped, tag = 'scratch operand']
  %s0 = inlined_call_operand.hbm [shape: f32[2,16,512], index: 0, kind: input, shape index: {}]
  %s1 = inlined_call_operand.hbm [shape: f32[2,1,16], index: 1, kind: input, shape index: {}]
  %s2 = inlined_call_operand.hbm [shape: bf16[128,128], index: 2, kind: input, shape index: {}]
  %s3 = inlined_call_operand.hbm [shape: bf16[128,128], index: 3, kind: input, shape index: {}]
  %s4 = inlined_call_operand.hbm [shape: bf16[128,128], index: 4, kind: input, shape index: {}]
  %s5 = inlined_call_operand.hbm [shape: bf16[512,512], index: 5, kind: input, shape index: {}]
  %s6 = inlined_call_operand.hbm [shape: f32[1,512], index: 6, kind: input, shape index: {}]
  %s7 = inlined_call_operand.hbm [shape: f32[1,512], index: 7, kind: input, shape index: {}]
  %s8 = inlined_call_operand.hbm [shape: f32[1,512], index: 8, kind: input, shape index: {}]
  %s9 = inlined_call_operand.hbm [shape: bf16[512,2048], index: 9, kind: input, shape index: {}]
  %s10 = inlined_call_operand.hbm [shape: f32[1,2048], index: 10, kind: input, shape index: {}]
  %s11 = inlined_call_operand.hbm [shape: bf16[2048,512], index: 11, kind: input, shape index: {}]
  %s12 = inlined_call_operand.hbm [shape: f32[1,512], index: 12, kind: input, shape index: {}]
  %s13 = inlined_call_operand.hbm [shape: f32[1,512], index: 13, kind: input, shape index: {}]
  %s14 = inlined_call_operand.hbm [shape: f32[1,512], index: 14, kind: input, shape index: {}]
  %s15 = inlined_call_operand.hbm [shape: f32[2,16,512], index: 15, kind: output, shape index: {}]
  %s16 = sld [smem:[#allocation0]]
  $region157: #{tpu_custom_call.1} parent=0
    _
  %s18 = ssub.s32 1, %s16
  %s19 = scalar_select 0, %s18, %s16
  $region1: #{tpu_custom_call.1} parent=0
    #allocation5 [shape = 'u8[65536]{0}', space=vmem, size = 0x10000, scoped, tag = 'input window, operand 0']
    #allocation6 [shape = 's32[2]{0}', space=sflag, size = 0x8, scoped, tag = 'scoped memory for tpu_custom_call.1']
    #allocation7 [shape = 's32[2]{0}', space=sflag, size = 0x8, scoped, tag = 'scoped memory for tpu_custom_call.1']
    #allocation8 [shape = 'u8[1024]{0}', space=vmem, size = 0x400, scoped, tag = 'input window, operand 1']
    #allocation9 [shape = 's32[2]{0}', space=sflag, size = 0x8, scoped, tag = 'scoped memory for tpu_custom_call.1']
    #allocation10 [shape = 'u8[32768]{0}', space=vmem, size = 0x8000, scoped, tag = 'input window, operand 2, single buffered']
    #allocation11 [shape = 'u8[32768]{0}', space=vmem, size = 0x8000, scoped, tag = 'input window, operand 3, single buffered']
    #allocation12 [shape = 's32[1]{0}', space=sflag, size = 0x4, scoped, tag = 'scoped memory for tpu_custom_call.1']
    #allocation13 [shape = 'u8[32768]{0}', space=vmem, size = 0x8000, scoped, tag = 'input window, operand 4, single buffered']
    #allocation14 [shape = 'u8[524288]{0}', space=vmem, size = 0x80000, scoped, tag = 'input window, operand 5, single buffered']
    #allocation15 [shape = 's32[1]{0}', space=sflag, size = 0x4, scoped, tag = 'scoped memory for tpu_custom_call.1']
    #allocation16 [shape = 'u8[2048]{0}', space=vmem, size = 0x800, scoped, tag = 'input window, operand 6, single buffered']
    #allocation17 [shape = 'u8[2048]{0}', space=vmem, size = 0x800, scoped, tag = 'input window, operand 7, single buffered']
    #allocation18 [shape = 's32[1]{0}', space=sflag, size = 0x4, scoped, tag = 'scoped memory for tpu_custom_call.1']
    #allocation19 [shape = 'u8[2048]{0}', space=vmem, size = 0x800, scoped, tag = 'input window, operand 8, single buffered']
    #allocation20 [shape = 'u8[2097152]{0}', space=vmem, size = 0x200000, scoped, tag = 'input window, operand 9, single buffered']
    #allocation21 [shape = 's32[1]{0}', space=sflag, size = 0x4, scoped, tag = 'scoped memory for tpu_custom_call.1']
    #allocation22 [shape = 'u8[8192]{0}', space=vmem, size = 0x2000, scoped, tag = 'input window, operand 10, single buffered']
    #allocation23 [shape = 'u8[2097152]{0}', space=vmem, size = 0x200000, scoped, tag = 'input window, operand 11, single buffered']
    #allocation24 [shape = 's32[1]{0}', space=sflag, size = 0x4, scoped, tag = 'scoped memory for tpu_custom_call.1']
    #allocation25 [shape = 'u8[2048]{0}', space=vmem, size = 0x800, scoped, tag = 'input window, operand 12, single buffered']
    #allocation26 [shape = 'u8[2048]{0}', space=vmem, size = 0x800, scoped, tag = 'input window, operand 13, single buffered']
    #allocation27 [shape = 's32[1]{0}', space=sflag, size = 0x4, scoped, tag = 'scoped memory for tpu_custom_call.1']
    #allocation28 [shape = 'u8[2048]{0}', space=vmem, size = 0x800, scoped, tag = 'input window, operand 14, single buffered']
    #allocation29 [shape = 'u8[65536]{0}', space=vmem, size = 0x10000, scoped, tag = 'output window, operand 0']
    %20 = vsyncpa [#allocation6], 0
    %s21 = scalar_lea.sflag [#allocation6], 1
    %22 = vsyncpa %s21, 0
    %23 = vsyncpa [#allocation9], 0
    %s24 = scalar_lea.sflag [#allocation9], 1
    %25 = vsyncpa %s24, 0
    %26 = vsyncpa [#allocation12], 0
    %27 = vsyncpa [#allocation15], 0
    %28 = vsyncpa [#allocation18], 0
    %29 = vsyncpa [#allocation21], 0
    %30 = vsyncpa [#allocation24], 0
    %31 = vsyncpa [#allocation27], 0
    %32 = vsyncpa [#allocation7], 0
    %s33 = scalar_lea.sflag [#allocation7], 1
    %34 = vsyncpa %s33, 0
    loop: start=0, step=1, limit=4
    $region2: #{tpu_custom_call.1} parent=1 // loop_pre_header
      _
    $region3: #{tpu_custom_call.1} parent=1 // loop_header
      %s36 = sphi 0, %s40
      %p37 = scmp.ge.s32.totalorder %s36, 4
      %s43 = sphi 0, %s55
      %s44 = sphi 0, %s51
      %s45 = sphi 0, %s43
      %s46 = sphi 0, %s44
      %s47 = sphi 0, %s45
      %s48 = sphi 0, %s46
      %s58 = sphi 0, %s60
      %s61 = sphi 0, %s58
      %s62 = sphi 0, %s61
      %s78 = sphi 0, %s62
      %s84 = sphi 0, %s86
      %s87 = sphi 0, %s84
      %s88 = sphi 0, %s87
      %s104 = sphi 0, %s88
      %s108 = sphi 0, %s108
      %s110 = sphi 0, %s108
      %s111 = sphi 0, %s110
      %s125 = sphi 0, %s111
      %s129 = sphi 0, %s129
      %s131 = sphi 0, %s129
      %s132 = sphi 0, %s131
      %s146 = sphi 0, %s132
      %s150 = sphi 0, %s150
      %s152 = sphi 0, %s150
      %s153 = sphi 0, %s152
      %s167 = sphi 0, %s153
      %s171 = sphi 0, %s171
      %s173 = sphi 0, %s171
      %s174 = sphi 0, %s173
      %s188 = sphi 0, %s174
      %s192 = sphi 0, %s192
      %s194 = sphi 0, %s192
      %s195 = sphi 0, %s194
      %s209 = sphi 0, %s195
      %s213 = sphi 0, %s213
      %s215 = sphi 0, %s213
      %s216 = sphi 0, %s215
      %s230 = sphi 0, %s216
      %s234 = sphi 0, %s234
      %s236 = sphi 0, %s234
      %s237 = sphi 0, %s236
      %s251 = sphi 0, %s237
      %s255 = sphi 0, %s255
      %s257 = sphi 0, %s255
      %s258 = sphi 0, %s257
      %s272 = sphi 0, %s258
      %s276 = sphi 0, %s276
      %s278 = sphi 0, %s276
      %s279 = sphi 0, %s278
      %s293 = sphi 0, %s279
      %s297 = sphi 0, %s297
      %s299 = sphi 0, %s297
      %s300 = sphi 0, %s299
      %s314 = sphi 0, %s300
      %s318 = sphi 0, %s318
      %s320 = sphi 0, %s318
      %s321 = sphi 0, %s320
      %s335 = sphi 0, %s321
      %s339 = sphi 0, %s339
      %s341 = sphi 0, %s339
      %s342 = sphi 0, %s341
      %s356 = sphi 0, %s342
      %s360 = sphi 0, %s360
      %s362 = sphi 0, %s360
      %s363 = sphi 0, %s362
      %s377 = sphi 0, %s363
      %s385 = sphi 0, %s387
      %s388 = sphi 0, %s385
      %s389 = sphi 0, %s388
      %s405 = sphi 0, %s389
    $region4: #{tpu_custom_call.1} parent=1 // loop_header_branch
      %39 = sbr.rel (%p37) target = $region8
    $region5: #{tpu_custom_call.1} parent=1 // loop_body
      %s41 = ssub.s32 %s36, 1
      %s42 = ssub.s32 %s36, 2
      %s49 = sadd.s32 1, %s44
      %p50 = scmp.ge.s32.totalorder %s49, 1
      %s51 = scalar_select %p50, 0, %s49
      %s52 = sadd.s32 1, %s43
      %s53 = scalar_select %p50, %s52, %s43
      %p54 = scmp.ge.s32.totalorder %s53, 2
      %s55 = scalar_select %p54, 0, %s53
      %s56 = ssub.s32 %s43, %s55
      %p57 = scmp.eq.s32.totalorder %s56, 0
      %s59 = sadd.s32 %s58, 1
      %s60 = scalar_select %p57, %s58, %s59
      %p63 = pneg %p57
      %p64 = scmp.eq.s32.totalorder %s36, 1
      %p65 = por %p63, %p64
      %p66 = scmp.ne.s32.totalorder %s58, %s61
      %p67 = scmp.eq.s32.totalorder %s36, 0
      %p68 = por %p66, %p67
      %p69 = scmp.ne.s32.totalorder %s58, %s61
      %p70 = scmp.eq.s32.totalorder %s41, 1
      %p71 = por %p69, %p70
      %p72 = scmp.ne.s32.totalorder %s61, %s62
      %p73 = scmp.eq.s32.totalorder %s41, 0
      %p74 = por %p72, %p73
      %p75 = scmp.ne.s32.totalorder %s61, %s62
      %p76 = scmp.eq.s32.totalorder %s42, 1
      %p77 = por %p75, %p76
      %p79 = scmp.ne.s32.totalorder %s62, %s78
      %p80 = scmp.eq.s32.totalorder %s42, 0
      %p81 = por %p79, %p80
      %s82 = ssub.s32 %s43, %s55
      %p83 = scmp.eq.s32.totalorder %s82, 0
      %s85 = sadd.s32 %s84, 1
      %s86 = scalar_select %p83, %s84, %s85
      %p89 = pneg %p83
      %p90 = scmp.eq.s32.totalorder %s36, 1
      %p91 = por %p89, %p90
      %p92 = scmp.ne.s32.totalorder %s84, %s87
      %p93 = scmp.eq.s32.totalorder %s36, 0
      %p94 = por %p92, %p93
      %p95 = scmp.ne.s32.totalorder %s84, %s87
      %p96 = scmp.eq.s32.totalorder %s41, 1
      %p97 = por %p95, %p96
      %p98 = scmp.ne.s32.totalorder %s87, %s88
      %p99 = scmp.eq.s32.totalorder %s41, 0
      %p100 = por %p98, %p99
      %p101 = scmp.ne.s32.totalorder %s87, %s88
      %p102 = scmp.eq.s32.totalorder %s42, 1
      %p103 = por %p101, %p102
      %p105 = scmp.ne.s32.totalorder %s88, %s104
      %p106 = scmp.eq.s32.totalorder %s42, 0
      %p107 = por %p105, %p106
      %s109 = sadd.s32 %s108, 1
      %p112 = scmp.eq.s32.totalorder %s36, 1
      %p113 = scmp.ne.s32.totalorder %s108, %s110
      %p114 = scmp.eq.s32.totalorder %s36, 0
      %p115 = por %p113, %p114
      %p116 = scmp.ne.s32.totalorder %s108, %s110
      %p117 = scmp.eq.s32.totalorder %s41, 1
      %p118 = por %p116, %p117
      %p119 = scmp.ne.s32.totalorder %s110, %s111
      %p120 = scmp.eq.s32.totalorder %s41, 0
      %p121 = por %p119, %p120
      %p122 = scmp.ne.s32.totalorder %s110, %s111
      %p123 = scmp.eq.s32.totalorder %s42, 1
      %p124 = por %p122, %p123
      %p126 = scmp.ne.s32.totalorder %s111, %s125
      %p127 = scmp.eq.s32.totalorder %s42, 0
      %p128 = por %p126, %p127
      %s130 = sadd.s32 %s129, 1
      %p133 = scmp.eq.s32.totalorder %s36, 1
      %p134 = scmp.ne.s32.totalorder %s129, %s131
      %p135 = scmp.eq.s32.totalorder %s36, 0
      %p136 = por %p134, %p135
      %p137 = scmp.ne.s32.totalorder %s129, %s131
      %p138 = scmp.eq.s32.totalorder %s41, 1
      %p139 = por %p137, %p138
      %p140 = scmp.ne.s32.totalorder %s131, %s132
      %p141 = scmp.eq.s32.totalorder %s41, 0
      %p142 = por %p140, %p141
      %p143 = scmp.ne.s32.totalorder %s131, %s132
      %p144 = scmp.eq.s32.totalorder %s42, 1
      %p145 = por %p143, %p144
      %p147 = scmp.ne.s32.totalorder %s132, %s146
      %p148 = scmp.eq.s32.totalorder %s42, 0
      %p149 = por %p147, %p148
      %s151 = sadd.s32 %s150, 1
      %p154 = scmp.eq.s32.totalorder %s36, 1
      %p155 = scmp.ne.s32.totalorder %s150, %s152
      %p156 = scmp.eq.s32.totalorder %s36, 0
      %p157 = por %p155, %p156
      %p158 = scmp.ne.s32.totalorder %s150, %s152
      %p159 = scmp.eq.s32.totalorder %s41, 1
      %p160 = por %p158, %p159
      %p161 = scmp.ne.s32.totalorder %s152, %s153
      %p162 = scmp.eq.s32.totalorder %s41, 0
      %p163 = por %p161, %p162
      %p164 = scmp.ne.s32.totalorder %s152, %s153
      %p165 = scmp.eq.s32.totalorder %s42, 1
      %p166 = por %p164, %p165
      %p168 = scmp.ne.s32.totalorder %s153, %s167
      %p169 = scmp.eq.s32.totalorder %s42, 0
      %p170 = por %p168, %p169
      %s172 = sadd.s32 %s171, 1
      %p175 = scmp.eq.s32.totalorder %s36, 1
      %p176 = scmp.ne.s32.totalorder %s171, %s173
      %p177 = scmp.eq.s32.totalorder %s36, 0
      %p178 = por %p176, %p177
      %p179 = scmp.ne.s32.totalorder %s171, %s173
      %p180 = scmp.eq.s32.totalorder %s41, 1
      %p181 = por %p179, %p180
      %p182 = scmp.ne.s32.totalorder %s173, %s174
      %p183 = scmp.eq.s32.totalorder %s41, 0
      %p184 = por %p182, %p183
      %p185 = scmp.ne.s32.totalorder %s173, %s174
      %p186 = scmp.eq.s32.totalorder %s42, 1
      %p187 = por %p185, %p186
      %p189 = scmp.ne.s32.totalorder %s174, %s188
      %p190 = scmp.eq.s32.totalorder %s42, 0
      %p191 = por %p189, %p190
      %s193 = sadd.s32 %s192, 1
      %p196 = scmp.eq.s32.totalorder %s36, 1
      %p197 = scmp.ne.s32.totalorder %s192, %s194
      %p198 = scmp.eq.s32.totalorder %s36, 0
      %p199 = por %p197, %p198
      %p200 = scmp.ne.s32.totalorder %s192, %s194
      %p201 = scmp.eq.s32.totalorder %s41, 1
      %p202 = por %p200, %p201
      %p203 = scmp.ne.s32.totalorder %s194, %s195
      %p204 = scmp.eq.s32.totalorder %s41, 0
      %p205 = por %p203, %p204
      %p206 = scmp.ne.s32.totalorder %s194, %s195
      %p207 = scmp.eq.s32.totalorder %s42, 1
      %p208 = por %p206, %p207
      %p210 = scmp.ne.s32.totalorder %s195, %s209
      %p211 = scmp.eq.s32.totalorder %s42, 0
      %p212 = por %p210, %p211
      %s214 = sadd.s32 %s213, 1
      %p217 = scmp.eq.s32.totalorder %s36, 1
      %p218 = scmp.ne.s32.totalorder %s213, %s215
      %p219 = scmp.eq.s32.totalorder %s36, 0
      %p220 = por %p218, %p219
      %p221 = scmp.ne.s32.totalorder %s213, %s215
      %p222 = scmp.eq.s32.totalorder %s41, 1
      %p223 = por %p221, %p222
      %p224 = scmp.ne.s32.totalorder %s215, %s216
      %p225 = scmp.eq.s32.totalorder %s41, 0
      %p226 = por %p224, %p225
      %p227 = scmp.ne.s32.totalorder %s215, %s216
      %p228 = scmp.eq.s32.totalorder %s42, 1
      %p229 = por %p227, %p228
      %p231 = scmp.ne.s32.totalorder %s216, %s230
      %p232 = scmp.eq.s32.totalorder %s42, 0
      %p233 = por %p231, %p232
      %s235 = sadd.s32 %s234, 1
      %p238 = scmp.eq.s32.totalorder %s36, 1
      %p239 = scmp.ne.s32.totalorder %s234, %s236
      %p240 = scmp.eq.s32.totalorder %s36, 0
      %p241 = por %p239, %p240
      %p242 = scmp.ne.s32.totalorder %s234, %s236
      %p243 = scmp.eq.s32.totalorder %s41, 1
      %p244 = por %p242, %p243
      %p245 = scmp.ne.s32.totalorder %s236, %s237
      %p246 = scmp.eq.s32.totalorder %s41, 0
      %p247 = por %p245, %p246
      %p248 = scmp.ne.s32.totalorder %s236, %s237
      %p249 = scmp.eq.s32.totalorder %s42, 1
      %p250 = por %p248, %p249
      %p252 = scmp.ne.s32.totalorder %s237, %s251
      %p253 = scmp.eq.s32.totalorder %s42, 0
      %p254 = por %p252, %p253
      %s256 = sadd.s32 %s255, 1
      %p259 = scmp.eq.s32.totalorder %s36, 1
      %p260 = scmp.ne.s32.totalorder %s255, %s257
      %p261 = scmp.eq.s32.totalorder %s36, 0
      %p262 = por %p260, %p261
      %p263 = scmp.ne.s32.totalorder %s255, %s257
      %p264 = scmp.eq.s32.totalorder %s41, 1
      %p265 = por %p263, %p264
      %p266 = scmp.ne.s32.totalorder %s257, %s258
      %p267 = scmp.eq.s32.totalorder %s41, 0
      %p268 = por %p266, %p267
      %p269 = scmp.ne.s32.totalorder %s257, %s258
      %p270 = scmp.eq.s32.totalorder %s42, 1
      %p271 = por %p269, %p270
      %p273 = scmp.ne.s32.totalorder %s258, %s272
      %p274 = scmp.eq.s32.totalorder %s42, 0
      %p275 = por %p273, %p274
      %s277 = sadd.s32 %s276, 1
      %p280 = scmp.eq.s32.totalorder %s36, 1
      %p281 = scmp.ne.s32.totalorder %s276, %s278
      %p282 = scmp.eq.s32.totalorder %s36, 0
      %p283 = por %p281, %p282
      %p284 = scmp.ne.s32.totalorder %s276, %s278
      %p285 = scmp.eq.s32.totalorder %s41, 1
      %p286 = por %p284, %p285
      %p287 = scmp.ne.s32.totalorder %s278, %s279
      %p288 = scmp.eq.s32.totalorder %s41, 0
      %p289 = por %p287, %p288
      %p290 = scmp.ne.s32.totalorder %s278, %s279
      %p291 = scmp.eq.s32.totalorder %s42, 1
      %p292 = por %p290, %p291
      %p294 = scmp.ne.s32.totalorder %s279, %s293
      %p295 = scmp.eq.s32.totalorder %s42, 0
      %p296 = por %p294, %p295
      %s298 = sadd.s32 %s297, 1
      %p301 = scmp.eq.s32.totalorder %s36, 1
      %p302 = scmp.ne.s32.totalorder %s297, %s299
      %p303 = scmp.eq.s32.totalorder %s36, 0
      %p304 = por %p302, %p303
      %p305 = scmp.ne.s32.totalorder %s297, %s299
      %p306 = scmp.eq.s32.totalorder %s41, 1
      %p307 = por %p305, %p306
      %p308 = scmp.ne.s32.totalorder %s299, %s300
      %p309 = scmp.eq.s32.totalorder %s41, 0
      %p310 = por %p308, %p309
      %p311 = scmp.ne.s32.totalorder %s299, %s300
      %p312 = scmp.eq.s32.totalorder %s42, 1
      %p313 = por %p311, %p312
      %p315 = scmp.ne.s32.totalorder %s300, %s314
      %p316 = scmp.eq.s32.totalorder %s42, 0
      %p317 = por %p315, %p316
      %s319 = sadd.s32 %s318, 1
      %p322 = scmp.eq.s32.totalorder %s36, 1
      %p323 = scmp.ne.s32.totalorder %s318, %s320
      %p324 = scmp.eq.s32.totalorder %s36, 0
      %p325 = por %p323, %p324
      %p326 = scmp.ne.s32.totalorder %s318, %s320
      %p327 = scmp.eq.s32.totalorder %s41, 1
      %p328 = por %p326, %p327
      %p329 = scmp.ne.s32.totalorder %s320, %s321
      %p330 = scmp.eq.s32.totalorder %s41, 0
      %p331 = por %p329, %p330
      %p332 = scmp.ne.s32.totalorder %s320, %s321
      %p333 = scmp.eq.s32.totalorder %s42, 1
      %p334 = por %p332, %p333
      %p336 = scmp.ne.s32.totalorder %s321, %s335
      %p337 = scmp.eq.s32.totalorder %s42, 0
      %p338 = por %p336, %p337
      %s340 = sadd.s32 %s339, 1
      %p343 = scmp.eq.s32.totalorder %s36, 1
      %p344 = scmp.ne.s32.totalorder %s339, %s341
      %p345 = scmp.eq.s32.totalorder %s36, 0
      %p346 = por %p344, %p345
      %p347 = scmp.ne.s32.totalorder %s339, %s341
      %p348 = scmp.eq.s32.totalorder %s41, 1
      %p349 = por %p347, %p348
      %p350 = scmp.ne.s32.totalorder %s341, %s342
      %p351 = scmp.eq.s32.totalorder %s41, 0
      %p352 = por %p350, %p351
      %p353 = scmp.ne.s32.totalorder %s341, %s342
      %p354 = scmp.eq.s32.totalorder %s42, 1
      %p355 = por %p353, %p354
      %p357 = scmp.ne.s32.totalorder %s342, %s356
      %p358 = scmp.eq.s32.totalorder %s42, 0
      %p359 = por %p357, %p358
      %s361 = sadd.s32 %s360, 1
      %p364 = scmp.eq.s32.totalorder %s36, 1
      %p365 = scmp.ne.s32.totalorder %s360, %s362
      %p366 = scmp.eq.s32.totalorder %s36, 0
      %p367 = por %p365, %p366
      %p368 = scmp.ne.s32.totalorder %s360, %s362
      %p369 = scmp.eq.s32.totalorder %s41, 1
      %p370 = por %p368, %p369
      %p371 = scmp.ne.s32.totalorder %s362, %s363
      %p372 = scmp.eq.s32.totalorder %s41, 0
      %p373 = por %p371, %p372
      %p374 = scmp.ne.s32.totalorder %s362, %s363
      %p375 = scmp.eq.s32.totalorder %s42, 1
      %p376 = por %p374, %p375
      %p378 = scmp.ne.s32.totalorder %s363, %s377
      %p379 = scmp.eq.s32.totalorder %s42, 0
      %p380 = por %p378, %p379
      %s381 = ssub.s32 %s43, %s55
      %s382 = ssub.s32 %s44, %s51
      %s383 = sor.u32 %s381, %s382
      %p384 = scmp.eq.s32.totalorder %s383, 0
      %s386 = sadd.s32 %s385, 1
      %s387 = scalar_select %p384, %s385, %s386
      %p390 = pneg %p384
      %p391 = scmp.eq.s32.totalorder %s36, 1
      %p392 = por %p390, %p391
      %p393 = scmp.ne.s32.totalorder %s385, %s388
      %p394 = scmp.eq.s32.totalorder %s36, 0
      %p395 = por %p393, %p394
      %p396 = scmp.ne.s32.totalorder %s385, %s388
      %p397 = scmp.eq.s32.totalorder %s41, 1
      %p398 = por %p396, %p397
      %p399 = scmp.ne.s32.totalorder %s388, %s389
      %p400 = scmp.eq.s32.totalorder %s41, 0
      %p401 = por %p399, %p400
      %p402 = scmp.ne.s32.totalorder %s388, %s389
      %p403 = scmp.eq.s32.totalorder %s42, 1
      %p404 = por %p402, %p403
      %p406 = scmp.ne.s32.totalorder %s389, %s405
      %p407 = scmp.eq.s32.totalorder %s42, 0
      %p408 = por %p406, %p407
      %p409 = scmp.le.s32.totalorder 1, %s36
      %p410 = scmp.lt.s32.totalorder %s36, 3
      %p411 = pnand %p409, %p410
      %p412 = pneg %p411
      // Predicated region
      $region9: #{tpu_custom_call.1} parent=5 // pred_check
        _
      $region10: #{tpu_custom_call.1} parent=5 // pred_check_branch
        %414 = sbr.rel (%p411) target = $region12
      $region11: #{tpu_custom_call.1} parent=5 // pred_region
        %s415 = ssub.s32 %s36, 1
        // Predicated region
        $region13: #{tpu_custom_call.1} parent=11 // pred_check
          %p416 = pneg %p121
        $region14: #{tpu_custom_call.1} parent=11 // pred_check_branch
          %418 = sbr.rel (%p416) target = $region16
        $region15: #{tpu_custom_call.1} parent=11 // pred_region
          %s420 = ssub.s32 1024, 1024
          %421 = vsyncadd [#allocation9], %s420
          %s422 = sshll.u32 [#allocation10], 4
          %s423 = int_to_ptr.vmem [resolvable:$true] %s422
          %428 = dma.hbm_to_vmem [thread:$0]  %s2, 1024, %s423, [#allocation9], 64, 64, 4
        $region16: #{tpu_custom_call.1} parent=11 // pred_fallthru
          _
        // Predicated region
        $region17: #{tpu_custom_call.1} parent=11 // pred_check
          %p429 = pneg %p142
        $region18: #{tpu_custom_call.1} parent=11 // pred_check_branch
          %431 = sbr.rel (%p429) target = $region20
        $region19: #{tpu_custom_call.1} parent=11 // pred_region
          %s433 = ssub.s32 1024, 1024
          %434 = vsyncadd [#allocation12], %s433
          %s435 = sshll.u32 [#allocation11], 4
          %s436 = int_to_ptr.vmem [resolvable:$true] %s435
          %441 = dma.hbm_to_vmem [thread:$0]  %s3, 1024, %s436, [#allocation12], 64, 64, 4
        $region20: #{tpu_custom_call.1} parent=11 // pred_fallthru
          _
        // Predicated region
        $region21: #{tpu_custom_call.1} parent=11 // pred_check
          %p442 = pneg %p163
        $region22: #{tpu_custom_call.1} parent=11 // pred_check_branch
          %444 = sbr.rel (%p442) target = $region24
        $region23: #{tpu_custom_call.1} parent=11 // pred_region
          %s446 = ssub.s32 1024, 1024
          %447 = vsyncadd [#allocation12], %s446
          %s448 = sshll.u32 [#allocation13], 4
          %s449 = int_to_ptr.vmem [resolvable:$true] %s448
          %454 = dma.hbm_to_vmem [thread:$0]  %s4, 1024, %s449, [#allocation12], 64, 64, 4
        $region24: #{tpu_custom_call.1} parent=11 // pred_fallthru
          _
        // Predicated region
        $region25: #{tpu_custom_call.1} parent=11 // pred_check
          %p455 = pneg %p184
        $region26: #{tpu_custom_call.1} parent=11 // pred_check_branch
          %457 = sbr.rel (%p455) target = $region28
        $region27: #{tpu_custom_call.1} parent=11 // pred_region
          %s459 = ssub.s32 16384, 16384
          %460 = vsyncadd [#allocation15], %s459
          %s461 = sshll.u32 [#allocation14], 4
          %s462 = int_to_ptr.vmem [resolvable:$true] %s461
          %467 = dma.hbm_to_vmem [thread:$0]  %s5, 16384, %s462, [#allocation15], 256, 256, 16
        $region28: #{tpu_custom_call.1} parent=11 // pred_fallthru
          _
        // Predicated region
        $region29: #{tpu_custom_call.1} parent=11 // pred_check
          %p468 = pneg %p205
        $region30: #{tpu_custom_call.1} parent=11 // pred_check_branch
          %470 = sbr.rel (%p468) target = $region32
        $region31: #{tpu_custom_call.1} parent=11 // pred_region
          %s472 = ssub.s32 64, 64
          %473 = vsyncadd [#allocation15], %s472
          %s475 = sshll.u32 [#allocation16], 4
          %s476 = int_to_ptr.vmem [resolvable:$true] %s475
          %478 = dma.hbm_to_vmem [thread:$0]  %s6, 64, %s476, [#allocation15]
        $region32: #{tpu_custom_call.1} parent=11 // pred_fallthru
          _
        // Predicated region
        $region33: #{tpu_custom_call.1} parent=11 // pred_check
          %p479 = pneg %p226
        $region34: #{tpu_custom_call.1} parent=11 // pred_check_branch
          %481 = sbr.rel (%p479) target = $region36
        $region35: #{tpu_custom_call.1} parent=11 // pred_region
          %s483 = ssub.s32 64, 64
          %484 = vsyncadd [#allocation18], %s483
          %s486 = sshll.u32 [#allocation17], 4
          %s487 = int_to_ptr.vmem [resolvable:$true] %s486
          %489 = dma.hbm_to_vmem [thread:$0]  %s7, 64, %s487, [#allocation18]
        $region36: #{tpu_custom_call.1} parent=11 // pred_fallthru
          _
        // Predicated region
        $region37: #{tpu_custom_call.1} parent=11 // pred_check
          %p490 = pneg %p247
        $region38: #{tpu_custom_call.1} parent=11 // pred_check_branch
          %492 = sbr.rel (%p490) target = $region40
        $region39: #{tpu_custom_call.1} parent=11 // pred_region
          %s494 = ssub.s32 64, 64
          %495 = vsyncadd [#allocation18], %s494
          %s497 = sshll.u32 [#allocation19], 4
          %s498 = int_to_ptr.vmem [resolvable:$true] %s497
          %500 = dma.hbm_to_vmem [thread:$0]  %s8, 64, %s498, [#allocation18]
        $region40: #{tpu_custom_call.1} parent=11 // pred_fallthru
          _
        // Predicated region
        $region41: #{tpu_custom_call.1} parent=11 // pred_check
          %p501 = pneg %p268
        $region42: #{tpu_custom_call.1} parent=11 // pred_check_branch
          %503 = sbr.rel (%p501) target = $region44
        $region43: #{tpu_custom_call.1} parent=11 // pred_region
          %s505 = ssub.s32 65536, 65536
          %506 = vsyncadd [#allocation21], %s505
          %s507 = sshll.u32 [#allocation20], 4
          %s508 = int_to_ptr.vmem [resolvable:$true] %s507
          %513 = dma.hbm_to_vmem [thread:$0]  %s9, 65536, %s508, [#allocation21], 1024, 1024, 64
        $region44: #{tpu_custom_call.1} parent=11 // pred_fallthru
          _
        // Predicated region
        $region45: #{tpu_custom_call.1} parent=11 // pred_check
          %p514 = pneg %p289
        $region46: #{tpu_custom_call.1} parent=11 // pred_check_branch
          %516 = sbr.rel (%p514) target = $region48
        $region47: #{tpu_custom_call.1} parent=11 // pred_region
          %s518 = ssub.s32 256, 256
          %519 = vsyncadd [#allocation21], %s518
          %s521 = sshll.u32 [#allocation22], 4
          %s522 = int_to_ptr.vmem [resolvable:$true] %s521
          %524 = dma.hbm_to_vmem [thread:$0]  %s10, 256, %s522, [#allocation21]
        $region48: #{tpu_custom_call.1} parent=11 // pred_fallthru
          _
        // Predicated region
        $region49: #{tpu_custom_call.1} parent=11 // pred_check
          %p525 = pneg %p310
        $region50: #{tpu_custom_call.1} parent=11 // pred_check_branch
          %527 = sbr.rel (%p525) target = $region52
        $region51: #{tpu_custom_call.1} parent=11 // pred_region
          %s529 = ssub.s32 65536, 65536
          %530 = vsyncadd [#allocation24], %s529
          %s531 = sshll.u32 [#allocation23], 4
          %s532 = int_to_ptr.vmem [resolvable:$true] %s531
          %537 = dma.hbm_to_vmem [thread:$0]  %s11, 65536, %s532, [#allocation24], 256, 256, 16
        $region52: #{tpu_custom_call.1} parent=11 // pred_fallthru
          _
        // Predicated region
        $region53: #{tpu_custom_call.1} parent=11 // pred_check
          %p538 = pneg %p331
        $region54: #{tpu_custom_call.1} parent=11 // pred_check_branch
          %540 = sbr.rel (%p538) target = $region56
        $region55: #{tpu_custom_call.1} parent=11 // pred_region
          %s542 = ssub.s32 64, 64
          %543 = vsyncadd [#allocation24], %s542
          %s545 = sshll.u32 [#allocation25], 4
          %s546 = int_to_ptr.vmem [resolvable:$true] %s545
          %548 = dma.hbm_to_vmem [thread:$0]  %s12, 64, %s546, [#allocation24]
        $region56: #{tpu_custom_call.1} parent=11 // pred_fallthru
          _
        // Predicated region
        $region57: #{tpu_custom_call.1} parent=11 // pred_check
          %p549 = pneg %p352
        $region58: #{tpu_custom_call.1} parent=11 // pred_check_branch
          %551 = sbr.rel (%p549) target = $region60
        $region59: #{tpu_custom_call.1} parent=11 // pred_region
          %s553 = ssub.s32 64, 64
          %554 = vsyncadd [#allocation27], %s553
          %s556 = sshll.u32 [#allocation26], 4
          %s557 = int_to_ptr.vmem [resolvable:$true] %s556
          %559 = dma.hbm_to_vmem [thread:$0]  %s13, 64, %s557, [#allocation27]
        $region60: #{tpu_custom_call.1} parent=11 // pred_fallthru
          _
        // Predicated region
        $region61: #{tpu_custom_call.1} parent=11 // pred_check
          %p560 = pneg %p373
        $region62: #{tpu_custom_call.1} parent=11 // pred_check_branch
          %562 = sbr.rel (%p560) target = $region64
        $region63: #{tpu_custom_call.1} parent=11 // pred_region
          %s564 = ssub.s32 64, 64
          %565 = vsyncadd [#allocation27], %s564
          %s567 = sshll.u32 [#allocation28], 4
          %s568 = int_to_ptr.vmem [resolvable:$true] %s567
          %570 = dma.hbm_to_vmem [thread:$0]  %s14, 64, %s568, [#allocation27]
        $region64: #{tpu_custom_call.1} parent=11 // pred_fallthru
          _
      $region12: #{tpu_custom_call.1} parent=5 // pred_fallthru
        _
      %p571 = scmp.lt.s32.totalorder %s36, 2
      // Predicated region
      $region65: #{tpu_custom_call.1} parent=5 // pred_check
        %p572 = pneg %p571
      $region66: #{tpu_custom_call.1} parent=5 // pred_check_branch
        %574 = sbr.rel (%p572) target = $region68
      $region67: #{tpu_custom_call.1} parent=5 // pred_region
        // Predicated region
        $region69: #{tpu_custom_call.1} parent=67 // pred_check
          %p575 = pneg %p68
        $region70: #{tpu_custom_call.1} parent=67 // pred_check_branch
          %577 = sbr.rel (%p575) target = $region72
        $region71: #{tpu_custom_call.1} parent=67 // pred_region
          %s578 = sand.u32 %s58, 1
          %s579 = scalar_lea.sflag [#allocation6], %s578
          %s580 = sand.u32 %s58, 1
          %s581 = smul.addr %s580, 64
          %s582 = scalar_lea.vmem [#allocation5], %s581
          %s584 = ssub.s32 1024, 1024
          %585 = vsyncadd %s579, %s584
          %s586 = smul.addr %s43, 8
          %s587 = smul.addr %s586, 128
          %s588 = scalar_lea.hbm %s0, %s587
          %s589 = sshll.u32 %s582, 4
          %s590 = int_to_ptr.vmem [resolvable:$true] %s589
          %595 = dma.hbm_to_vmem [thread:$0]  %s588, 1024, %s590, %s579, 512, 512, 32
        $region72: #{tpu_custom_call.1} parent=67 // pred_fallthru
          _
        // Predicated region
        $region73: #{tpu_custom_call.1} parent=67 // pred_check
          %p596 = pneg %p94
        $region74: #{tpu_custom_call.1} parent=67 // pred_check_branch
          %598 = sbr.rel (%p596) target = $region76
        $region75: #{tpu_custom_call.1} parent=67 // pred_region
          %s599 = sand.u32 %s36, 1
          %s600 = scalar_lea.sflag [#allocation9], %s599
          %s601 = sand.u32 %s84, 1
          %s602 = scalar_lea.vmem [#allocation8], %s601
          %s604 = ssub.s32 16, 16
          %605 = vsyncadd %s600, %s604
          %s606 = smul.addr %s43, 16
          %s607 = scalar_lea.hbm %s1, %s606
          %s609 = sshll.u32 %s602, 4
          %s610 = int_to_ptr.vmem [resolvable:$true] %s609
          %612 = dma.hbm_to_vmem [thread:$0]  %s607, 16, %s610, %s600
        $region76: #{tpu_custom_call.1} parent=67 // pred_fallthru
          _
      $region68: #{tpu_custom_call.1} parent=5 // pred_fallthru
        _
      %p613 = scmp.le.s32.totalorder 1, %s36
      %p614 = scmp.lt.s32.totalorder %s36, 3
      %p615 = pnand %p613, %p614
      %p616 = pneg %p615
      // Predicated region
      $region77: #{tpu_custom_call.1} parent=5 // pred_check
        _
      $region78: #{tpu_custom_call.1} parent=5 // pred_check_branch
        %618 = sbr.rel (%p615) target = $region80
      $region79: #{tpu_custom_call.1} parent=5 // pred_region
        %s619 = ssub.s32 %s36, 1
        %s620 = sand.u32 %s61, 1
        %s621 = scalar_lea.sflag [#allocation6], %s620
        %s622 = sand.u32 %s61, 1
        %s623 = smul.addr %s622, 64
        %s624 = scalar_lea.vmem [#allocation5], %s623
        // Predicated region
        $region81: #{tpu_custom_call.1} parent=79 // pred_check
          %p625 = pneg %p74
        $region82: #{tpu_custom_call.1} parent=79 // pred_check_branch
          %627 = sbr.rel (%p625) target = $region84
        $region83: #{tpu_custom_call.1} parent=79 // pred_region
          %628 = dma.done %s621, 1024
        $region84: #{tpu_custom_call.1} parent=79 // pred_fallthru
          _
        %s629 = sand.u32 %s41, 1
        %s630 = scalar_lea.sflag [#allocation9], %s629
        %s631 = sand.u32 %s87, 1
        %s632 = scalar_lea.vmem [#allocation8], %s631
        // Predicated region
        $region85: #{tpu_custom_call.1} parent=79 // pred_check
          %p633 = pneg %p100
        $region86: #{tpu_custom_call.1} parent=79 // pred_check_branch
          %635 = sbr.rel (%p633) target = $region88
        $region87: #{tpu_custom_call.1} parent=79 // pred_region
          %636 = dma.done %s630, 16
        $region88: #{tpu_custom_call.1} parent=79 // pred_fallthru
          _
        // Predicated region
        $region89: #{tpu_custom_call.1} parent=79 // pred_check
          %p637 = pneg %p121
        $region90: #{tpu_custom_call.1} parent=79 // pred_check_branch
          %639 = sbr.rel (%p637) target = $region92
        $region91: #{tpu_custom_call.1} parent=79 // pred_region
          %640 = dma.done [#allocation9], 1024
        $region92: #{tpu_custom_call.1} parent=79 // pred_fallthru
          _
        // Predicated region
        $region93: #{tpu_custom_call.1} parent=79 // pred_check
          %p641 = pneg %p142
        $region94: #{tpu_custom_call.1} parent=79 // pred_check_branch
          %643 = sbr.rel (%p641) target = $region96
        $region95: #{tpu_custom_call.1} parent=79 // pred_region
          %644 = dma.done [#allocation12], 1024
        $region96: #{tpu_custom_call.1} parent=79 // pred_fallthru
          _
        // Predicated region
        $region97: #{tpu_custom_call.1} parent=79 // pred_check
          %p645 = pneg %p163
        $region98: #{tpu_custom_call.1} parent=79 // pred_check_branch
          %647 = sbr.rel (%p645) target = $region100
        $region99: #{tpu_custom_call.1} parent=79 // pred_region
          %648 = dma.done [#allocation12], 1024
        $region100: #{tpu_custom_call.1} parent=79 // pred_fallthru
          _
        // Predicated region
        $region101: #{tpu_custom_call.1} parent=79 // pred_check
          %p649 = pneg %p184
        $region102: #{tpu_custom_call.1} parent=79 // pred_check_branch
          %651 = sbr.rel (%p649) target = $region104
        $region103: #{tpu_custom_call.1} parent=79 // pred_region
          %652 = dma.done [#allocation15], 16384
        $region104: #{tpu_custom_call.1} parent=79 // pred_fallthru
          _
        // Predicated region
        $region105: #{tpu_custom_call.1} parent=79 // pred_check
          %p653 = pneg %p205
        $region106: #{tpu_custom_call.1} parent=79 // pred_check_branch
          %655 = sbr.rel (%p653) target = $region108
        $region107: #{tpu_custom_call.1} parent=79 // pred_region
          %656 = dma.done [#allocation15], 64
        $region108: #{tpu_custom_call.1} parent=79 // pred_fallthru
          _
        // Predicated region
        $region109: #{tpu_custom_call.1} parent=79 // pred_check
          %p657 = pneg %p226
        $region110: #{tpu_custom_call.1} parent=79 // pred_check_branch
          %659 = sbr.rel (%p657) target = $region112
        $region111: #{tpu_custom_call.1} parent=79 // pred_region
          %660 = dma.done [#allocation18], 64
        $region112: #{tpu_custom_call.1} parent=79 // pred_fallthru
          _
        // Predicated region
        $region113: #{tpu_custom_call.1} parent=79 // pred_check
          %p661 = pneg %p247
        $region114: #{tpu_custom_call.1} parent=79 // pred_check_branch
          %663 = sbr.rel (%p661) target = $region116
        $region115: #{tpu_custom_call.1} parent=79 // pred_region
          %664 = dma.done [#allocation18], 64
        $region116: #{tpu_custom_call.1} parent=79 // pred_fallthru
          _
        // Predicated region
        $region117: #{tpu_custom_call.1} parent=79 // pred_check
          %p665 = pneg %p268
        $region118: #{tpu_custom_call.1} parent=79 // pred_check_branch
          %667 = sbr.rel (%p665) target = $region120
        $region119: #{tpu_custom_call.1} parent=79 // pred_region
          %668 = dma.done [#allocation21], 65536
        $region120: #{tpu_custom_call.1} parent=79 // pred_fallthru
          _
        // Predicated region
        $region121: #{tpu_custom_call.1} parent=79 // pred_check
          %p669 = pneg %p289
        $region122: #{tpu_custom_call.1} parent=79 // pred_check_branch
          %671 = sbr.rel (%p669) target = $region124
        $region123: #{tpu_custom_call.1} parent=79 // pred_region
          %672 = dma.done [#allocation21], 256
        $region124: #{tpu_custom_call.1} parent=79 // pred_fallthru
          _
        // Predicated region
        $region125: #{tpu_custom_call.1} parent=79 // pred_check
          %p673 = pneg %p310
        $region126: #{tpu_custom_call.1} parent=79 // pred_check_branch
          %675 = sbr.rel (%p673) target = $region128
        $region127: #{tpu_custom_call.1} parent=79 // pred_region
          %676 = dma.done [#allocation24], 65536
        $region128: #{tpu_custom_call.1} parent=79 // pred_fallthru
          _
        // Predicated region
        $region129: #{tpu_custom_call.1} parent=79 // pred_check
          %p677 = pneg %p331
        $region130: #{tpu_custom_call.1} parent=79 // pred_check_branch
          %679 = sbr.rel (%p677) target = $region132
        $region131: #{tpu_custom_call.1} parent=79 // pred_region
          %680 = dma.done [#allocation24], 64
        $region132: #{tpu_custom_call.1} parent=79 // pred_fallthru
          _
        // Predicated region
        $region133: #{tpu_custom_call.1} parent=79 // pred_check
          %p681 = pneg %p352
        $region134: #{tpu_custom_call.1} parent=79 // pred_check_branch
          %683 = sbr.rel (%p681) target = $region136
        $region135: #{tpu_custom_call.1} parent=79 // pred_region
          %684 = dma.done [#allocation27], 64
        $region136: #{tpu_custom_call.1} parent=79 // pred_fallthru
          _
        // Predicated region
        $region137: #{tpu_custom_call.1} parent=79 // pred_check
          %p685 = pneg %p373
        $region138: #{tpu_custom_call.1} parent=79 // pred_check_branch
          %687 = sbr.rel (%p685) target = $region140
        $region139: #{tpu_custom_call.1} parent=79 // pred_region
          %688 = dma.done [#allocation27], 64
        $region140: #{tpu_custom_call.1} parent=79 // pred_fallthru
          _
        %s689 = sand.u32 %s61, 1
        %s690 = scalar_lea.sflag [#allocation6], %s689
        %s691 = sand.u32 %s61, 1
        %s692 = smul.addr %s691, 64
        %s693 = scalar_lea.vmem [#allocation5], %s692
        %p694 = pneg %p74
        %p695 = pneg %p71
        %s696 = sand.u32 %s41, 1
        %s697 = scalar_lea.sflag [#allocation9], %s696
        %s698 = sand.u32 %s87, 1
        %s699 = scalar_lea.vmem [#allocation8], %s698
        %p700 = pneg %p100
        %p701 = pneg %p97
        %p702 = pneg %p121
        %p703 = pneg %p118
        %p704 = pneg %p142
        %p705 = pneg %p139
        %p706 = pneg %p163
        %p707 = pneg %p160
        %p708 = pneg %p184
        %p709 = pneg %p181
        %p710 = pneg %p205
        %p711 = pneg %p202
        %p712 = pneg %p226
        %p713 = pneg %p223
        %p714 = pneg %p247
        %p715 = pneg %p244
        %p716 = pneg %p268
        %p717 = pneg %p265
        %p718 = pneg %p289
        %p719 = pneg %p286
        %p720 = pneg %p310
        %p721 = pneg %p307
        %p722 = pneg %p331
        %p723 = pneg %p328
        %p724 = pneg %p352
        %p725 = pneg %p349
        %p726 = pneg %p373
        %p727 = pneg %p370
        %p728 = pneg %p401
        %p729 = pneg %p398
        %s730 = sand.u32 %s388, 1
        %s731 = scalar_lea.sflag [#allocation7], %s730
        %s732 = sand.u32 %s388, 1
        %s733 = smul.addr %s732, 64
        %s734 = scalar_lea.vmem [#allocation29], %s733
        %s735 = smul.u32 2, %s46
        %p737 = scmp.eq.s32.totalorder %s46, 0
        // Predicated region
        $region141: #{tpu_custom_call.1} parent=79 // pred_check
          %p738 = pneg %p737
        $region142: #{tpu_custom_call.1} parent=79 // pred_check_branch
          %740 = sbr.rel (%p738) target = $region144
        $region143: #{tpu_custom_call.1} parent=79 // pred_region
          %v741 = vld [vmem:[%s624] sm:$0xff]
          %v742 = vld [vmem:[%s624 + $0x8] sm:$0xff]
          %v743 = vld [vmem:[%s624 + $0x10] sm:$0xff]
          %v744 = vld [vmem:[%s624 + $0x18] sm:$0xff]
          %v745 = vld [vmem:[%s624 + $0x20] sm:$0xff]
          %v746 = vld [vmem:[%s624 + $0x28] sm:$0xff]
          %v747 = vld [vmem:[%s624 + $0x30] sm:$0xff]
          %v748 = vld [vmem:[%s624 + $0x38] sm:$0xff]
          %v749 = vpack.c.bf16 %v745, %v741
          %v750 = vpack.c.bf16 %v746, %v742
          %v751 = vpack.c.bf16 %v747, %v743
          %v752 = vpack.c.bf16 %v748, %v744
          %v753 = vld [vmem:[#allocation11] sm:$0xf]
          %v754 = vld [vmem:[#allocation11 + $0x4] sm:$0xf]
          %v755 = vld [vmem:[#allocation11 + $0x8] sm:$0xf]
          %v756 = vld [vmem:[#allocation11 + $0xc] sm:$0xf]
          %v757 = vld [vmem:[#allocation11 + $0x10] sm:$0xf]
          %v758 = vld [vmem:[#allocation11 + $0x14] sm:$0xf]
          %v759 = vld [vmem:[#allocation11 + $0x18] sm:$0xf]
          %v760 = vld [vmem:[#allocation11 + $0x1c] sm:$0xf]
          %v761 = vld [vmem:[#allocation11 + $0x20] sm:$0xf]
          %v762 = vld [vmem:[#allocation11 + $0x24] sm:$0xf]
          %v763 = vld [vmem:[#allocation11 + $0x28] sm:$0xf]
          %v764 = vld [vmem:[#allocation11 + $0x2c] sm:$0xf]
          %v765 = vld [vmem:[#allocation11 + $0x30] sm:$0xf]
          %v766 = vld [vmem:[#allocation11 + $0x34] sm:$0xf]
          %v767 = vld [vmem:[#allocation11 + $0x38] sm:$0xf]
          %v768 = vld [vmem:[#allocation11 + $0x3c] sm:$0xf]
          %v769 = vld [vmem:[#allocation13] sm:$0xf]
          %v770 = vld [vmem:[#allocation13 + $0x4] sm:$0xf]
          %v771 = vld [vmem:[#allocation13 + $0x8] sm:$0xf]
          %v772 = vld [vmem:[#allocation13 + $0xc] sm:$0xf]
          %v773 = vld [vmem:[#allocation13 + $0x10] sm:$0xf]
          %v774 = vld [vmem:[#allocation13 + $0x14] sm:$0xf]
          %v775 = vld [vmem:[#allocation13 + $0x18] sm:$0xf]
          %v776 = vld [vmem:[#allocation13 + $0x1c] sm:$0xf]
          %v777 = vld [vmem:[#allocation13 + $0x20] sm:$0xf]
          %v778 = vld [vmem:[#allocation13 + $0x24] sm:$0xf]
          %v779 = vld [vmem:[#allocation13 + $0x28] sm:$0xf]
          %v780 = vld [vmem:[#allocation13 + $0x2c] sm:$0xf]
          %v781 = vld [vmem:[#allocation13 + $0x30] sm:$0xf]
          %v782 = vld [vmem:[#allocation13 + $0x34] sm:$0xf]
          %v783 = vld [vmem:[#allocation13 + $0x38] sm:$0xf]
          %v784 = vld [vmem:[#allocation13 + $0x3c] sm:$0xf]
          %v801 = vunpack.c.l.b16 %v753
          %v802 = vunpack.c.l.b16 %v754
          %v803 = vunpack.c.l.b16 %v755
          %v804 = vunpack.c.l.b16 %v756
          %v805 = vunpack.c.l.b16 %v757
          %v806 = vunpack.c.l.b16 %v758
          %v807 = vunpack.c.l.b16 %v759
          %v808 = vunpack.c.l.b16 %v760
          %v809 = vunpack.c.l.b16 %v761
          %v810 = vunpack.c.l.b16 %v762
          %v811 = vunpack.c.l.b16 %v763
          %v812 = vunpack.c.l.b16 %v764
          %v813 = vunpack.c.l.b16 %v765
          %v814 = vunpack.c.l.b16 %v766
          %v815 = vunpack.c.l.b16 %v767
          %v816 = vunpack.c.l.b16 %v768
          %v817 = vpack.c.b16 %v802, %v801
          %v818 = vpack.c.b16 %v804, %v803
          %v819 = vpack.c.b16 %v806, %v805
          %v820 = vpack.c.b16 %v808, %v807
          %v821 = vpack.c.b16 %v810, %v809
          %v822 = vpack.c.b16 %v812, %v811
          %v823 = vpack.c.b16 %v814, %v813
          %v824 = vpack.c.b16 %v816, %v815
          %833 = vmatprep.subr.bf16.mxu0 0
          %834 = vmatpush1.bf16.msra.mxu0 %v817
          %835 = vmatprep.subr.bf16.mxu0 0
          %836 = vmatpush1.bf16.msra.mxu0 %v818
          %837 = vmatprep.subr.bf16.mxu0 0
          %838 = vmatpush1.bf16.msra.mxu0 %v819
          %839 = vmatprep.subr.bf16.mxu0 0
          %840 = vmatpush1.bf16.msra.mxu0 %v820
          %841 = vmatprep.subr.bf16.mxu0 0
          %842 = vmatpush1.bf16.msra.mxu0 %v821
          %843 = vmatprep.subr.bf16.mxu0 0
          %844 = vmatpush1.bf16.msra.mxu0 %v822
          %845 = vmatprep.subr.bf16.mxu0 0
          %846 = vmatpush1.bf16.msra.mxu0 %v823
          %847 = vmatprep.subr.bf16.mxu0 0
          %848 = vmatpush1.bf16.msra.mxu0 %v824
          %849 = vmatprep.subr.bf16.mxu0 0
          %850 = vmatpush1.bf16.msra.mxu0 0
          %851 = vmatprep.subr.bf16.mxu0 0
          %852 = vmatpush1.bf16.msra.mxu0 0
          %853 = vmatprep.subr.bf16.mxu0 0
          %854 = vmatpush1.bf16.msra.mxu0 0
          %855 = vmatprep.subr.bf16.mxu0 0
          %856 = vmatpush1.bf16.msra.mxu0 0
          %857 = vmatprep.subr.bf16.mxu0 0
          %858 = vmatpush1.bf16.msra.mxu0 0
          %859 = vmatprep.subr.bf16.mxu0 0
          %860 = vmatpush1.bf16.msra.mxu0 0
          %861 = vmatprep.subr.bf16.mxu0 0
          %862 = vmatpush1.bf16.msra.mxu0 0
          %863 = vmatprep.subr.bf16.mxu0 0
          %864 = vmatpush1.bf16.msra.mxu0 0
          %865 = vmatprep.mubr.bf16.mxu0 0
          %866 = vmatmul.mubr.bf16.gmra.mrb[0].mxu0 %v749
          %v867 = vpop.f32.mrb[0].mxu0
          %v868 = vadd.f32 0.0, %v867
          %v869 = vpop.f32.mrb[0].mxu0
          %v870 = vpop.f32.mrb[0].mxu0
          %v871 = vadd.f32 0.0, %v870
          %v872 = vpop.f32.mrb[0].mxu0
          %873 = vdwg.mxu0
          %v874 = vpack.c.bf16 %v871, %v868
          %875 = vst [vmem:[#allocation2] sm:$0xff] %v874
          %v892 = vunpack.c.l.b16 %v769
          %v893 = vunpack.c.l.b16 %v770
          %v894 = vunpack.c.l.b16 %v771
          %v895 = vunpack.c.l.b16 %v772
          %v896 = vunpack.c.l.b16 %v773
          %v897 = vunpack.c.l.b16 %v774
          %v898 = vunpack.c.l.b16 %v775
          %v899 = vunpack.c.l.b16 %v776
          %v900 = vunpack.c.l.b16 %v777
          %v901 = vunpack.c.l.b16 %v778
          %v902 = vunpack.c.l.b16 %v779
          %v903 = vunpack.c.l.b16 %v780
          %v904 = vunpack.c.l.b16 %v781
          %v905 = vunpack.c.l.b16 %v782
          %v906 = vunpack.c.l.b16 %v783
          %v907 = vunpack.c.l.b16 %v784
          %v908 = vpack.c.b16 %v893, %v892
          %v909 = vpack.c.b16 %v895, %v894
          %v910 = vpack.c.b16 %v897, %v896
          %v911 = vpack.c.b16 %v899, %v898
          %v912 = vpack.c.b16 %v901, %v900
          %v913 = vpack.c.b16 %v903, %v902
          %v914 = vpack.c.b16 %v905, %v904
          %v915 = vpack.c.b16 %v907, %v906
          %924 = vmatprep.subr.bf16.mxu0 0
          %925 = vmatpush1.bf16.msra.mxu0 %v908
          %926 = vmatprep.subr.bf16.mxu0 0
          %927 = vmatpush1.bf16.msra.mxu0 %v909
          %928 = vmatprep.subr.bf16.mxu0 0
          %929 = vmatpush1.bf16.msra.mxu0 %v910
          %930 = vmatprep.subr.bf16.mxu0 0
          %931 = vmatpush1.bf16.msra.mxu0 %v911
          %932 = vmatprep.subr.bf16.mxu0 0
          %933 = vmatpush1.bf16.msra.mxu0 %v912
          %934 = vmatprep.subr.bf16.mxu0 0
          %935 = vmatpush1.bf16.msra.mxu0 %v913
          %936 = vmatprep.subr.bf16.mxu0 0
          %937 = vmatpush1.bf16.msra.mxu0 %v914
          %938 = vmatprep.subr.bf16.mxu0 0
          %939 = vmatpush1.bf16.msra.mxu0 %v915
          %940 = vmatprep.subr.bf16.mxu0 0
          %941 = vmatpush1.bf16.msra.mxu0 0
          %942 = vmatprep.subr.bf16.mxu0 0
          %943 = vmatpush1.bf16.msra.mxu0 0
          %944 = vmatprep.subr.bf16.mxu0 0
          %945 = vmatpush1.bf16.msra.mxu0 0
          %946 = vmatprep.subr.bf16.mxu0 0
          %947 = vmatpush1.bf16.msra.mxu0 0
          %948 = vmatprep.subr.bf16.mxu0 0
          %949 = vmatpush1.bf16.msra.mxu0 0
          %950 = vmatprep.subr.bf16.mxu0 0
          %951 = vmatpush1.bf16.msra.mxu0 0
          %952 = vmatprep.subr.bf16.mxu0 0
          %953 = vmatpush1.bf16.msra.mxu0 0
          %954 = vmatprep.subr.bf16.mxu0 0
          %955 = vmatpush1.bf16.msra.mxu0 0
          %956 = vmatprep.mubr.bf16.mxu0 0
          %957 = vmatmul.mubr.bf16.gmra.mrb[0].mxu0 %v749
          %v958 = vpop.f32.mrb[0].mxu0
          %v959 = vadd.f32 0.0, %v958
          %v960 = vpop.f32.mrb[0].mxu0
          %v961 = vpop.f32.mrb[0].mxu0
          %v962 = vadd.f32 0.0, %v961
          %v963 = vpop.f32.mrb[0].mxu0
          %964 = vdwg.mxu0
          %v965 = vpack.c.bf16 %v962, %v959
          %966 = vst [vmem:[#allocation3] sm:$0xff] %v965
          %967 = vmatprep.subr.bf16.mxu0 0
          %968 = vmatpush1.bf16.msra.mxu0 %v817
          %969 = vmatprep.subr.bf16.mxu0 0
          %970 = vmatpush1.bf16.msra.mxu0 %v818
          %971 = vmatprep.subr.bf16.mxu0 0
          %972 = vmatpush1.bf16.msra.mxu0 %v819
          %973 = vmatprep.subr.bf16.mxu0 0
          %974 = vmatpush1.bf16.msra.mxu0 %v820
          %975 = vmatprep.subr.bf16.mxu0 0
          %976 = vmatpush1.bf16.msra.mxu0 %v821
          %977 = vmatprep.subr.bf16.mxu0 0
          %978 = vmatpush1.bf16.msra.mxu0 %v822
          %979 = vmatprep.subr.bf16.mxu0 0
          %980 = vmatpush1.bf16.msra.mxu0 %v823
          %981 = vmatprep.subr.bf16.mxu0 0
          %982 = vmatpush1.bf16.msra.mxu0 %v824
          %983 = vmatprep.subr.bf16.mxu0 0
          %984 = vmatpush1.bf16.msra.mxu0 0
          %985 = vmatprep.subr.bf16.mxu0 0
          %986 = vmatpush1.bf16.msra.mxu0 0
          %987 = vmatprep.subr.bf16.mxu0 0
          %988 = vmatpush1.bf16.msra.mxu0 0
          %989 = vmatprep.subr.bf16.mxu0 0
          %990 = vmatpush1.bf16.msra.mxu0 0
          %991 = vmatprep.subr.bf16.mxu0 0
          %992 = vmatpush1.bf16.msra.mxu0 0
          %993 = vmatprep.subr.bf16.mxu0 0
          %994 = vmatpush1.bf16.msra.mxu0 0
          %995 = vmatprep.subr.bf16.mxu0 0
          %996 = vmatpush1.bf16.msra.mxu0 0
          %997 = vmatprep.subr.bf16.mxu0 0
          %998 = vmatpush1.bf16.msra.mxu0 0
          %999 = vmatprep.mubr.bf16.mxu0 0
          %1000 = vmatmul.mubr.bf16.gmra.mrb[0].mxu0 %v750
          %v1001 = vpop.f32.mrb[0].mxu0
          %v1002 = vadd.f32 0.0, %v1001
          %v1003 = vpop.f32.mrb[0].mxu0
          %v1004 = vpop.f32.mrb[0].mxu0
          %v1005 = vadd.f32 0.0, %v1004
          %v1006 = vpop.f32.mrb[0].mxu0
          %1007 = vdwg.mxu0
          %v1008 = vpack.c.bf16 %v1005, %v1002
          %1009 = vst [vmem:[#allocation2 + $0x8] sm:$0xff] %v1008
          %1010 = vmatprep.subr.bf16.mxu0 0
          %1011 = vmatpush1.bf16.msra.mxu0 %v908
          %1012 = vmatprep.subr.bf16.mxu0 0
          %1013 = vmatpush1.bf16.msra.mxu0 %v909
          %1014 = vmatprep.subr.bf16.mxu0 0
          %1015 = vmatpush1.bf16.msra.mxu0 %v910
          %1016 = vmatprep.subr.bf16.mxu0 0
          %1017 = vmatpush1.bf16.msra.mxu0 %v911
          %1018 = vmatprep.subr.bf16.mxu0 0
          %1019 = vmatpush1.bf16.msra.mxu0 %v912
          %1020 = vmatprep.subr.bf16.mxu0 0
          %1021 = vmatpush1.bf16.msra.mxu0 %v913
          %1022 = vmatprep.subr.bf16.mxu0 0
          %1023 = vmatpush1.bf16.msra.mxu0 %v914
          %1024 = vmatprep.subr.bf16.mxu0 0
          %1025 = vmatpush1.bf16.msra.mxu0 %v915
          %1026 = vmatprep.subr.bf16.mxu0 0
          %1027 = vmatpush1.bf16.msra.mxu0 0
          %1028 = vmatprep.subr.bf16.mxu0 0
          %1029 = vmatpush1.bf16.msra.mxu0 0
          %1030 = vmatprep.subr.bf16.mxu0 0
          %1031 = vmatpush1.bf16.msra.mxu0 0
          %1032 = vmatprep.subr.bf16.mxu0 0
          %1033 = vmatpush1.bf16.msra.mxu0 0
          %1034 = vmatprep.subr.bf16.mxu0 0
          %1035 = vmatpush1.bf16.msra.mxu0 0
          %1036 = vmatprep.subr.bf16.mxu0 0
          %1037 = vmatpush1.bf16.msra.mxu0 0
          %1038 = vmatprep.subr.bf16.mxu0 0
          %1039 = vmatpush1.bf16.msra.mxu0 0
          %1040 = vmatprep.subr.bf16.mxu0 0
          %1041 = vmatpush1.bf16.msra.mxu0 0
          %1042 = vmatprep.mubr.bf16.mxu0 0
          %1043 = vmatmul.mubr.bf16.gmra.mrb[0].mxu0 %v750
          %v1044 = vpop.f32.mrb[0].mxu0
          %v1045 = vadd.f32 0.0, %v1044
          %v1046 = vpop.f32.mrb[0].mxu0
          %v1047 = vpop.f32.mrb[0].mxu0
          %v1048 = vadd.f32 0.0, %v1047
          %v1049 = vpop.f32.mrb[0].mxu0
          %1050 = vdwg.mxu0
          %v1051 = vpack.c.bf16 %v1048, %v1045
          %1052 = vst [vmem:[#allocation3 + $0x8] sm:$0xff] %v1051
          %1053 = vmatprep.subr.bf16.mxu0 0
          %1054 = vmatpush1.bf16.msra.mxu0 %v817
          %1055 = vmatprep.subr.bf16.mxu0 0
          %1056 = vmatpush1.bf16.msra.mxu0 %v818
          %1057 = vmatprep.subr.bf16.mxu0 0
          %1058 = vmatpush1.bf16.msra.mxu0 %v819
          %1059 = vmatprep.subr.bf16.mxu0 0
          %1060 = vmatpush1.bf16.msra.mxu0 %v820
          %1061 = vmatprep.subr.bf16.mxu0 0
          %1062 = vmatpush1.bf16.msra.mxu0 %v821
          %1063 = vmatprep.subr.bf16.mxu0 0
          %1064 = vmatpush1.bf16.msra.mxu0 %v822
          %1065 = vmatprep.subr.bf16.mxu0 0
          %1066 = vmatpush1.bf16.msra.mxu0 %v823
          %1067 = vmatprep.subr.bf16.mxu0 0
          %1068 = vmatpush1.bf16.msra.mxu0 %v824
          %1069 = vmatprep.subr.bf16.mxu0 0
          %1070 = vmatpush1.bf16.msra.mxu0 0
          %1071 = vmatprep.subr.bf16.mxu0 0
          %1072 = vmatpush1.bf16.msra.mxu0 0
          %1073 = vmatprep.subr.bf16.mxu0 0
          %1074 = vmatpush1.bf16.msra.mxu0 0
          %1075 = vmatprep.subr.bf16.mxu0 0
          %1076 = vmatpush1.bf16.msra.mxu0 0
          %1077 = vmatprep.subr.bf16.mxu0 0
          %1078 = vmatpush1.bf16.msra.mxu0 0
          %1079 = vmatprep.subr.bf16.mxu0 0
          %1080 = vmatpush1.bf16.msra.mxu0 0
          %1081 = vmatprep.subr.bf16.mxu0 0
          %1082 = vmatpush1.bf16.msra.mxu0 0
          %1083 = vmatprep.subr.bf16.mxu0 0
          %1084 = vmatpush1.bf16.msra.mxu0 0
          %1085 = vmatprep.mubr.bf16.mxu0 0
          %1086 = vmatmul.mubr.bf16.gmra.mrb[0].mxu0 %v751
          %v1087 = vpop.f32.mrb[0].mxu0
          %v1088 = vadd.f32 0.0, %v1087
          %v1089 = vpop.f32.mrb[0].mxu0
          %v1090 = vpop.f32.mrb[0].mxu0
          %v1091 = vadd.f32 0.0, %v1090
          %v1092 = vpop.f32.mrb[0].mxu0
          %1093 = vdwg.mxu0
          %v1094 = vpack.c.bf16 %v1091, %v1088
          %1095 = vst [vmem:[#allocation2 + $0x10] sm:$0xff] %v1094
          %1096 = vmatprep.subr.bf16.mxu0 0
          %1097 = vmatpush1.bf16.msra.mxu0 %v908
          %1098 = vmatprep.subr.bf16.mxu0 0
          %1099 = vmatpush1.bf16.msra.mxu0 %v909
          %1100 = vmatprep.subr.bf16.mxu0 0
          %1101 = vmatpush1.bf16.msra.mxu0 %v910
          %1102 = vmatprep.subr.bf16.mxu0 0
          %1103 = vmatpush1.bf16.msra.mxu0 %v911
          %1104 = vmatprep.subr.bf16.mxu0 0
          %1105 = vmatpush1.bf16.msra.mxu0 %v912
          %1106 = vmatprep.subr.bf16.mxu0 0
          %1107 = vmatpush1.bf16.msra.mxu0 %v913
          %1108 = vmatprep.subr.bf16.mxu0 0
          %1109 = vmatpush1.bf16.msra.mxu0 %v914
          %1110 = vmatprep.subr.bf16.mxu0 0
          %1111 = vmatpush1.bf16.msra.mxu0 %v915
          %1112 = vmatprep.subr.bf16.mxu0 0
          %1113 = vmatpush1.bf16.msra.mxu0 0
          %1114 = vmatprep.subr.bf16.mxu0 0
          %1115 = vmatpush1.bf16.msra.mxu0 0
          %1116 = vmatprep.subr.bf16.mxu0 0
          %1117 = vmatpush1.bf16.msra.mxu0 0
          %1118 = vmatprep.subr.bf16.mxu0 0
          %1119 = vmatpush1.bf16.msra.mxu0 0
          %1120 = vmatprep.subr.bf16.mxu0 0
          %1121 = vmatpush1.bf16.msra.mxu0 0
          %1122 = vmatprep.subr.bf16.mxu0 0
          %1123 = vmatpush1.bf16.msra.mxu0 0
          %1124 = vmatprep.subr.bf16.mxu0 0
          %1125 = vmatpush1.bf16.msra.mxu0 0
          %1126 = vmatprep.subr.bf16.mxu0 0
          %1127 = vmatpush1.bf16.msra.mxu0 0
          %1128 = vmatprep.mubr.bf16.mxu0 0
          %1129 = vmatmul.mubr.bf16.gmra.mrb[0].mxu0 %v751
          %v1130 = vpop.f32.mrb[0].mxu0
          %v1131 = vadd.f32 0.0, %v1130
          %v1132 = vpop.f32.mrb[0].mxu0
          %v1133 = vpop.f32.mrb[0].mxu0
          %v1134 = vadd.f32 0.0, %v1133
          %v1135 = vpop.f32.mrb[0].mxu0
          %1136 = vdwg.mxu0
          %v1137 = vpack.c.bf16 %v1134, %v1131
          %1138 = vst [vmem:[#allocation3 + $0x10] sm:$0xff] %v1137
          %1139 = vmatprep.subr.bf16.mxu0 0
          %1140 = vmatpush1.bf16.msra.mxu0 %v817
          %1141 = vmatprep.subr.bf16.mxu0 0
          %1142 = vmatpush1.bf16.msra.mxu0 %v818
          %1143 = vmatprep.subr.bf16.mxu0 0
          %1144 = vmatpush1.bf16.msra.mxu0 %v819
          %1145 = vmatprep.subr.bf16.mxu0 0
          %1146 = vmatpush1.bf16.msra.mxu0 %v820
          %1147 = vmatprep.subr.bf16.mxu0 0
          %1148 = vmatpush1.bf16.msra.mxu0 %v821
          %1149 = vmatprep.subr.bf16.mxu0 0
          %1150 = vmatpush1.bf16.msra.mxu0 %v822
          %1151 = vmatprep.subr.bf16.mxu0 0
          %1152 = vmatpush1.bf16.msra.mxu0 %v823
          %1153 = vmatprep.subr.bf16.mxu0 0
          %1154 = vmatpush1.bf16.msra.mxu0 %v824
          %1155 = vmatprep.subr.bf16.mxu0 0
          %1156 = vmatpush1.bf16.msra.mxu0 0
          %1157 = vmatprep.subr.bf16.mxu0 0
          %1158 = vmatpush1.bf16.msra.mxu0 0
          %1159 = vmatprep.subr.bf16.mxu0 0
          %1160 = vmatpush1.bf16.msra.mxu0 0
          %1161 = vmatprep.subr.bf16.mxu0 0
          %1162 = vmatpush1.bf16.msra.mxu0 0
          %1163 = vmatprep.subr.bf16.mxu0 0
          %1164 = vmatpush1.bf16.msra.mxu0 0
          %1165 = vmatprep.subr.bf16.mxu0 0
          %1166 = vmatpush1.bf16.msra.mxu0 0
          %1167 = vmatprep.subr.bf16.mxu0 0
          %1168 = vmatpush1.bf16.msra.mxu0 0
          %1169 = vmatprep.subr.bf16.mxu0 0
          %1170 = vmatpush1.bf16.msra.mxu0 0
          %1171 = vmatprep.mubr.bf16.mxu0 0
          %1172 = vmatmul.mubr.bf16.gmra.mrb[0].mxu0 %v752
          %v1173 = vpop.f32.mrb[0].mxu0
          %v1174 = vadd.f32 0.0, %v1173
          %v1175 = vpop.f32.mrb[0].mxu0
          %v1176 = vpop.f32.mrb[0].mxu0
          %v1177 = vadd.f32 0.0, %v1176
          %v1178 = vpop.f32.mrb[0].mxu0
          %1179 = vdwg.mxu0
          %v1180 = vpack.c.bf16 %v1177, %v1174
          %1181 = vst [vmem:[#allocation2 + $0x18] sm:$0xff] %v1180
          %1182 = vmatprep.subr.bf16.mxu0 0
          %1183 = vmatpush1.bf16.msra.mxu0 %v908
          %1184 = vmatprep.subr.bf16.mxu0 0
          %1185 = vmatpush1.bf16.msra.mxu0 %v909
          %1186 = vmatprep.subr.bf16.mxu0 0
          %1187 = vmatpush1.bf16.msra.mxu0 %v910
          %1188 = vmatprep.subr.bf16.mxu0 0
          %1189 = vmatpush1.bf16.msra.mxu0 %v911
          %1190 = vmatprep.subr.bf16.mxu0 0
          %1191 = vmatpush1.bf16.msra.mxu0 %v912
          %1192 = vmatprep.subr.bf16.mxu0 0
          %1193 = vmatpush1.bf16.msra.mxu0 %v913
          %1194 = vmatprep.subr.bf16.mxu0 0
          %1195 = vmatpush1.bf16.msra.mxu0 %v914
          %1196 = vmatprep.subr.bf16.mxu0 0
          %1197 = vmatpush1.bf16.msra.mxu0 %v915
          %1198 = vmatprep.subr.bf16.mxu0 0
          %1199 = vmatpush1.bf16.msra.mxu0 0
          %1200 = vmatprep.subr.bf16.mxu0 0
          %1201 = vmatpush1.bf16.msra.mxu0 0
          %1202 = vmatprep.subr.bf16.mxu0 0
          %1203 = vmatpush1.bf16.msra.mxu0 0
          %1204 = vmatprep.subr.bf16.mxu0 0
          %1205 = vmatpush1.bf16.msra.mxu0 0
          %1206 = vmatprep.subr.bf16.mxu0 0
          %1207 = vmatpush1.bf16.msra.mxu0 0
          %1208 = vmatprep.subr.bf16.mxu0 0
          %1209 = vmatpush1.bf16.msra.mxu0 0
          %1210 = vmatprep.subr.bf16.mxu0 0
          %1211 = vmatpush1.bf16.msra.mxu0 0
          %1212 = vmatprep.subr.bf16.mxu0 0
          %1213 = vmatpush1.bf16.msra.mxu0 0
          %1214 = vmatprep.mubr.bf16.mxu0 0
          %1215 = vmatmul.mubr.bf16.gmra.mrb[0].mxu0 %v752
          %v1216 = vpop.f32.mrb[0].mxu0
          %v1217 = vadd.f32 0.0, %v1216
          %v1218 = vpop.f32.mrb[0].mxu0
          %v1219 = vpop.f32.mrb[0].mxu0
          %v1220 = vadd.f32 0.0, %v1219
          %v1221 = vpop.f32.mrb[0].mxu0
          %1222 = vdwg.mxu0
          %v1223 = vpack.c.bf16 %v1220, %v1217
          %1224 = vst [vmem:[#allocation3 + $0x18] sm:$0xff] %v1223
        $region144: #{tpu_custom_call.1} parent=79 // pred_fallthru
          _
        %s1225 = smul.u32 %s46, 16
        %s1226 = sshra.s32 %s1225, 3
        %s1227 = sand.u32 %s1225, 7
        %s1228 = smul.u32 %s1226, 4
        %s1229 = smul.addr %s1228, 8
        %s1230 = scalar_lea.vmem %s624, %s1229 [#allocation5]
        %v1231 = vld [vmem:[%s1230] sm:$0xff]
        %v1232 = vld [vmem:[%s1230 + $0x8] sm:$0xff]
        %v1233 = vld [vmem:[%s1230 + $0x10] sm:$0xff]
        %v1234 = vld [vmem:[%s1230 + $0x18] sm:$0xff]
        %v1235 = vld [vmem:[%s1230 + $0x20] sm:$0xff]
        %v1236 = vld [vmem:[%s1230 + $0x28] sm:$0xff]
        %v1237 = vld [vmem:[%s1230 + $0x30] sm:$0xff]
        %v1238 = vld [vmem:[%s1230 + $0x38] sm:$0xff]
        %v1239 = vpack.c.bf16 %v1235, %v1231
        %v1240 = vpack.c.bf16 %v1236, %v1232
        %v1241 = vpack.c.bf16 %v1237, %v1233
        %v1242 = vpack.c.bf16 %v1238, %v1234
        %v1243 = vld [vmem:[%s632] sm:$0x1]
        %v1244 = vld [vmem:[#allocation10] sm:$0xf]
        %v1245 = vld [vmem:[#allocation10 + $0x4] sm:$0xf]
        %v1246 = vld [vmem:[#allocation10 + $0x8] sm:$0xf]
        %v1247 = vld [vmem:[#allocation10 + $0xc] sm:$0xf]
        %v1248 = vld [vmem:[#allocation10 + $0x10] sm:$0xf]
        %v1249 = vld [vmem:[#allocation10 + $0x14] sm:$0xf]
        %v1250 = vld [vmem:[#allocation10 + $0x18] sm:$0xf]
        %v1251 = vld [vmem:[#allocation10 + $0x1c] sm:$0xf]
        %v1252 = vld [vmem:[#allocation10 + $0x20] sm:$0xf]
        %v1253 = vld [vmem:[#allocation10 + $0x24] sm:$0xf]
        %v1254 = vld [vmem:[#allocation10 + $0x28] sm:$0xf]
        %v1255 = vld [vmem:[#allocation10 + $0x2c] sm:$0xf]
        %v1256 = vld [vmem:[#allocation10 + $0x30] sm:$0xf]
        %v1257 = vld [vmem:[#allocation10 + $0x34] sm:$0xf]
        %v1258 = vld [vmem:[#allocation10 + $0x38] sm:$0xf]
        %v1259 = vld [vmem:[#allocation10 + $0x3c] sm:$0xf]
        %v1276 = vunpack.c.l.b16 %v1244
        %v1277 = vunpack.c.l.b16 %v1245
        %v1278 = vunpack.c.l.b16 %v1246
        %v1279 = vunpack.c.l.b16 %v1247
        %v1280 = vunpack.c.l.b16 %v1248
        %v1281 = vunpack.c.l.b16 %v1249
        %v1282 = vunpack.c.l.b16 %v1250
        %v1283 = vunpack.c.l.b16 %v1251
        %v1284 = vunpack.c.l.b16 %v1252
        %v1285 = vunpack.c.l.b16 %v1253
        %v1286 = vunpack.c.l.b16 %v1254
        %v1287 = vunpack.c.l.b16 %v1255
        %v1288 = vunpack.c.l.b16 %v1256
        %v1289 = vunpack.c.l.b16 %v1257
        %v1290 = vunpack.c.l.b16 %v1258
        %v1291 = vunpack.c.l.b16 %v1259
        %v1292 = vpack.c.b16 %v1277, %v1276
        %v1293 = vpack.c.b16 %v1279, %v1278
        %v1294 = vpack.c.b16 %v1281, %v1280
        %v1295 = vpack.c.b16 %v1283, %v1282
        %v1296 = vpack.c.b16 %v1285, %v1284
        %v1297 = vpack.c.b16 %v1287, %v1286
        %v1298 = vpack.c.b16 %v1289, %v1288
        %v1299 = vpack.c.b16 %v1291, %v1290
        %1308 = vmatprep.subr.bf16.mxu0 0
        %1309 = vmatpush1.bf16.msra.mxu0 %v1292
        %1310 = vmatprep.subr.bf16.mxu0 0
        %1311 = vmatpush1.bf16.msra.mxu0 %v1293
        %1312 = vmatprep.subr.bf16.mxu0 0
        %1313 = vmatpush1.bf16.msra.mxu0 %v1294
        %1314 = vmatprep.subr.bf16.mxu0 0
        %1315 = vmatpush1.bf16.msra.mxu0 %v1295
        %1316 = vmatprep.subr.bf16.mxu0 0
        %1317 = vmatpush1.bf16.msra.mxu0 %v1296
        %1318 = vmatprep.subr.bf16.mxu0 0
        %1319 = vmatpush1.bf16.msra.mxu0 %v1297
        %1320 = vmatprep.subr.bf16.mxu0 0
        %1321 = vmatpush1.bf16.msra.mxu0 %v1298
        %1322 = vmatprep.subr.bf16.mxu0 0
        %1323 = vmatpush1.bf16.msra.mxu0 %v1299
        %1324 = vmatprep.subr.bf16.mxu0 0
        %1325 = vmatpush1.bf16.msra.mxu0 0
        %1326 = vmatprep.subr.bf16.mxu0 0
        %1327 = vmatpush1.bf16.msra.mxu0 0
        %1328 = vmatprep.subr.bf16.mxu0 0
        %1329 = vmatpush1.bf16.msra.mxu0 0
        %1330 = vmatprep.subr.bf16.mxu0 0
        %1331 = vmatpush1.bf16.msra.mxu0 0
        %1332 = vmatprep.subr.bf16.mxu0 0
        %1333 = vmatpush1.bf16.msra.mxu0 0
        %1334 = vmatprep.subr.bf16.mxu0 0
        %1335 = vmatpush1.bf16.msra.mxu0 0
        %1336 = vmatprep.subr.bf16.mxu0 0
        %1337 = vmatpush1.bf16.msra.mxu0 0
        %1338 = vmatprep.subr.bf16.mxu0 0
        %1339 = vmatpush1.bf16.msra.mxu0 0
        %1340 = vmatprep.mubr.bf16.mxu0 0
        %1341 = vmatmul.mubr.bf16.gmra.mrb[0].mxu0 %v1239
        %v1342 = vpop.f32.mrb[0].mxu0
        %v1343 = vadd.f32 0.0, %v1342
        %v1344 = vpop.f32.mrb[0].mxu0
        %v1345 = vpop.f32.mrb[0].mxu0
        %v1346 = vadd.f32 0.0, %v1345
        %v1347 = vpop.f32.mrb[0].mxu0
        %1348 = vdwg.mxu0
        %v1349 = vpack.c.bf16 %v1346, %v1343
        %v1350 = vld [vmem:[#allocation2] sm:$0xff]
        %v1351 = vld [vmem:[#allocation3] sm:$0xff]
        %v1353 = vlaneseq
        %v1354 = vshrl.u32 %v1353, 7
        %v1355 = vsub.s32 0, %v1354
        %v1356 = vrot.slane %v1243, %v1355
        %1358 = vmatprep.subr.bf16.mxu0 0
        %1359 = vmatpush1.bf16.xpose.msra.mxu0 %v1350
        %1360 = vmatprep.subr.bf16.mxu0 0
        %1361 = vmatpush1.bf16.xpose.msra.mxu0 0
        %1362 = vmatprep.subr.bf16.mxu0 0
        %1363 = vmatpush1.bf16.xpose.msra.mxu0 0
        %1364 = vmatprep.subr.bf16.mxu0 0
        %1365 = vmatpush1.bf16.xpose.msra.mxu0 0
        %1366 = vmatprep.subr.bf16.mxu0 0
        %1367 = vmatpush1.bf16.xpose.msra.mxu0 0
        %1368 = vmatprep.subr.bf16.mxu0 0
        %1369 = vmatpush1.bf16.xpose.msra.mxu0 0
        %1370 = vmatprep.subr.bf16.mxu0 0
        %1371 = vmatpush1.bf16.xpose.msra.mxu0 0
        %1372 = vmatprep.subr.bf16.mxu0 0
        %1373 = vmatpush1.bf16.xpose.msra.mxu0 0
        %1374 = vmatprep.subr.bf16.mxu0 0
        %1375 = vmatpush1.bf16.xpose.msra.mxu0 0
        %1376 = vmatprep.subr.bf16.mxu0 0
        %1377 = vmatpush1.bf16.xpose.msra.mxu0 0
        %1378 = vmatprep.subr.bf16.mxu0 0
        %1379 = vmatpush1.bf16.xpose.msra.mxu0 0
        %1380 = vmatprep.subr.bf16.mxu0 0
        %1381 = vmatpush1.bf16.xpose.msra.mxu0 0
        %1382 = vmatprep.subr.bf16.mxu0 0
        %1383 = vmatpush1.bf16.xpose.msra.mxu0 0
        %1384 = vmatprep.subr.bf16.mxu0 0
        %1385 = vmatpush1.bf16.xpose.msra.mxu0 0
        %1386 = vmatprep.subr.bf16.mxu0 0
        %1387 = vmatpush1.bf16.xpose.msra.mxu0 0
        %1388 = vmatprep.subr.bf16.mxu0 0
        %1389 = vmatpush1.bf16.xpose.msra.mxu0 0
        %1390 = vmatprep.mubr.bf16.mxu0 0
        %1391 = vmatmul.mubr.bf16.gmra.mrb[0].mxu0 %v1349
        %v1392 = vpop.f32.mrb[0].mxu0
        %v1393 = vadd.f32 %v1356, %v1392
        %v1394 = vpop.f32.mrb[0].mxu0
        %v1395 = vpop.f32.mrb[0].mxu0
        %v1396 = vadd.f32 %v1356, %v1395
        %v1397 = vpop.f32.mrb[0].mxu0
        %1398 = vdwg.mxu0
        %vm1399 = vcmask 130048
        %v1400 = vsel %vm1399, %v1393, -inf
        %1401 = vmax.xlane.f32.xlu0 %v1400
        %v1402 = vpop.xlane.xlu0 %1401
        %v1403 = vsel %vm1399, %v1396, -inf
        %1404 = vmax.xlane.f32.xlu0 %v1403
        %v1405 = vpop.xlane.xlu0 %1404
        %v1406 = vsub.f32 %v1393, %v1402
        %v1407 = vsub.f32 %v1396, %v1405
        %v1408 = vmul.f32 %v1406, 1.442695
        %v1409 = vpow.pop %v1408
        %v1410 = vmul.f32 %v1407, 1.442695
        %v1411 = vpow.pop %v1410
        %v1412 = vsel %vm1399, %v1409, 0.0
        %1413 = vadd.xlane.f32.xlu0 %v1412
        %v1414 = vpop.xlane.xlu0 %1413
        %v1415 = vsel %vm1399, %v1411, 0.0
        %1416 = vadd.xlane.f32.xlu0 %v1415
        %v1417 = vpop.xlane.xlu0 %1416
        %v1418 = vrcp.pop %v1414
        %v1419 = vrcp.pop %v1417
        %v1420 = vpack.c.bf16 %v1411, %v1409
        %v1422 = vsel %vm1399, %v1420, 0
        %1424 = vmatprep.subr.bf16.mxu0 0
        %1425 = vmatpush1.bf16.msra.mxu0 %v1351
        %1426 = vmatprep.subr.bf16.mxu0 0
        %1427 = vmatpush1.bf16.msra.mxu0 0
        %1428 = vmatprep.subr.bf16.mxu0 0
        %1429 = vmatpush1.bf16.msra.mxu0 0
        %1430 = vmatprep.subr.bf16.mxu0 0
        %1431 = vmatpush1.bf16.msra.mxu0 0
        %1432 = vmatprep.subr.bf16.mxu0 0
        %1433 = vmatpush1.bf16.msra.mxu0 0
        %1434 = vmatprep.subr.bf16.mxu0 0
        %1435 = vmatpush1.bf16.msra.mxu0 0
        %1436 = vmatprep.subr.bf16.mxu0 0
        %1437 = vmatpush1.bf16.msra.mxu0 0
        %1438 = vmatprep.subr.bf16.mxu0 0
        %1439 = vmatpush1.bf16.msra.mxu0 0
        %1440 = vmatprep.subr.bf16.mxu0 0
        %1441 = vmatpush1.bf16.msra.mxu0 0
        %1442 = vmatprep.subr.bf16.mxu0 0
        %1443 = vmatpush1.bf16.msra.mxu0 0
        %1444 = vmatprep.subr.bf16.mxu0 0
        %1445 = vmatpush1.bf16.msra.mxu0 0
        %1446 = vmatprep.subr.bf16.mxu0 0
        %1447 = vmatpush1.bf16.msra.mxu0 0
        %1448 = vmatprep.subr.bf16.mxu0 0
        %1449 = vmatpush1.bf16.msra.mxu0 0
        %1450 = vmatprep.subr.bf16.mxu0 0
        %1451 = vmatpush1.bf16.msra.mxu0 0
        %1452 = vmatprep.subr.bf16.mxu0 0
        %1453 = vmatpush1.bf16.msra.mxu0 0
        %1454 = vmatprep.subr.bf16.mxu0 0
        %1455 = vmatpush1.bf16.msra.mxu0 0
        %1456 = vmatprep.mubr.bf16.mxu0 0
        %1457 = vmatmul.mubr.bf16.gmra.mrb[0].mxu0 %v1422
        %v1458 = vpop.f32.mrb[0].mxu0
        %v1459 = vadd.f32 0.0, %v1458
        %v1460 = vpop.f32.mrb[0].mxu0
        %v1461 = vpop.f32.mrb[0].mxu0
        %v1462 = vadd.f32 0.0, %v1461
        %v1463 = vpop.f32.mrb[0].mxu0
        %1464 = vdwg.mxu0
        %v1465 = vmul.f32 %v1459, %v1418
        %v1466 = vmul.f32 %v1462, %v1419
        %v1467 = vpack.c.bf16 %v1466, %v1465
        %1468 = vst [vmem:[#allocation4] sm:$0xff] %v1467
        %1469 = vmatprep.subr.bf16.mxu0 0
        %1470 = vmatpush1.bf16.msra.mxu0 %v1292
        %1471 = vmatprep.subr.bf16.mxu0 0
        %1472 = vmatpush1.bf16.msra.mxu0 %v1293
        %1473 = vmatprep.subr.bf16.mxu0 0
        %1474 = vmatpush1.bf16.msra.mxu0 %v1294
        %1475 = vmatprep.subr.bf16.mxu0 0
        %1476 = vmatpush1.bf16.msra.mxu0 %v1295
        %1477 = vmatprep.subr.bf16.mxu0 0
        %1478 = vmatpush1.bf16.msra.mxu0 %v1296
        %1479 = vmatprep.subr.bf16.mxu0 0
        %1480 = vmatpush1.bf16.msra.mxu0 %v1297
        %1481 = vmatprep.subr.bf16.mxu0 0
        %1482 = vmatpush1.bf16.msra.mxu0 %v1298
        %1483 = vmatprep.subr.bf16.mxu0 0
        %1484 = vmatpush1.bf16.msra.mxu0 %v1299
        %1485 = vmatprep.subr.bf16.mxu0 0
        %1486 = vmatpush1.bf16.msra.mxu0 0
        %1487 = vmatprep.subr.bf16.mxu0 0
        %1488 = vmatpush1.bf16.msra.mxu0 0
        %1489 = vmatprep.subr.bf16.mxu0 0
        %1490 = vmatpush1.bf16.msra.mxu0 0
        %1491 = vmatprep.subr.bf16.mxu0 0
        %1492 = vmatpush1.bf16.msra.mxu0 0
        %1493 = vmatprep.subr.bf16.mxu0 0
        %1494 = vmatpush1.bf16.msra.mxu0 0
        %1495 = vmatprep.subr.bf16.mxu0 0
        %1496 = vmatpush1.bf16.msra.mxu0 0
        %1497 = vmatprep.subr.bf16.mxu0 0
        %1498 = vmatpush1.bf16.msra.mxu0 0
        %1499 = vmatprep.subr.bf16.mxu0 0
        %1500 = vmatpush1.bf16.msra.mxu0 0
        %1501 = vmatprep.mubr.bf16.mxu0 0
        %1502 = vmatmul.mubr.bf16.gmra.mrb[0].mxu0 %v1240
        %v1503 = vpop.f32.mrb[0].mxu0
        %v1504 = vadd.f32 0.0, %v1503
        %v1505 = vpop.f32.mrb[0].mxu0
        %v1506 = vpop.f32.mrb[0].mxu0
        %v1507 = vadd.f32 0.0, %v1506
        %v1508 = vpop.f32.mrb[0].mxu0
        %1509 = vdwg.mxu0
        %v1510 = vpack.c.bf16 %v1507, %v1504
        %v1511 = vld [vmem:[#allocation2 + $0x8] sm:$0xff]
        %v1512 = vld [vmem:[#allocation3 + $0x8] sm:$0xff]
        %1513 = vmatprep.subr.bf16.mxu0 0
        %1514 = vmatpush1.bf16.xpose.msra.mxu0 %v1511
        %1515 = vmatprep.subr.bf16.mxu0 0
        %1516 = vmatpush1.bf16.xpose.msra.mxu0 0
        %1517 = vmatprep.subr.bf16.mxu0 0
        %1518 = vmatpush1.bf16.xpose.msra.mxu0 0
        %1519 = vmatprep.subr.bf16.mxu0 0
        %1520 = vmatpush1.bf16.xpose.msra.mxu0 0
        %1521 = vmatprep.subr.bf16.mxu0 0
        %1522 = vmatpush1.bf16.xpose.msra.mxu0 0
        %1523 = vmatprep.subr.bf16.mxu0 0
        %1524 = vmatpush1.bf16.xpose.msra.mxu0 0
        %1525 = vmatprep.subr.bf16.mxu0 0
        %1526 = vmatpush1.bf16.xpose.msra.mxu0 0
        %1527 = vmatprep.subr.bf16.mxu0 0
        %1528 = vmatpush1.bf16.xpose.msra.mxu0 0
        %1529 = vmatprep.subr.bf16.mxu0 0
        %1530 = vmatpush1.bf16.xpose.msra.mxu0 0
        %1531 = vmatprep.subr.bf16.mxu0 0
        %1532 = vmatpush1.bf16.xpose.msra.mxu0 0
        %1533 = vmatprep.subr.bf16.mxu0 0
        %1534 = vmatpush1.bf16.xpose.msra.mxu0 0
        %1535 = vmatprep.subr.bf16.mxu0 0
        %1536 = vmatpush1.bf16.xpose.msra.mxu0 0
        %1537 = vmatprep.subr.bf16.mxu0 0
        %1538 = vmatpush1.bf16.xpose.msra.mxu0 0
        %1539 = vmatprep.subr.bf16.mxu0 0
        %1540 = vmatpush1.bf16.xpose.msra.mxu0 0
        %1541 = vmatprep.subr.bf16.mxu0 0
        %1542 = vmatpush1.bf16.xpose.msra.mxu0 0
        %1543 = vmatprep.subr.bf16.mxu0 0
        %1544 = vmatpush1.bf16.xpose.msra.mxu0 0
        %1545 = vmatprep.mubr.bf16.mxu0 0
        %1546 = vmatmul.mubr.bf16.gmra.mrb[0].mxu0 %v1510
        %v1547 = vpop.f32.mrb[0].mxu0
        %v1548 = vadd.f32 %v1356, %v1547
        %v1549 = vpop.f32.mrb[0].mxu0
        %v1550 = vpop.f32.mrb[0].mxu0
        %v1551 = vadd.f32 %v1356, %v1550
        %v1552 = vpop.f32.mrb[0].mxu0
        %1553 = vdwg.mxu0
        %v1554 = vsel %vm1399, %v1548, -inf
        %1555 = vmax.xlane.f32.xlu0 %v1554
        %v1556 = vpop.xlane.xlu0 %1555
        %v1557 = vsel %vm1399, %v1551, -inf
        %1558 = vmax.xlane.f32.xlu0 %v1557
        %v1559 = vpop.xlane.xlu0 %1558
        %v1560 = vsub.f32 %v1548, %v1556
        %v1561 = vsub.f32 %v1551, %v1559
        %v1562 = vmul.f32 %v1560, 1.442695
        %v1563 = vpow.pop %v1562
        %v1564 = vmul.f32 %v1561, 1.442695
        %v1565 = vpow.pop %v1564
        %v1566 = vsel %vm1399, %v1563, 0.0
        %1567 = vadd.xlane.f32.xlu0 %v1566
        %v1568 = vpop.xlane.xlu0 %1567
        %v1569 = vsel %vm1399, %v1565, 0.0
        %1570 = vadd.xlane.f32.xlu0 %v1569
        %v1571 = vpop.xlane.xlu0 %1570
        %v1572 = vrcp.pop %v1568
        %v1573 = vrcp.pop %v1571
        %v1574 = vpack.c.bf16 %v1565, %v1563
        %v1576 = vsel %vm1399, %v1574, 0
        %1578 = vmatprep.subr.bf16.mxu0 0
        %1579 = vmatpush1.bf16.msra.mxu0 %v1512
        %1580 = vmatprep.subr.bf16.mxu0 0
        %1581 = vmatpush1.bf16.msra.mxu0 0
        %1582 = vmatprep.subr.bf16.mxu0 0
        %1583 = vmatpush1.bf16.msra.mxu0 0
        %1584 = vmatprep.subr.bf16.mxu0 0
        %1585 = vmatpush1.bf16.msra.mxu0 0
        %1586 = vmatprep.subr.bf16.mxu0 0
        %1587 = vmatpush1.bf16.msra.mxu0 0
        %1588 = vmatprep.subr.bf16.mxu0 0
        %1589 = vmatpush1.bf16.msra.mxu0 0
        %1590 = vmatprep.subr.bf16.mxu0 0
        %1591 = vmatpush1.bf16.msra.mxu0 0
        %1592 = vmatprep.subr.bf16.mxu0 0
        %1593 = vmatpush1.bf16.msra.mxu0 0
        %1594 = vmatprep.subr.bf16.mxu0 0
        %1595 = vmatpush1.bf16.msra.mxu0 0
        %1596 = vmatprep.subr.bf16.mxu0 0
        %1597 = vmatpush1.bf16.msra.mxu0 0
        %1598 = vmatprep.subr.bf16.mxu0 0
        %1599 = vmatpush1.bf16.msra.mxu0 0
        %1600 = vmatprep.subr.bf16.mxu0 0
        %1601 = vmatpush1.bf16.msra.mxu0 0
        %1602 = vmatprep.subr.bf16.mxu0 0
        %1603 = vmatpush1.bf16.msra.mxu0 0
        %1604 = vmatprep.subr.bf16.mxu0 0
        %1605 = vmatpush1.bf16.msra.mxu0 0
        %1606 = vmatprep.subr.bf16.mxu0 0
        %1607 = vmatpush1.bf16.msra.mxu0 0
        %1608 = vmatprep.subr.bf16.mxu0 0
        %1609 = vmatpush1.bf16.msra.mxu0 0
        %1610 = vmatprep.mubr.bf16.mxu0 0
        %1611 = vmatmul.mubr.bf16.gmra.mrb[0].mxu0 %v1576
        %v1612 = vpop.f32.mrb[0].mxu0
        %v1613 = vadd.f32 0.0, %v1612
        %v1614 = vpop.f32.mrb[0].mxu0
        %v1615 = vpop.f32.mrb[0].mxu0
        %v1616 = vadd.f32 0.0, %v1615
        %v1617 = vpop.f32.mrb[0].mxu0
        %1618 = vdwg.mxu0
        %v1619 = vmul.f32 %v1613, %v1572
        %v1620 = vmul.f32 %v1616, %v1573
        %v1621 = vpack.c.bf16 %v1620, %v1619
        %1622 = vst [vmem:[#allocation4 + $0x8] sm:$0xff] %v1621
        %1623 = vmatprep.subr.bf16.mxu0 0
        %1624 = vmatpush1.bf16.msra.mxu0 %v1292
        %1625 = vmatprep.subr.bf16.mxu0 0
        %1626 = vmatpush1.bf16.msra.mxu0 %v1293
        %1627 = vmatprep.subr.bf16.mxu0 0
        %1628 = vmatpush1.bf16.msra.mxu0 %v1294
        %1629 = vmatprep.subr.bf16.mxu0 0
        %1630 = vmatpush1.bf16.msra.mxu0 %v1295
        %1631 = vmatprep.subr.bf16.mxu0 0
        %1632 = vmatpush1.bf16.msra.mxu0 %v1296
        %1633 = vmatprep.subr.bf16.mxu0 0
        %1634 = vmatpush1.bf16.msra.mxu0 %v1297
        %1635 = vmatprep.subr.bf16.mxu0 0
        %1636 = vmatpush1.bf16.msra.mxu0 %v1298
        %1637 = vmatprep.subr.bf16.mxu0 0
        %1638 = vmatpush1.bf16.msra.mxu0 %v1299
        %1639 = vmatprep.subr.bf16.mxu0 0
        %1640 = vmatpush1.bf16.msra.mxu0 0
        %1641 = vmatprep.subr.bf16.mxu0 0
        %1642 = vmatpush1.bf16.msra.mxu0 0
        %1643 = vmatprep.subr.bf16.mxu0 0
        %1644 = vmatpush1.bf16.msra.mxu0 0
        %1645 = vmatprep.subr.bf16.mxu0 0
        %1646 = vmatpush1.bf16.msra.mxu0 0
        %1647 = vmatprep.subr.bf16.mxu0 0
        %1648 = vmatpush1.bf16.msra.mxu0 0
        %1649 = vmatprep.subr.bf16.mxu0 0
        %1650 = vmatpush1.bf16.msra.mxu0 0
        %1651 = vmatprep.subr.bf16.mxu0 0
        %1652 = vmatpush1.bf16.msra.mxu0 0
        %1653 = vmatprep.subr.bf16.mxu0 0
        %1654 = vmatpush1.bf16.msra.mxu0 0
        %1655 = vmatprep.mubr.bf16.mxu0 0
        %1656 = vmatmul.mubr.bf16.gmra.mrb[0].mxu0 %v1241
        %v1657 = vpop.f32.mrb[0].mxu0
        %v1658 = vadd.f32 0.0, %v1657
        %v1659 = vpop.f32.mrb[0].mxu0
        %v1660 = vpop.f32.mrb[0].mxu0
        %v1661 = vadd.f32 0.0, %v1660
        %v1662 = vpop.f32.mrb[0].mxu0
        %1663 = vdwg.mxu0
        %v1664 = vpack.c.bf16 %v1661, %v1658
        %v1665 = vld [vmem:[#allocation2 + $0x10] sm:$0xff]
        %v1666 = vld [vmem:[#allocation3 + $0x10] sm:$0xff]
        %1667 = vmatprep.subr.bf16.mxu0 0
        %1668 = vmatpush1.bf16.xpose.msra.mxu0 %v1665
        %1669 = vmatprep.subr.bf16.mxu0 0
        %1670 = vmatpush1.bf16.xpose.msra.mxu0 0
        %1671 = vmatprep.subr.bf16.mxu0 0
        %1672 = vmatpush1.bf16.xpose.msra.mxu0 0
        %1673 = vmatprep.subr.bf16.mxu0 0
        %1674 = vmatpush1.bf16.xpose.msra.mxu0 0
        %1675 = vmatprep.subr.bf16.mxu0 0
        %1676 = vmatpush1.bf16.xpose.msra.mxu0 0
        %1677 = vmatprep.subr.bf16.mxu0 0
        %1678 = vmatpush1.bf16.xpose.msra.mxu0 0
        %1679 = vmatprep.subr.bf16.mxu0 0
        %1680 = vmatpush1.bf16.xpose.msra.mxu0 0
        %1681 = vmatprep.subr.bf16.mxu0 0
        %1682 = vmatpush1.bf16.xpose.msra.mxu0 0
        %1683 = vmatprep.subr.bf16.mxu0 0
        %1684 = vmatpush1.bf16.xpose.msra.mxu0 0
        %1685 = vmatprep.subr.bf16.mxu0 0
        %1686 = vmatpush1.bf16.xpose.msra.mxu0 0
        %1687 = vmatprep.subr.bf16.mxu0 0
        %1688 = vmatpush1.bf16.xpose.msra.mxu0 0
        %1689 = vmatprep.subr.bf16.mxu0 0
        %1690 = vmatpush1.bf16.xpose.msra.mxu0 0
        %1691 = vmatprep.subr.bf16.mxu0 0
        %1692 = vmatpush1.bf16.xpose.msra.mxu0 0
        %1693 = vmatprep.subr.bf16.mxu0 0
        %1694 = vmatpush1.bf16.xpose.msra.mxu0 0
        %1695 = vmatprep.subr.bf16.mxu0 0
        %1696 = vmatpush1.bf16.xpose.msra.mxu0 0
        %1697 = vmatprep.subr.bf16.mxu0 0
        %1698 = vmatpush1.bf16.xpose.msra.mxu0 0
        %1699 = vmatprep.mubr.bf16.mxu0 0
        %1700 = vmatmul.mubr.bf16.gmra.mrb[0].mxu0 %v1664
        %v1701 = vpop.f32.mrb[0].mxu0
        %v1702 = vadd.f32 %v1356, %v1701
        %v1703 = vpop.f32.mrb[0].mxu0
        %v1704 = vpop.f32.mrb[0].mxu0
        %v1705 = vadd.f32 %v1356, %v1704
        %v1706 = vpop.f32.mrb[0].mxu0
        %1707 = vdwg.mxu0
        %v1708 = vsel %vm1399, %v1702, -inf
        %1709 = vmax.xlane.f32.xlu0 %v1708
        %v1710 = vpop.xlane.xlu0 %1709
        %v1711 = vsel %vm1399, %v1705, -inf
        %1712 = vmax.xlane.f32.xlu0 %v1711
        %v1713 = vpop.xlane.xlu0 %1712
        %v1714 = vsub.f32 %v1702, %v1710
        %v1715 = vsub.f32 %v1705, %v1713
        %v1716 = vmul.f32 %v1714, 1.442695
        %v1717 = vpow.pop %v1716
        %v1718 = vmul.f32 %v1715, 1.442695
        %v1719 = vpow.pop %v1718
        %v1720 = vsel %vm1399, %v1717, 0.0
        %1721 = vadd.xlane.f32.xlu0 %v1720
        %v1722 = vpop.xlane.xlu0 %1721
        %v1723 = vsel %vm1399, %v1719, 0.0
        %1724 = vadd.xlane.f32.xlu0 %v1723
        %v1725 = vpop.xlane.xlu0 %1724
        %v1726 = vrcp.pop %v1722
        %v1727 = vrcp.pop %v1725
        %v1728 = vpack.c.bf16 %v1719, %v1717
        %v1730 = vsel %vm1399, %v1728, 0
        %1732 = vmatprep.subr.bf16.mxu0 0
        %1733 = vmatpush1.bf16.msra.mxu0 %v1666
        %1734 = vmatprep.subr.bf16.mxu0 0
        %1735 = vmatpush1.bf16.msra.mxu0 0
        %1736 = vmatprep.subr.bf16.mxu0 0
        %1737 = vmatpush1.bf16.msra.mxu0 0
        %1738 = vmatprep.subr.bf16.mxu0 0
        %1739 = vmatpush1.bf16.msra.mxu0 0
        %1740 = vmatprep.subr.bf16.mxu0 0
        %1741 = vmatpush1.bf16.msra.mxu0 0
        %1742 = vmatprep.subr.bf16.mxu0 0
        %1743 = vmatpush1.bf16.msra.mxu0 0
        %1744 = vmatprep.subr.bf16.mxu0 0
        %1745 = vmatpush1.bf16.msra.mxu0 0
        %1746 = vmatprep.subr.bf16.mxu0 0
        %1747 = vmatpush1.bf16.msra.mxu0 0
        %1748 = vmatprep.subr.bf16.mxu0 0
        %1749 = vmatpush1.bf16.msra.mxu0 0
        %1750 = vmatprep.subr.bf16.mxu0 0
        %1751 = vmatpush1.bf16.msra.mxu0 0
        %1752 = vmatprep.subr.bf16.mxu0 0
        %1753 = vmatpush1.bf16.msra.mxu0 0
        %1754 = vmatprep.subr.bf16.mxu0 0
        %1755 = vmatpush1.bf16.msra.mxu0 0
        %1756 = vmatprep.subr.bf16.mxu0 0
        %1757 = vmatpush1.bf16.msra.mxu0 0
        %1758 = vmatprep.subr.bf16.mxu0 0
        %1759 = vmatpush1.bf16.msra.mxu0 0
        %1760 = vmatprep.subr.bf16.mxu0 0
        %1761 = vmatpush1.bf16.msra.mxu0 0
        %1762 = vmatprep.subr.bf16.mxu0 0
        %1763 = vmatpush1.bf16.msra.mxu0 0
        %1764 = vmatprep.mubr.bf16.mxu0 0
        %1765 = vmatmul.mubr.bf16.gmra.mrb[0].mxu0 %v1730
        %v1766 = vpop.f32.mrb[0].mxu0
        %v1767 = vadd.f32 0.0, %v1766
        %v1768 = vpop.f32.mrb[0].mxu0
        %v1769 = vpop.f32.mrb[0].mxu0
        %v1770 = vadd.f32 0.0, %v1769
        %v1771 = vpop.f32.mrb[0].mxu0
        %1772 = vdwg.mxu0
        %v1773 = vmul.f32 %v1767, %v1726
        %v1774 = vmul.f32 %v1770, %v1727
        %v1775 = vpack.c.bf16 %v1774, %v1773
        %1776 = vst [vmem:[#allocation4 + $0x10] sm:$0xff] %v1775
        %1777 = vmatprep.subr.bf16.mxu0 0
        %1778 = vmatpush1.bf16.msra.mxu0 %v1292
        %1779 = vmatprep.subr.bf16.mxu0 0
        %1780 = vmatpush1.bf16.msra.mxu0 %v1293
        %1781 = vmatprep.subr.bf16.mxu0 0
        %1782 = vmatpush1.bf16.msra.mxu0 %v1294
        %1783 = vmatprep.subr.bf16.mxu0 0
        %1784 = vmatpush1.bf16.msra.mxu0 %v1295
        %1785 = vmatprep.subr.bf16.mxu0 0
        %1786 = vmatpush1.bf16.msra.mxu0 %v1296
        %1787 = vmatprep.subr.bf16.mxu0 0
        %1788 = vmatpush1.bf16.msra.mxu0 %v1297
        %1789 = vmatprep.subr.bf16.mxu0 0
        %1790 = vmatpush1.bf16.msra.mxu0 %v1298
        %1791 = vmatprep.subr.bf16.mxu0 0
        %1792 = vmatpush1.bf16.msra.mxu0 %v1299
        %1793 = vmatprep.subr.bf16.mxu0 0
        %1794 = vmatpush1.bf16.msra.mxu0 0
        %1795 = vmatprep.subr.bf16.mxu0 0
        %1796 = vmatpush1.bf16.msra.mxu0 0
        %1797 = vmatprep.subr.bf16.mxu0 0
        %1798 = vmatpush1.bf16.msra.mxu0 0
        %1799 = vmatprep.subr.bf16.mxu0 0
        %1800 = vmatpush1.bf16.msra.mxu0 0
        %1801 = vmatprep.subr.bf16.mxu0 0
        %1802 = vmatpush1.bf16.msra.mxu0 0
        %1803 = vmatprep.subr.bf16.mxu0 0
        %1804 = vmatpush1.bf16.msra.mxu0 0
        %1805 = vmatprep.subr.bf16.mxu0 0
        %1806 = vmatpush1.bf16.msra.mxu0 0
        %1807 = vmatprep.subr.bf16.mxu0 0
        %1808 = vmatpush1.bf16.msra.mxu0 0
        %1809 = vmatprep.mubr.bf16.mxu0 0
        %1810 = vmatmul.mubr.bf16.gmra.mrb[0].mxu0 %v1242
        %v1811 = vpop.f32.mrb[0].mxu0
        %v1812 = vadd.f32 0.0, %v1811
        %v1813 = vpop.f32.mrb[0].mxu0
        %v1814 = vpop.f32.mrb[0].mxu0
        %v1815 = vadd.f32 0.0, %v1814
        %v1816 = vpop.f32.mrb[0].mxu0
        %1817 = vdwg.mxu0
        %v1818 = vpack.c.bf16 %v1815, %v1812
        %v1819 = vld [vmem:[#allocation2 + $0x18] sm:$0xff]
        %v1820 = vld [vmem:[#allocation3 + $0x18] sm:$0xff]
        %1821 = vmatprep.subr.bf16.mxu0 0
        %1822 = vmatpush1.bf16.xpose.msra.mxu0 %v1819
        %1823 = vmatprep.subr.bf16.mxu0 0
        %1824 = vmatpush1.bf16.xpose.msra.mxu0 0
        %1825 = vmatprep.subr.bf16.mxu0 0
        %1826 = vmatpush1.bf16.xpose.msra.mxu0 0
        %1827 = vmatprep.subr.bf16.mxu0 0
        %1828 = vmatpush1.bf16.xpose.msra.mxu0 0
        %1829 = vmatprep.subr.bf16.mxu0 0
        %1830 = vmatpush1.bf16.xpose.msra.mxu0 0
        %1831 = vmatprep.subr.bf16.mxu0 0
        %1832 = vmatpush1.bf16.xpose.msra.mxu0 0
        %1833 = vmatprep.subr.bf16.mxu0 0
        %1834 = vmatpush1.bf16.xpose.msra.mxu0 0
        %1835 = vmatprep.subr.bf16.mxu0 0
        %1836 = vmatpush1.bf16.xpose.msra.mxu0 0
        %1837 = vmatprep.subr.bf16.mxu0 0
        %1838 = vmatpush1.bf16.xpose.msra.mxu0 0
        %1839 = vmatprep.subr.bf16.mxu0 0
        %1840 = vmatpush1.bf16.xpose.msra.mxu0 0
        %1841 = vmatprep.subr.bf16.mxu0 0
        %1842 = vmatpush1.bf16.xpose.msra.mxu0 0
        %1843 = vmatprep.subr.bf16.mxu0 0
        %1844 = vmatpush1.bf16.xpose.msra.mxu0 0
        %1845 = vmatprep.subr.bf16.mxu0 0
        %1846 = vmatpush1.bf16.xpose.msra.mxu0 0
        %1847 = vmatprep.subr.bf16.mxu0 0
        %1848 = vmatpush1.bf16.xpose.msra.mxu0 0
        %1849 = vmatprep.subr.bf16.mxu0 0
        %1850 = vmatpush1.bf16.xpose.msra.mxu0 0
        %1851 = vmatprep.subr.bf16.mxu0 0
        %1852 = vmatpush1.bf16.xpose.msra.mxu0 0
        %1853 = vmatprep.mubr.bf16.mxu0 0
        %1854 = vmatmul.mubr.bf16.gmra.mrb[0].mxu0 %v1818
        %v1855 = vpop.f32.mrb[0].mxu0
        %v1856 = vadd.f32 %v1356, %v1855
        %v1857 = vpop.f32.mrb[0].mxu0
        %v1858 = vpop.f32.mrb[0].mxu0
        %v1859 = vadd.f32 %v1356, %v1858
        %v1860 = vpop.f32.mrb[0].mxu0
        %1861 = vdwg.mxu0
        %v1862 = vsel %vm1399, %v1856, -inf
        %1863 = vmax.xlane.f32.xlu0 %v1862
        %v1864 = vpop.xlane.xlu0 %1863
        %v1865 = vsel %vm1399, %v1859, -inf
        %1866 = vmax.xlane.f32.xlu0 %v1865
        %v1867 = vpop.xlane.xlu0 %1866
        %v1868 = vsub.f32 %v1856, %v1864
        %v1869 = vsub.f32 %v1859, %v1867
        %v1870 = vmul.f32 %v1868, 1.442695
        %v1871 = vpow.pop %v1870
        %v1872 = vmul.f32 %v1869, 1.442695
        %v1873 = vpow.pop %v1872
        %v1874 = vsel %vm1399, %v1871, 0.0
        %1875 = vadd.xlane.f32.xlu0 %v1874
        %v1876 = vpop.xlane.xlu0 %1875
        %v1877 = vsel %vm1399, %v1873, 0.0
        %1878 = vadd.xlane.f32.xlu0 %v1877
        %v1879 = vpop.xlane.xlu0 %1878
        %v1880 = vrcp.pop %v1876
        %v1881 = vrcp.pop %v1879
        %v1882 = vpack.c.bf16 %v1873, %v1871
        %v1884 = vsel %vm1399, %v1882, 0
        %1886 = vmatprep.subr.bf16.mxu0 0
        %1887 = vmatpush1.bf16.msra.mxu0 %v1820
        %1888 = vmatprep.subr.bf16.mxu0 0
        %1889 = vmatpush1.bf16.msra.mxu0 0
        %1890 = vmatprep.subr.bf16.mxu0 0
        %1891 = vmatpush1.bf16.msra.mxu0 0
        %1892 = vmatprep.subr.bf16.mxu0 0
        %1893 = vmatpush1.bf16.msra.mxu0 0
        %1894 = vmatprep.subr.bf16.mxu0 0
        %1895 = vmatpush1.bf16.msra.mxu0 0
        %1896 = vmatprep.subr.bf16.mxu0 0
        %1897 = vmatpush1.bf16.msra.mxu0 0
        %1898 = vmatprep.subr.bf16.mxu0 0
        %1899 = vmatpush1.bf16.msra.mxu0 0
        %1900 = vmatprep.subr.bf16.mxu0 0
        %1901 = vmatpush1.bf16.msra.mxu0 0
        %1902 = vmatprep.subr.bf16.mxu0 0
        %1903 = vmatpush1.bf16.msra.mxu0 0
        %1904 = vmatprep.subr.bf16.mxu0 0
        %1905 = vmatpush1.bf16.msra.mxu0 0
        %1906 = vmatprep.subr.bf16.mxu0 0
        %1907 = vmatpush1.bf16.msra.mxu0 0
        %1908 = vmatprep.subr.bf16.mxu0 0
        %1909 = vmatpush1.bf16.msra.mxu0 0
        %1910 = vmatprep.subr.bf16.mxu0 0
        %1911 = vmatpush1.bf16.msra.mxu0 0
        %1912 = vmatprep.subr.bf16.mxu0 0
        %1913 = vmatpush1.bf16.msra.mxu0 0
        %1914 = vmatprep.subr.bf16.mxu0 0
        %1915 = vmatpush1.bf16.msra.mxu0 0
        %1916 = vmatprep.subr.bf16.mxu0 0
        %1917 = vmatpush1.bf16.msra.mxu0 0
        %1918 = vmatprep.mubr.bf16.mxu0 0
        %1919 = vmatmul.mubr.bf16.gmra.mrb[0].mxu0 %v1884
        %v1920 = vpop.f32.mrb[0].mxu0
        %v1921 = vadd.f32 0.0, %v1920
        %v1922 = vpop.f32.mrb[0].mxu0
        %v1923 = vpop.f32.mrb[0].mxu0
        %v1924 = vadd.f32 0.0, %v1923
        %v1925 = vpop.f32.mrb[0].mxu0
        %1926 = vdwg.mxu0
        %v1927 = vmul.f32 %v1921, %v1880
        %v1928 = vmul.f32 %v1924, %v1881
        %v1929 = vpack.c.bf16 %v1928, %v1927
        %1930 = vst [vmem:[#allocation4 + $0x18] sm:$0xff] %v1929
        %v1931 = vld [vmem:[#allocation4] sm:$0xff]
        %v1932 = vld [vmem:[#allocation4 + $0x8] sm:$0xff]
        %v1933 = vld [vmem:[#allocation4 + $0x10] sm:$0xff]
        %v1934 = vld [vmem:[#allocation4 + $0x18] sm:$0xff]
        %v1935 = vld [vmem:[#allocation14] sm:$0xff]
        %v1936 = vld [vmem:[#allocation14 + $0x8] sm:$0xff]
        %v1937 = vld [vmem:[#allocation14 + $0x10] sm:$0xff]
        %v1938 = vld [vmem:[#allocation14 + $0x18] sm:$0xff]
        %v1939 = vld [vmem:[#allocation14 + $0x20] sm:$0xff]
        %v1940 = vld [vmem:[#allocation14 + $0x28] sm:$0xff]
        %v1941 = vld [vmem:[#allocation14 + $0x30] sm:$0xff]
        %v1942 = vld [vmem:[#allocation14 + $0x38] sm:$0xff]
        %v1943 = vld [vmem:[#allocation14 + $0x40] sm:$0xff]
        %v1944 = vld [vmem:[#allocation14 + $0x48] sm:$0xff]
        %v1945 = vld [vmem:[#allocation14 + $0x50] sm:$0xff]
        %v1946 = vld [vmem:[#allocation14 + $0x58] sm:$0xff]
        %v1947 = vld [vmem:[#allocation14 + $0x60] sm:$0xff]
        %v1948 = vld [vmem:[#allocation14 + $0x68] sm:$0xff]
        %v1949 = vld [vmem:[#allocation14 + $0x70] sm:$0xff]
        %v1950 = vld [vmem:[#allocation14 + $0x78] sm:$0xff]
        %v1951 = vld [vmem:[#allocation14 + $0x80] sm:$0xff]
        %v1952 = vld [vmem:[#allocation14 + $0x88] sm:$0xff]
        %v1953 = vld [vmem:[#allocation14 + $0x90] sm:$0xff]
        %v1954 = vld [vmem:[#allocation14 + $0x98] sm:$0xff]
        %v1955 = vld [vmem:[#allocation14 + $0xa0] sm:$0xff]
        %v1956 = vld [vmem:[#allocation14 + $0xa8] sm:$0xff]
        %v1957 = vld [vmem:[#allocation14 + $0xb0] sm:$0xff]
        %v1958 = vld [vmem:[#allocation14 + $0xb8] sm:$0xff]
        %v1959 = vld [vmem:[#allocation14 + $0xc0] sm:$0xff]
        %v1960 = vld [vmem:[#allocation14 + $0xc8] sm:$0xff]
        %v1961 = vld [vmem:[#allocation14 + $0xd0] sm:$0xff]
        %v1962 = vld [vmem:[#allocation14 + $0xd8] sm:$0xff]
        %v1963 = vld [vmem:[#allocation14 + $0xe0] sm:$0xff]
        %v1964 = vld [vmem:[#allocation14 + $0xe8] sm:$0xff]
        %v1965 = vld [vmem:[#allocation14 + $0xf0] sm:$0xff]
        %v1966 = vld [vmem:[#allocation14 + $0xf8] sm:$0xff]
        %v1967 = vld [vmem:[#allocation14 + $0x100] sm:$0xff]
        %v1968 = vld [vmem:[#allocation14 + $0x108] sm:$0xff]
        %v1969 = vld [vmem:[#allocation14 + $0x110] sm:$0xff]
        %v1970 = vld [vmem:[#allocation14 + $0x118] sm:$0xff]
        %v1971 = vld [vmem:[#allocation14 + $0x120] sm:$0xff]
        %v1972 = vld [vmem:[#allocation14 + $0x128] sm:$0xff]
        %v1973 = vld [vmem:[#allocation14 + $0x130] sm:$0xff]
        %v1974 = vld [vmem:[#allocation14 + $0x138] sm:$0xff]
        %v1975 = vld [vmem:[#allocation14 + $0x140] sm:$0xff]
        %v1976 = vld [vmem:[#allocation14 + $0x148] sm:$0xff]
        %v1977 = vld [vmem:[#allocation14 + $0x150] sm:$0xff]
        %v1978 = vld [vmem:[#allocation14 + $0x158] sm:$0xff]
        %v1979 = vld [vmem:[#allocation14 + $0x160] sm:$0xff]
        %v1980 = vld [vmem:[#allocation14 + $0x168] sm:$0xff]
        %v1981 = vld [vmem:[#allocation14 + $0x170] sm:$0xff]
        %v1982 = vld [vmem:[#allocation14 + $0x178] sm:$0xff]
        %v1983 = vld [vmem:[#allocation14 + $0x180] sm:$0xff]
        %v1984 = vld [vmem:[#allocation14 + $0x188] sm:$0xff]
        %v1985 = vld [vmem:[#allocation14 + $0x190] sm:$0xff]
        %v1986 = vld [vmem:[#allocation14 + $0x198] sm:$0xff]
        %v1987 = vld [vmem:[#allocation14 + $0x1a0] sm:$0xff]
        %v1988 = vld [vmem:[#allocation14 + $0x1a8] sm:$0xff]
        %v1989 = vld [vmem:[#allocation14 + $0x1b0] sm:$0xff]
        %v1990 = vld [vmem:[#allocation14 + $0x1b8] sm:$0xff]
        %v1991 = vld [vmem:[#allocation14 + $0x1c0] sm:$0xff]
        %v1992 = vld [vmem:[#allocation14 + $0x1c8] sm:$0xff]
        %v1993 = vld [vmem:[#allocation14 + $0x1d0] sm:$0xff]
        %v1994 = vld [vmem:[#allocation14 + $0x1d8] sm:$0xff]
        %v1995 = vld [vmem:[#allocation14 + $0x1e0] sm:$0xff]
        %v1996 = vld [vmem:[#allocation14 + $0x1e8] sm:$0xff]
        %v1997 = vld [vmem:[#allocation14 + $0x1f0] sm:$0xff]
        %v1998 = vld [vmem:[#allocation14 + $0x1f8] sm:$0xff]
        %v1999 = vld [vmem:[#allocation14 + $0x200] sm:$0xff]
        %v2000 = vld [vmem:[#allocation14 + $0x208] sm:$0xff]
        %v2001 = vld [vmem:[#allocation14 + $0x210] sm:$0xff]
        %v2002 = vld [vmem:[#allocation14 + $0x218] sm:$0xff]
        %v2003 = vld [vmem:[#allocation14 + $0x220] sm:$0xff]
        %v2004 = vld [vmem:[#allocation14 + $0x228] sm:$0xff]
        %v2005 = vld [vmem:[#allocation14 + $0x230] sm:$0xff]
        %v2006 = vld [vmem:[#allocation14 + $0x238] sm:$0xff]
        %v2007 = vld [vmem:[#allocation14 + $0x240] sm:$0xff]
        %v2008 = vld [vmem:[#allocation14 + $0x248] sm:$0xff]
        %v2009 = vld [vmem:[#allocation14 + $0x250] sm:$0xff]
        %v2010 = vld [vmem:[#allocation14 + $0x258] sm:$0xff]
        %v2011 = vld [vmem:[#allocation14 + $0x260] sm:$0xff]
        %v2012 = vld [vmem:[#allocation14 + $0x268] sm:$0xff]
        %v2013 = vld [vmem:[#allocation14 + $0x270] sm:$0xff]
        %v2014 = vld [vmem:[#allocation14 + $0x278] sm:$0xff]
        %v2015 = vld [vmem:[#allocation14 + $0x280] sm:$0xff]
        %v2016 = vld [vmem:[#allocation14 + $0x288] sm:$0xff]
        %v2017 = vld [vmem:[#allocation14 + $0x290] sm:$0xff]
        %v2018 = vld [vmem:[#allocation14 + $0x298] sm:$0xff]
        %v2019 = vld [vmem:[#allocation14 + $0x2a0] sm:$0xff]
        %v2020 = vld [vmem:[#allocation14 + $0x2a8] sm:$0xff]
        %v2021 = vld [vmem:[#allocation14 + $0x2b0] sm:$0xff]
        %v2022 = vld [vmem:[#allocation14 + $0x2b8] sm:$0xff]
        %v2023 = vld [vmem:[#allocation14 + $0x2c0] sm:$0xff]
        %v2024 = vld [vmem:[#allocation14 + $0x2c8] sm:$0xff]
        %v2025 = vld [vmem:[#allocation14 + $0x2d0] sm:$0xff]
        %v2026 = vld [vmem:[#allocation14 + $0x2d8] sm:$0xff]
        %v2027 = vld [vmem:[#allocation14 + $0x2e0] sm:$0xff]
        %v2028 = vld [vmem:[#allocation14 + $0x2e8] sm:$0xff]
        %v2029 = vld [vmem:[#allocation14 + $0x2f0] sm:$0xff]
        %v2030 = vld [vmem:[#allocation14 + $0x2f8] sm:$0xff]
        %v2031 = vld [vmem:[#allocation14 + $0x300] sm:$0xff]
        %v2032 = vld [vmem:[#allocation14 + $0x308] sm:$0xff]
        %v2033 = vld [vmem:[#allocation14 + $0x310] sm:$0xff]
        %v2034 = vld [vmem:[#allocation14 + $0x318] sm:$0xff]
        %v2035 = vld [vmem:[#allocation14 + $0x320] sm:$0xff]
        %v2036 = vld [vmem:[#allocation14 + $0x328] sm:$0xff]
        %v2037 = vld [vmem:[#allocation14 + $0x330] sm:$0xff]
        %v2038 = vld [vmem:[#allocation14 + $0x338] sm:$0xff]
        %v2039 = vld [vmem:[#allocation14 + $0x340] sm:$0xff]
        %v2040 = vld [vmem:[#allocation14 + $0x348] sm:$0xff]
        %v2041 = vld [vmem:[#allocation14 + $0x350] sm:$0xff]
        %v2042 = vld [vmem:[#allocation14 + $0x358] sm:$0xff]
        %v2043 = vld [vmem:[#allocation14 + $0x360] sm:$0xff]
        %v2044 = vld [vmem:[#allocation14 + $0x368] sm:$0xff]
        %v2045 = vld [vmem:[#allocation14 + $0x370] sm:$0xff]
        %v2046 = vld [vmem:[#allocation14 + $0x378] sm:$0xff]
        %v2047 = vld [vmem:[#allocation14 + $0x380] sm:$0xff]
        %v2048 = vld [vmem:[#allocation14 + $0x388] sm:$0xff]
        %v2049 = vld [vmem:[#allocation14 + $0x390] sm:$0xff]
        %v2050 = vld [vmem:[#allocation14 + $0x398] sm:$0xff]
        %v2051 = vld [vmem:[#allocation14 + $0x3a0] sm:$0xff]
        %v2052 = vld [vmem:[#allocation14 + $0x3a8] sm:$0xff]
        %v2053 = vld [vmem:[#allocation14 + $0x3b0] sm:$0xff]
        %v2054 = vld [vmem:[#allocation14 + $0x3b8] sm:$0xff]
        %v2055 = vld [vmem:[#allocation14 + $0x3c0] sm:$0xff]
        %v2056 = vld [vmem:[#allocation14 + $0x3c8] sm:$0xff]
        %v2057 = vld [vmem:[#allocation14 + $0x3d0] sm:$0xff]
        %v2058 = vld [vmem:[#allocation14 + $0x3d8] sm:$0xff]
        %v2059 = vld [vmem:[#allocation14 + $0x3e0] sm:$0xff]
        %v2060 = vld [vmem:[#allocation14 + $0x3e8] sm:$0xff]
        %v2061 = vld [vmem:[#allocation14 + $0x3f0] sm:$0xff]
        %v2062 = vld [vmem:[#allocation14 + $0x3f8] sm:$0xff]
        %v2063 = vld [vmem:[#allocation16] sm:$0xf]
        %v2065 = vlaneseq
        %v2066 = vshrl.u32 %v2065, 7
        %v2067 = vsub.s32 0, %v2066
        %v2068 = vrot.slane %v2063, %v2067
        %v2069 = vlaneseq
        %v2070 = vshrl.u32 %v2069, 7
        %v2071 = vsub.s32 1, %v2070
        %v2072 = vrot.slane %v2063, %v2071
        %v2073 = vlaneseq
        %v2074 = vshrl.u32 %v2073, 7
        %v2075 = vsub.s32 2, %v2074
        %v2076 = vrot.slane %v2063, %v2075
        %v2077 = vlaneseq
        %v2078 = vshrl.u32 %v2077, 7
        %v2079 = vsub.s32 3, %v2078
        %v2080 = vrot.slane %v2063, %v2079
        %v2213 = vunpack.c.l.b16 %v1935
        %v2214 = vunpack.c.h.b16 %v1935
        %v2215 = vunpack.c.l.b16 %v1936
        %v2216 = vunpack.c.h.b16 %v1936
        %v2217 = vunpack.c.l.b16 %v1937
        %v2218 = vunpack.c.h.b16 %v1937
        %v2219 = vunpack.c.l.b16 %v1938
        %v2220 = vunpack.c.h.b16 %v1938
        %v2221 = vunpack.c.l.b16 %v1939
        %v2222 = vunpack.c.h.b16 %v1939
        %v2223 = vunpack.c.l.b16 %v1940
        %v2224 = vunpack.c.h.b16 %v1940
        %v2225 = vunpack.c.l.b16 %v1941
        %v2226 = vunpack.c.h.b16 %v1941
        %v2227 = vunpack.c.l.b16 %v1942
        %v2228 = vunpack.c.h.b16 %v1942
        %v2229 = vunpack.c.l.b16 %v1943
        %v2230 = vunpack.c.h.b16 %v1943
        %v2231 = vunpack.c.l.b16 %v1944
        %v2232 = vunpack.c.h.b16 %v1944
        %v2233 = vunpack.c.l.b16 %v1945
        %v2234 = vunpack.c.h.b16 %v1945
        %v2235 = vunpack.c.l.b16 %v1946
        %v2236 = vunpack.c.h.b16 %v1946
        %v2237 = vunpack.c.l.b16 %v1947
        %v2238 = vunpack.c.h.b16 %v1947
        %v2239 = vunpack.c.l.b16 %v1948
        %v2240 = vunpack.c.h.b16 %v1948
        %v2241 = vunpack.c.l.b16 %v1949
        %v2242 = vunpack.c.h.b16 %v1949
        %v2243 = vunpack.c.l.b16 %v1950
        %v2244 = vunpack.c.h.b16 %v1950
        %v2245 = vunpack.c.l.b16 %v1951
        %v2246 = vunpack.c.h.b16 %v1951
        %v2247 = vunpack.c.l.b16 %v1952
        %v2248 = vunpack.c.h.b16 %v1952
        %v2249 = vunpack.c.l.b16 %v1953
        %v2250 = vunpack.c.h.b16 %v1953
        %v2251 = vunpack.c.l.b16 %v1954
        %v2252 = vunpack.c.h.b16 %v1954
        %v2253 = vunpack.c.l.b16 %v1955
        %v2254 = vunpack.c.h.b16 %v1955
        %v2255 = vunpack.c.l.b16 %v1956
        %v2256 = vunpack.c.h.b16 %v1956
        %v2257 = vunpack.c.l.b16 %v1957
        %v2258 = vunpack.c.h.b16 %v1957
        %v2259 = vunpack.c.l.b16 %v1958
        %v2260 = vunpack.c.h.b16 %v1958
        %v2261 = vunpack.c.l.b16 %v1959
        %v2262 = vunpack.c.h.b16 %v1959
        %v2263 = vunpack.c.l.b16 %v1960
        %v2264 = vunpack.c.h.b16 %v1960
        %v2265 = vunpack.c.l.b16 %v1961
        %v2266 = vunpack.c.h.b16 %v1961
        %v2267 = vunpack.c.l.b16 %v1962
        %v2268 = vunpack.c.h.b16 %v1962
        %v2269 = vunpack.c.l.b16 %v1963
        %v2270 = vunpack.c.h.b16 %v1963
        %v2271 = vunpack.c.l.b16 %v1964
        %v2272 = vunpack.c.h.b16 %v1964
        %v2273 = vunpack.c.l.b16 %v1965
        %v2274 = vunpack.c.h.b16 %v1965
        %v2275 = vunpack.c.l.b16 %v1966
        %v2276 = vunpack.c.h.b16 %v1966
        %v2277 = vunpack.c.l.b16 %v1967
        %v2278 = vunpack.c.h.b16 %v1967
        %v2279 = vunpack.c.l.b16 %v1968
        %v2280 = vunpack.c.h.b16 %v1968
        %v2281 = vunpack.c.l.b16 %v1969
        %v2282 = vunpack.c.h.b16 %v1969
        %v2283 = vunpack.c.l.b16 %v1970
        %v2284 = vunpack.c.h.b16 %v1970
        %v2285 = vunpack.c.l.b16 %v1971
        %v2286 = vunpack.c.h.b16 %v1971
        %v2287 = vunpack.c.l.b16 %v1972
        %v2288 = vunpack.c.h.b16 %v1972
        %v2289 = vunpack.c.l.b16 %v1973
        %v2290 = vunpack.c.h.b16 %v1973
        %v2291 = vunpack.c.l.b16 %v1974
        %v2292 = vunpack.c.h.b16 %v1974
        %v2293 = vunpack.c.l.b16 %v1975
        %v2294 = vunpack.c.h.b16 %v1975
        %v2295 = vunpack.c.l.b16 %v1976
        %v2296 = vunpack.c.h.b16 %v1976
        %v2297 = vunpack.c.l.b16 %v1977
        %v2298 = vunpack.c.h.b16 %v1977
        %v2299 = vunpack.c.l.b16 %v1978
        %v2300 = vunpack.c.h.b16 %v1978
        %v2301 = vunpack.c.l.b16 %v1979
        %v2302 = vunpack.c.h.b16 %v1979
        %v2303 = vunpack.c.l.b16 %v1980
        %v2304 = vunpack.c.h.b16 %v1980
        %v2305 = vunpack.c.l.b16 %v1981
        %v2306 = vunpack.c.h.b16 %v1981
        %v2307 = vunpack.c.l.b16 %v1982
        %v2308 = vunpack.c.h.b16 %v1982
        %v2309 = vunpack.c.l.b16 %v1983
        %v2310 = vunpack.c.h.b16 %v1983
        %v2311 = vunpack.c.l.b16 %v1984
        %v2312 = vunpack.c.h.b16 %v1984
        %v2313 = vunpack.c.l.b16 %v1985
        %v2314 = vunpack.c.h.b16 %v1985
        %v2315 = vunpack.c.l.b16 %v1986
        %v2316 = vunpack.c.h.b16 %v1986
        %v2317 = vunpack.c.l.b16 %v1987
        %v2318 = vunpack.c.h.b16 %v1987
        %v2319 = vunpack.c.l.b16 %v1988
        %v2320 = vunpack.c.h.b16 %v1988
        %v2321 = vunpack.c.l.b16 %v1989
        %v2322 = vunpack.c.h.b16 %v1989
        %v2323 = vunpack.c.l.b16 %v1990
        %v2324 = vunpack.c.h.b16 %v1990
        %v2325 = vunpack.c.l.b16 %v1991
        %v2326 = vunpack.c.h.b16 %v1991
        %v2327 = vunpack.c.l.b16 %v1992
        %v2328 = vunpack.c.h.b16 %v1992
        %v2329 = vunpack.c.l.b16 %v1993
        %v2330 = vunpack.c.h.b16 %v1993
        %v2331 = vunpack.c.l.b16 %v1994
        %v2332 = vunpack.c.h.b16 %v1994
        %v2333 = vunpack.c.l.b16 %v1995
        %v2334 = vunpack.c.h.b16 %v1995
        %v2335 = vunpack.c.l.b16 %v1996
        %v2336 = vunpack.c.h.b16 %v1996
        %v2337 = vunpack.c.l.b16 %v1997
        %v2338 = vunpack.c.h.b16 %v1997
        %v2339 = vunpack.c.l.b16 %v1998
        %v2340 = vunpack.c.h.b16 %v1998
        %v2341 = vunpack.c.l.b16 %v1999
        %v2342 = vunpack.c.h.b16 %v1999
        %v2343 = vunpack.c.l.b16 %v2000
        %v2344 = vunpack.c.h.b16 %v2000
        %v2345 = vunpack.c.l.b16 %v2001
        %v2346 = vunpack.c.h.b16 %v2001
        %v2347 = vunpack.c.l.b16 %v2002
        %v2348 = vunpack.c.h.b16 %v2002
        %v2349 = vunpack.c.l.b16 %v2003
        %v2350 = vunpack.c.h.b16 %v2003
        %v2351 = vunpack.c.l.b16 %v2004
        %v2352 = vunpack.c.h.b16 %v2004
        %v2353 = vunpack.c.l.b16 %v2005
        %v2354 = vunpack.c.h.b16 %v2005
        %v2355 = vunpack.c.l.b16 %v2006
        %v2356 = vunpack.c.h.b16 %v2006
        %v2357 = vunpack.c.l.b16 %v2007
        %v2358 = vunpack.c.h.b16 %v2007
        %v2359 = vunpack.c.l.b16 %v2008
        %v2360 = vunpack.c.h.b16 %v2008
        %v2361 = vunpack.c.l.b16 %v2009
        %v2362 = vunpack.c.h.b16 %v2009
        %v2363 = vunpack.c.l.b16 %v2010
        %v2364 = vunpack.c.h.b16 %v2010
        %v2365 = vunpack.c.l.b16 %v2011
        %v2366 = vunpack.c.h.b16 %v2011
        %v2367 = vunpack.c.l.b16 %v2012
        %v2368 = vunpack.c.h.b16 %v2012
        %v2369 = vunpack.c.l.b16 %v2013
        %v2370 = vunpack.c.h.b16 %v2013
        %v2371 = vunpack.c.l.b16 %v2014
        %v2372 = vunpack.c.h.b16 %v2014
        %v2373 = vunpack.c.l.b16 %v2015
        %v2374 = vunpack.c.h.b16 %v2015
        %v2375 = vunpack.c.l.b16 %v2016
        %v2376 = vunpack.c.h.b16 %v2016
        %v2377 = vunpack.c.l.b16 %v2017
        %v2378 = vunpack.c.h.b16 %v2017
        %v2379 = vunpack.c.l.b16 %v2018
        %v2380 = vunpack.c.h.b16 %v2018
        %v2381 = vunpack.c.l.b16 %v2019
        %v2382 = vunpack.c.h.b16 %v2019
        %v2383 = vunpack.c.l.b16 %v2020
        %v2384 = vunpack.c.h.b16 %v2020
        %v2385 = vunpack.c.l.b16 %v2021
        %v2386 = vunpack.c.h.b16 %v2021
        %v2387 = vunpack.c.l.b16 %v2022
        %v2388 = vunpack.c.h.b16 %v2022
        %v2389 = vunpack.c.l.b16 %v2023
        %v2390 = vunpack.c.h.b16 %v2023
        %v2391 = vunpack.c.l.b16 %v2024
        %v2392 = vunpack.c.h.b16 %v2024
        %v2393 = vunpack.c.l.b16 %v2025
        %v2394 = vunpack.c.h.b16 %v2025
        %v2395 = vunpack.c.l.b16 %v2026
        %v2396 = vunpack.c.h.b16 %v2026
        %v2397 = vunpack.c.l.b16 %v2027
        %v2398 = vunpack.c.h.b16 %v2027
        %v2399 = vunpack.c.l.b16 %v2028
        %v2400 = vunpack.c.h.b16 %v2028
        %v2401 = vunpack.c.l.b16 %v2029
        %v2402 = vunpack.c.h.b16 %v2029
        %v2403 = vunpack.c.l.b16 %v2030
        %v2404 = vunpack.c.h.b16 %v2030
        %v2405 = vunpack.c.l.b16 %v2031
        %v2406 = vunpack.c.h.b16 %v2031
        %v2407 = vunpack.c.l.b16 %v2032
        %v2408 = vunpack.c.h.b16 %v2032
        %v2409 = vunpack.c.l.b16 %v2033
        %v2410 = vunpack.c.h.b16 %v2033
        %v2411 = vunpack.c.l.b16 %v2034
        %v2412 = vunpack.c.h.b16 %v2034
        %v2413 = vunpack.c.l.b16 %v2035
        %v2414 = vunpack.c.h.b16 %v2035
        %v2415 = vunpack.c.l.b16 %v2036
        %v2416 = vunpack.c.h.b16 %v2036
        %v2417 = vunpack.c.l.b16 %v2037
        %v2418 = vunpack.c.h.b16 %v2037
        %v2419 = vunpack.c.l.b16 %v2038
        %v2420 = vunpack.c.h.b16 %v2038
        %v2421 = vunpack.c.l.b16 %v2039
        %v2422 = vunpack.c.h.b16 %v2039
        %v2423 = vunpack.c.l.b16 %v2040
        %v2424 = vunpack.c.h.b16 %v2040
        %v2425 = vunpack.c.l.b16 %v2041
        %v2426 = vunpack.c.h.b16 %v2041
        %v2427 = vunpack.c.l.b16 %v2042
        %v2428 = vunpack.c.h.b16 %v2042
        %v2429 = vunpack.c.l.b16 %v2043
        %v2430 = vunpack.c.h.b16 %v2043
        %v2431 = vunpack.c.l.b16 %v2044
        %v2432 = vunpack.c.h.b16 %v2044
        %v2433 = vunpack.c.l.b16 %v2045
        %v2434 = vunpack.c.h.b16 %v2045
        %v2435 = vunpack.c.l.b16 %v2046
        %v2436 = vunpack.c.h.b16 %v2046
        %v2437 = vunpack.c.l.b16 %v2047
        %v2438 = vunpack.c.h.b16 %v2047
        %v2439 = vunpack.c.l.b16 %v2048
        %v2440 = vunpack.c.h.b16 %v2048
        %v2441 = vunpack.c.l.b16 %v2049
        %v2442 = vunpack.c.h.b16 %v2049
        %v2443 = vunpack.c.l.b16 %v2050
        %v2444 = vunpack.c.h.b16 %v2050
        %v2445 = vunpack.c.l.b16 %v2051
        %v2446 = vunpack.c.h.b16 %v2051
        %v2447 = vunpack.c.l.b16 %v2052
        %v2448 = vunpack.c.h.b16 %v2052
        %v2449 = vunpack.c.l.b16 %v2053
        %v2450 = vunpack.c.h.b16 %v2053
        %v2451 = vunpack.c.l.b16 %v2054
        %v2452 = vunpack.c.h.b16 %v2054
        %v2453 = vunpack.c.l.b16 %v2055
        %v2454 = vunpack.c.h.b16 %v2055
        %v2455 = vunpack.c.l.b16 %v2056
        %v2456 = vunpack.c.h.b16 %v2056
        %v2457 = vunpack.c.l.b16 %v2057
        %v2458 = vunpack.c.h.b16 %v2057
        %v2459 = vunpack.c.l.b16 %v2058
        %v2460 = vunpack.c.h.b16 %v2058
        %v2461 = vunpack.c.l.b16 %v2059
        %v2462 = vunpack.c.h.b16 %v2059
        %v2463 = vunpack.c.l.b16 %v2060
        %v2464 = vunpack.c.h.b16 %v2060
        %v2465 = vunpack.c.l.b16 %v2061
        %v2466 = vunpack.c.h.b16 %v2061
        %v2467 = vunpack.c.l.b16 %v2062
        %v2468 = vunpack.c.h.b16 %v2062
        %v2469 = vpack.c.b16 %v2217, %v2213
        %v2470 = vpack.c.b16 %v2218, %v2214
        %v2471 = vpack.c.b16 %v2219, %v2215
        %v2472 = vpack.c.b16 %v2220, %v2216
        %v2473 = vpack.c.b16 %v2225, %v2221
        %v2474 = vpack.c.b16 %v2226, %v2222
        %v2475 = vpack.c.b16 %v2227, %v2223
        %v2476 = vpack.c.b16 %v2228, %v2224
        %v2477 = vpack.c.b16 %v2233, %v2229
        %v2478 = vpack.c.b16 %v2234, %v2230
        %v2479 = vpack.c.b16 %v2235, %v2231
        %v2480 = vpack.c.b16 %v2236, %v2232
        %v2481 = vpack.c.b16 %v2241, %v2237
        %v2482 = vpack.c.b16 %v2242, %v2238
        %v2483 = vpack.c.b16 %v2243, %v2239
        %v2484 = vpack.c.b16 %v2244, %v2240
        %v2485 = vpack.c.b16 %v2249, %v2245
        %v2486 = vpack.c.b16 %v2250, %v2246
        %v2487 = vpack.c.b16 %v2251, %v2247
        %v2488 = vpack.c.b16 %v2252, %v2248
        %v2489 = vpack.c.b16 %v2257, %v2253
        %v2490 = vpack.c.b16 %v2258, %v2254
        %v2491 = vpack.c.b16 %v2259, %v2255
        %v2492 = vpack.c.b16 %v2260, %v2256
        %v2493 = vpack.c.b16 %v2265, %v2261
        %v2494 = vpack.c.b16 %v2266, %v2262
        %v2495 = vpack.c.b16 %v2267, %v2263
        %v2496 = vpack.c.b16 %v2268, %v2264
        %v2497 = vpack.c.b16 %v2273, %v2269
        %v2498 = vpack.c.b16 %v2274, %v2270
        %v2499 = vpack.c.b16 %v2275, %v2271
        %v2500 = vpack.c.b16 %v2276, %v2272
        %v2501 = vpack.c.b16 %v2281, %v2277
        %v2502 = vpack.c.b16 %v2282, %v2278
        %v2503 = vpack.c.b16 %v2283, %v2279
        %v2504 = vpack.c.b16 %v2284, %v2280
        %v2505 = vpack.c.b16 %v2289, %v2285
        %v2506 = vpack.c.b16 %v2290, %v2286
        %v2507 = vpack.c.b16 %v2291, %v2287
        %v2508 = vpack.c.b16 %v2292, %v2288
        %v2509 = vpack.c.b16 %v2297, %v2293
        %v2510 = vpack.c.b16 %v2298, %v2294
        %v2511 = vpack.c.b16 %v2299, %v2295
        %v2512 = vpack.c.b16 %v2300, %v2296
        %v2513 = vpack.c.b16 %v2305, %v2301
        %v2514 = vpack.c.b16 %v2306, %v2302
        %v2515 = vpack.c.b16 %v2307, %v2303
        %v2516 = vpack.c.b16 %v2308, %v2304
        %v2517 = vpack.c.b16 %v2313, %v2309
        %v2518 = vpack.c.b16 %v2314, %v2310
        %v2519 = vpack.c.b16 %v2315, %v2311
        %v2520 = vpack.c.b16 %v2316, %v2312
        %v2521 = vpack.c.b16 %v2321, %v2317
        %v2522 = vpack.c.b16 %v2322, %v2318
        %v2523 = vpack.c.b16 %v2323, %v2319
        %v2524 = vpack.c.b16 %v2324, %v2320
        %v2525 = vpack.c.b16 %v2329, %v2325
        %v2526 = vpack.c.b16 %v2330, %v2326
        %v2527 = vpack.c.b16 %v2331, %v2327
        %v2528 = vpack.c.b16 %v2332, %v2328
        %v2529 = vpack.c.b16 %v2337, %v2333
        %v2530 = vpack.c.b16 %v2338, %v2334
        %v2531 = vpack.c.b16 %v2339, %v2335
        %v2532 = vpack.c.b16 %v2340, %v2336
        %v2533 = vpack.c.b16 %v2345, %v2341
        %v2534 = vpack.c.b16 %v2346, %v2342
        %v2535 = vpack.c.b16 %v2347, %v2343
        %v2536 = vpack.c.b16 %v2348, %v2344
        %v2537 = vpack.c.b16 %v2353, %v2349
        %v2538 = vpack.c.b16 %v2354, %v2350
        %v2539 = vpack.c.b16 %v2355, %v2351
        %v2540 = vpack.c.b16 %v2356, %v2352
        %v2541 = vpack.c.b16 %v2361, %v2357
        %v2542 = vpack.c.b16 %v2362, %v2358
        %v2543 = vpack.c.b16 %v2363, %v2359
        %v2544 = vpack.c.b16 %v2364, %v2360
        %v2545 = vpack.c.b16 %v2369, %v2365
        %v2546 = vpack.c.b16 %v2370, %v2366
        %v2547 = vpack.c.b16 %v2371, %v2367
        %v2548 = vpack.c.b16 %v2372, %v2368
        %v2549 = vpack.c.b16 %v2377, %v2373
        %v2550 = vpack.c.b16 %v2378, %v2374
        %v2551 = vpack.c.b16 %v2379, %v2375
        %v2552 = vpack.c.b16 %v2380, %v2376
        %v2553 = vpack.c.b16 %v2385, %v2381
        %v2554 = vpack.c.b16 %v2386, %v2382
        %v2555 = vpack.c.b16 %v2387, %v2383
        %v2556 = vpack.c.b16 %v2388, %v2384
        %v2557 = vpack.c.b16 %v2393, %v2389
        %v2558 = vpack.c.b16 %v2394, %v2390
        %v2559 = vpack.c.b16 %v2395, %v2391
        %v2560 = vpack.c.b16 %v2396, %v2392
        %v2561 = vpack.c.b16 %v2401, %v2397
        %v2562 = vpack.c.b16 %v2402, %v2398
        %v2563 = vpack.c.b16 %v2403, %v2399
        %v2564 = vpack.c.b16 %v2404, %v2400
        %v2565 = vpack.c.b16 %v2409, %v2405
        %v2566 = vpack.c.b16 %v2410, %v2406
        %v2567 = vpack.c.b16 %v2411, %v2407
        %v2568 = vpack.c.b16 %v2412, %v2408
        %v2569 = vpack.c.b16 %v2417, %v2413
        %v2570 = vpack.c.b16 %v2418, %v2414
        %v2571 = vpack.c.b16 %v2419, %v2415
        %v2572 = vpack.c.b16 %v2420, %v2416
        %v2573 = vpack.c.b16 %v2425, %v2421
        %v2574 = vpack.c.b16 %v2426, %v2422
        %v2575 = vpack.c.b16 %v2427, %v2423
        %v2576 = vpack.c.b16 %v2428, %v2424
        %v2577 = vpack.c.b16 %v2433, %v2429
        %v2578 = vpack.c.b16 %v2434, %v2430
        %v2579 = vpack.c.b16 %v2435, %v2431
        %v2580 = vpack.c.b16 %v2436, %v2432
        %v2581 = vpack.c.b16 %v2441, %v2437
        %v2582 = vpack.c.b16 %v2442, %v2438
        %v2583 = vpack.c.b16 %v2443, %v2439
        %v2584 = vpack.c.b16 %v2444, %v2440
        %v2585 = vpack.c.b16 %v2449, %v2445
        %v2586 = vpack.c.b16 %v2450, %v2446
        %v2587 = vpack.c.b16 %v2451, %v2447
        %v2588 = vpack.c.b16 %v2452, %v2448
        %v2589 = vpack.c.b16 %v2457, %v2453
        %v2590 = vpack.c.b16 %v2458, %v2454
        %v2591 = vpack.c.b16 %v2459, %v2455
        %v2592 = vpack.c.b16 %v2460, %v2456
        %v2593 = vpack.c.b16 %v2465, %v2461
        %v2594 = vpack.c.b16 %v2466, %v2462
        %v2595 = vpack.c.b16 %v2467, %v2463
        %v2596 = vpack.c.b16 %v2468, %v2464
        %2725 = vmatprep.subr.bf16.mxu0 %v2470
        %2726 = vmatpush1.bf16.msra.mxu0 %v2469
        %2727 = vmatprep.subr.bf16.mxu0 %v2474
        %2728 = vmatpush1.bf16.msra.mxu0 %v2473
        %2729 = vmatprep.subr.bf16.mxu0 %v2478
        %2730 = vmatpush1.bf16.msra.mxu0 %v2477
        %2731 = vmatprep.subr.bf16.mxu0 %v2482
        %2732 = vmatpush1.bf16.msra.mxu0 %v2481
        %2733 = vmatprep.subr.bf16.mxu0 %v2486
        %2734 = vmatpush1.bf16.msra.mxu0 %v2485
        %2735 = vmatprep.subr.bf16.mxu0 %v2490
        %2736 = vmatpush1.bf16.msra.mxu0 %v2489
        %2737 = vmatprep.subr.bf16.mxu0 %v2494
        %2738 = vmatpush1.bf16.msra.mxu0 %v2493
        %2739 = vmatprep.subr.bf16.mxu0 %v2498
        %2740 = vmatpush1.bf16.msra.mxu0 %v2497
        %2741 = vmatprep.subr.bf16.mxu0 %v2502
        %2742 = vmatpush1.bf16.msra.mxu0 %v2501
        %2743 = vmatprep.subr.bf16.mxu0 %v2506
        %2744 = vmatpush1.bf16.msra.mxu0 %v2505
        %2745 = vmatprep.subr.bf16.mxu0 %v2510
        %2746 = vmatpush1.bf16.msra.mxu0 %v2509
        %2747 = vmatprep.subr.bf16.mxu0 %v2514
        %2748 = vmatpush1.bf16.msra.mxu0 %v2513
        %2749 = vmatprep.subr.bf16.mxu0 %v2518
        %2750 = vmatpush1.bf16.msra.mxu0 %v2517
        %2751 = vmatprep.subr.bf16.mxu0 %v2522
        %2752 = vmatpush1.bf16.msra.mxu0 %v2521
        %2753 = vmatprep.subr.bf16.mxu0 %v2526
        %2754 = vmatpush1.bf16.msra.mxu0 %v2525
        %2755 = vmatprep.subr.bf16.mxu0 %v2530
        %2756 = vmatpush1.bf16.msra.mxu0 %v2529
        %2757 = vmatprep.mubr.bf16.mxu0 %v1932
        %2758 = vmatmul.mubr.bf16.gmra.mrb[0].mxu0 %v1931
        %v2759 = vpop.f32.mrb[0].mxu0
        %v2760 = vadd.f32 %v2068, %v2759
        %v2761 = vpop.f32.mrb[0].mxu0
        %v2762 = vadd.f32 %v2072, %v2761
        %v2763 = vpop.f32.mrb[0].mxu0
        %v2764 = vadd.f32 %v2068, %v2763
        %v2765 = vpop.f32.mrb[0].mxu0
        %v2766 = vadd.f32 %v2072, %v2765
        %2767 = vdwg.mxu0
        %2768 = vmatprep.subr.bf16.mxu0 %v2534
        %2769 = vmatpush1.bf16.msra.mxu0 %v2533
        %2770 = vmatprep.subr.bf16.mxu0 %v2538
        %2771 = vmatpush1.bf16.msra.mxu0 %v2537
        %2772 = vmatprep.subr.bf16.mxu0 %v2542
        %2773 = vmatpush1.bf16.msra.mxu0 %v2541
        %2774 = vmatprep.subr.bf16.mxu0 %v2546
        %2775 = vmatpush1.bf16.msra.mxu0 %v2545
        %2776 = vmatprep.subr.bf16.mxu0 %v2550
        %2777 = vmatpush1.bf16.msra.mxu0 %v2549
        %2778 = vmatprep.subr.bf16.mxu0 %v2554
        %2779 = vmatpush1.bf16.msra.mxu0 %v2553
        %2780 = vmatprep.subr.bf16.mxu0 %v2558
        %2781 = vmatpush1.bf16.msra.mxu0 %v2557
        %2782 = vmatprep.subr.bf16.mxu0 %v2562
        %2783 = vmatpush1.bf16.msra.mxu0 %v2561
        %2784 = vmatprep.subr.bf16.mxu0 %v2566
        %2785 = vmatpush1.bf16.msra.mxu0 %v2565
        %2786 = vmatprep.subr.bf16.mxu0 %v2570
        %2787 = vmatpush1.bf16.msra.mxu0 %v2569
        %2788 = vmatprep.subr.bf16.mxu0 %v2574
        %2789 = vmatpush1.bf16.msra.mxu0 %v2573
        %2790 = vmatprep.subr.bf16.mxu0 %v2578
        %2791 = vmatpush1.bf16.msra.mxu0 %v2577
        %2792 = vmatprep.subr.bf16.mxu0 %v2582
        %2793 = vmatpush1.bf16.msra.mxu0 %v2581
        %2794 = vmatprep.subr.bf16.mxu0 %v2586
        %2795 = vmatpush1.bf16.msra.mxu0 %v2585
        %2796 = vmatprep.subr.bf16.mxu0 %v2590
        %2797 = vmatpush1.bf16.msra.mxu0 %v2589
        %2798 = vmatprep.subr.bf16.mxu0 %v2594
        %2799 = vmatpush1.bf16.msra.mxu0 %v2593
        %2800 = vmatprep.mubr.bf16.mxu0 %v1934
        %2801 = vmatmul.mubr.bf16.gmra.mrb[0].mxu0 %v1933
        %v2802 = vpop.f32.mrb[0].mxu0
        %v2803 = vadd.f32 %v2760, %v2802
        %v2804 = vpop.f32.mrb[0].mxu0
        %v2805 = vadd.f32 %v2762, %v2804
        %v2806 = vpop.f32.mrb[0].mxu0
        %v2807 = vadd.f32 %v2764, %v2806
        %v2808 = vpop.f32.mrb[0].mxu0
        %v2809 = vadd.f32 %v2766, %v2808
        %2810 = vdwg.mxu0
        %2811 = vmatprep.subr.bf16.mxu0 %v2472
        %2812 = vmatpush1.bf16.msra.mxu0 %v2471
        %2813 = vmatprep.subr.bf16.mxu0 %v2476
        %2814 = vmatpush1.bf16.msra.mxu0 %v2475
        %2815 = vmatprep.subr.bf16.mxu0 %v2480
        %2816 = vmatpush1.bf16.msra.mxu0 %v2479
        %2817 = vmatprep.subr.bf16.mxu0 %v2484
        %2818 = vmatpush1.bf16.msra.mxu0 %v2483
        %2819 = vmatprep.subr.bf16.mxu0 %v2488
        %2820 = vmatpush1.bf16.msra.mxu0 %v2487
        %2821 = vmatprep.subr.bf16.mxu0 %v2492
        %2822 = vmatpush1.bf16.msra.mxu0 %v2491
        %2823 = vmatprep.subr.bf16.mxu0 %v2496
        %2824 = vmatpush1.bf16.msra.mxu0 %v2495
        %2825 = vmatprep.subr.bf16.mxu0 %v2500
        %2826 = vmatpush1.bf16.msra.mxu0 %v2499
        %2827 = vmatprep.subr.bf16.mxu0 %v2504
        %2828 = vmatpush1.bf16.msra.mxu0 %v2503
        %2829 = vmatprep.subr.bf16.mxu0 %v2508
        %2830 = vmatpush1.bf16.msra.mxu0 %v2507
        %2831 = vmatprep.subr.bf16.mxu0 %v2512
        %2832 = vmatpush1.bf16.msra.mxu0 %v2511
        %2833 = vmatprep.subr.bf16.mxu0 %v2516
        %2834 = vmatpush1.bf16.msra.mxu0 %v2515
        %2835 = vmatprep.subr.bf16.mxu0 %v2520
        %2836 = vmatpush1.bf16.msra.mxu0 %v2519
        %2837 = vmatprep.subr.bf16.mxu0 %v2524
        %2838 = vmatpush1.bf16.msra.mxu0 %v2523
        %2839 = vmatprep.subr.bf16.mxu0 %v2528
        %2840 = vmatpush1.bf16.msra.mxu0 %v2527
        %2841 = vmatprep.subr.bf16.mxu0 %v2532
        %2842 = vmatpush1.bf16.msra.mxu0 %v2531
        %2843 = vmatprep.mubr.bf16.mxu0 %v1932
        %2844 = vmatmul.mubr.bf16.gmra.mrb[0].mxu0 %v1931
        %v2845 = vpop.f32.mrb[0].mxu0
        %v2846 = vadd.f32 %v2076, %v2845
        %v2847 = vpop.f32.mrb[0].mxu0
        %v2848 = vadd.f32 %v2080, %v2847
        %v2849 = vpop.f32.mrb[0].mxu0
        %v2850 = vadd.f32 %v2076, %v2849
        %v2851 = vpop.f32.mrb[0].mxu0
        %v2852 = vadd.f32 %v2080, %v2851
        %2853 = vdwg.mxu0
        %2854 = vmatprep.subr.bf16.mxu0 %v2536
        %2855 = vmatpush1.bf16.msra.mxu0 %v2535
        %2856 = vmatprep.subr.bf16.mxu0 %v2540
        %2857 = vmatpush1.bf16.msra.mxu0 %v2539
        %2858 = vmatprep.subr.bf16.mxu0 %v2544
        %2859 = vmatpush1.bf16.msra.mxu0 %v2543
        %2860 = vmatprep.subr.bf16.mxu0 %v2548
        %2861 = vmatpush1.bf16.msra.mxu0 %v2547
        %2862 = vmatprep.subr.bf16.mxu0 %v2552
        %2863 = vmatpush1.bf16.msra.mxu0 %v2551
        %2864 = vmatprep.subr.bf16.mxu0 %v2556
        %2865 = vmatpush1.bf16.msra.mxu0 %v2555
        %2866 = vmatprep.subr.bf16.mxu0 %v2560
        %2867 = vmatpush1.bf16.msra.mxu0 %v2559
        %2868 = vmatprep.subr.bf16.mxu0 %v2564
        %2869 = vmatpush1.bf16.msra.mxu0 %v2563
        %2870 = vmatprep.subr.bf16.mxu0 %v2568
        %2871 = vmatpush1.bf16.msra.mxu0 %v2567
        %2872 = vmatprep.subr.bf16.mxu0 %v2572
        %2873 = vmatpush1.bf16.msra.mxu0 %v2571
        %2874 = vmatprep.subr.bf16.mxu0 %v2576
        %2875 = vmatpush1.bf16.msra.mxu0 %v2575
        %2876 = vmatprep.subr.bf16.mxu0 %v2580
        %2877 = vmatpush1.bf16.msra.mxu0 %v2579
        %2878 = vmatprep.subr.bf16.mxu0 %v2584
        %2879 = vmatpush1.bf16.msra.mxu0 %v2583
        %2880 = vmatprep.subr.bf16.mxu0 %v2588
        %2881 = vmatpush1.bf16.msra.mxu0 %v2587
        %2882 = vmatprep.subr.bf16.mxu0 %v2592
        %2883 = vmatpush1.bf16.msra.mxu0 %v2591
        %2884 = vmatprep.subr.bf16.mxu0 %v2596
        %2885 = vmatpush1.bf16.msra.mxu0 %v2595
        %2886 = vmatprep.mubr.bf16.mxu0 %v1934
        %2887 = vmatmul.mubr.bf16.gmra.mrb[0].mxu0 %v1933
        %v2888 = vpop.f32.mrb[0].mxu0
        %v2889 = vadd.f32 %v2846, %v2888
        %v2890 = vpop.f32.mrb[0].mxu0
        %v2891 = vadd.f32 %v2848, %v2890
        %v2892 = vpop.f32.mrb[0].mxu0
        %v2893 = vadd.f32 %v2850, %v2892
        %v2894 = vpop.f32.mrb[0].mxu0
        %v2895 = vadd.f32 %v2852, %v2894
        %2896 = vdwg.mxu0
        %v2897 = vadd.f32 %v2803, %v1231
        %v2898 = vadd.f32 %v2805, %v1232
        %v2899 = vadd.f32 %v2889, %v1233
        %v2900 = vadd.f32 %v2891, %v1234
        %v2901 = vadd.f32 %v2807, %v1235
        %v2902 = vadd.f32 %v2809, %v1236
        %v2903 = vadd.f32 %v2893, %v1237
        %v2904 = vadd.f32 %v2895, %v1238
        %v2905 = vld [vmem:[#allocation17] sm:$0xf]
        %v2906 = vld [vmem:[#allocation19] sm:$0xf]
        %v2907 = vadd.f32 %v2897, %v2898
        %v2908 = vadd.f32 %v2907, %v2899
        %v2909 = vadd.f32 %v2908, %v2900
        %2910 = vadd.xlane.f32.xlu0 %v2909
        %v2911 = vpop.xlane.xlu0 %2910
        %v2912 = vadd.f32 %v2901, %v2902
        %v2913 = vadd.f32 %v2912, %v2903
        %v2914 = vadd.f32 %v2913, %v2904
        %2915 = vadd.xlane.f32.xlu0 %v2914
        %v2916 = vpop.xlane.xlu0 %2915
        %v2917 = vrcp.pop 512.0
        %v2918 = vmul.f32 %v2911, %v2917
        %v2919 = vmul.f32 %v2916, %v2917
        %v2920 = vsub.f32 %v2897, %v2918
        %v2921 = vsub.f32 %v2898, %v2918
        %v2922 = vsub.f32 %v2899, %v2918
        %v2923 = vsub.f32 %v2900, %v2918
        %v2924 = vsub.f32 %v2901, %v2919
        %v2925 = vsub.f32 %v2902, %v2919
        %v2926 = vsub.f32 %v2903, %v2919
        %v2927 = vsub.f32 %v2904, %v2919
        %v2928 = vmul.f32 %v2920, %v2920
        %v2929 = vmul.f32 %v2921, %v2921
        %v2930 = vmul.f32 %v2922, %v2922
        %v2931 = vmul.f32 %v2923, %v2923
        %v2932 = vmul.f32 %v2924, %v2924
        %v2933 = vmul.f32 %v2925, %v2925
        %v2934 = vmul.f32 %v2926, %v2926
        %v2935 = vmul.f32 %v2927, %v2927
        %v2936 = vadd.f32 %v2928, %v2929
        %v2937 = vadd.f32 %v2936, %v2930
        %v2938 = vadd.f32 %v2937, %v2931
        %2939 = vadd.xlane.f32.xlu0 %v2938
        %v2940 = vpop.xlane.xlu0 %2939
        %v2941 = vadd.f32 %v2932, %v2933
        %v2942 = vadd.f32 %v2941, %v2934
        %v2943 = vadd.f32 %v2942, %v2935
        %2944 = vadd.xlane.f32.xlu0 %v2943
        %v2945 = vpop.xlane.xlu0 %2944
        %v2946 = vmul.f32 %v2940, %v2917
        %v2947 = vmul.f32 %v2945, %v2917
        %v2948 = vadd.f32 %v2946, 1e-05
        %v2949 = vadd.f32 %v2947, 1e-05
        %v2950 = vrsqrt.pop %v2948
        %v2951 = vrsqrt.pop %v2949
        %v2952 = vmul.f32 %v2920, %v2950
        %v2953 = vmul.f32 %v2921, %v2950
        %v2954 = vmul.f32 %v2922, %v2950
        %v2955 = vmul.f32 %v2923, %v2950
        %v2956 = vmul.f32 %v2924, %v2951
        %v2957 = vmul.f32 %v2925, %v2951
        %v2958 = vmul.f32 %v2926, %v2951
        %v2959 = vmul.f32 %v2927, %v2951
        %v2961 = vlaneseq
        %v2962 = vshrl.u32 %v2961, 7
        %v2963 = vsub.s32 0, %v2962
        %v2964 = vrot.slane %v2905, %v2963
        %v2965 = vlaneseq
        %v2966 = vshrl.u32 %v2965, 7
        %v2967 = vsub.s32 1, %v2966
        %v2968 = vrot.slane %v2905, %v2967
        %v2969 = vlaneseq
        %v2970 = vshrl.u32 %v2969, 7
        %v2971 = vsub.s32 2, %v2970
        %v2972 = vrot.slane %v2905, %v2971
        %v2973 = vlaneseq
        %v2974 = vshrl.u32 %v2973, 7
        %v2975 = vsub.s32 3, %v2974
        %v2976 = vrot.slane %v2905, %v2975
        %v2981 = vmul.f32 %v2952, %v2964
        %v2982 = vmul.f32 %v2953, %v2968
        %v2983 = vmul.f32 %v2954, %v2972
        %v2984 = vmul.f32 %v2955, %v2976
        %v2985 = vmul.f32 %v2956, %v2964
        %v2986 = vmul.f32 %v2957, %v2968
        %v2987 = vmul.f32 %v2958, %v2972
        %v2988 = vmul.f32 %v2959, %v2976
        %v2990 = vlaneseq
        %v2991 = vshrl.u32 %v2990, 7
        %v2992 = vsub.s32 0, %v2991
        %v2993 = vrot.slane %v2906, %v2992
        %v2994 = vlaneseq
        %v2995 = vshrl.u32 %v2994, 7
        %v2996 = vsub.s32 1, %v2995
        %v2997 = vrot.slane %v2906, %v2996
        %v2998 = vlaneseq
        %v2999 = vshrl.u32 %v2998, 7
        %v3000 = vsub.s32 2, %v2999
        %v3001 = vrot.slane %v2906, %v3000
        %v3002 = vlaneseq
        %v3003 = vshrl.u32 %v3002, 7
        %v3004 = vsub.s32 3, %v3003
        %v3005 = vrot.slane %v2906, %v3004
        %v3010 = vadd.f32 %v2981, %v2993
        %v3011 = vadd.f32 %v2982, %v2997
        %v3012 = vadd.f32 %v2983, %v3001
        %v3013 = vadd.f32 %v2984, %v3005
        %v3014 = vadd.f32 %v2985, %v2993
        %v3015 = vadd.f32 %v2986, %v2997
        %v3016 = vadd.f32 %v2987, %v3001
        %v3017 = vadd.f32 %v2988, %v3005
        %v3018 = vpack.c.bf16 %v3014, %v3010
        %v3019 = vpack.c.bf16 %v3015, %v3011
        %v3020 = vpack.c.bf16 %v3016, %v3012
        %v3021 = vpack.c.bf16 %v3017, %v3013
        %v3022 = vld [vmem:[#allocation20] sm:$0xff]
        %v3023 = vld [vmem:[#allocation20 + $0x8] sm:$0xff]
        %v3024 = vld [vmem:[#allocation20 + $0x10] sm:$0xff]
        %v3025 = vld [vmem:[#allocation20 + $0x18] sm:$0xff]
        %v3026 = vld [vmem:[#allocation20 + $0x20] sm:$0xff]
        %v3027 = vld [vmem:[#allocation20 + $0x28] sm:$0xff]
        %v3028 = vld [vmem:[#allocation20 + $0x30] sm:$0xff]
        %v3029 = vld [vmem:[#allocation20 + $0x38] sm:$0xff]
        %v3030 = vld [vmem:[#allocation20 + $0x40] sm:$0xff]
        %v3031 = vld [vmem:[#allocation20 + $0x48] sm:$0xff]
        %v3032 = vld [vmem:[#allocation20 + $0x50] sm:$0xff]
        %v3033 = vld [vmem:[#allocation20 + $0x58] sm:$0xff]
        %v3034 = vld [vmem:[#allocation20 + $0x60] sm:$0xff]
        %v3035 = vld [vmem:[#allocation20 + $0x68] sm:$0xff]
        %v3036 = vld [vmem:[#allocation20 + $0x70] sm:$0xff]
        %v3037 = vld [vmem:[#allocation20 + $0x78] sm:$0xff]
        %v3038 = vld [vmem:[#allocation20 + $0x80] sm:$0xff]
        %v3039 = vld [vmem:[#allocation20 + $0x88] sm:$0xff]
        %v3040 = vld [vmem:[#allocation20 + $0x90] sm:$0xff]
        %v3041 = vld [vmem:[#allocation20 + $0x98] sm:$0xff]
        %v3042 = vld [vmem:[#allocation20 + $0xa0] sm:$0xff]
        %v3043 = vld [vmem:[#allocation20 + $0xa8] sm:$0xff]
        %v3044 = vld [vmem:[#allocation20 + $0xb0] sm:$0xff]
        %v3045 = vld [vmem:[#allocation20 + $0xb8] sm:$0xff]
        %v3046 = vld [vmem:[#allocation20 + $0xc0] sm:$0xff]
        %v3047 = vld [vmem:[#allocation20 + $0xc8] sm:$0xff]
        %v3048 = vld [vmem:[#allocation20 + $0xd0] sm:$0xff]
        %v3049 = vld [vmem:[#allocation20 + $0xd8] sm:$0xff]
        %v3050 = vld [vmem:[#allocation20 + $0xe0] sm:$0xff]
        %v3051 = vld [vmem:[#allocation20 + $0xe8] sm:$0xff]
        %v3052 = vld [vmem:[#allocation20 + $0xf0] sm:$0xff]
        %v3053 = vld [vmem:[#allocation20 + $0xf8] sm:$0xff]
        %v3054 = vld [vmem:[#allocation20 + $0x100] sm:$0xff]
        %v3055 = vld [vmem:[#allocation20 + $0x108] sm:$0xff]
        %v3056 = vld [vmem:[#allocation20 + $0x110] sm:$0xff]
        %v3057 = vld [vmem:[#allocation20 + $0x118] sm:$0xff]
        %v3058 = vld [vmem:[#allocation20 + $0x120] sm:$0xff]
        %v3059 = vld [vmem:[#allocation20 + $0x128] sm:$0xff]
        %v3060 = vld [vmem:[#allocation20 + $0x130] sm:$0xff]
        %v3061 = vld [vmem:[#allocation20 + $0x138] sm:$0xff]
        %v3062 = vld [vmem:[#allocation20 + $0x140] sm:$0xff]
        %v3063 = vld [vmem:[#allocation20 + $0x148] sm:$0xff]
        %v3064 = vld [vmem:[#allocation20 + $0x150] sm:$0xff]
        %v3065 = vld [vmem:[#allocation20 + $0x158] sm:$0xff]
        %v3066 = vld [vmem:[#allocation20 + $0x160] sm:$0xff]
        %v3067 = vld [vmem:[#allocation20 + $0x168] sm:$0xff]
        %v3068 = vld [vmem:[#allocation20 + $0x170] sm:$0xff]
        %v3069 = vld [vmem:[#allocation20 + $0x178] sm:$0xff]
        %v3070 = vld [vmem:[#allocation20 + $0x180] sm:$0xff]
        %v3071 = vld [vmem:[#allocation20 + $0x188] sm:$0xff]
        %v3072 = vld [vmem:[#allocation20 + $0x190] sm:$0xff]
        %v3073 = vld [vmem:[#allocation20 + $0x198] sm:$0xff]
        %v3074 = vld [vmem:[#allocation20 + $0x1a0] sm:$0xff]
        %v3075 = vld [vmem:[#allocation20 + $0x1a8] sm:$0xff]
        %v3076 = vld [vmem:[#allocation20 + $0x1b0] sm:$0xff]
        %v3077 = vld [vmem:[#allocation20 + $0x1b8] sm:$0xff]
        %v3078 = vld [vmem:[#allocation20 + $0x1c0] sm:$0xff]
        %v3079 = vld [vmem:[#allocation20 + $0x1c8] sm:$0xff]
        %v3080 = vld [vmem:[#allocation20 + $0x1d0] sm:$0xff]
        %v3081 = vld [vmem:[#allocation20 + $0x1d8] sm:$0xff]
        %v3082 = vld [vmem:[#allocation20 + $0x1e0] sm:$0xff]
        %v3083 = vld [vmem:[#allocation20 + $0x1e8] sm:$0xff]
        %v3084 = vld [vmem:[#allocation20 + $0x1f0] sm:$0xff]
        %v3085 = vld [vmem:[#allocation20 + $0x1f8] sm:$0xff]
        %v3086 = vld [vmem:[#allocation20 + $0x200] sm:$0xff]
        %v3087 = vld [vmem:[#allocation20 + $0x208] sm:$0xff]
        %v3088 = vld [vmem:[#allocation20 + $0x210] sm:$0xff]
        %v3089 = vld [vmem:[#allocation20 + $0x218] sm:$0xff]
        %v3090 = vld [vmem:[#allocation20 + $0x220] sm:$0xff]
        %v3091 = vld [vmem:[#allocation20 + $0x228] sm:$0xff]
        %v3092 = vld [vmem:[#allocation20 + $0x230] sm:$0xff]
        %v3093 = vld [vmem:[#allocation20 + $0x238] sm:$0xff]
        %v3094 = vld [vmem:[#allocation20 + $0x240] sm:$0xff]
        %v3095 = vld [vmem:[#allocation20 + $0x248] sm:$0xff]
        %v3096 = vld [vmem:[#allocation20 + $0x250] sm:$0xff]
        %v3097 = vld [vmem:[#allocation20 + $0x258] sm:$0xff]
        %v3098 = vld [vmem:[#allocation20 + $0x260] sm:$0xff]
        %v3099 = vld [vmem:[#allocation20 + $0x268] sm:$0xff]
        %v3100 = vld [vmem:[#allocation20 + $0x270] sm:$0xff]
        %v3101 = vld [vmem:[#allocation20 + $0x278] sm:$0xff]
        %v3102 = vld [vmem:[#allocation20 + $0x280] sm:$0xff]
        %v3103 = vld [vmem:[#allocation20 + $0x288] sm:$0xff]
        %v3104 = vld [vmem:[#allocation20 + $0x290] sm:$0xff]
        %v3105 = vld [vmem:[#allocation20 + $0x298] sm:$0xff]
        %v3106 = vld [vmem:[#allocation20 + $0x2a0] sm:$0xff]
        %v3107 = vld [vmem:[#allocation20 + $0x2a8] sm:$0xff]
        %v3108 = vld [vmem:[#allocation20 + $0x2b0] sm:$0xff]
        %v3109 = vld [vmem:[#allocation20 + $0x2b8] sm:$0xff]
        %v3110 = vld [vmem:[#allocation20 + $0x2c0] sm:$0xff]
        %v3111 = vld [vmem:[#allocation20 + $0x2c8] sm:$0xff]
        %v3112 = vld [vmem:[#allocation20 + $0x2d0] sm:$0xff]
        %v3113 = vld [vmem:[#allocation20 + $0x2d8] sm:$0xff]
        %v3114 = vld [vmem:[#allocation20 + $0x2e0] sm:$0xff]
        %v3115 = vld [vmem:[#allocation20 + $0x2e8] sm:$0xff]
        %v3116 = vld [vmem:[#allocation20 + $0x2f0] sm:$0xff]
        %v3117 = vld [vmem:[#allocation20 + $0x2f8] sm:$0xff]
        %v3118 = vld [vmem:[#allocation20 + $0x300] sm:$0xff]
        %v3119 = vld [vmem:[#allocation20 + $0x308] sm:$0xff]
        %v3120 = vld [vmem:[#allocation20 + $0x310] sm:$0xff]
        %v3121 = vld [vmem:[#allocation20 + $0x318] sm:$0xff]
        %v3122 = vld [vmem:[#allocation20 + $0x320] sm:$0xff]
        %v3123 = vld [vmem:[#allocation20 + $0x328] sm:$0xff]
        %v3124 = vld [vmem:[#allocation20 + $0x330] sm:$0xff]
        %v3125 = vld [vmem:[#allocation20 + $0x338] sm:$0xff]
        %v3126 = vld [vmem:[#allocation20 + $0x340] sm:$0xff]
        %v3127 = vld [vmem:[#allocation20 + $0x348] sm:$0xff]
        %v3128 = vld [vmem:[#allocation20 + $0x350] sm:$0xff]
        %v3129 = vld [vmem:[#allocation20 + $0x358] sm:$0xff]
        %v3130 = vld [vmem:[#allocation20 + $0x360] sm:$0xff]
        %v3131 = vld [vmem:[#allocation20 + $0x368] sm:$0xff]
        %v3132 = vld [vmem:[#allocation20 + $0x370] sm:$0xff]
        %v3133 = vld [vmem:[#allocation20 + $0x378] sm:$0xff]
        %v3134 = vld [vmem:[#allocation20 + $0x380] sm:$0xff]
        %v3135 = vld [vmem:[#allocation20 + $0x388] sm:$0xff]
        %v3136 = vld [vmem:[#allocation20 + $0x390] sm:$0xff]
        %v3137 = vld [vmem:[#allocation20 + $0x398] sm:$0xff]
        %v3138 = vld [vmem:[#allocation20 + $0x3a0] sm:$0xff]
        %v3139 = vld [vmem:[#allocation20 + $0x3a8] sm:$0xff]
        %v3140 = vld [vmem:[#allocation20 + $0x3b0] sm:$0xff]
        %v3141 = vld [vmem:[#allocation20 + $0x3b8] sm:$0xff]
        %v3142 = vld [vmem:[#allocation20 + $0x3c0] sm:$0xff]
        %v3143 = vld [vmem:[#allocation20 + $0x3c8] sm:$0xff]
        %v3144 = vld [vmem:[#allocation20 + $0x3d0] sm:$0xff]
        %v3145 = vld [vmem:[#allocation20 + $0x3d8] sm:$0xff]
        %v3146 = vld [vmem:[#allocation20 + $0x3e0] sm:$0xff]
        %v3147 = vld [vmem:[#allocation20 + $0x3e8] sm:$0xff]
        %v3148 = vld [vmem:[#allocation20 + $0x3f0] sm:$0xff]
        %v3149 = vld [vmem:[#allocation20 + $0x3f8] sm:$0xff]
        %v3150 = vld [vmem:[#allocation20 + $0x400] sm:$0xff]
        %v3151 = vld [vmem:[#allocation20 + $0x408] sm:$0xff]
        %v3152 = vld [vmem:[#allocation20 + $0x410] sm:$0xff]
        %v3153 = vld [vmem:[#allocation20 + $0x418] sm:$0xff]
        %v3154 = vld [vmem:[#allocation20 + $0x420] sm:$0xff]
        %v3155 = vld [vmem:[#allocation20 + $0x428] sm:$0xff]
        %v3156 = vld [vmem:[#allocation20 + $0x430] sm:$0xff]
        %v3157 = vld [vmem:[#allocation20 + $0x438] sm:$0xff]
        %v3158 = vld [vmem:[#allocation20 + $0x440] sm:$0xff]
        %v3159 = vld [vmem:[#allocation20 + $0x448] sm:$0xff]
        %v3160 = vld [vmem:[#allocation20 + $0x450] sm:$0xff]
        %v3161 = vld [vmem:[#allocation20 + $0x458] sm:$0xff]
        %v3162 = vld [vmem:[#allocation20 + $0x460] sm:$0xff]
        %v3163 = vld [vmem:[#allocation20 + $0x468] sm:$0xff]
        %v3164 = vld [vmem:[#allocation20 + $0x470] sm:$0xff]
        %v3165 = vld [vmem:[#allocation20 + $0x478] sm:$0xff]
        %v3166 = vld [vmem:[#allocation20 + $0x480] sm:$0xff]
        %v3167 = vld [vmem:[#allocation20 + $0x488] sm:$0xff]
        %v3168 = vld [vmem:[#allocation20 + $0x490] sm:$0xff]
        %v3169 = vld [vmem:[#allocation20 + $0x498] sm:$0xff]
        %v3170 = vld [vmem:[#allocation20 + $0x4a0] sm:$0xff]
        %v3171 = vld [vmem:[#allocation20 + $0x4a8] sm:$0xff]
        %v3172 = vld [vmem:[#allocation20 + $0x4b0] sm:$0xff]
        %v3173 = vld [vmem:[#allocation20 + $0x4b8] sm:$0xff]
        %v3174 = vld [vmem:[#allocation20 + $0x4c0] sm:$0xff]
        %v3175 = vld [vmem:[#allocation20 + $0x4c8] sm:$0xff]
        %v3176 = vld [vmem:[#allocation20 + $0x4d0] sm:$0xff]
        %v3177 = vld [vmem:[#allocation20 + $0x4d8] sm:$0xff]
        %v3178 = vld [vmem:[#allocation20 + $0x4e0] sm:$0xff]
        %v3179 = vld [vmem:[#allocation20 + $0x4e8] sm:$0xff]
        %v3180 = vld [vmem:[#allocation20 + $0x4f0] sm:$0xff]
        %v3181 = vld [vmem:[#allocation20 + $0x4f8] sm:$0xff]
        %v3182 = vld [vmem:[#allocation20 + $0x500] sm:$0xff]
        %v3183 = vld [vmem:[#allocation20 + $0x508] sm:$0xff]
        %v3184 = vld [vmem:[#allocation20 + $0x510] sm:$0xff]
        %v3185 = vld [vmem:[#allocation20 + $0x518] sm:$0xff]
        %v3186 = vld [vmem:[#allocation20 + $0x520] sm:$0xff]
        %v3187 = vld [vmem:[#allocation20 + $0x528] sm:$0xff]
        %v3188 = vld [vmem:[#allocation20 + $0x530] sm:$0xff]
        %v3189 = vld [vmem:[#allocation20 + $0x538] sm:$0xff]
        %v3190 = vld [vmem:[#allocation20 + $0x540] sm:$0xff]
        %v3191 = vld [vmem:[#allocation20 + $0x548] sm:$0xff]
        %v3192 = vld [vmem:[#allocation20 + $0x550] sm:$0xff]
        %v3193 = vld [vmem:[#allocation20 + $0x558] sm:$0xff]
        %v3194 = vld [vmem:[#allocation20 + $0x560] sm:$0xff]
        %v3195 = vld [vmem:[#allocation20 + $0x568] sm:$0xff]
        %v3196 = vld [vmem:[#allocation20 + $0x570] sm:$0xff]
        %v3197 = vld [vmem:[#allocation20 + $0x578] sm:$0xff]
        %v3198 = vld [vmem:[#allocation20 + $0x580] sm:$0xff]
        %v3199 = vld [vmem:[#allocation20 + $0x588] sm:$0xff]
        %v3200 = vld [vmem:[#allocation20 + $0x590] sm:$0xff]
        %v3201 = vld [vmem:[#allocation20 + $0x598] sm:$0xff]
        %v3202 = vld [vmem:[#allocation20 + $0x5a0] sm:$0xff]
        %v3203 = vld [vmem:[#allocation20 + $0x5a8] sm:$0xff]
        %v3204 = vld [vmem:[#allocation20 + $0x5b0] sm:$0xff]
        %v3205 = vld [vmem:[#allocation20 + $0x5b8] sm:$0xff]
        %v3206 = vld [vmem:[#allocation20 + $0x5c0] sm:$0xff]
        %v3207 = vld [vmem:[#allocation20 + $0x5c8] sm:$0xff]
        %v3208 = vld [vmem:[#allocation20 + $0x5d0] sm:$0xff]
        %v3209 = vld [vmem:[#allocation20 + $0x5d8] sm:$0xff]
        %v3210 = vld [vmem:[#allocation20 + $0x5e0] sm:$0xff]
        %v3211 = vld [vmem:[#allocation20 + $0x5e8] sm:$0xff]
        %v3212 = vld [vmem:[#allocation20 + $0x5f0] sm:$0xff]
        %v3213 = vld [vmem:[#allocation20 + $0x5f8] sm:$0xff]
        %v3214 = vld [vmem:[#allocation20 + $0x600] sm:$0xff]
        %v3215 = vld [vmem:[#allocation20 + $0x608] sm:$0xff]
        %v3216 = vld [vmem:[#allocation20 + $0x610] sm:$0xff]
        %v3217 = vld [vmem:[#allocation20 + $0x618] sm:$0xff]
        %v3218 = vld [vmem:[#allocation20 + $0x620] sm:$0xff]
        %v3219 = vld [vmem:[#allocation20 + $0x628] sm:$0xff]
        %v3220 = vld [vmem:[#allocation20 + $0x630] sm:$0xff]
        %v3221 = vld [vmem:[#allocation20 + $0x638] sm:$0xff]
        %v3222 = vld [vmem:[#allocation20 + $0x640] sm:$0xff]
        %v3223 = vld [vmem:[#allocation20 + $0x648] sm:$0xff]
        %v3224 = vld [vmem:[#allocation20 + $0x650] sm:$0xff]
        %v3225 = vld [vmem:[#allocation20 + $0x658] sm:$0xff]
        %v3226 = vld [vmem:[#allocation20 + $0x660] sm:$0xff]
        %v3227 = vld [vmem:[#allocation20 + $0x668] sm:$0xff]
        %v3228 = vld [vmem:[#allocation20 + $0x670] sm:$0xff]
        %v3229 = vld [vmem:[#allocation20 + $0x678] sm:$0xff]
        %v3230 = vld [vmem:[#allocation20 + $0x680] sm:$0xff]
        %v3231 = vld [vmem:[#allocation20 + $0x688] sm:$0xff]
        %v3232 = vld [vmem:[#allocation20 + $0x690] sm:$0xff]
        %v3233 = vld [vmem:[#allocation20 + $0x698] sm:$0xff]
        %v3234 = vld [vmem:[#allocation20 + $0x6a0] sm:$0xff]
        %v3235 = vld [vmem:[#allocation20 + $0x6a8] sm:$0xff]
        %v3236 = vld [vmem:[#allocation20 + $0x6b0] sm:$0xff]
        %v3237 = vld [vmem:[#allocation20 + $0x6b8] sm:$0xff]
        %v3238 = vld [vmem:[#allocation20 + $0x6c0] sm:$0xff]
        %v3239 = vld [vmem:[#allocation20 + $0x6c8] sm:$0xff]
        %v3240 = vld [vmem:[#allocation20 + $0x6d0] sm:$0xff]
        %v3241 = vld [vmem:[#allocation20 + $0x6d8] sm:$0xff]
        %v3242 = vld [vmem:[#allocation20 + $0x6e0] sm:$0xff]
        %v3243 = vld [vmem:[#allocation20 + $0x6e8] sm:$0xff]
        %v3244 = vld [vmem:[#allocation20 + $0x6f0] sm:$0xff]
        %v3245 = vld [vmem:[#allocation20 + $0x6f8] sm:$0xff]
        %v3246 = vld [vmem:[#allocation20 + $0x700] sm:$0xff]
        %v3247 = vld [vmem:[#allocation20 + $0x708] sm:$0xff]
        %v3248 = vld [vmem:[#allocation20 + $0x710] sm:$0xff]
        %v3249 = vld [vmem:[#allocation20 + $0x718] sm:$0xff]
        %v3250 = vld [vmem:[#allocation20 + $0x720] sm:$0xff]
        %v3251 = vld [vmem:[#allocation20 + $0x728] sm:$0xff]
        %v3252 = vld [vmem:[#allocation20 + $0x730] sm:$0xff]
        %v3253 = vld [vmem:[#allocation20 + $0x738] sm:$0xff]
        %v3254 = vld [vmem:[#allocation20 + $0x740] sm:$0xff]
        %v3255 = vld [vmem:[#allocation20 + $0x748] sm:$0xff]
        %v3256 = vld [vmem:[#allocation20 + $0x750] sm:$0xff]
        %v3257 = vld [vmem:[#allocation20 + $0x758] sm:$0xff]
        %v3258 = vld [vmem:[#allocation20 + $0x760] sm:$0xff]
        %v3259 = vld [vmem:[#allocation20 + $0x768] sm:$0xff]
        %v3260 = vld [vmem:[#allocation20 + $0x770] sm:$0xff]
        %v3261 = vld [vmem:[#allocation20 + $0x778] sm:$0xff]
        %v3262 = vld [vmem:[#allocation20 + $0x780] sm:$0xff]
        %v3263 = vld [vmem:[#allocation20 + $0x788] sm:$0xff]
        %v3264 = vld [vmem:[#allocation20 + $0x790] sm:$0xff]
        %v3265 = vld [vmem:[#allocation20 + $0x798] sm:$0xff]
        %v3266 = vld [vmem:[#allocation20 + $0x7a0] sm:$0xff]
        %v3267 = vld [vmem:[#allocation20 + $0x7a8] sm:$0xff]
        %v3268 = vld [vmem:[#allocation20 + $0x7b0] sm:$0xff]
        %v3269 = vld [vmem:[#allocation20 + $0x7b8] sm:$0xff]
        %v3270 = vld [vmem:[#allocation20 + $0x7c0] sm:$0xff]
        %v3271 = vld [vmem:[#allocation20 + $0x7c8] sm:$0xff]
        %v3272 = vld [vmem:[#allocation20 + $0x7d0] sm:$0xff]
        %v3273 = vld [vmem:[#allocation20 + $0x7d8] sm:$0xff]
        %v3274 = vld [vmem:[#allocation20 + $0x7e0] sm:$0xff]
        %v3275 = vld [vmem:[#allocation20 + $0x7e8] sm:$0xff]
        %v3276 = vld [vmem:[#allocation20 + $0x7f0] sm:$0xff]
        %v3277 = vld [vmem:[#allocation20 + $0x7f8] sm:$0xff]
        %v3278 = vld [vmem:[#allocation20 + $0x800] sm:$0xff]
        %v3279 = vld [vmem:[#allocation20 + $0x808] sm:$0xff]
        %v3280 = vld [vmem:[#allocation20 + $0x810] sm:$0xff]
        %v3281 = vld [vmem:[#allocation20 + $0x818] sm:$0xff]
        %v3282 = vld [vmem:[#allocation20 + $0x820] sm:$0xff]
        %v3283 = vld [vmem:[#allocation20 + $0x828] sm:$0xff]
        %v3284 = vld [vmem:[#allocation20 + $0x830] sm:$0xff]
        %v3285 = vld [vmem:[#allocation20 + $0x838] sm:$0xff]
        %v3286 = vld [vmem:[#allocation20 + $0x840] sm:$0xff]
        %v3287 = vld [vmem:[#allocation20 + $0x848] sm:$0xff]
        %v3288 = vld [vmem:[#allocation20 + $0x850] sm:$0xff]
        %v3289 = vld [vmem:[#allocation20 + $0x858] sm:$0xff]
        %v3290 = vld [vmem:[#allocation20 + $0x860] sm:$0xff]
        %v3291 = vld [vmem:[#allocation20 + $0x868] sm:$0xff]
        %v3292 = vld [vmem:[#allocation20 + $0x870] sm:$0xff]
        %v3293 = vld [vmem:[#allocation20 + $0x878] sm:$0xff]
        %v3294 = vld [vmem:[#allocation20 + $0x880] sm:$0xff]
        %v3295 = vld [vmem:[#allocation20 + $0x888] sm:$0xff]
        %v3296 = vld [vmem:[#allocation20 + $0x890] sm:$0xff]
        %v3297 = vld [vmem:[#allocation20 + $0x898] sm:$0xff]
        %v3298 = vld [vmem:[#allocation20 + $0x8a0] sm:$0xff]
        %v3299 = vld [vmem:[#allocation20 + $0x8a8] sm:$0xff]
        %v3300 = vld [vmem:[#allocation20 + $0x8b0] sm:$0xff]
        %v3301 = vld [vmem:[#allocation20 + $0x8b8] sm:$0xff]
        %v3302 = vld [vmem:[#allocation20 + $0x8c0] sm:$0xff]
        %v3303 = vld [vmem:[#allocation20 + $0x8c8] sm:$0xff]
        %v3304 = vld [vmem:[#allocation20 + $0x8d0] sm:$0xff]
        %v3305 = vld [vmem:[#allocation20 + $0x8d8] sm:$0xff]
        %v3306 = vld [vmem:[#allocation20 + $0x8e0] sm:$0xff]
        %v3307 = vld [vmem:[#allocation20 + $0x8e8] sm:$0xff]
        %v3308 = vld [vmem:[#allocation20 + $0x8f0] sm:$0xff]
        %v3309 = vld [vmem:[#allocation20 + $0x8f8] sm:$0xff]
        %v3310 = vld [vmem:[#allocation20 + $0x900] sm:$0xff]
        %v3311 = vld [vmem:[#allocation20 + $0x908] sm:$0xff]
        %v3312 = vld [vmem:[#allocation20 + $0x910] sm:$0xff]
        %v3313 = vld [vmem:[#allocation20 + $0x918] sm:$0xff]
        %v3314 = vld [vmem:[#allocation20 + $0x920] sm:$0xff]
        %v3315 = vld [vmem:[#allocation20 + $0x928] sm:$0xff]
        %v3316 = vld [vmem:[#allocation20 + $0x930] sm:$0xff]
        %v3317 = vld [vmem:[#allocation20 + $0x938] sm:$0xff]
        %v3318 = vld [vmem:[#allocation20 + $0x940] sm:$0xff]
        %v3319 = vld [vmem:[#allocation20 + $0x948] sm:$0xff]
        %v3320 = vld [vmem:[#allocation20 + $0x950] sm:$0xff]
        %v3321 = vld [vmem:[#allocation20 + $0x958] sm:$0xff]
        %v3322 = vld [vmem:[#allocation20 + $0x960] sm:$0xff]
        %v3323 = vld [vmem:[#allocation20 + $0x968] sm:$0xff]
        %v3324 = vld [vmem:[#allocation20 + $0x970] sm:$0xff]
        %v3325 = vld [vmem:[#allocation20 + $0x978] sm:$0xff]
        %v3326 = vld [vmem:[#allocation20 + $0x980] sm:$0xff]
        %v3327 = vld [vmem:[#allocation20 + $0x988] sm:$0xff]
        %v3328 = vld [vmem:[#allocation20 + $0x990] sm:$0xff]
        %v3329 = vld [vmem:[#allocation20 + $0x998] sm:$0xff]
        %v3330 = vld [vmem:[#allocation20 + $0x9a0] sm:$0xff]
        %v3331 = vld [vmem:[#allocation20 + $0x9a8] sm:$0xff]
        %v3332 = vld [vmem:[#allocation20 + $0x9b0] sm:$0xff]
        %v3333 = vld [vmem:[#allocation20 + $0x9b8] sm:$0xff]
        %v3334 = vld [vmem:[#allocation20 + $0x9c0] sm:$0xff]
        %v3335 = vld [vmem:[#allocation20 + $0x9c8] sm:$0xff]
        %v3336 = vld [vmem:[#allocation20 + $0x9d0] sm:$0xff]
        %v3337 = vld [vmem:[#allocation20 + $0x9d8] sm:$0xff]
        %v3338 = vld [vmem:[#allocation20 + $0x9e0] sm:$0xff]
        %v3339 = vld [vmem:[#allocation20 + $0x9e8] sm:$0xff]
        %v3340 = vld [vmem:[#allocation20 + $0x9f0] sm:$0xff]
        %v3341 = vld [vmem:[#allocation20 + $0x9f8] sm:$0xff]
        %v3342 = vld [vmem:[#allocation20 + $0xa00] sm:$0xff]
        %v3343 = vld [vmem:[#allocation20 + $0xa08] sm:$0xff]
        %v3344 = vld [vmem:[#allocation20 + $0xa10] sm:$0xff]
        %v3345 = vld [vmem:[#allocation20 + $0xa18] sm:$0xff]
        %v3346 = vld [vmem:[#allocation20 + $0xa20] sm:$0xff]
        %v3347 = vld [vmem:[#allocation20 + $0xa28] sm:$0xff]
        %v3348 = vld [vmem:[#allocation20 + $0xa30] sm:$0xff]
        %v3349 = vld [vmem:[#allocation20 + $0xa38] sm:$0xff]
        %v3350 = vld [vmem:[#allocation20 + $0xa40] sm:$0xff]
        %v3351 = vld [vmem:[#allocation20 + $0xa48] sm:$0xff]
        %v3352 = vld [vmem:[#allocation20 + $0xa50] sm:$0xff]
        %v3353 = vld [vmem:[#allocation20 + $0xa58] sm:$0xff]
        %v3354 = vld [vmem:[#allocation20 + $0xa60] sm:$0xff]
        %v3355 = vld [vmem:[#allocation20 + $0xa68] sm:$0xff]
        %v3356 = vld [vmem:[#allocation20 + $0xa70] sm:$0xff]
        %v3357 = vld [vmem:[#allocation20 + $0xa78] sm:$0xff]
        %v3358 = vld [vmem:[#allocation20 + $0xa80] sm:$0xff]
        %v3359 = vld [vmem:[#allocation20 + $0xa88] sm:$0xff]
        %v3360 = vld [vmem:[#allocation20 + $0xa90] sm:$0xff]
        %v3361 = vld [vmem:[#allocation20 + $0xa98] sm:$0xff]
        %v3362 = vld [vmem:[#allocation20 + $0xaa0] sm:$0xff]
        %v3363 = vld [vmem:[#allocation20 + $0xaa8] sm:$0xff]
        %v3364 = vld [vmem:[#allocation20 + $0xab0] sm:$0xff]
        %v3365 = vld [vmem:[#allocation20 + $0xab8] sm:$0xff]
        %v3366 = vld [vmem:[#allocation20 + $0xac0] sm:$0xff]
        %v3367 = vld [vmem:[#allocation20 + $0xac8] sm:$0xff]
        %v3368 = vld [vmem:[#allocation20 + $0xad0] sm:$0xff]
        %v3369 = vld [vmem:[#allocation20 + $0xad8] sm:$0xff]
        %v3370 = vld [vmem:[#allocation20 + $0xae0] sm:$0xff]
        %v3371 = vld [vmem:[#allocation20 + $0xae8] sm:$0xff]
        %v3372 = vld [vmem:[#allocation20 + $0xaf0] sm:$0xff]
        %v3373 = vld [vmem:[#allocation20 + $0xaf8] sm:$0xff]
        %v3374 = vld [vmem:[#allocation20 + $0xb00] sm:$0xff]
        %v3375 = vld [vmem:[#allocation20 + $0xb08] sm:$0xff]
        %v3376 = vld [vmem:[#allocation20 + $0xb10] sm:$0xff]
        %v3377 = vld [vmem:[#allocation20 + $0xb18] sm:$0xff]
        %v3378 = vld [vmem:[#allocation20 + $0xb20] sm:$0xff]
        %v3379 = vld [vmem:[#allocation20 + $0xb28] sm:$0xff]
        %v3380 = vld [vmem:[#allocation20 + $0xb30] sm:$0xff]
        %v3381 = vld [vmem:[#allocation20 + $0xb38] sm:$0xff]
        %v3382 = vld [vmem:[#allocation20 + $0xb40] sm:$0xff]
        %v3383 = vld [vmem:[#allocation20 + $0xb48] sm:$0xff]
        %v3384 = vld [vmem:[#allocation20 + $0xb50] sm:$0xff]
        %v3385 = vld [vmem:[#allocation20 + $0xb58] sm:$0xff]
        %v3386 = vld [vmem:[#allocation20 + $0xb60] sm:$0xff]
        %v3387 = vld [vmem:[#allocation20 + $0xb68] sm:$0xff]
        %v3388 = vld [vmem:[#allocation20 + $0xb70] sm:$0xff]
        %v3389 = vld [vmem:[#allocation20 + $0xb78] sm:$0xff]
        %v3390 = vld [vmem:[#allocation20 + $0xb80] sm:$0xff]
        %v3391 = vld [vmem:[#allocation20 + $0xb88] sm:$0xff]
        %v3392 = vld [vmem:[#allocation20 + $0xb90] sm:$0xff]
        %v3393 = vld [vmem:[#allocation20 + $0xb98] sm:$0xff]
        %v3394 = vld [vmem:[#allocation20 + $0xba0] sm:$0xff]
        %v3395 = vld [vmem:[#allocation20 + $0xba8] sm:$0xff]
        %v3396 = vld [vmem:[#allocation20 + $0xbb0] sm:$0xff]
        %v3397 = vld [vmem:[#allocation20 + $0xbb8] sm:$0xff]
        %v3398 = vld [vmem:[#allocation20 + $0xbc0] sm:$0xff]
        %v3399 = vld [vmem:[#allocation20 + $0xbc8] sm:$0xff]
        %v3400 = vld [vmem:[#allocation20 + $0xbd0] sm:$0xff]
        %v3401 = vld [vmem:[#allocation20 + $0xbd8] sm:$0xff]
        %v3402 = vld [vmem:[#allocation20 + $0xbe0] sm:$0xff]
        %v3403 = vld [vmem:[#allocation20 + $0xbe8] sm:$0xff]
        %v3404 = vld [vmem:[#allocation20 + $0xbf0] sm:$0xff]
        %v3405 = vld [vmem:[#allocation20 + $0xbf8] sm:$0xff]
        %v3406 = vld [vmem:[#allocation20 + $0xc00] sm:$0xff]
        %v3407 = vld [vmem:[#allocation20 + $0xc08] sm:$0xff]
        %v3408 = vld [vmem:[#allocation20 + $0xc10] sm:$0xff]
        %v3409 = vld [vmem:[#allocation20 + $0xc18] sm:$0xff]
        %v3410 = vld [vmem:[#allocation20 + $0xc20] sm:$0xff]
        %v3411 = vld [vmem:[#allocation20 + $0xc28] sm:$0xff]
        %v3412 = vld [vmem:[#allocation20 + $0xc30] sm:$0xff]
        %v3413 = vld [vmem:[#allocation20 + $0xc38] sm:$0xff]
        %v3414 = vld [vmem:[#allocation20 + $0xc40] sm:$0xff]
        %v3415 = vld [vmem:[#allocation20 + $0xc48] sm:$0xff]
        %v3416 = vld [vmem:[#allocation20 + $0xc50] sm:$0xff]
        %v3417 = vld [vmem:[#allocation20 + $0xc58] sm:$0xff]
        %v3418 = vld [vmem:[#allocation20 + $0xc60] sm:$0xff]
        %v3419 = vld [vmem:[#allocation20 + $0xc68] sm:$0xff]
        %v3420 = vld [vmem:[#allocation20 + $0xc70] sm:$0xff]
        %v3421 = vld [vmem:[#allocation20 + $0xc78] sm:$0xff]
        %v3422 = vld [vmem:[#allocation20 + $0xc80] sm:$0xff]
        %v3423 = vld [vmem:[#allocation20 + $0xc88] sm:$0xff]
        %v3424 = vld [vmem:[#allocation20 + $0xc90] sm:$0xff]
        %v3425 = vld [vmem:[#allocation20 + $0xc98] sm:$0xff]
        %v3426 = vld [vmem:[#allocation20 + $0xca0] sm:$0xff]
        %v3427 = vld [vmem:[#allocation20 + $0xca8] sm:$0xff]
        %v3428 = vld [vmem:[#allocation20 + $0xcb0] sm:$0xff]
        %v3429 = vld [vmem:[#allocation20 + $0xcb8] sm:$0xff]
        %v3430 = vld [vmem:[#allocation20 + $0xcc0] sm:$0xff]
        %v3431 = vld [vmem:[#allocation20 + $0xcc8] sm:$0xff]
        %v3432 = vld [vmem:[#allocation20 + $0xcd0] sm:$0xff]
        %v3433 = vld [vmem:[#allocation20 + $0xcd8] sm:$0xff]
        %v3434 = vld [vmem:[#allocation20 + $0xce0] sm:$0xff]
        %v3435 = vld [vmem:[#allocation20 + $0xce8] sm:$0xff]
        %v3436 = vld [vmem:[#allocation20 + $0xcf0] sm:$0xff]
        %v3437 = vld [vmem:[#allocation20 + $0xcf8] sm:$0xff]
        %v3438 = vld [vmem:[#allocation20 + $0xd00] sm:$0xff]
        %v3439 = vld [vmem:[#allocation20 + $0xd08] sm:$0xff]
        %v3440 = vld [vmem:[#allocation20 + $0xd10] sm:$0xff]
        %v3441 = vld [vmem:[#allocation20 + $0xd18] sm:$0xff]
        %v3442 = vld [vmem:[#allocation20 + $0xd20] sm:$0xff]
        %v3443 = vld [vmem:[#allocation20 + $0xd28] sm:$0xff]
        %v3444 = vld [vmem:[#allocation20 + $0xd30] sm:$0xff]
        %v3445 = vld [vmem:[#allocation20 + $0xd38] sm:$0xff]
        %v3446 = vld [vmem:[#allocation20 + $0xd40] sm:$0xff]
        %v3447 = vld [vmem:[#allocation20 + $0xd48] sm:$0xff]
        %v3448 = vld [vmem:[#allocation20 + $0xd50] sm:$0xff]
        %v3449 = vld [vmem:[#allocation20 + $0xd58] sm:$0xff]
        %v3450 = vld [vmem:[#allocation20 + $0xd60] sm:$0xff]
        %v3451 = vld [vmem:[#allocation20 + $0xd68] sm:$0xff]
        %v3452 = vld [vmem:[#allocation20 + $0xd70] sm:$0xff]
        %v3453 = vld [vmem:[#allocation20 + $0xd78] sm:$0xff]
        %v3454 = vld [vmem:[#allocation20 + $0xd80] sm:$0xff]
        %v3455 = vld [vmem:[#allocation20 + $0xd88] sm:$0xff]
        %v3456 = vld [vmem:[#allocation20 + $0xd90] sm:$0xff]
        %v3457 = vld [vmem:[#allocation20 + $0xd98] sm:$0xff]
        %v3458 = vld [vmem:[#allocation20 + $0xda0] sm:$0xff]
        %v3459 = vld [vmem:[#allocation20 + $0xda8] sm:$0xff]
        %v3460 = vld [vmem:[#allocation20 + $0xdb0] sm:$0xff]
        %v3461 = vld [vmem:[#allocation20 + $0xdb8] sm:$0xff]
        %v3462 = vld [vmem:[#allocation20 + $0xdc0] sm:$0xff]
        %v3463 = vld [vmem:[#allocation20 + $0xdc8] sm:$0xff]
        %v3464 = vld [vmem:[#allocation20 + $0xdd0] sm:$0xff]
        %v3465 = vld [vmem:[#allocation20 + $0xdd8] sm:$0xff]
        %v3466 = vld [vmem:[#allocation20 + $0xde0] sm:$0xff]
        %v3467 = vld [vmem:[#allocation20 + $0xde8] sm:$0xff]
        %v3468 = vld [vmem:[#allocation20 + $0xdf0] sm:$0xff]
        %v3469 = vld [vmem:[#allocation20 + $0xdf8] sm:$0xff]
        %v3470 = vld [vmem:[#allocation20 + $0xe00] sm:$0xff]
        %v3471 = vld [vmem:[#allocation20 + $0xe08] sm:$0xff]
        %v3472 = vld [vmem:[#allocation20 + $0xe10] sm:$0xff]
        %v3473 = vld [vmem:[#allocation20 + $0xe18] sm:$0xff]
        %v3474 = vld [vmem:[#allocation20 + $0xe20] sm:$0xff]
        %v3475 = vld [vmem:[#allocation20 + $0xe28] sm:$0xff]
        %v3476 = vld [vmem:[#allocation20 + $0xe30] sm:$0xff]
        %v3477 = vld [vmem:[#allocation20 + $0xe38] sm:$0xff]
        %v3478 = vld [vmem:[#allocation20 + $0xe40] sm:$0xff]
        %v3479 = vld [vmem:[#allocation20 + $0xe48] sm:$0xff]
        %v3480 = vld [vmem:[#allocation20 + $0xe50] sm:$0xff]
        %v3481 = vld [vmem:[#allocation20 + $0xe58] sm:$0xff]
        %v3482 = vld [vmem:[#allocation20 + $0xe60] sm:$0xff]
        %v3483 = vld [vmem:[#allocation20 + $0xe68] sm:$0xff]
        %v3484 = vld [vmem:[#allocation20 + $0xe70] sm:$0xff]
        %v3485 = vld [vmem:[#allocation20 + $0xe78] sm:$0xff]
        %v3486 = vld [vmem:[#allocation20 + $0xe80] sm:$0xff]
        %v3487 = vld [vmem:[#allocation20 + $0xe88] sm:$0xff]
        %v3488 = vld [vmem:[#allocation20 + $0xe90] sm:$0xff]
        %v3489 = vld [vmem:[#allocation20 + $0xe98] sm:$0xff]
        %v3490 = vld [vmem:[#allocation20 + $0xea0] sm:$0xff]
        %v3491 = vld [vmem:[#allocation20 + $0xea8] sm:$0xff]
        %v3492 = vld [vmem:[#allocation20 + $0xeb0] sm:$0xff]
        %v3493 = vld [vmem:[#allocation20 + $0xeb8] sm:$0xff]
        %v3494 = vld [vmem:[#allocation20 + $0xec0] sm:$0xff]
        %v3495 = vld [vmem:[#allocation20 + $0xec8] sm:$0xff]
        %v3496 = vld [vmem:[#allocation20 + $0xed0] sm:$0xff]
        %v3497 = vld [vmem:[#allocation20 + $0xed8] sm:$0xff]
        %v3498 = vld [vmem:[#allocation20 + $0xee0] sm:$0xff]
        %v3499 = vld [vmem:[#allocation20 + $0xee8] sm:$0xff]
        %v3500 = vld [vmem:[#allocation20 + $0xef0] sm:$0xff]
        %v3501 = vld [vmem:[#allocation20 + $0xef8] sm:$0xff]
        %v3502 = vld [vmem:[#allocation20 + $0xf00] sm:$0xff]
        %v3503 = vld [vmem:[#allocation20 + $0xf08] sm:$0xff]
        %v3504 = vld [vmem:[#allocation20 + $0xf10] sm:$0xff]
        %v3505 = vld [vmem:[#allocation20 + $0xf18] sm:$0xff]
        %v3506 = vld [vmem:[#allocation20 + $0xf20] sm:$0xff]
        %v3507 = vld [vmem:[#allocation20 + $0xf28] sm:$0xff]
        %v3508 = vld [vmem:[#allocation20 + $0xf30] sm:$0xff]
        %v3509 = vld [vmem:[#allocation20 + $0xf38] sm:$0xff]
        %v3510 = vld [vmem:[#allocation20 + $0xf40] sm:$0xff]
        %v3511 = vld [vmem:[#allocation20 + $0xf48] sm:$0xff]
        %v3512 = vld [vmem:[#allocation20 + $0xf50] sm:$0xff]
        %v3513 = vld [vmem:[#allocation20 + $0xf58] sm:$0xff]
        %v3514 = vld [vmem:[#allocation20 + $0xf60] sm:$0xff]
        %v3515 = vld [vmem:[#allocation20 + $0xf68] sm:$0xff]
        %v3516 = vld [vmem:[#allocation20 + $0xf70] sm:$0xff]
        %v3517 = vld [vmem:[#allocation20 + $0xf78] sm:$0xff]
        %v3518 = vld [vmem:[#allocation20 + $0xf80] sm:$0xff]
        %v3519 = vld [vmem:[#allocation20 + $0xf88] sm:$0xff]
        %v3520 = vld [vmem:[#allocation20 + $0xf90] sm:$0xff]
        %v3521 = vld [vmem:[#allocation20 + $0xf98] sm:$0xff]
        %v3522 = vld [vmem:[#allocation20 + $0xfa0] sm:$0xff]
        %v3523 = vld [vmem:[#allocation20 + $0xfa8] sm:$0xff]
        %v3524 = vld [vmem:[#allocation20 + $0xfb0] sm:$0xff]
        %v3525 = vld [vmem:[#allocation20 + $0xfb8] sm:$0xff]
        %v3526 = vld [vmem:[#allocation20 + $0xfc0] sm:$0xff]
        %v3527 = vld [vmem:[#allocation20 + $0xfc8] sm:$0xff]
        %v3528 = vld [vmem:[#allocation20 + $0xfd0] sm:$0xff]
        %v3529 = vld [vmem:[#allocation20 + $0xfd8] sm:$0xff]
        %v3530 = vld [vmem:[#allocation20 + $0xfe0] sm:$0xff]
        %v3531 = vld [vmem:[#allocation20 + $0xfe8] sm:$0xff]
        %v3532 = vld [vmem:[#allocation20 + $0xff0] sm:$0xff]
        %v3533 = vld [vmem:[#allocation20 + $0xff8] sm:$0xff]
        %v3534 = vld [vmem:[#allocation22] sm:$0xff]
        %v3535 = vld [vmem:[#allocation22 + $0x8] sm:$0xff]
        %v3538 = vlaneseq
        %v3539 = vshrl.u32 %v3538, 7
        %v3540 = vsub.s32 0, %v3539
        %v3541 = vrot.slane %v3534, %v3540
        %v3542 = vlaneseq
        %v3543 = vshrl.u32 %v3542, 7
        %v3544 = vsub.s32 1, %v3543
        %v3545 = vrot.slane %v3534, %v3544
        %v3546 = vlaneseq
        %v3547 = vshrl.u32 %v3546, 7
        %v3548 = vsub.s32 2, %v3547
        %v3549 = vrot.slane %v3534, %v3548
        %v3550 = vlaneseq
        %v3551 = vshrl.u32 %v3550, 7
        %v3552 = vsub.s32 3, %v3551
        %v3553 = vrot.slane %v3534, %v3552
        %v3554 = vlaneseq
        %v3555 = vshrl.u32 %v3554, 7
        %v3556 = vsub.s32 4, %v3555
        %v3557 = vrot.slane %v3534, %v3556
        %v3558 = vlaneseq
        %v3559 = vshrl.u32 %v3558, 7
        %v3560 = vsub.s32 5, %v3559
        %v3561 = vrot.slane %v3534, %v3560
        %v3562 = vlaneseq
        %v3563 = vshrl.u32 %v3562, 7
        %v3564 = vsub.s32 6, %v3563
        %v3565 = vrot.slane %v3534, %v3564
        %v3566 = vlaneseq
        %v3567 = vshrl.u32 %v3566, 7
        %v3568 = vsub.s32 7, %v3567
        %v3569 = vrot.slane %v3534, %v3568
        %v3570 = vlaneseq
        %v3571 = vshrl.u32 %v3570, 7
        %v3572 = vsub.s32 0, %v3571
        %v3573 = vrot.slane %v3535, %v3572
        %v3574 = vlaneseq
        %v3575 = vshrl.u32 %v3574, 7
        %v3576 = vsub.s32 1, %v3575
        %v3577 = vrot.slane %v3535, %v3576
        %v3578 = vlaneseq
        %v3579 = vshrl.u32 %v3578, 7
        %v3580 = vsub.s32 2, %v3579
        %v3581 = vrot.slane %v3535, %v3580
        %v3582 = vlaneseq
        %v3583 = vshrl.u32 %v3582, 7
        %v3584 = vsub.s32 3, %v3583
        %v3585 = vrot.slane %v3535, %v3584
        %v3586 = vlaneseq
        %v3587 = vshrl.u32 %v3586, 7
        %v3588 = vsub.s32 4, %v3587
        %v3589 = vrot.slane %v3535, %v3588
        %v3590 = vlaneseq
        %v3591 = vshrl.u32 %v3590, 7
        %v3592 = vsub.s32 5, %v3591
        %v3593 = vrot.slane %v3535, %v3592
        %v3594 = vlaneseq
        %v3595 = vshrl.u32 %v3594, 7
        %v3596 = vsub.s32 6, %v3595
        %v3597 = vrot.slane %v3535, %v3596
        %v3598 = vlaneseq
        %v3599 = vshrl.u32 %v3598, 7
        %v3600 = vsub.s32 7, %v3599
        %v3601 = vrot.slane %v3535, %v3600
        %v4130 = vunpack.c.l.b16 %v3022
        %v4131 = vunpack.c.h.b16 %v3022
        %v4132 = vunpack.c.l.b16 %v3023
        %v4133 = vunpack.c.h.b16 %v3023
        %v4134 = vunpack.c.l.b16 %v3024
        %v4135 = vunpack.c.h.b16 %v3024
        %v4136 = vunpack.c.l.b16 %v3025
        %v4137 = vunpack.c.h.b16 %v3025
        %v4138 = vunpack.c.l.b16 %v3026
        %v4139 = vunpack.c.h.b16 %v3026
        %v4140 = vunpack.c.l.b16 %v3027
        %v4141 = vunpack.c.h.b16 %v3027
        %v4142 = vunpack.c.l.b16 %v3028
        %v4143 = vunpack.c.h.b16 %v3028
        %v4144 = vunpack.c.l.b16 %v3029
        %v4145 = vunpack.c.h.b16 %v3029
        %v4146 = vunpack.c.l.b16 %v3030
        %v4147 = vunpack.c.h.b16 %v3030
        %v4148 = vunpack.c.l.b16 %v3031
        %v4149 = vunpack.c.h.b16 %v3031
        %v4150 = vunpack.c.l.b16 %v3032
        %v4151 = vunpack.c.h.b16 %v3032
        %v4152 = vunpack.c.l.b16 %v3033
        %v4153 = vunpack.c.h.b16 %v3033
        %v4154 = vunpack.c.l.b16 %v3034
        %v4155 = vunpack.c.h.b16 %v3034
        %v4156 = vunpack.c.l.b16 %v3035
        %v4157 = vunpack.c.h.b16 %v3035
        %v4158 = vunpack.c.l.b16 %v3036
        %v4159 = vunpack.c.h.b16 %v3036
        %v4160 = vunpack.c.l.b16 %v3037
        %v4161 = vunpack.c.h.b16 %v3037
        %v4162 = vunpack.c.l.b16 %v3038
        %v4163 = vunpack.c.h.b16 %v3038
        %v4164 = vunpack.c.l.b16 %v3039
        %v4165 = vunpack.c.h.b16 %v3039
        %v4166 = vunpack.c.l.b16 %v3040
        %v4167 = vunpack.c.h.b16 %v3040
        %v4168 = vunpack.c.l.b16 %v3041
        %v4169 = vunpack.c.h.b16 %v3041
        %v4170 = vunpack.c.l.b16 %v3042
        %v4171 = vunpack.c.h.b16 %v3042
        %v4172 = vunpack.c.l.b16 %v3043
        %v4173 = vunpack.c.h.b16 %v3043
        %v4174 = vunpack.c.l.b16 %v3044
        %v4175 = vunpack.c.h.b16 %v3044
        %v4176 = vunpack.c.l.b16 %v3045
        %v4177 = vunpack.c.h.b16 %v3045
        %v4178 = vunpack.c.l.b16 %v3046
        %v4179 = vunpack.c.h.b16 %v3046
        %v4180 = vunpack.c.l.b16 %v3047
        %v4181 = vunpack.c.h.b16 %v3047
        %v4182 = vunpack.c.l.b16 %v3048
        %v4183 = vunpack.c.h.b16 %v3048
        %v4184 = vunpack.c.l.b16 %v3049
        %v4185 = vunpack.c.h.b16 %v3049
        %v4186 = vunpack.c.l.b16 %v3050
        %v4187 = vunpack.c.h.b16 %v3050
        %v4188 = vunpack.c.l.b16 %v3051
        %v4189 = vunpack.c.h.b16 %v3051
        %v4190 = vunpack.c.l.b16 %v3052
        %v4191 = vunpack.c.h.b16 %v3052
        %v4192 = vunpack.c.l.b16 %v3053
        %v4193 = vunpack.c.h.b16 %v3053
        %v4194 = vunpack.c.l.b16 %v3054
        %v4195 = vunpack.c.h.b16 %v3054
        %v4196 = vunpack.c.l.b16 %v3055
        %v4197 = vunpack.c.h.b16 %v3055
        %v4198 = vunpack.c.l.b16 %v3056
        %v4199 = vunpack.c.h.b16 %v3056
        %v4200 = vunpack.c.l.b16 %v3057
        %v4201 = vunpack.c.h.b16 %v3057
        %v4202 = vunpack.c.l.b16 %v3058
        %v4203 = vunpack.c.h.b16 %v3058
        %v4204 = vunpack.c.l.b16 %v3059
        %v4205 = vunpack.c.h.b16 %v3059
        %v4206 = vunpack.c.l.b16 %v3060
        %v4207 = vunpack.c.h.b16 %v3060
        %v4208 = vunpack.c.l.b16 %v3061
        %v4209 = vunpack.c.h.b16 %v3061
        %v4210 = vunpack.c.l.b16 %v3062
        %v4211 = vunpack.c.h.b16 %v3062
        %v4212 = vunpack.c.l.b16 %v3063
        %v4213 = vunpack.c.h.b16 %v3063
        %v4214 = vunpack.c.l.b16 %v3064
        %v4215 = vunpack.c.h.b16 %v3064
        %v4216 = vunpack.c.l.b16 %v3065
        %v4217 = vunpack.c.h.b16 %v3065
        %v4218 = vunpack.c.l.b16 %v3066
        %v4219 = vunpack.c.h.b16 %v3066
        %v4220 = vunpack.c.l.b16 %v3067
        %v4221 = vunpack.c.h.b16 %v3067
        %v4222 = vunpack.c.l.b16 %v3068
        %v4223 = vunpack.c.h.b16 %v3068
        %v4224 = vunpack.c.l.b16 %v3069
        %v4225 = vunpack.c.h.b16 %v3069
        %v4226 = vunpack.c.l.b16 %v3070
        %v4227 = vunpack.c.h.b16 %v3070
        %v4228 = vunpack.c.l.b16 %v3071
        %v4229 = vunpack.c.h.b16 %v3071
        %v4230 = vunpack.c.l.b16 %v3072
        %v4231 = vunpack.c.h.b16 %v3072
        %v4232 = vunpack.c.l.b16 %v3073
        %v4233 = vunpack.c.h.b16 %v3073
        %v4234 = vunpack.c.l.b16 %v3074
        %v4235 = vunpack.c.h.b16 %v3074
        %v4236 = vunpack.c.l.b16 %v3075
        %v4237 = vunpack.c.h.b16 %v3075
        %v4238 = vunpack.c.l.b16 %v3076
        %v4239 = vunpack.c.h.b16 %v3076
        %v4240 = vunpack.c.l.b16 %v3077
        %v4241 = vunpack.c.h.b16 %v3077
        %v4242 = vunpack.c.l.b16 %v3078
        %v4243 = vunpack.c.h.b16 %v3078
        %v4244 = vunpack.c.l.b16 %v3079
        %v4245 = vunpack.c.h.b16 %v3079
        %v4246 = vunpack.c.l.b16 %v3080
        %v4247 = vunpack.c.h.b16 %v3080
        %v4248 = vunpack.c.l.b16 %v3081
        %v4249 = vunpack.c.h.b16 %v3081
        %v4250 = vunpack.c.l.b16 %v3082
        %v4251 = vunpack.c.h.b16 %v3082
        %v4252 = vunpack.c.l.b16 %v3083
        %v4253 = vunpack.c.h.b16 %v3083
        %v4254 = vunpack.c.l.b16 %v3084
        %v4255 = vunpack.c.h.b16 %v3084
        %v4256 = vunpack.c.l.b16 %v3085
        %v4257 = vunpack.c.h.b16 %v3085
        %v4258 = vunpack.c.l.b16 %v3086
        %v4259 = vunpack.c.h.b16 %v3086
        %v4260 = vunpack.c.l.b16 %v3087
        %v4261 = vunpack.c.h.b16 %v3087
        %v4262 = vunpack.c.l.b16 %v3088
        %v4263 = vunpack.c.h.b16 %v3088
        %v4264 = vunpack.c.l.b16 %v3089
        %v4265 = vunpack.c.h.b16 %v3089
        %v4266 = vunpack.c.l.b16 %v3090
        %v4267 = vunpack.c.h.b16 %v3090
        %v4268 = vunpack.c.l.b16 %v3091
        %v4269 = vunpack.c.h.b16 %v3091
        %v4270 = vunpack.c.l.b16 %v3092
        %v4271 = vunpack.c.h.b16 %v3092
        %v4272 = vunpack.c.l.b16 %v3093
        %v4273 = vunpack.c.h.b16 %v3093
        %v4274 = vunpack.c.l.b16 %v3094
        %v4275 = vunpack.c.h.b16 %v3094
        %v4276 = vunpack.c.l.b16 %v3095
        %v4277 = vunpack.c.h.b16 %v3095
        %v4278 = vunpack.c.l.b16 %v3096
        %v4279 = vunpack.c.h.b16 %v3096
        %v4280 = vunpack.c.l.b16 %v3097
        %v4281 = vunpack.c.h.b16 %v3097
        %v4282 = vunpack.c.l.b16 %v3098
        %v4283 = vunpack.c.h.b16 %v3098
        %v4284 = vunpack.c.l.b16 %v3099
        %v4285 = vunpack.c.h.b16 %v3099
        %v4286 = vunpack.c.l.b16 %v3100
        %v4287 = vunpack.c.h.b16 %v3100
        %v4288 = vunpack.c.l.b16 %v3101
        %v4289 = vunpack.c.h.b16 %v3101
        %v4290 = vunpack.c.l.b16 %v3102
        %v4291 = vunpack.c.h.b16 %v3102
        %v4292 = vunpack.c.l.b16 %v3103
        %v4293 = vunpack.c.h.b16 %v3103
        %v4294 = vunpack.c.l.b16 %v3104
        %v4295 = vunpack.c.h.b16 %v3104
        %v4296 = vunpack.c.l.b16 %v3105
        %v4297 = vunpack.c.h.b16 %v3105
        %v4298 = vunpack.c.l.b16 %v3106
        %v4299 = vunpack.c.h.b16 %v3106
        %v4300 = vunpack.c.l.b16 %v3107
        %v4301 = vunpack.c.h.b16 %v3107
        %v4302 = vunpack.c.l.b16 %v3108
        %v4303 = vunpack.c.h.b16 %v3108
        %v4304 = vunpack.c.l.b16 %v3109
        %v4305 = vunpack.c.h.b16 %v3109
        %v4306 = vunpack.c.l.b16 %v3110
        %v4307 = vunpack.c.h.b16 %v3110
        %v4308 = vunpack.c.l.b16 %v3111
        %v4309 = vunpack.c.h.b16 %v3111
        %v4310 = vunpack.c.l.b16 %v3112
        %v4311 = vunpack.c.h.b16 %v3112
        %v4312 = vunpack.c.l.b16 %v3113
        %v4313 = vunpack.c.h.b16 %v3113
        %v4314 = vunpack.c.l.b16 %v3114
        %v4315 = vunpack.c.h.b16 %v3114
        %v4316 = vunpack.c.l.b16 %v3115
        %v4317 = vunpack.c.h.b16 %v3115
        %v4318 = vunpack.c.l.b16 %v3116
        %v4319 = vunpack.c.h.b16 %v3116
        %v4320 = vunpack.c.l.b16 %v3117
        %v4321 = vunpack.c.h.b16 %v3117
        %v4322 = vunpack.c.l.b16 %v3118
        %v4323 = vunpack.c.h.b16 %v3118
        %v4324 = vunpack.c.l.b16 %v3119
        %v4325 = vunpack.c.h.b16 %v3119
        %v4326 = vunpack.c.l.b16 %v3120
        %v4327 = vunpack.c.h.b16 %v3120
        %v4328 = vunpack.c.l.b16 %v3121
        %v4329 = vunpack.c.h.b16 %v3121
        %v4330 = vunpack.c.l.b16 %v3122
        %v4331 = vunpack.c.h.b16 %v3122
        %v4332 = vunpack.c.l.b16 %v3123
        %v4333 = vunpack.c.h.b16 %v3123
        %v4334 = vunpack.c.l.b16 %v3124
        %v4335 = vunpack.c.h.b16 %v3124
        %v4336 = vunpack.c.l.b16 %v3125
        %v4337 = vunpack.c.h.b16 %v3125
        %v4338 = vunpack.c.l.b16 %v3126
        %v4339 = vunpack.c.h.b16 %v3126
        %v4340 = vunpack.c.l.b16 %v3127
        %v4341 = vunpack.c.h.b16 %v3127
        %v4342 = vunpack.c.l.b16 %v3128
        %v4343 = vunpack.c.h.b16 %v3128
        %v4344 = vunpack.c.l.b16 %v3129
        %v4345 = vunpack.c.h.b16 %v3129
        %v4346 = vunpack.c.l.b16 %v3130
        %v4347 = vunpack.c.h.b16 %v3130
        %v4348 = vunpack.c.l.b16 %v3131
        %v4349 = vunpack.c.h.b16 %v3131
        %v4350 = vunpack.c.l.b16 %v3132
        %v4351 = vunpack.c.h.b16 %v3132
        %v4352 = vunpack.c.l.b16 %v3133
        %v4353 = vunpack.c.h.b16 %v3133
        %v4354 = vunpack.c.l.b16 %v3134
        %v4355 = vunpack.c.h.b16 %v3134
        %v4356 = vunpack.c.l.b16 %v3135
        %v4357 = vunpack.c.h.b16 %v3135
        %v4358 = vunpack.c.l.b16 %v3136
        %v4359 = vunpack.c.h.b16 %v3136
        %v4360 = vunpack.c.l.b16 %v3137
        %v4361 = vunpack.c.h.b16 %v3137
        %v4362 = vunpack.c.l.b16 %v3138
        %v4363 = vunpack.c.h.b16 %v3138
        %v4364 = vunpack.c.l.b16 %v3139
        %v4365 = vunpack.c.h.b16 %v3139
        %v4366 = vunpack.c.l.b16 %v3140
        %v4367 = vunpack.c.h.b16 %v3140
        %v4368 = vunpack.c.l.b16 %v3141
        %v4369 = vunpack.c.h.b16 %v3141
        %v4370 = vunpack.c.l.b16 %v3142
        %v4371 = vunpack.c.h.b16 %v3142
        %v4372 = vunpack.c.l.b16 %v3143
        %v4373 = vunpack.c.h.b16 %v3143
        %v4374 = vunpack.c.l.b16 %v3144
        %v4375 = vunpack.c.h.b16 %v3144
        %v4376 = vunpack.c.l.b16 %v3145
        %v4377 = vunpack.c.h.b16 %v3145
        %v4378 = vunpack.c.l.b16 %v3146
        %v4379 = vunpack.c.h.b16 %v3146
        %v4380 = vunpack.c.l.b16 %v3147
        %v4381 = vunpack.c.h.b16 %v3147
        %v4382 = vunpack.c.l.b16 %v3148
        %v4383 = vunpack.c.h.b16 %v3148
        %v4384 = vunpack.c.l.b16 %v3149
        %v4385 = vunpack.c.h.b16 %v3149
        %v4386 = vunpack.c.l.b16 %v3150
        %v4387 = vunpack.c.h.b16 %v3150
        %v4388 = vunpack.c.l.b16 %v3151
        %v4389 = vunpack.c.h.b16 %v3151
        %v4390 = vunpack.c.l.b16 %v3152
        %v4391 = vunpack.c.h.b16 %v3152
        %v4392 = vunpack.c.l.b16 %v3153
        %v4393 = vunpack.c.h.b16 %v3153
        %v4394 = vunpack.c.l.b16 %v3154
        %v4395 = vunpack.c.h.b16 %v3154
        %v4396 = vunpack.c.l.b16 %v3155
        %v4397 = vunpack.c.h.b16 %v3155
        %v4398 = vunpack.c.l.b16 %v3156
        %v4399 = vunpack.c.h.b16 %v3156
        %v4400 = vunpack.c.l.b16 %v3157
        %v4401 = vunpack.c.h.b16 %v3157
        %v4402 = vunpack.c.l.b16 %v3158
        %v4403 = vunpack.c.h.b16 %v3158
        %v4404 = vunpack.c.l.b16 %v3159
        %v4405 = vunpack.c.h.b16 %v3159
        %v4406 = vunpack.c.l.b16 %v3160
        %v4407 = vunpack.c.h.b16 %v3160
        %v4408 = vunpack.c.l.b16 %v3161
        %v4409 = vunpack.c.h.b16 %v3161
        %v4410 = vunpack.c.l.b16 %v3162
        %v4411 = vunpack.c.h.b16 %v3162
        %v4412 = vunpack.c.l.b16 %v3163
        %v4413 = vunpack.c.h.b16 %v3163
        %v4414 = vunpack.c.l.b16 %v3164
        %v4415 = vunpack.c.h.b16 %v3164
        %v4416 = vunpack.c.l.b16 %v3165
        %v4417 = vunpack.c.h.b16 %v3165
        %v4418 = vunpack.c.l.b16 %v3166
        %v4419 = vunpack.c.h.b16 %v3166
        %v4420 = vunpack.c.l.b16 %v3167
        %v4421 = vunpack.c.h.b16 %v3167
        %v4422 = vunpack.c.l.b16 %v3168
        %v4423 = vunpack.c.h.b16 %v3168
        %v4424 = vunpack.c.l.b16 %v3169
        %v4425 = vunpack.c.h.b16 %v3169
        %v4426 = vunpack.c.l.b16 %v3170
        %v4427 = vunpack.c.h.b16 %v3170
        %v4428 = vunpack.c.l.b16 %v3171
        %v4429 = vunpack.c.h.b16 %v3171
        %v4430 = vunpack.c.l.b16 %v3172
        %v4431 = vunpack.c.h.b16 %v3172
        %v4432 = vunpack.c.l.b16 %v3173
        %v4433 = vunpack.c.h.b16 %v3173
        %v4434 = vunpack.c.l.b16 %v3174
        %v4435 = vunpack.c.h.b16 %v3174
        %v4436 = vunpack.c.l.b16 %v3175
        %v4437 = vunpack.c.h.b16 %v3175
        %v4438 = vunpack.c.l.b16 %v3176
        %v4439 = vunpack.c.h.b16 %v3176
        %v4440 = vunpack.c.l.b16 %v3177
        %v4441 = vunpack.c.h.b16 %v3177
        %v4442 = vunpack.c.l.b16 %v3178
        %v4443 = vunpack.c.h.b16 %v3178
        %v4444 = vunpack.c.l.b16 %v3179
        %v4445 = vunpack.c.h.b16 %v3179
        %v4446 = vunpack.c.l.b16 %v3180
        %v4447 = vunpack.c.h.b16 %v3180
        %v4448 = vunpack.c.l.b16 %v3181
        %v4449 = vunpack.c.h.b16 %v3181
        %v4450 = vunpack.c.l.b16 %v3182
        %v4451 = vunpack.c.h.b16 %v3182
        %v4452 = vunpack.c.l.b16 %v3183
        %v4453 = vunpack.c.h.b16 %v3183
        %v4454 = vunpack.c.l.b16 %v3184
        %v4455 = vunpack.c.h.b16 %v3184
        %v4456 = vunpack.c.l.b16 %v3185
        %v4457 = vunpack.c.h.b16 %v3185
        %v4458 = vunpack.c.l.b16 %v3186
        %v4459 = vunpack.c.h.b16 %v3186
        %v4460 = vunpack.c.l.b16 %v3187
        %v4461 = vunpack.c.h.b16 %v3187
        %v4462 = vunpack.c.l.b16 %v3188
        %v4463 = vunpack.c.h.b16 %v3188
        %v4464 = vunpack.c.l.b16 %v3189
        %v4465 = vunpack.c.h.b16 %v3189
        %v4466 = vunpack.c.l.b16 %v3190
        %v4467 = vunpack.c.h.b16 %v3190
        %v4468 = vunpack.c.l.b16 %v3191
        %v4469 = vunpack.c.h.b16 %v3191
        %v4470 = vunpack.c.l.b16 %v3192
        %v4471 = vunpack.c.h.b16 %v3192
        %v4472 = vunpack.c.l.b16 %v3193
        %v4473 = vunpack.c.h.b16 %v3193
        %v4474 = vunpack.c.l.b16 %v3194
        %v4475 = vunpack.c.h.b16 %v3194
        %v4476 = vunpack.c.l.b16 %v3195
        %v4477 = vunpack.c.h.b16 %v3195
        %v4478 = vunpack.c.l.b16 %v3196
        %v4479 = vunpack.c.h.b16 %v3196
        %v4480 = vunpack.c.l.b16 %v3197
        %v4481 = vunpack.c.h.b16 %v3197
        %v4482 = vunpack.c.l.b16 %v3198
        %v4483 = vunpack.c.h.b16 %v3198
        %v4484 = vunpack.c.l.b16 %v3199
        %v4485 = vunpack.c.h.b16 %v3199
        %v4486 = vunpack.c.l.b16 %v3200
        %v4487 = vunpack.c.h.b16 %v3200
        %v4488 = vunpack.c.l.b16 %v3201
        %v4489 = vunpack.c.h.b16 %v3201
        %v4490 = vunpack.c.l.b16 %v3202
        %v4491 = vunpack.c.h.b16 %v3202
        %v4492 = vunpack.c.l.b16 %v3203
        %v4493 = vunpack.c.h.b16 %v3203
        %v4494 = vunpack.c.l.b16 %v3204
        %v4495 = vunpack.c.h.b16 %v3204
        %v4496 = vunpack.c.l.b16 %v3205
        %v4497 = vunpack.c.h.b16 %v3205
        %v4498 = vunpack.c.l.b16 %v3206
        %v4499 = vunpack.c.h.b16 %v3206
        %v4500 = vunpack.c.l.b16 %v3207
        %v4501 = vunpack.c.h.b16 %v3207
        %v4502 = vunpack.c.l.b16 %v3208
        %v4503 = vunpack.c.h.b16 %v3208
        %v4504 = vunpack.c.l.b16 %v3209
        %v4505 = vunpack.c.h.b16 %v3209
        %v4506 = vunpack.c.l.b16 %v3210
        %v4507 = vunpack.c.h.b16 %v3210
        %v4508 = vunpack.c.l.b16 %v3211
        %v4509 = vunpack.c.h.b16 %v3211
        %v4510 = vunpack.c.l.b16 %v3212
        %v4511 = vunpack.c.h.b16 %v3212
        %v4512 = vunpack.c.l.b16 %v3213
        %v4513 = vunpack.c.h.b16 %v3213
        %v4514 = vunpack.c.l.b16 %v3214
        %v4515 = vunpack.c.h.b16 %v3214
        %v4516 = vunpack.c.l.b16 %v3215
        %v4517 = vunpack.c.h.b16 %v3215
        %v4518 = vunpack.c.l.b16 %v3216
        %v4519 = vunpack.c.h.b16 %v3216
        %v4520 = vunpack.c.l.b16 %v3217
        %v4521 = vunpack.c.h.b16 %v3217
        %v4522 = vunpack.c.l.b16 %v3218
        %v4523 = vunpack.c.h.b16 %v3218
        %v4524 = vunpack.c.l.b16 %v3219
        %v4525 = vunpack.c.h.b16 %v3219
        %v4526 = vunpack.c.l.b16 %v3220
        %v4527 = vunpack.c.h.b16 %v3220
        %v4528 = vunpack.c.l.b16 %v3221
        %v4529 = vunpack.c.h.b16 %v3221
        %v4530 = vunpack.c.l.b16 %v3222
        %v4531 = vunpack.c.h.b16 %v3222
        %v4532 = vunpack.c.l.b16 %v3223
        %v4533 = vunpack.c.h.b16 %v3223
        %v4534 = vunpack.c.l.b16 %v3224
        %v4535 = vunpack.c.h.b16 %v3224
        %v4536 = vunpack.c.l.b16 %v3225
        %v4537 = vunpack.c.h.b16 %v3225
        %v4538 = vunpack.c.l.b16 %v3226
        %v4539 = vunpack.c.h.b16 %v3226
        %v4540 = vunpack.c.l.b16 %v3227
        %v4541 = vunpack.c.h.b16 %v3227
        %v4542 = vunpack.c.l.b16 %v3228
        %v4543 = vunpack.c.h.b16 %v3228
        %v4544 = vunpack.c.l.b16 %v3229
        %v4545 = vunpack.c.h.b16 %v3229
        %v4546 = vunpack.c.l.b16 %v3230
        %v4547 = vunpack.c.h.b16 %v3230
        %v4548 = vunpack.c.l.b16 %v3231
        %v4549 = vunpack.c.h.b16 %v3231
        %v4550 = vunpack.c.l.b16 %v3232
        %v4551 = vunpack.c.h.b16 %v3232
        %v4552 = vunpack.c.l.b16 %v3233
        %v4553 = vunpack.c.h.b16 %v3233
        %v4554 = vunpack.c.l.b16 %v3234
        %v4555 = vunpack.c.h.b16 %v3234
        %v4556 = vunpack.c.l.b16 %v3235
        %v4557 = vunpack.c.h.b16 %v3235
        %v4558 = vunpack.c.l.b16 %v3236
        %v4559 = vunpack.c.h.b16 %v3236
        %v4560 = vunpack.c.l.b16 %v3237
        %v4561 = vunpack.c.h.b16 %v3237
        %v4562 = vunpack.c.l.b16 %v3238
        %v4563 = vunpack.c.h.b16 %v3238
        %v4564 = vunpack.c.l.b16 %v3239
        %v4565 = vunpack.c.h.b16 %v3239
        %v4566 = vunpack.c.l.b16 %v3240
        %v4567 = vunpack.c.h.b16 %v3240
        %v4568 = vunpack.c.l.b16 %v3241
        %v4569 = vunpack.c.h.b16 %v3241
        %v4570 = vunpack.c.l.b16 %v3242
        %v4571 = vunpack.c.h.b16 %v3242
        %v4572 = vunpack.c.l.b16 %v3243
        %v4573 = vunpack.c.h.b16 %v3243
        %v4574 = vunpack.c.l.b16 %v3244
        %v4575 = vunpack.c.h.b16 %v3244
        %v4576 = vunpack.c.l.b16 %v3245
        %v4577 = vunpack.c.h.b16 %v3245
        %v4578 = vunpack.c.l.b16 %v3246
        %v4579 = vunpack.c.h.b16 %v3246
        %v4580 = vunpack.c.l.b16 %v3247
        %v4581 = vunpack.c.h.b16 %v3247
        %v4582 = vunpack.c.l.b16 %v3248
        %v4583 = vunpack.c.h.b16 %v3248
        %v4584 = vunpack.c.l.b16 %v3249
        %v4585 = vunpack.c.h.b16 %v3249
        %v4586 = vunpack.c.l.b16 %v3250
        %v4587 = vunpack.c.h.b16 %v3250
        %v4588 = vunpack.c.l.b16 %v3251
        %v4589 = vunpack.c.h.b16 %v3251
        %v4590 = vunpack.c.l.b16 %v3252
        %v4591 = vunpack.c.h.b16 %v3252
        %v4592 = vunpack.c.l.b16 %v3253
        %v4593 = vunpack.c.h.b16 %v3253
        %v4594 = vunpack.c.l.b16 %v3254
        %v4595 = vunpack.c.h.b16 %v3254
        %v4596 = vunpack.c.l.b16 %v3255
        %v4597 = vunpack.c.h.b16 %v3255
        %v4598 = vunpack.c.l.b16 %v3256
        %v4599 = vunpack.c.h.b16 %v3256
        %v4600 = vunpack.c.l.b16 %v3257
        %v4601 = vunpack.c.h.b16 %v3257
        %v4602 = vunpack.c.l.b16 %v3258
        %v4603 = vunpack.c.h.b16 %v3258
        %v4604 = vunpack.c.l.b16 %v3259
        %v4605 = vunpack.c.h.b16 %v3259
        %v4606 = vunpack.c.l.b16 %v3260
        %v4607 = vunpack.c.h.b16 %v3260
        %v4608 = vunpack.c.l.b16 %v3261
        %v4609 = vunpack.c.h.b16 %v3261
        %v4610 = vunpack.c.l.b16 %v3262
        %v4611 = vunpack.c.h.b16 %v3262
        %v4612 = vunpack.c.l.b16 %v3263
        %v4613 = vunpack.c.h.b16 %v3263
        %v4614 = vunpack.c.l.b16 %v3264
        %v4615 = vunpack.c.h.b16 %v3264
        %v4616 = vunpack.c.l.b16 %v3265
        %v4617 = vunpack.c.h.b16 %v3265
        %v4618 = vunpack.c.l.b16 %v3266
        %v4619 = vunpack.c.h.b16 %v3266
        %v4620 = vunpack.c.l.b16 %v3267
        %v4621 = vunpack.c.h.b16 %v3267
        %v4622 = vunpack.c.l.b16 %v3268
        %v4623 = vunpack.c.h.b16 %v3268
        %v4624 = vunpack.c.l.b16 %v3269
        %v4625 = vunpack.c.h.b16 %v3269
        %v4626 = vunpack.c.l.b16 %v3270
        %v4627 = vunpack.c.h.b16 %v3270
        %v4628 = vunpack.c.l.b16 %v3271
        %v4629 = vunpack.c.h.b16 %v3271
        %v4630 = vunpack.c.l.b16 %v3272
        %v4631 = vunpack.c.h.b16 %v3272
        %v4632 = vunpack.c.l.b16 %v3273
        %v4633 = vunpack.c.h.b16 %v3273
        %v4634 = vunpack.c.l.b16 %v3274
        %v4635 = vunpack.c.h.b16 %v3274
        %v4636 = vunpack.c.l.b16 %v3275
        %v4637 = vunpack.c.h.b16 %v3275
        %v4638 = vunpack.c.l.b16 %v3276
        %v4639 = vunpack.c.h.b16 %v3276
        %v4640 = vunpack.c.l.b16 %v3277
        %v4641 = vunpack.c.h.b16 %v3277
        %v4642 = vunpack.c.l.b16 %v3278
        %v4643 = vunpack.c.h.b16 %v3278
        %v4644 = vunpack.c.l.b16 %v3279
        %v4645 = vunpack.c.h.b16 %v3279
        %v4646 = vunpack.c.l.b16 %v3280
        %v4647 = vunpack.c.h.b16 %v3280
        %v4648 = vunpack.c.l.b16 %v3281
        %v4649 = vunpack.c.h.b16 %v3281
        %v4650 = vunpack.c.l.b16 %v3282
        %v4651 = vunpack.c.h.b16 %v3282
        %v4652 = vunpack.c.l.b16 %v3283
        %v4653 = vunpack.c.h.b16 %v3283
        %v4654 = vunpack.c.l.b16 %v3284
        %v4655 = vunpack.c.h.b16 %v3284
        %v4656 = vunpack.c.l.b16 %v3285
        %v4657 = vunpack.c.h.b16 %v3285
        %v4658 = vunpack.c.l.b16 %v3286
        %v4659 = vunpack.c.h.b16 %v3286
        %v4660 = vunpack.c.l.b16 %v3287
        %v4661 = vunpack.c.h.b16 %v3287
        %v4662 = vunpack.c.l.b16 %v3288
        %v4663 = vunpack.c.h.b16 %v3288
        %v4664 = vunpack.c.l.b16 %v3289
        %v4665 = vunpack.c.h.b16 %v3289
        %v4666 = vunpack.c.l.b16 %v3290
        %v4667 = vunpack.c.h.b16 %v3290
        %v4668 = vunpack.c.l.b16 %v3291
        %v4669 = vunpack.c.h.b16 %v3291
        %v4670 = vunpack.c.l.b16 %v3292
        %v4671 = vunpack.c.h.b16 %v3292
        %v4672 = vunpack.c.l.b16 %v3293
        %v4673 = vunpack.c.h.b16 %v3293
        %v4674 = vunpack.c.l.b16 %v3294
        %v4675 = vunpack.c.h.b16 %v3294
        %v4676 = vunpack.c.l.b16 %v3295
        %v4677 = vunpack.c.h.b16 %v3295
        %v4678 = vunpack.c.l.b16 %v3296
        %v4679 = vunpack.c.h.b16 %v3296
        %v4680 = vunpack.c.l.b16 %v3297
        %v4681 = vunpack.c.h.b16 %v3297
        %v4682 = vunpack.c.l.b16 %v3298
        %v4683 = vunpack.c.h.b16 %v3298
        %v4684 = vunpack.c.l.b16 %v3299
        %v4685 = vunpack.c.h.b16 %v3299
        %v4686 = vunpack.c.l.b16 %v3300
        %v4687 = vunpack.c.h.b16 %v3300
        %v4688 = vunpack.c.l.b16 %v3301
        %v4689 = vunpack.c.h.b16 %v3301
        %v4690 = vunpack.c.l.b16 %v3302
        %v4691 = vunpack.c.h.b16 %v3302
        %v4692 = vunpack.c.l.b16 %v3303
        %v4693 = vunpack.c.h.b16 %v3303
        %v4694 = vunpack.c.l.b16 %v3304
        %v4695 = vunpack.c.h.b16 %v3304
        %v4696 = vunpack.c.l.b16 %v3305
        %v4697 = vunpack.c.h.b16 %v3305
        %v4698 = vunpack.c.l.b16 %v3306
        %v4699 = vunpack.c.h.b16 %v3306
        %v4700 = vunpack.c.l.b16 %v3307
        %v4701 = vunpack.c.h.b16 %v3307
        %v4702 = vunpack.c.l.b16 %v3308
        %v4703 = vunpack.c.h.b16 %v3308
        %v4704 = vunpack.c.l.b16 %v3309
        %v4705 = vunpack.c.h.b16 %v3309
        %v4706 = vunpack.c.l.b16 %v3310
        %v4707 = vunpack.c.h.b16 %v3310
        %v4708 = vunpack.c.l.b16 %v3311
        %v4709 = vunpack.c.h.b16 %v3311
        %v4710 = vunpack.c.l.b16 %v3312
        %v4711 = vunpack.c.h.b16 %v3312
        %v4712 = vunpack.c.l.b16 %v3313
        %v4713 = vunpack.c.h.b16 %v3313
        %v4714 = vunpack.c.l.b16 %v3314
        %v4715 = vunpack.c.h.b16 %v3314
        %v4716 = vunpack.c.l.b16 %v3315
        %v4717 = vunpack.c.h.b16 %v3315
        %v4718 = vunpack.c.l.b16 %v3316
        %v4719 = vunpack.c.h.b16 %v3316
        %v4720 = vunpack.c.l.b16 %v3317
        %v4721 = vunpack.c.h.b16 %v3317
        %v4722 = vunpack.c.l.b16 %v3318
        %v4723 = vunpack.c.h.b16 %v3318
        %v4724 = vunpack.c.l.b16 %v3319
        %v4725 = vunpack.c.h.b16 %v3319
        %v4726 = vunpack.c.l.b16 %v3320
        %v4727 = vunpack.c.h.b16 %v3320
        %v4728 = vunpack.c.l.b16 %v3321
        %v4729 = vunpack.c.h.b16 %v3321
        %v4730 = vunpack.c.l.b16 %v3322
        %v4731 = vunpack.c.h.b16 %v3322
        %v4732 = vunpack.c.l.b16 %v3323
        %v4733 = vunpack.c.h.b16 %v3323
        %v4734 = vunpack.c.l.b16 %v3324
        %v4735 = vunpack.c.h.b16 %v3324
        %v4736 = vunpack.c.l.b16 %v3325
        %v4737 = vunpack.c.h.b16 %v3325
        %v4738 = vunpack.c.l.b16 %v3326
        %v4739 = vunpack.c.h.b16 %v3326
        %v4740 = vunpack.c.l.b16 %v3327
        %v4741 = vunpack.c.h.b16 %v3327
        %v4742 = vunpack.c.l.b16 %v3328
        %v4743 = vunpack.c.h.b16 %v3328
        %v4744 = vunpack.c.l.b16 %v3329
        %v4745 = vunpack.c.h.b16 %v3329
        %v4746 = vunpack.c.l.b16 %v3330
        %v4747 = vunpack.c.h.b16 %v3330
        %v4748 = vunpack.c.l.b16 %v3331
        %v4749 = vunpack.c.h.b16 %v3331
        %v4750 = vunpack.c.l.b16 %v3332
        %v4751 = vunpack.c.h.b16 %v3332
        %v4752 = vunpack.c.l.b16 %v3333
        %v4753 = vunpack.c.h.b16 %v3333
        %v4754 = vunpack.c.l.b16 %v3334
        %v4755 = vunpack.c.h.b16 %v3334
        %v4756 = vunpack.c.l.b16 %v3335
        %v4757 = vunpack.c.h.b16 %v3335
        %v4758 = vunpack.c.l.b16 %v3336
        %v4759 = vunpack.c.h.b16 %v3336
        %v4760 = vunpack.c.l.b16 %v3337
        %v4761 = vunpack.c.h.b16 %v3337
        %v4762 = vunpack.c.l.b16 %v3338
        %v4763 = vunpack.c.h.b16 %v3338
        %v4764 = vunpack.c.l.b16 %v3339
        %v4765 = vunpack.c.h.b16 %v3339
        %v4766 = vunpack.c.l.b16 %v3340
        %v4767 = vunpack.c.h.b16 %v3340
        %v4768 = vunpack.c.l.b16 %v3341
        %v4769 = vunpack.c.h.b16 %v3341
        %v4770 = vunpack.c.l.b16 %v3342
        %v4771 = vunpack.c.h.b16 %v3342
        %v4772 = vunpack.c.l.b16 %v3343
        %v4773 = vunpack.c.h.b16 %v3343
        %v4774 = vunpack.c.l.b16 %v3344
        %v4775 = vunpack.c.h.b16 %v3344
        %v4776 = vunpack.c.l.b16 %v3345
        %v4777 = vunpack.c.h.b16 %v3345
        %v4778 = vunpack.c.l.b16 %v3346
        %v4779 = vunpack.c.h.b16 %v3346
        %v4780 = vunpack.c.l.b16 %v3347
        %v4781 = vunpack.c.h.b16 %v3347
        %v4782 = vunpack.c.l.b16 %v3348
        %v4783 = vunpack.c.h.b16 %v3348
        %v4784 = vunpack.c.l.b16 %v3349
        %v4785 = vunpack.c.h.b16 %v3349
        %v4786 = vunpack.c.l.b16 %v3350
        %v4787 = vunpack.c.h.b16 %v3350
        %v4788 = vunpack.c.l.b16 %v3351
        %v4789 = vunpack.c.h.b16 %v3351
        %v4790 = vunpack.c.l.b16 %v3352
        %v4791 = vunpack.c.h.b16 %v3352
        %v4792 = vunpack.c.l.b16 %v3353
        %v4793 = vunpack.c.h.b16 %v3353
        %v4794 = vunpack.c.l.b16 %v3354
        %v4795 = vunpack.c.h.b16 %v3354
        %v4796 = vunpack.c.l.b16 %v3355
        %v4797 = vunpack.c.h.b16 %v3355
        %v4798 = vunpack.c.l.b16 %v3356
        %v4799 = vunpack.c.h.b16 %v3356
        %v4800 = vunpack.c.l.b16 %v3357
        %v4801 = vunpack.c.h.b16 %v3357
        %v4802 = vunpack.c.l.b16 %v3358
        %v4803 = vunpack.c.h.b16 %v3358
        %v4804 = vunpack.c.l.b16 %v3359
        %v4805 = vunpack.c.h.b16 %v3359
        %v4806 = vunpack.c.l.b16 %v3360
        %v4807 = vunpack.c.h.b16 %v3360
        %v4808 = vunpack.c.l.b16 %v3361
        %v4809 = vunpack.c.h.b16 %v3361
        %v4810 = vunpack.c.l.b16 %v3362
        %v4811 = vunpack.c.h.b16 %v3362
        %v4812 = vunpack.c.l.b16 %v3363
        %v4813 = vunpack.c.h.b16 %v3363
        %v4814 = vunpack.c.l.b16 %v3364
        %v4815 = vunpack.c.h.b16 %v3364
        %v4816 = vunpack.c.l.b16 %v3365
        %v4817 = vunpack.c.h.b16 %v3365
        %v4818 = vunpack.c.l.b16 %v3366
        %v4819 = vunpack.c.h.b16 %v3366
        %v4820 = vunpack.c.l.b16 %v3367
        %v4821 = vunpack.c.h.b16 %v3367
        %v4822 = vunpack.c.l.b16 %v3368
        %v4823 = vunpack.c.h.b16 %v3368
        %v4824 = vunpack.c.l.b16 %v3369
        %v4825 = vunpack.c.h.b16 %v3369
        %v4826 = vunpack.c.l.b16 %v3370
        %v4827 = vunpack.c.h.b16 %v3370
        %v4828 = vunpack.c.l.b16 %v3371
        %v4829 = vunpack.c.h.b16 %v3371
        %v4830 = vunpack.c.l.b16 %v3372
        %v4831 = vunpack.c.h.b16 %v3372
        %v4832 = vunpack.c.l.b16 %v3373
        %v4833 = vunpack.c.h.b16 %v3373
        %v4834 = vunpack.c.l.b16 %v3374
        %v4835 = vunpack.c.h.b16 %v3374
        %v4836 = vunpack.c.l.b16 %v3375
        %v4837 = vunpack.c.h.b16 %v3375
        %v4838 = vunpack.c.l.b16 %v3376
        %v4839 = vunpack.c.h.b16 %v3376
        %v4840 = vunpack.c.l.b16 %v3377
        %v4841 = vunpack.c.h.b16 %v3377
        %v4842 = vunpack.c.l.b16 %v3378
        %v4843 = vunpack.c.h.b16 %v3378
        %v4844 = vunpack.c.l.b16 %v3379
        %v4845 = vunpack.c.h.b16 %v3379
        %v4846 = vunpack.c.l.b16 %v3380
        %v4847 = vunpack.c.h.b16 %v3380
        %v4848 = vunpack.c.l.b16 %v3381
        %v4849 = vunpack.c.h.b16 %v3381
        %v4850 = vunpack.c.l.b16 %v3382
        %v4851 = vunpack.c.h.b16 %v3382
        %v4852 = vunpack.c.l.b16 %v3383
        %v4853 = vunpack.c.h.b16 %v3383
        %v4854 = vunpack.c.l.b16 %v3384
        %v4855 = vunpack.c.h.b16 %v3384
        %v4856 = vunpack.c.l.b16 %v3385
        %v4857 = vunpack.c.h.b16 %v3385
        %v4858 = vunpack.c.l.b16 %v3386
        %v4859 = vunpack.c.h.b16 %v3386
        %v4860 = vunpack.c.l.b16 %v3387
        %v4861 = vunpack.c.h.b16 %v3387
        %v4862 = vunpack.c.l.b16 %v3388
        %v4863 = vunpack.c.h.b16 %v3388
        %v4864 = vunpack.c.l.b16 %v3389
        %v4865 = vunpack.c.h.b16 %v3389
        %v4866 = vunpack.c.l.b16 %v3390
        %v4867 = vunpack.c.h.b16 %v3390
        %v4868 = vunpack.c.l.b16 %v3391
        %v4869 = vunpack.c.h.b16 %v3391
        %v4870 = vunpack.c.l.b16 %v3392
        %v4871 = vunpack.c.h.b16 %v3392
        %v4872 = vunpack.c.l.b16 %v3393
        %v4873 = vunpack.c.h.b16 %v3393
        %v4874 = vunpack.c.l.b16 %v3394
        %v4875 = vunpack.c.h.b16 %v3394
        %v4876 = vunpack.c.l.b16 %v3395
        %v4877 = vunpack.c.h.b16 %v3395
        %v4878 = vunpack.c.l.b16 %v3396
        %v4879 = vunpack.c.h.b16 %v3396
        %v4880 = vunpack.c.l.b16 %v3397
        %v4881 = vunpack.c.h.b16 %v3397
        %v4882 = vunpack.c.l.b16 %v3398
        %v4883 = vunpack.c.h.b16 %v3398
        %v4884 = vunpack.c.l.b16 %v3399
        %v4885 = vunpack.c.h.b16 %v3399
        %v4886 = vunpack.c.l.b16 %v3400
        %v4887 = vunpack.c.h.b16 %v3400
        %v4888 = vunpack.c.l.b16 %v3401
        %v4889 = vunpack.c.h.b16 %v3401
        %v4890 = vunpack.c.l.b16 %v3402
        %v4891 = vunpack.c.h.b16 %v3402
        %v4892 = vunpack.c.l.b16 %v3403
        %v4893 = vunpack.c.h.b16 %v3403
        %v4894 = vunpack.c.l.b16 %v3404
        %v4895 = vunpack.c.h.b16 %v3404
        %v4896 = vunpack.c.l.b16 %v3405
        %v4897 = vunpack.c.h.b16 %v3405
        %v4898 = vunpack.c.l.b16 %v3406
        %v4899 = vunpack.c.h.b16 %v3406
        %v4900 = vunpack.c.l.b16 %v3407
        %v4901 = vunpack.c.h.b16 %v3407
        %v4902 = vunpack.c.l.b16 %v3408
        %v4903 = vunpack.c.h.b16 %v3408
        %v4904 = vunpack.c.l.b16 %v3409
        %v4905 = vunpack.c.h.b16 %v3409
        %v4906 = vunpack.c.l.b16 %v3410
        %v4907 = vunpack.c.h.b16 %v3410
        %v4908 = vunpack.c.l.b16 %v3411
        %v4909 = vunpack.c.h.b16 %v3411
        %v4910 = vunpack.c.l.b16 %v3412
        %v4911 = vunpack.c.h.b16 %v3412
        %v4912 = vunpack.c.l.b16 %v3413
        %v4913 = vunpack.c.h.b16 %v3413
        %v4914 = vunpack.c.l.b16 %v3414
        %v4915 = vunpack.c.h.b16 %v3414
        %v4916 = vunpack.c.l.b16 %v3415
        %v4917 = vunpack.c.h.b16 %v3415
        %v4918 = vunpack.c.l.b16 %v3416
        %v4919 = vunpack.c.h.b16 %v3416
        %v4920 = vunpack.c.l.b16 %v3417
        %v4921 = vunpack.c.h.b16 %v3417
        %v4922 = vunpack.c.l.b16 %v3418
        %v4923 = vunpack.c.h.b16 %v3418
        %v4924 = vunpack.c.l.b16 %v3419
        %v4925 = vunpack.c.h.b16 %v3419
        %v4926 = vunpack.c.l.b16 %v3420
        %v4927 = vunpack.c.h.b16 %v3420
        %v4928 = vunpack.c.l.b16 %v3421
        %v4929 = vunpack.c.h.b16 %v3421
        %v4930 = vunpack.c.l.b16 %v3422
        %v4931 = vunpack.c.h.b16 %v3422
        %v4932 = vunpack.c.l.b16 %v3423
        %v4933 = vunpack.c.h.b16 %v3423
        %v4934 = vunpack.c.l.b16 %v3424
        %v4935 = vunpack.c.h.b16 %v3424
        %v4936 = vunpack.c.l.b16 %v3425
        %v4937 = vunpack.c.h.b16 %v3425
        %v4938 = vunpack.c.l.b16 %v3426
        %v4939 = vunpack.c.h.b16 %v3426
        %v4940 = vunpack.c.l.b16 %v3427
        %v4941 = vunpack.c.h.b16 %v3427
        %v4942 = vunpack.c.l.b16 %v3428
        %v4943 = vunpack.c.h.b16 %v3428
        %v4944 = vunpack.c.l.b16 %v3429
        %v4945 = vunpack.c.h.b16 %v3429
        %v4946 = vunpack.c.l.b16 %v3430
        %v4947 = vunpack.c.h.b16 %v3430
        %v4948 = vunpack.c.l.b16 %v3431
        %v4949 = vunpack.c.h.b16 %v3431
        %v4950 = vunpack.c.l.b16 %v3432
        %v4951 = vunpack.c.h.b16 %v3432
        %v4952 = vunpack.c.l.b16 %v3433
        %v4953 = vunpack.c.h.b16 %v3433
        %v4954 = vunpack.c.l.b16 %v3434
        %v4955 = vunpack.c.h.b16 %v3434
        %v4956 = vunpack.c.l.b16 %v3435
        %v4957 = vunpack.c.h.b16 %v3435
        %v4958 = vunpack.c.l.b16 %v3436
        %v4959 = vunpack.c.h.b16 %v3436
        %v4960 = vunpack.c.l.b16 %v3437
        %v4961 = vunpack.c.h.b16 %v3437
        %v4962 = vunpack.c.l.b16 %v3438
        %v4963 = vunpack.c.h.b16 %v3438
        %v4964 = vunpack.c.l.b16 %v3439
        %v4965 = vunpack.c.h.b16 %v3439
        %v4966 = vunpack.c.l.b16 %v3440
        %v4967 = vunpack.c.h.b16 %v3440
        %v4968 = vunpack.c.l.b16 %v3441
        %v4969 = vunpack.c.h.b16 %v3441
        %v4970 = vunpack.c.l.b16 %v3442
        %v4971 = vunpack.c.h.b16 %v3442
        %v4972 = vunpack.c.l.b16 %v3443
        %v4973 = vunpack.c.h.b16 %v3443
        %v4974 = vunpack.c.l.b16 %v3444
        %v4975 = vunpack.c.h.b16 %v3444
        %v4976 = vunpack.c.l.b16 %v3445
        %v4977 = vunpack.c.h.b16 %v3445
        %v4978 = vunpack.c.l.b16 %v3446
        %v4979 = vunpack.c.h.b16 %v3446
        %v4980 = vunpack.c.l.b16 %v3447
        %v4981 = vunpack.c.h.b16 %v3447
        %v4982 = vunpack.c.l.b16 %v3448
        %v4983 = vunpack.c.h.b16 %v3448
        %v4984 = vunpack.c.l.b16 %v3449
        %v4985 = vunpack.c.h.b16 %v3449
        %v4986 = vunpack.c.l.b16 %v3450
        %v4987 = vunpack.c.h.b16 %v3450
        %v4988 = vunpack.c.l.b16 %v3451
        %v4989 = vunpack.c.h.b16 %v3451
        %v4990 = vunpack.c.l.b16 %v3452
        %v4991 = vunpack.c.h.b16 %v3452
        %v4992 = vunpack.c.l.b16 %v3453
        %v4993 = vunpack.c.h.b16 %v3453
        %v4994 = vunpack.c.l.b16 %v3454
        %v4995 = vunpack.c.h.b16 %v3454
        %v4996 = vunpack.c.l.b16 %v3455
        %v4997 = vunpack.c.h.b16 %v3455
        %v4998 = vunpack.c.l.b16 %v3456
        %v4999 = vunpack.c.h.b16 %v3456
        %v5000 = vunpack.c.l.b16 %v3457
        %v5001 = vunpack.c.h.b16 %v3457
        %v5002 = vunpack.c.l.b16 %v3458
        %v5003 = vunpack.c.h.b16 %v3458
        %v5004 = vunpack.c.l.b16 %v3459
        %v5005 = vunpack.c.h.b16 %v3459
        %v5006 = vunpack.c.l.b16 %v3460
        %v5007 = vunpack.c.h.b16 %v3460
        %v5008 = vunpack.c.l.b16 %v3461
        %v5009 = vunpack.c.h.b16 %v3461
        %v5010 = vunpack.c.l.b16 %v3462
        %v5011 = vunpack.c.h.b16 %v3462
        %v5012 = vunpack.c.l.b16 %v3463
        %v5013 = vunpack.c.h.b16 %v3463
        %v5014 = vunpack.c.l.b16 %v3464
        %v5015 = vunpack.c.h.b16 %v3464
        %v5016 = vunpack.c.l.b16 %v3465
        %v5017 = vunpack.c.h.b16 %v3465
        %v5018 = vunpack.c.l.b16 %v3466
        %v5019 = vunpack.c.h.b16 %v3466
        %v5020 = vunpack.c.l.b16 %v3467
        %v5021 = vunpack.c.h.b16 %v3467
        %v5022 = vunpack.c.l.b16 %v3468
        %v5023 = vunpack.c.h.b16 %v3468
        %v5024 = vunpack.c.l.b16 %v3469
        %v5025 = vunpack.c.h.b16 %v3469
        %v5026 = vunpack.c.l.b16 %v3470
        %v5027 = vunpack.c.h.b16 %v3470
        %v5028 = vunpack.c.l.b16 %v3471
        %v5029 = vunpack.c.h.b16 %v3471
        %v5030 = vunpack.c.l.b16 %v3472
        %v5031 = vunpack.c.h.b16 %v3472
        %v5032 = vunpack.c.l.b16 %v3473
        %v5033 = vunpack.c.h.b16 %v3473
        %v5034 = vunpack.c.l.b16 %v3474
        %v5035 = vunpack.c.h.b16 %v3474
        %v5036 = vunpack.c.l.b16 %v3475
        %v5037 = vunpack.c.h.b16 %v3475
        %v5038 = vunpack.c.l.b16 %v3476
        %v5039 = vunpack.c.h.b16 %v3476
        %v5040 = vunpack.c.l.b16 %v3477
        %v5041 = vunpack.c.h.b16 %v3477
        %v5042 = vunpack.c.l.b16 %v3478
        %v5043 = vunpack.c.h.b16 %v3478
        %v5044 = vunpack.c.l.b16 %v3479
        %v5045 = vunpack.c.h.b16 %v3479
        %v5046 = vunpack.c.l.b16 %v3480
        %v5047 = vunpack.c.h.b16 %v3480
        %v5048 = vunpack.c.l.b16 %v3481
        %v5049 = vunpack.c.h.b16 %v3481
        %v5050 = vunpack.c.l.b16 %v3482
        %v5051 = vunpack.c.h.b16 %v3482
        %v5052 = vunpack.c.l.b16 %v3483
        %v5053 = vunpack.c.h.b16 %v3483
        %v5054 = vunpack.c.l.b16 %v3484
        %v5055 = vunpack.c.h.b16 %v3484
        %v5056 = vunpack.c.l.b16 %v3485
        %v5057 = vunpack.c.h.b16 %v3485
        %v5058 = vunpack.c.l.b16 %v3486
        %v5059 = vunpack.c.h.b16 %v3486
        %v5060 = vunpack.c.l.b16 %v3487
        %v5061 = vunpack.c.h.b16 %v3487
        %v5062 = vunpack.c.l.b16 %v3488
        %v5063 = vunpack.c.h.b16 %v3488
        %v5064 = vunpack.c.l.b16 %v3489
        %v5065 = vunpack.c.h.b16 %v3489
        %v5066 = vunpack.c.l.b16 %v3490
        %v5067 = vunpack.c.h.b16 %v3490
        %v5068 = vunpack.c.l.b16 %v3491
        %v5069 = vunpack.c.h.b16 %v3491
        %v5070 = vunpack.c.l.b16 %v3492
        %v5071 = vunpack.c.h.b16 %v3492
        %v5072 = vunpack.c.l.b16 %v3493
        %v5073 = vunpack.c.h.b16 %v3493
        %v5074 = vunpack.c.l.b16 %v3494
        %v5075 = vunpack.c.h.b16 %v3494
        %v5076 = vunpack.c.l.b16 %v3495
        %v5077 = vunpack.c.h.b16 %v3495
        %v5078 = vunpack.c.l.b16 %v3496
        %v5079 = vunpack.c.h.b16 %v3496
        %v5080 = vunpack.c.l.b16 %v3497
        %v5081 = vunpack.c.h.b16 %v3497
        %v5082 = vunpack.c.l.b16 %v3498
        %v5083 = vunpack.c.h.b16 %v3498
        %v5084 = vunpack.c.l.b16 %v3499
        %v5085 = vunpack.c.h.b16 %v3499
        %v5086 = vunpack.c.l.b16 %v3500
        %v5087 = vunpack.c.h.b16 %v3500
        %v5088 = vunpack.c.l.b16 %v3501
        %v5089 = vunpack.c.h.b16 %v3501
        %v5090 = vunpack.c.l.b16 %v3502
        %v5091 = vunpack.c.h.b16 %v3502
        %v5092 = vunpack.c.l.b16 %v3503
        %v5093 = vunpack.c.h.b16 %v3503
        %v5094 = vunpack.c.l.b16 %v3504
        %v5095 = vunpack.c.h.b16 %v3504
        %v5096 = vunpack.c.l.b16 %v3505
        %v5097 = vunpack.c.h.b16 %v3505
        %v5098 = vunpack.c.l.b16 %v3506
        %v5099 = vunpack.c.h.b16 %v3506
        %v5100 = vunpack.c.l.b16 %v3507
        %v5101 = vunpack.c.h.b16 %v3507
        %v5102 = vunpack.c.l.b16 %v3508
        %v5103 = vunpack.c.h.b16 %v3508
        %v5104 = vunpack.c.l.b16 %v3509
        %v5105 = vunpack.c.h.b16 %v3509
        %v5106 = vunpack.c.l.b16 %v3510
        %v5107 = vunpack.c.h.b16 %v3510
        %v5108 = vunpack.c.l.b16 %v3511
        %v5109 = vunpack.c.h.b16 %v3511
        %v5110 = vunpack.c.l.b16 %v3512
        %v5111 = vunpack.c.h.b16 %v3512
        %v5112 = vunpack.c.l.b16 %v3513
        %v5113 = vunpack.c.h.b16 %v3513
        %v5114 = vunpack.c.l.b16 %v3514
        %v5115 = vunpack.c.h.b16 %v3514
        %v5116 = vunpack.c.l.b16 %v3515
        %v5117 = vunpack.c.h.b16 %v3515
        %v5118 = vunpack.c.l.b16 %v3516
        %v5119 = vunpack.c.h.b16 %v3516
        %v5120 = vunpack.c.l.b16 %v3517
        %v5121 = vunpack.c.h.b16 %v3517
        %v5122 = vunpack.c.l.b16 %v3518
        %v5123 = vunpack.c.h.b16 %v3518
        %v5124 = vunpack.c.l.b16 %v3519
        %v5125 = vunpack.c.h.b16 %v3519
        %v5126 = vunpack.c.l.b16 %v3520
        %v5127 = vunpack.c.h.b16 %v3520
        %v5128 = vunpack.c.l.b16 %v3521
        %v5129 = vunpack.c.h.b16 %v3521
        %v5130 = vunpack.c.l.b16 %v3522
        %v5131 = vunpack.c.h.b16 %v3522
        %v5132 = vunpack.c.l.b16 %v3523
        %v5133 = vunpack.c.h.b16 %v3523
        %v5134 = vunpack.c.l.b16 %v3524
        %v5135 = vunpack.c.h.b16 %v3524
        %v5136 = vunpack.c.l.b16 %v3525
        %v5137 = vunpack.c.h.b16 %v3525
        %v5138 = vunpack.c.l.b16 %v3526
        %v5139 = vunpack.c.h.b16 %v3526
        %v5140 = vunpack.c.l.b16 %v3527
        %v5141 = vunpack.c.h.b16 %v3527
        %v5142 = vunpack.c.l.b16 %v3528
        %v5143 = vunpack.c.h.b16 %v3528
        %v5144 = vunpack.c.l.b16 %v3529
        %v5145 = vunpack.c.h.b16 %v3529
        %v5146 = vunpack.c.l.b16 %v3530
        %v5147 = vunpack.c.h.b16 %v3530
        %v5148 = vunpack.c.l.b16 %v3531
        %v5149 = vunpack.c.h.b16 %v3531
        %v5150 = vunpack.c.l.b16 %v3532
        %v5151 = vunpack.c.h.b16 %v3532
        %v5152 = vunpack.c.l.b16 %v3533
        %v5153 = vunpack.c.h.b16 %v3533
        %v5154 = vpack.c.b16 %v4146, %v4130
        %v5155 = vpack.c.b16 %v4147, %v4131
        %v5156 = vpack.c.b16 %v4148, %v4132
        %v5157 = vpack.c.b16 %v4149, %v4133
        %v5158 = vpack.c.b16 %v4150, %v4134
        %v5159 = vpack.c.b16 %v4151, %v4135
        %v5160 = vpack.c.b16 %v4152, %v4136
        %v5161 = vpack.c.b16 %v4153, %v4137
        %v5162 = vpack.c.b16 %v4154, %v4138
        %v5163 = vpack.c.b16 %v4155, %v4139
        %v5164 = vpack.c.b16 %v4156, %v4140
        %v5165 = vpack.c.b16 %v4157, %v4141
        %v5166 = vpack.c.b16 %v4158, %v4142
        %v5167 = vpack.c.b16 %v4159, %v4143
        %v5168 = vpack.c.b16 %v4160, %v4144
        %v5169 = vpack.c.b16 %v4161, %v4145
        %v5170 = vpack.c.b16 %v4178, %v4162
        %v5171 = vpack.c.b16 %v4179, %v4163
        %v5172 = vpack.c.b16 %v4180, %v4164
        %v5173 = vpack.c.b16 %v4181, %v4165
        %v5174 = vpack.c.b16 %v4182, %v4166
        %v5175 = vpack.c.b16 %v4183, %v4167
        %v5176 = vpack.c.b16 %v4184, %v4168
        %v5177 = vpack.c.b16 %v4185, %v4169
        %v5178 = vpack.c.b16 %v4186, %v4170
        %v5179 = vpack.c.b16 %v4187, %v4171
        %v5180 = vpack.c.b16 %v4188, %v4172
        %v5181 = vpack.c.b16 %v4189, %v4173
        %v5182 = vpack.c.b16 %v4190, %v4174
        %v5183 = vpack.c.b16 %v4191, %v4175
        %v5184 = vpack.c.b16 %v4192, %v4176
        %v5185 = vpack.c.b16 %v4193, %v4177
        %v5186 = vpack.c.b16 %v4210, %v4194
        %v5187 = vpack.c.b16 %v4211, %v4195
        %v5188 = vpack.c.b16 %v4212, %v4196
        %v5189 = vpack.c.b16 %v4213, %v4197
        %v5190 = vpack.c.b16 %v4214, %v4198
        %v5191 = vpack.c.b16 %v4215, %v4199
        %v5192 = vpack.c.b16 %v4216, %v4200
        %v5193 = vpack.c.b16 %v4217, %v4201
        %v5194 = vpack.c.b16 %v4218, %v4202
        %v5195 = vpack.c.b16 %v4219, %v4203
        %v5196 = vpack.c.b16 %v4220, %v4204
        %v5197 = vpack.c.b16 %v4221, %v4205
        %v5198 = vpack.c.b16 %v4222, %v4206
        %v5199 = vpack.c.b16 %v4223, %v4207
        %v5200 = vpack.c.b16 %v4224, %v4208
        %v5201 = vpack.c.b16 %v4225, %v4209
        %v5202 = vpack.c.b16 %v4242, %v4226
        %v5203 = vpack.c.b16 %v4243, %v4227
        %v5204 = vpack.c.b16 %v4244, %v4228
        %v5205 = vpack.c.b16 %v4245, %v4229
        %v5206 = vpack.c.b16 %v4246, %v4230
        %v5207 = vpack.c.b16 %v4247, %v4231
        %v5208 = vpack.c.b16 %v4248, %v4232
        %v5209 = vpack.c.b16 %v4249, %v4233
        %v5210 = vpack.c.b16 %v4250, %v4234
        %v5211 = vpack.c.b16 %v4251, %v4235
        %v5212 = vpack.c.b16 %v4252, %v4236
        %v5213 = vpack.c.b16 %v4253, %v4237
        %v5214 = vpack.c.b16 %v4254, %v4238
        %v5215 = vpack.c.b16 %v4255, %v4239
        %v5216 = vpack.c.b16 %v4256, %v4240
        %v5217 = vpack.c.b16 %v4257, %v4241
        %v5218 = vpack.c.b16 %v4274, %v4258
        %v5219 = vpack.c.b16 %v4275, %v4259
        %v5220 = vpack.c.b16 %v4276, %v4260
        %v5221 = vpack.c.b16 %v4277, %v4261
        %v5222 = vpack.c.b16 %v4278, %v4262
        %v5223 = vpack.c.b16 %v4279, %v4263
        %v5224 = vpack.c.b16 %v4280, %v4264
        %v5225 = vpack.c.b16 %v4281, %v4265
        %v5226 = vpack.c.b16 %v4282, %v4266
        %v5227 = vpack.c.b16 %v4283, %v4267
        %v5228 = vpack.c.b16 %v4284, %v4268
        %v5229 = vpack.c.b16 %v4285, %v4269
        %v5230 = vpack.c.b16 %v4286, %v4270
        %v5231 = vpack.c.b16 %v4287, %v4271
        %v5232 = vpack.c.b16 %v4288, %v4272
        %v5233 = vpack.c.b16 %v4289, %v4273
        %v5234 = vpack.c.b16 %v4306, %v4290
        %v5235 = vpack.c.b16 %v4307, %v4291
        %v5236 = vpack.c.b16 %v4308, %v4292
        %v5237 = vpack.c.b16 %v4309, %v4293
        %v5238 = vpack.c.b16 %v4310, %v4294
        %v5239 = vpack.c.b16 %v4311, %v4295
        %v5240 = vpack.c.b16 %v4312, %v4296
        %v5241 = vpack.c.b16 %v4313, %v4297
        %v5242 = vpack.c.b16 %v4314, %v4298
        %v5243 = vpack.c.b16 %v4315, %v4299
        %v5244 = vpack.c.b16 %v4316, %v4300
        %v5245 = vpack.c.b16 %v4317, %v4301
        %v5246 = vpack.c.b16 %v4318, %v4302
        %v5247 = vpack.c.b16 %v4319, %v4303
        %v5248 = vpack.c.b16 %v4320, %v4304
        %v5249 = vpack.c.b16 %v4321, %v4305
        %v5250 = vpack.c.b16 %v4338, %v4322
        %v5251 = vpack.c.b16 %v4339, %v4323
        %v5252 = vpack.c.b16 %v4340, %v4324
        %v5253 = vpack.c.b16 %v4341, %v4325
        %v5254 = vpack.c.b16 %v4342, %v4326
        %v5255 = vpack.c.b16 %v4343, %v4327
        %v5256 = vpack.c.b16 %v4344, %v4328
        %v5257 = vpack.c.b16 %v4345, %v4329
        %v5258 = vpack.c.b16 %v4346, %v4330
        %v5259 = vpack.c.b16 %v4347, %v4331
        %v5260 = vpack.c.b16 %v4348, %v4332
        %v5261 = vpack.c.b16 %v4349, %v4333
        %v5262 = vpack.c.b16 %v4350, %v4334
        %v5263 = vpack.c.b16 %v4351, %v4335
        %v5264 = vpack.c.b16 %v4352, %v4336
        %v5265 = vpack.c.b16 %v4353, %v4337
        %v5266 = vpack.c.b16 %v4370, %v4354
        %v5267 = vpack.c.b16 %v4371, %v4355
        %v5268 = vpack.c.b16 %v4372, %v4356
        %v5269 = vpack.c.b16 %v4373, %v4357
        %v5270 = vpack.c.b16 %v4374, %v4358
        %v5271 = vpack.c.b16 %v4375, %v4359
        %v5272 = vpack.c.b16 %v4376, %v4360
        %v5273 = vpack.c.b16 %v4377, %v4361
        %v5274 = vpack.c.b16 %v4378, %v4362
        %v5275 = vpack.c.b16 %v4379, %v4363
        %v5276 = vpack.c.b16 %v4380, %v4364
        %v5277 = vpack.c.b16 %v4381, %v4365
        %v5278 = vpack.c.b16 %v4382, %v4366
        %v5279 = vpack.c.b16 %v4383, %v4367
        %v5280 = vpack.c.b16 %v4384, %v4368
        %v5281 = vpack.c.b16 %v4385, %v4369
        %v5282 = vpack.c.b16 %v4402, %v4386
        %v5283 = vpack.c.b16 %v4403, %v4387
        %v5284 = vpack.c.b16 %v4404, %v4388
        %v5285 = vpack.c.b16 %v4405, %v4389
        %v5286 = vpack.c.b16 %v4406, %v4390
        %v5287 = vpack.c.b16 %v4407, %v4391
        %v5288 = vpack.c.b16 %v4408, %v4392
        %v5289 = vpack.c.b16 %v4409, %v4393
        %v5290 = vpack.c.b16 %v4410, %v4394
        %v5291 = vpack.c.b16 %v4411, %v4395
        %v5292 = vpack.c.b16 %v4412, %v4396
        %v5293 = vpack.c.b16 %v4413, %v4397
        %v5294 = vpack.c.b16 %v4414, %v4398
        %v5295 = vpack.c.b16 %v4415, %v4399
        %v5296 = vpack.c.b16 %v4416, %v4400
        %v5297 = vpack.c.b16 %v4417, %v4401
        %v5298 = vpack.c.b16 %v4434, %v4418
        %v5299 = vpack.c.b16 %v4435, %v4419
        %v5300 = vpack.c.b16 %v4436, %v4420
        %v5301 = vpack.c.b16 %v4437, %v4421
        %v5302 = vpack.c.b16 %v4438, %v4422
        %v5303 = vpack.c.b16 %v4439, %v4423
        %v5304 = vpack.c.b16 %v4440, %v4424
        %v5305 = vpack.c.b16 %v4441, %v4425
        %v5306 = vpack.c.b16 %v4442, %v4426
        %v5307 = vpack.c.b16 %v4443, %v4427
        %v5308 = vpack.c.b16 %v4444, %v4428
        %v5309 = vpack.c.b16 %v4445, %v4429
        %v5310 = vpack.c.b16 %v4446, %v4430
        %v5311 = vpack.c.b16 %v4447, %v4431
        %v5312 = vpack.c.b16 %v4448, %v4432
        %v5313 = vpack.c.b16 %v4449, %v4433
        %v5314 = vpack.c.b16 %v4466, %v4450
        %v5315 = vpack.c.b16 %v4467, %v4451
        %v5316 = vpack.c.b16 %v4468, %v4452
        %v5317 = vpack.c.b16 %v4469, %v4453
        %v5318 = vpack.c.b16 %v4470, %v4454
        %v5319 = vpack.c.b16 %v4471, %v4455
        %v5320 = vpack.c.b16 %v4472, %v4456
        %v5321 = vpack.c.b16 %v4473, %v4457
        %v5322 = vpack.c.b16 %v4474, %v4458
        %v5323 = vpack.c.b16 %v4475, %v4459
        %v5324 = vpack.c.b16 %v4476, %v4460
        %v5325 = vpack.c.b16 %v4477, %v4461
        %v5326 = vpack.c.b16 %v4478, %v4462
        %v5327 = vpack.c.b16 %v4479, %v4463
        %v5328 = vpack.c.b16 %v4480, %v4464
        %v5329 = vpack.c.b16 %v4481, %v4465
        %v5330 = vpack.c.b16 %v4498, %v4482
        %v5331 = vpack.c.b16 %v4499, %v4483
        %v5332 = vpack.c.b16 %v4500, %v4484
        %v5333 = vpack.c.b16 %v4501, %v4485
        %v5334 = vpack.c.b16 %v4502, %v4486
        %v5335 = vpack.c.b16 %v4503, %v4487
        %v5336 = vpack.c.b16 %v4504, %v4488
        %v5337 = vpack.c.b16 %v4505, %v4489
        %v5338 = vpack.c.b16 %v4506, %v4490
        %v5339 = vpack.c.b16 %v4507, %v4491
        %v5340 = vpack.c.b16 %v4508, %v4492
        %v5341 = vpack.c.b16 %v4509, %v4493
        %v5342 = vpack.c.b16 %v4510, %v4494
        %v5343 = vpack.c.b16 %v4511, %v4495
        %v5344 = vpack.c.b16 %v4512, %v4496
        %v5345 = vpack.c.b16 %v4513, %v4497
        %v5346 = vpack.c.b16 %v4530, %v4514
        %v5347 = vpack.c.b16 %v4531, %v4515
        %v5348 = vpack.c.b16 %v4532, %v4516
        %v5349 = vpack.c.b16 %v4533, %v4517
        %v5350 = vpack.c.b16 %v4534, %v4518
        %v5351 = vpack.c.b16 %v4535, %v4519
        %v5352 = vpack.c.b16 %v4536, %v4520
        %v5353 = vpack.c.b16 %v4537, %v4521
        %v5354 = vpack.c.b16 %v4538, %v4522
        %v5355 = vpack.c.b16 %v4539, %v4523
        %v5356 = vpack.c.b16 %v4540, %v4524
        %v5357 = vpack.c.b16 %v4541, %v4525
        %v5358 = vpack.c.b16 %v4542, %v4526
        %v5359 = vpack.c.b16 %v4543, %v4527
        %v5360 = vpack.c.b16 %v4544, %v4528
        %v5361 = vpack.c.b16 %v4545, %v4529
        %v5362 = vpack.c.b16 %v4562, %v4546
        %v5363 = vpack.c.b16 %v4563, %v4547
        %v5364 = vpack.c.b16 %v4564, %v4548
        %v5365 = vpack.c.b16 %v4565, %v4549
        %v5366 = vpack.c.b16 %v4566, %v4550
        %v5367 = vpack.c.b16 %v4567, %v4551
        %v5368 = vpack.c.b16 %v4568, %v4552
        %v5369 = vpack.c.b16 %v4569, %v4553
        %v5370 = vpack.c.b16 %v4570, %v4554
        %v5371 = vpack.c.b16 %v4571, %v4555
        %v5372 = vpack.c.b16 %v4572, %v4556
        %v5373 = vpack.c.b16 %v4573, %v4557
        %v5374 = vpack.c.b16 %v4574, %v4558
        %v5375 = vpack.c.b16 %v4575, %v4559
        %v5376 = vpack.c.b16 %v4576, %v4560
        %v5377 = vpack.c.b16 %v4577, %v4561
        %v5378 = vpack.c.b16 %v4594, %v4578
        %v5379 = vpack.c.b16 %v4595, %v4579
        %v5380 = vpack.c.b16 %v4596, %v4580
        %v5381 = vpack.c.b16 %v4597, %v4581
        %v5382 = vpack.c.b16 %v4598, %v4582
        %v5383 = vpack.c.b16 %v4599, %v4583
        %v5384 = vpack.c.b16 %v4600, %v4584
        %v5385 = vpack.c.b16 %v4601, %v4585
        %v5386 = vpack.c.b16 %v4602, %v4586
        %v5387 = vpack.c.b16 %v4603, %v4587
        %v5388 = vpack.c.b16 %v4604, %v4588
        %v5389 = vpack.c.b16 %v4605, %v4589
        %v5390 = vpack.c.b16 %v4606, %v4590
        %v5391 = vpack.c.b16 %v4607, %v4591
        %v5392 = vpack.c.b16 %v4608, %v4592
        %v5393 = vpack.c.b16 %v4609, %v4593
        %v5394 = vpack.c.b16 %v4626, %v4610
        %v5395 = vpack.c.b16 %v4627, %v4611
        %v5396 = vpack.c.b16 %v4628, %v4612
        %v5397 = vpack.c.b16 %v4629, %v4613
        %v5398 = vpack.c.b16 %v4630, %v4614
        %v5399 = vpack.c.b16 %v4631, %v4615
        %v5400 = vpack.c.b16 %v4632, %v4616
        %v5401 = vpack.c.b16 %v4633, %v4617
        %v5402 = vpack.c.b16 %v4634, %v4618
        %v5403 = vpack.c.b16 %v4635, %v4619
        %v5404 = vpack.c.b16 %v4636, %v4620
        %v5405 = vpack.c.b16 %v4637, %v4621
        %v5406 = vpack.c.b16 %v4638, %v4622
        %v5407 = vpack.c.b16 %v4639, %v4623
        %v5408 = vpack.c.b16 %v4640, %v4624
        %v5409 = vpack.c.b16 %v4641, %v4625
        %v5410 = vpack.c.b16 %v4658, %v4642
        %v5411 = vpack.c.b16 %v4659, %v4643
        %v5412 = vpack.c.b16 %v4660, %v4644
        %v5413 = vpack.c.b16 %v4661, %v4645
        %v5414 = vpack.c.b16 %v4662, %v4646
        %v5415 = vpack.c.b16 %v4663, %v4647
        %v5416 = vpack.c.b16 %v4664, %v4648
        %v5417 = vpack.c.b16 %v4665, %v4649
        %v5418 = vpack.c.b16 %v4666, %v4650
        %v5419 = vpack.c.b16 %v4667, %v4651
        %v5420 = vpack.c.b16 %v4668, %v4652
        %v5421 = vpack.c.b16 %v4669, %v4653
        %v5422 = vpack.c.b16 %v4670, %v4654
        %v5423 = vpack.c.b16 %v4671, %v4655
        %v5424 = vpack.c.b16 %v4672, %v4656
        %v5425 = vpack.c.b16 %v4673, %v4657
        %v5426 = vpack.c.b16 %v4690, %v4674
        %v5427 = vpack.c.b16 %v4691, %v4675
        %v5428 = vpack.c.b16 %v4692, %v4676
        %v5429 = vpack.c.b16 %v4693, %v4677
        %v5430 = vpack.c.b16 %v4694, %v4678
        %v5431 = vpack.c.b16 %v4695, %v4679
        %v5432 = vpack.c.b16 %v4696, %v4680
        %v5433 = vpack.c.b16 %v4697, %v4681
        %v5434 = vpack.c.b16 %v4698, %v4682
        %v5435 = vpack.c.b16 %v4699, %v4683
        %v5436 = vpack.c.b16 %v4700, %v4684
        %v5437 = vpack.c.b16 %v4701, %v4685
        %v5438 = vpack.c.b16 %v4702, %v4686
        %v5439 = vpack.c.b16 %v4703, %v4687
        %v5440 = vpack.c.b16 %v4704, %v4688
        %v5441 = vpack.c.b16 %v4705, %v4689
        %v5442 = vpack.c.b16 %v4722, %v4706
        %v5443 = vpack.c.b16 %v4723, %v4707
        %v5444 = vpack.c.b16 %v4724, %v4708
        %v5445 = vpack.c.b16 %v4725, %v4709
        %v5446 = vpack.c.b16 %v4726, %v4710
        %v5447 = vpack.c.b16 %v4727, %v4711
        %v5448 = vpack.c.b16 %v4728, %v4712
        %v5449 = vpack.c.b16 %v4729, %v4713
        %v5450 = vpack.c.b16 %v4730, %v4714
        %v5451 = vpack.c.b16 %v4731, %v4715
        %v5452 = vpack.c.b16 %v4732, %v4716
        %v5453 = vpack.c.b16 %v4733, %v4717
        %v5454 = vpack.c.b16 %v4734, %v4718
        %v5455 = vpack.c.b16 %v4735, %v4719
        %v5456 = vpack.c.b16 %v4736, %v4720
        %v5457 = vpack.c.b16 %v4737, %v4721
        %v5458 = vpack.c.b16 %v4754, %v4738
        %v5459 = vpack.c.b16 %v4755, %v4739
        %v5460 = vpack.c.b16 %v4756, %v4740
        %v5461 = vpack.c.b16 %v4757, %v4741
        %v5462 = vpack.c.b16 %v4758, %v4742
        %v5463 = vpack.c.b16 %v4759, %v4743
        %v5464 = vpack.c.b16 %v4760, %v4744
        %v5465 = vpack.c.b16 %v4761, %v4745
        %v5466 = vpack.c.b16 %v4762, %v4746
        %v5467 = vpack.c.b16 %v4763, %v4747
        %v5468 = vpack.c.b16 %v4764, %v4748
        %v5469 = vpack.c.b16 %v4765, %v4749
        %v5470 = vpack.c.b16 %v4766, %v4750
        %v5471 = vpack.c.b16 %v4767, %v4751
        %v5472 = vpack.c.b16 %v4768, %v4752
        %v5473 = vpack.c.b16 %v4769, %v4753
        %v5474 = vpack.c.b16 %v4786, %v4770
        %v5475 = vpack.c.b16 %v4787, %v4771
        %v5476 = vpack.c.b16 %v4788, %v4772
        %v5477 = vpack.c.b16 %v4789, %v4773
        %v5478 = vpack.c.b16 %v4790, %v4774
        %v5479 = vpack.c.b16 %v4791, %v4775
        %v5480 = vpack.c.b16 %v4792, %v4776
        %v5481 = vpack.c.b16 %v4793, %v4777
        %v5482 = vpack.c.b16 %v4794, %v4778
        %v5483 = vpack.c.b16 %v4795, %v4779
        %v5484 = vpack.c.b16 %v4796, %v4780
        %v5485 = vpack.c.b16 %v4797, %v4781
        %v5486 = vpack.c.b16 %v4798, %v4782
        %v5487 = vpack.c.b16 %v4799, %v4783
        %v5488 = vpack.c.b16 %v4800, %v4784
        %v5489 = vpack.c.b16 %v4801, %v4785
        %v5490 = vpack.c.b16 %v4818, %v4802
        %v5491 = vpack.c.b16 %v4819, %v4803
        %v5492 = vpack.c.b16 %v4820, %v4804
        %v5493 = vpack.c.b16 %v4821, %v4805
        %v5494 = vpack.c.b16 %v4822, %v4806
        %v5495 = vpack.c.b16 %v4823, %v4807
        %v5496 = vpack.c.b16 %v4824, %v4808
        %v5497 = vpack.c.b16 %v4825, %v4809
        %v5498 = vpack.c.b16 %v4826, %v4810
        %v5499 = vpack.c.b16 %v4827, %v4811
        %v5500 = vpack.c.b16 %v4828, %v4812
        %v5501 = vpack.c.b16 %v4829, %v4813
        %v5502 = vpack.c.b16 %v4830, %v4814
        %v5503 = vpack.c.b16 %v4831, %v4815
        %v5504 = vpack.c.b16 %v4832, %v4816
        %v5505 = vpack.c.b16 %v4833, %v4817
        %v5506 = vpack.c.b16 %v4850, %v4834
        %v5507 = vpack.c.b16 %v4851, %v4835
        %v5508 = vpack.c.b16 %v4852, %v4836
        %v5509 = vpack.c.b16 %v4853, %v4837
        %v5510 = vpack.c.b16 %v4854, %v4838
        %v5511 = vpack.c.b16 %v4855, %v4839
        %v5512 = vpack.c.b16 %v4856, %v4840
        %v5513 = vpack.c.b16 %v4857, %v4841
        %v5514 = vpack.c.b16 %v4858, %v4842
        %v5515 = vpack.c.b16 %v4859, %v4843
        %v5516 = vpack.c.b16 %v4860, %v4844
        %v5517 = vpack.c.b16 %v4861, %v4845
        %v5518 = vpack.c.b16 %v4862, %v4846
        %v5519 = vpack.c.b16 %v4863, %v4847
        %v5520 = vpack.c.b16 %v4864, %v4848
        %v5521 = vpack.c.b16 %v4865, %v4849
        %v5522 = vpack.c.b16 %v4882, %v4866
        %v5523 = vpack.c.b16 %v4883, %v4867
        %v5524 = vpack.c.b16 %v4884, %v4868
        %v5525 = vpack.c.b16 %v4885, %v4869
        %v5526 = vpack.c.b16 %v4886, %v4870
        %v5527 = vpack.c.b16 %v4887, %v4871
        %v5528 = vpack.c.b16 %v4888, %v4872
        %v5529 = vpack.c.b16 %v4889, %v4873
        %v5530 = vpack.c.b16 %v4890, %v4874
        %v5531 = vpack.c.b16 %v4891, %v4875
        %v5532 = vpack.c.b16 %v4892, %v4876
        %v5533 = vpack.c.b16 %v4893, %v4877
        %v5534 = vpack.c.b16 %v4894, %v4878
        %v5535 = vpack.c.b16 %v4895, %v4879
        %v5536 = vpack.c.b16 %v4896, %v4880
        %v5537 = vpack.c.b16 %v4897, %v4881
        %v5538 = vpack.c.b16 %v4914, %v4898
        %v5539 = vpack.c.b16 %v4915, %v4899
        %v5540 = vpack.c.b16 %v4916, %v4900
        %v5541 = vpack.c.b16 %v4917, %v4901
        %v5542 = vpack.c.b16 %v4918, %v4902
        %v5543 = vpack.c.b16 %v4919, %v4903
        %v5544 = vpack.c.b16 %v4920, %v4904
        %v5545 = vpack.c.b16 %v4921, %v4905
        %v5546 = vpack.c.b16 %v4922, %v4906
        %v5547 = vpack.c.b16 %v4923, %v4907
        %v5548 = vpack.c.b16 %v4924, %v4908
        %v5549 = vpack.c.b16 %v4925, %v4909
        %v5550 = vpack.c.b16 %v4926, %v4910
        %v5551 = vpack.c.b16 %v4927, %v4911
        %v5552 = vpack.c.b16 %v4928, %v4912
        %v5553 = vpack.c.b16 %v4929, %v4913
        %v5554 = vpack.c.b16 %v4946, %v4930
        %v5555 = vpack.c.b16 %v4947, %v4931
        %v5556 = vpack.c.b16 %v4948, %v4932
        %v5557 = vpack.c.b16 %v4949, %v4933
        %v5558 = vpack.c.b16 %v4950, %v4934
        %v5559 = vpack.c.b16 %v4951, %v4935
        %v5560 = vpack.c.b16 %v4952, %v4936
        %v5561 = vpack.c.b16 %v4953, %v4937
        %v5562 = vpack.c.b16 %v4954, %v4938
        %v5563 = vpack.c.b16 %v4955, %v4939
        %v5564 = vpack.c.b16 %v4956, %v4940
        %v5565 = vpack.c.b16 %v4957, %v4941
        %v5566 = vpack.c.b16 %v4958, %v4942
        %v5567 = vpack.c.b16 %v4959, %v4943
        %v5568 = vpack.c.b16 %v4960, %v4944
        %v5569 = vpack.c.b16 %v4961, %v4945
        %v5570 = vpack.c.b16 %v4978, %v4962
        %v5571 = vpack.c.b16 %v4979, %v4963
        %v5572 = vpack.c.b16 %v4980, %v4964
        %v5573 = vpack.c.b16 %v4981, %v4965
        %v5574 = vpack.c.b16 %v4982, %v4966
        %v5575 = vpack.c.b16 %v4983, %v4967
        %v5576 = vpack.c.b16 %v4984, %v4968
        %v5577 = vpack.c.b16 %v4985, %v4969
        %v5578 = vpack.c.b16 %v4986, %v4970
        %v5579 = vpack.c.b16 %v4987, %v4971
        %v5580 = vpack.c.b16 %v4988, %v4972
        %v5581 = vpack.c.b16 %v4989, %v4973
        %v5582 = vpack.c.b16 %v4990, %v4974
        %v5583 = vpack.c.b16 %v4991, %v4975
        %v5584 = vpack.c.b16 %v4992, %v4976
        %v5585 = vpack.c.b16 %v4993, %v4977
        %v5586 = vpack.c.b16 %v5010, %v4994
        %v5587 = vpack.c.b16 %v5011, %v4995
        %v5588 = vpack.c.b16 %v5012, %v4996
        %v5589 = vpack.c.b16 %v5013, %v4997
        %v5590 = vpack.c.b16 %v5014, %v4998
        %v5591 = vpack.c.b16 %v5015, %v4999
        %v5592 = vpack.c.b16 %v5016, %v5000
        %v5593 = vpack.c.b16 %v5017, %v5001
        %v5594 = vpack.c.b16 %v5018, %v5002
        %v5595 = vpack.c.b16 %v5019, %v5003
        %v5596 = vpack.c.b16 %v5020, %v5004
        %v5597 = vpack.c.b16 %v5021, %v5005
        %v5598 = vpack.c.b16 %v5022, %v5006
        %v5599 = vpack.c.b16 %v5023, %v5007
        %v5600 = vpack.c.b16 %v5024, %v5008
        %v5601 = vpack.c.b16 %v5025, %v5009
        %v5602 = vpack.c.b16 %v5042, %v5026
        %v5603 = vpack.c.b16 %v5043, %v5027
        %v5604 = vpack.c.b16 %v5044, %v5028
        %v5605 = vpack.c.b16 %v5045, %v5029
        %v5606 = vpack.c.b16 %v5046, %v5030
        %v5607 = vpack.c.b16 %v5047, %v5031
        %v5608 = vpack.c.b16 %v5048, %v5032
        %v5609 = vpack.c.b16 %v5049, %v5033
        %v5610 = vpack.c.b16 %v5050, %v5034
        %v5611 = vpack.c.b16 %v5051, %v5035
        %v5612 = vpack.c.b16 %v5052, %v5036
        %v5613 = vpack.c.b16 %v5053, %v5037
        %v5614 = vpack.c.b16 %v5054, %v5038
        %v5615 = vpack.c.b16 %v5055, %v5039
        %v5616 = vpack.c.b16 %v5056, %v5040
        %v5617 = vpack.c.b16 %v5057, %v5041
        %v5618 = vpack.c.b16 %v5074, %v5058
        %v5619 = vpack.c.b16 %v5075, %v5059
        %v5620 = vpack.c.b16 %v5076, %v5060
        %v5621 = vpack.c.b16 %v5077, %v5061
        %v5622 = vpack.c.b16 %v5078, %v5062
        %v5623 = vpack.c.b16 %v5079, %v5063
        %v5624 = vpack.c.b16 %v5080, %v5064
        %v5625 = vpack.c.b16 %v5081, %v5065
        %v5626 = vpack.c.b16 %v5082, %v5066
        %v5627 = vpack.c.b16 %v5083, %v5067
        %v5628 = vpack.c.b16 %v5084, %v5068
        %v5629 = vpack.c.b16 %v5085, %v5069
        %v5630 = vpack.c.b16 %v5086, %v5070
        %v5631 = vpack.c.b16 %v5087, %v5071
        %v5632 = vpack.c.b16 %v5088, %v5072
        %v5633 = vpack.c.b16 %v5089, %v5073
        %v5634 = vpack.c.b16 %v5106, %v5090
        %v5635 = vpack.c.b16 %v5107, %v5091
        %v5636 = vpack.c.b16 %v5108, %v5092
        %v5637 = vpack.c.b16 %v5109, %v5093
        %v5638 = vpack.c.b16 %v5110, %v5094
        %v5639 = vpack.c.b16 %v5111, %v5095
        %v5640 = vpack.c.b16 %v5112, %v5096
        %v5641 = vpack.c.b16 %v5113, %v5097
        %v5642 = vpack.c.b16 %v5114, %v5098
        %v5643 = vpack.c.b16 %v5115, %v5099
        %v5644 = vpack.c.b16 %v5116, %v5100
        %v5645 = vpack.c.b16 %v5117, %v5101
        %v5646 = vpack.c.b16 %v5118, %v5102
        %v5647 = vpack.c.b16 %v5119, %v5103
        %v5648 = vpack.c.b16 %v5120, %v5104
        %v5649 = vpack.c.b16 %v5121, %v5105
        %v5650 = vpack.c.b16 %v5138, %v5122
        %v5651 = vpack.c.b16 %v5139, %v5123
        %v5652 = vpack.c.b16 %v5140, %v5124
        %v5653 = vpack.c.b16 %v5141, %v5125
        %v5654 = vpack.c.b16 %v5142, %v5126
        %v5655 = vpack.c.b16 %v5143, %v5127
        %v5656 = vpack.c.b16 %v5144, %v5128
        %v5657 = vpack.c.b16 %v5145, %v5129
        %v5658 = vpack.c.b16 %v5146, %v5130
        %v5659 = vpack.c.b16 %v5147, %v5131
        %v5660 = vpack.c.b16 %v5148, %v5132
        %v5661 = vpack.c.b16 %v5149, %v5133
        %v5662 = vpack.c.b16 %v5150, %v5134
        %v5663 = vpack.c.b16 %v5151, %v5135
        %v5664 = vpack.c.b16 %v5152, %v5136
        %v5665 = vpack.c.b16 %v5153, %v5137
        %6178 = vmatprep.subr.bf16.mxu0 %v5155
        %6179 = vmatpush1.bf16.msra.mxu0 %v5154
        %6180 = vmatprep.subr.bf16.mxu0 %v5171
        %6181 = vmatpush1.bf16.msra.mxu0 %v5170
        %6182 = vmatprep.subr.bf16.mxu0 %v5187
        %6183 = vmatpush1.bf16.msra.mxu0 %v5186
        %6184 = vmatprep.subr.bf16.mxu0 %v5203
        %6185 = vmatpush1.bf16.msra.mxu0 %v5202
        %6186 = vmatprep.subr.bf16.mxu0 %v5219
        %6187 = vmatpush1.bf16.msra.mxu0 %v5218
        %6188 = vmatprep.subr.bf16.mxu0 %v5235
        %6189 = vmatpush1.bf16.msra.mxu0 %v5234
        %6190 = vmatprep.subr.bf16.mxu0 %v5251
        %6191 = vmatpush1.bf16.msra.mxu0 %v5250
        %6192 = vmatprep.subr.bf16.mxu0 %v5267
        %6193 = vmatpush1.bf16.msra.mxu0 %v5266
        %6194 = vmatprep.subr.bf16.mxu0 %v5283
        %6195 = vmatpush1.bf16.msra.mxu0 %v5282
        %6196 = vmatprep.subr.bf16.mxu0 %v5299
        %6197 = vmatpush1.bf16.msra.mxu0 %v5298
        %6198 = vmatprep.subr.bf16.mxu0 %v5315
        %6199 = vmatpush1.bf16.msra.mxu0 %v5314
        %6200 = vmatprep.subr.bf16.mxu0 %v5331
        %6201 = vmatpush1.bf16.msra.mxu0 %v5330
        %6202 = vmatprep.subr.bf16.mxu0 %v5347
        %6203 = vmatpush1.bf16.msra.mxu0 %v5346
        %6204 = vmatprep.subr.bf16.mxu0 %v5363
        %6205 = vmatpush1.bf16.msra.mxu0 %v5362
        %6206 = vmatprep.subr.bf16.mxu0 %v5379
        %6207 = vmatpush1.bf16.msra.mxu0 %v5378
        %6208 = vmatprep.subr.bf16.mxu0 %v5395
        %6209 = vmatpush1.bf16.msra.mxu0 %v5394
        %6210 = vmatprep.mubr.bf16.mxu0 %v3019
        %6211 = vmatmul.mubr.bf16.gmra.mrb[0].mxu0 %v3018
        %v6212 = vpop.f32.mrb[0].mxu0
        %v6213 = vadd.f32 %v3541, %v6212
        %v6214 = vpop.f32.mrb[0].mxu0
        %v6215 = vadd.f32 %v3545, %v6214
        %v6216 = vpop.f32.mrb[0].mxu0
        %v6217 = vadd.f32 %v3541, %v6216
        %v6218 = vpop.f32.mrb[0].mxu0
        %v6219 = vadd.f32 %v3545, %v6218
        %6220 = vdwg.mxu0
        %6221 = vmatprep.subr.bf16.mxu0 %v5411
        %6222 = vmatpush1.bf16.msra.mxu0 %v5410
        %6223 = vmatprep.subr.bf16.mxu0 %v5427
        %6224 = vmatpush1.bf16.msra.mxu0 %v5426
        %6225 = vmatprep.subr.bf16.mxu0 %v5443
        %6226 = vmatpush1.bf16.msra.mxu0 %v5442
        %6227 = vmatprep.subr.bf16.mxu0 %v5459
        %6228 = vmatpush1.bf16.msra.mxu0 %v5458
        %6229 = vmatprep.subr.bf16.mxu0 %v5475
        %6230 = vmatpush1.bf16.msra.mxu0 %v5474
        %6231 = vmatprep.subr.bf16.mxu0 %v5491
        %6232 = vmatpush1.bf16.msra.mxu0 %v5490
        %6233 = vmatprep.subr.bf16.mxu0 %v5507
        %6234 = vmatpush1.bf16.msra.mxu0 %v5506
        %6235 = vmatprep.subr.bf16.mxu0 %v5523
        %6236 = vmatpush1.bf16.msra.mxu0 %v5522
        %6237 = vmatprep.subr.bf16.mxu0 %v5539
        %6238 = vmatpush1.bf16.msra.mxu0 %v5538
        %6239 = vmatprep.subr.bf16.mxu0 %v5555
        %6240 = vmatpush1.bf16.msra.mxu0 %v5554
        %6241 = vmatprep.subr.bf16.mxu0 %v5571
        %6242 = vmatpush1.bf16.msra.mxu0 %v5570
        %6243 = vmatprep.subr.bf16.mxu0 %v5587
        %6244 = vmatpush1.bf16.msra.mxu0 %v5586
        %6245 = vmatprep.subr.bf16.mxu0 %v5603
        %6246 = vmatpush1.bf16.msra.mxu0 %v5602
        %6247 = vmatprep.subr.bf16.mxu0 %v5619
        %6248 = vmatpush1.bf16.msra.mxu0 %v5618
        %6249 = vmatprep.subr.bf16.mxu0 %v5635
        %6250 = vmatpush1.bf16.msra.mxu0 %v5634
        %6251 = vmatprep.subr.bf16.mxu0 %v5651
        %6252 = vmatpush1.bf16.msra.mxu0 %v5650
        %6253 = vmatprep.mubr.bf16.mxu0 %v3021
        %6254 = vmatmul.mubr.bf16.gmra.mrb[0].mxu0 %v3020
        %v6255 = vpop.f32.mrb[0].mxu0
        %v6256 = vadd.f32 %v6213, %v6255
        %v6257 = vpop.f32.mrb[0].mxu0
        %v6258 = vadd.f32 %v6215, %v6257
        %v6259 = vpop.f32.mrb[0].mxu0
        %v6260 = vadd.f32 %v6217, %v6259
        %v6261 = vpop.f32.mrb[0].mxu0
        %v6262 = vadd.f32 %v6219, %v6261
        %6263 = vdwg.mxu0
        %6264 = vmatprep.subr.bf16.mxu0 %v5157
        %6265 = vmatpush1.bf16.msra.mxu0 %v5156
        %6266 = vmatprep.subr.bf16.mxu0 %v5173
        %6267 = vmatpush1.bf16.msra.mxu0 %v5172
        %6268 = vmatprep.subr.bf16.mxu0 %v5189
        %6269 = vmatpush1.bf16.msra.mxu0 %v5188
        %6270 = vmatprep.subr.bf16.mxu0 %v5205
        %6271 = vmatpush1.bf16.msra.mxu0 %v5204
        %6272 = vmatprep.subr.bf16.mxu0 %v5221
        %6273 = vmatpush1.bf16.msra.mxu0 %v5220
        %6274 = vmatprep.subr.bf16.mxu0 %v5237
        %6275 = vmatpush1.bf16.msra.mxu0 %v5236
        %6276 = vmatprep.subr.bf16.mxu0 %v5253
        %6277 = vmatpush1.bf16.msra.mxu0 %v5252
        %6278 = vmatprep.subr.bf16.mxu0 %v5269
        %6279 = vmatpush1.bf16.msra.mxu0 %v5268
        %6280 = vmatprep.subr.bf16.mxu0 %v5285
        %6281 = vmatpush1.bf16.msra.mxu0 %v5284
        %6282 = vmatprep.subr.bf16.mxu0 %v5301
        %6283 = vmatpush1.bf16.msra.mxu0 %v5300
        %6284 = vmatprep.subr.bf16.mxu0 %v5317
        %6285 = vmatpush1.bf16.msra.mxu0 %v5316
        %6286 = vmatprep.subr.bf16.mxu0 %v5333
        %6287 = vmatpush1.bf16.msra.mxu0 %v5332
        %6288 = vmatprep.subr.bf16.mxu0 %v5349
        %6289 = vmatpush1.bf16.msra.mxu0 %v5348
        %6290 = vmatprep.subr.bf16.mxu0 %v5365
        %6291 = vmatpush1.bf16.msra.mxu0 %v5364
        %6292 = vmatprep.subr.bf16.mxu0 %v5381
        %6293 = vmatpush1.bf16.msra.mxu0 %v5380
        %6294 = vmatprep.subr.bf16.mxu0 %v5397
        %6295 = vmatpush1.bf16.msra.mxu0 %v5396
        %6296 = vmatprep.mubr.bf16.mxu0 %v3019
        %6297 = vmatmul.mubr.bf16.gmra.mrb[0].mxu0 %v3018
        %v6298 = vpop.f32.mrb[0].mxu0
        %v6299 = vadd.f32 %v3549, %v6298
        %v6300 = vpop.f32.mrb[0].mxu0
        %v6301 = vadd.f32 %v3553, %v6300
        %v6302 = vpop.f32.mrb[0].mxu0
        %v6303 = vadd.f32 %v3549, %v6302
        %v6304 = vpop.f32.mrb[0].mxu0
        %v6305 = vadd.f32 %v3553, %v6304
        %6306 = vdwg.mxu0
        %6307 = vmatprep.subr.bf16.mxu0 %v5413
        %6308 = vmatpush1.bf16.msra.mxu0 %v5412
        %6309 = vmatprep.subr.bf16.mxu0 %v5429
        %6310 = vmatpush1.bf16.msra.mxu0 %v5428
        %6311 = vmatprep.subr.bf16.mxu0 %v5445
        %6312 = vmatpush1.bf16.msra.mxu0 %v5444
        %6313 = vmatprep.subr.bf16.mxu0 %v5461
        %6314 = vmatpush1.bf16.msra.mxu0 %v5460
        %6315 = vmatprep.subr.bf16.mxu0 %v5477
        %6316 = vmatpush1.bf16.msra.mxu0 %v5476
        %6317 = vmatprep.subr.bf16.mxu0 %v5493
        %6318 = vmatpush1.bf16.msra.mxu0 %v5492
        %6319 = vmatprep.subr.bf16.mxu0 %v5509
        %6320 = vmatpush1.bf16.msra.mxu0 %v5508
        %6321 = vmatprep.subr.bf16.mxu0 %v5525
        %6322 = vmatpush1.bf16.msra.mxu0 %v5524
        %6323 = vmatprep.subr.bf16.mxu0 %v5541
        %6324 = vmatpush1.bf16.msra.mxu0 %v5540
        %6325 = vmatprep.subr.bf16.mxu0 %v5557
        %6326 = vmatpush1.bf16.msra.mxu0 %v5556
        %6327 = vmatprep.subr.bf16.mxu0 %v5573
        %6328 = vmatpush1.bf16.msra.mxu0 %v5572
        %6329 = vmatprep.subr.bf16.mxu0 %v5589
        %6330 = vmatpush1.bf16.msra.mxu0 %v5588
        %6331 = vmatprep.subr.bf16.mxu0 %v5605
        %6332 = vmatpush1.bf16.msra.mxu0 %v5604
        %6333 = vmatprep.subr.bf16.mxu0 %v5621
        %6334 = vmatpush1.bf16.msra.mxu0 %v5620
        %6335 = vmatprep.subr.bf16.mxu0 %v5637
        %6336 = vmatpush1.bf16.msra.mxu0 %v5636
        %6337 = vmatprep.subr.bf16.mxu0 %v5653
        %6338 = vmatpush1.bf16.msra.mxu0 %v5652
        %6339 = vmatprep.mubr.bf16.mxu0 %v3021
        %6340 = vmatmul.mubr.bf16.gmra.mrb[0].mxu0 %v3020
        %v6341 = vpop.f32.mrb[0].mxu0
        %v6342 = vadd.f32 %v6299, %v6341
        %v6343 = vpop.f32.mrb[0].mxu0
        %v6344 = vadd.f32 %v6301, %v6343
        %v6345 = vpop.f32.mrb[0].mxu0
        %v6346 = vadd.f32 %v6303, %v6345
        %v6347 = vpop.f32.mrb[0].mxu0
        %v6348 = vadd.f32 %v6305, %v6347
        %6349 = vdwg.mxu0
        %6350 = vmatprep.subr.bf16.mxu0 %v5159
        %6351 = vmatpush1.bf16.msra.mxu0 %v5158
        %6352 = vmatprep.subr.bf16.mxu0 %v5175
        %6353 = vmatpush1.bf16.msra.mxu0 %v5174
        %6354 = vmatprep.subr.bf16.mxu0 %v5191
        %6355 = vmatpush1.bf16.msra.mxu0 %v5190
        %6356 = vmatprep.subr.bf16.mxu0 %v5207
        %6357 = vmatpush1.bf16.msra.mxu0 %v5206
        %6358 = vmatprep.subr.bf16.mxu0 %v5223
        %6359 = vmatpush1.bf16.msra.mxu0 %v5222
        %6360 = vmatprep.subr.bf16.mxu0 %v5239
        %6361 = vmatpush1.bf16.msra.mxu0 %v5238
        %6362 = vmatprep.subr.bf16.mxu0 %v5255
        %6363 = vmatpush1.bf16.msra.mxu0 %v5254
        %6364 = vmatprep.subr.bf16.mxu0 %v5271
        %6365 = vmatpush1.bf16.msra.mxu0 %v5270
        %6366 = vmatprep.subr.bf16.mxu0 %v5287
        %6367 = vmatpush1.bf16.msra.mxu0 %v5286
        %6368 = vmatprep.subr.bf16.mxu0 %v5303
        %6369 = vmatpush1.bf16.msra.mxu0 %v5302
        %6370 = vmatprep.subr.bf16.mxu0 %v5319
        %6371 = vmatpush1.bf16.msra.mxu0 %v5318
        %6372 = vmatprep.subr.bf16.mxu0 %v5335
        %6373 = vmatpush1.bf16.msra.mxu0 %v5334
        %6374 = vmatprep.subr.bf16.mxu0 %v5351
        %6375 = vmatpush1.bf16.msra.mxu0 %v5350
        %6376 = vmatprep.subr.bf16.mxu0 %v5367
        %6377 = vmatpush1.bf16.msra.mxu0 %v5366
        %6378 = vmatprep.subr.bf16.mxu0 %v5383
        %6379 = vmatpush1.bf16.msra.mxu0 %v5382
        %6380 = vmatprep.subr.bf16.mxu0 %v5399
        %6381 = vmatpush1.bf16.msra.mxu0 %v5398
        %6382 = vmatprep.mubr.bf16.mxu0 %v3019
        %6383 = vmatmul.mubr.bf16.gmra.mrb[0].mxu0 %v3018
        %v6384 = vpop.f32.mrb[0].mxu0
        %v6385 = vadd.f32 %v3557, %v6384
        %v6386 = vpop.f32.mrb[0].mxu0
        %v6387 = vadd.f32 %v3561, %v6386
        %v6388 = vpop.f32.mrb[0].mxu0
        %v6389 = vadd.f32 %v3557, %v6388
        %v6390 = vpop.f32.mrb[0].mxu0
        %v6391 = vadd.f32 %v3561, %v6390
        %6392 = vdwg.mxu0
        %6393 = vmatprep.subr.bf16.mxu0 %v5415
        %6394 = vmatpush1.bf16.msra.mxu0 %v5414
        %6395 = vmatprep.subr.bf16.mxu0 %v5431
        %6396 = vmatpush1.bf16.msra.mxu0 %v5430
        %6397 = vmatprep.subr.bf16.mxu0 %v5447
        %6398 = vmatpush1.bf16.msra.mxu0 %v5446
        %6399 = vmatprep.subr.bf16.mxu0 %v5463
        %6400 = vmatpush1.bf16.msra.mxu0 %v5462
        %6401 = vmatprep.subr.bf16.mxu0 %v5479
        %6402 = vmatpush1.bf16.msra.mxu0 %v5478
        %6403 = vmatprep.subr.bf16.mxu0 %v5495
        %6404 = vmatpush1.bf16.msra.mxu0 %v5494
        %6405 = vmatprep.subr.bf16.mxu0 %v5511
        %6406 = vmatpush1.bf16.msra.mxu0 %v5510
        %6407 = vmatprep.subr.bf16.mxu0 %v5527
        %6408 = vmatpush1.bf16.msra.mxu0 %v5526
        %6409 = vmatprep.subr.bf16.mxu0 %v5543
        %6410 = vmatpush1.bf16.msra.mxu0 %v5542
        %6411 = vmatprep.subr.bf16.mxu0 %v5559
        %6412 = vmatpush1.bf16.msra.mxu0 %v5558
        %6413 = vmatprep.subr.bf16.mxu0 %v5575
        %6414 = vmatpush1.bf16.msra.mxu0 %v5574
        %6415 = vmatprep.subr.bf16.mxu0 %v5591
        %6416 = vmatpush1.bf16.msra.mxu0 %v5590
        %6417 = vmatprep.subr.bf16.mxu0 %v5607
        %6418 = vmatpush1.bf16.msra.mxu0 %v5606
        %6419 = vmatprep.subr.bf16.mxu0 %v5623
        %6420 = vmatpush1.bf16.msra.mxu0 %v5622
        %6421 = vmatprep.subr.bf16.mxu0 %v5639
        %6422 = vmatpush1.bf16.msra.mxu0 %v5638
        %6423 = vmatprep.subr.bf16.mxu0 %v5655
        %6424 = vmatpush1.bf16.msra.mxu0 %v5654
        %6425 = vmatprep.mubr.bf16.mxu0 %v3021
        %6426 = vmatmul.mubr.bf16.gmra.mrb[0].mxu0 %v3020
        %v6427 = vpop.f32.mrb[0].mxu0
        %v6428 = vadd.f32 %v6385, %v6427
        %v6429 = vpop.f32.mrb[0].mxu0
        %v6430 = vadd.f32 %v6387, %v6429
        %v6431 = vpop.f32.mrb[0].mxu0
        %v6432 = vadd.f32 %v6389, %v6431
        %v6433 = vpop.f32.mrb[0].mxu0
        %v6434 = vadd.f32 %v6391, %v6433
        %6435 = vdwg.mxu0
        %6436 = vmatprep.subr.bf16.mxu0 %v5161
        %6437 = vmatpush1.bf16.msra.mxu0 %v5160
        %6438 = vmatprep.subr.bf16.mxu0 %v5177
        %6439 = vmatpush1.bf16.msra.mxu0 %v5176
        %6440 = vmatprep.subr.bf16.mxu0 %v5193
        %6441 = vmatpush1.bf16.msra.mxu0 %v5192
        %6442 = vmatprep.subr.bf16.mxu0 %v5209
        %6443 = vmatpush1.bf16.msra.mxu0 %v5208
        %6444 = vmatprep.subr.bf16.mxu0 %v5225
        %6445 = vmatpush1.bf16.msra.mxu0 %v5224
        %6446 = vmatprep.subr.bf16.mxu0 %v5241
        %6447 = vmatpush1.bf16.msra.mxu0 %v5240
        %6448 = vmatprep.subr.bf16.mxu0 %v5257
        %6449 = vmatpush1.bf16.msra.mxu0 %v5256
        %6450 = vmatprep.subr.bf16.mxu0 %v5273
        %6451 = vmatpush1.bf16.msra.mxu0 %v5272
        %6452 = vmatprep.subr.bf16.mxu0 %v5289
        %6453 = vmatpush1.bf16.msra.mxu0 %v5288
        %6454 = vmatprep.subr.bf16.mxu0 %v5305
        %6455 = vmatpush1.bf16.msra.mxu0 %v5304
        %6456 = vmatprep.subr.bf16.mxu0 %v5321
        %6457 = vmatpush1.bf16.msra.mxu0 %v5320
        %6458 = vmatprep.subr.bf16.mxu0 %v5337
        %6459 = vmatpush1.bf16.msra.mxu0 %v5336
        %6460 = vmatprep.subr.bf16.mxu0 %v5353
        %6461 = vmatpush1.bf16.msra.mxu0 %v5352
        %6462 = vmatprep.subr.bf16.mxu0 %v5369
        %6463 = vmatpush1.bf16.msra.mxu0 %v5368
        %6464 = vmatprep.subr.bf16.mxu0 %v5385
        %6465 = vmatpush1.bf16.msra.mxu0 %v5384
        %6466 = vmatprep.subr.bf16.mxu0 %v5401
        %6467 = vmatpush1.bf16.msra.mxu0 %v5400
        %6468 = vmatprep.mubr.bf16.mxu0 %v3019
        %6469 = vmatmul.mubr.bf16.gmra.mrb[0].mxu0 %v3018
        %v6470 = vpop.f32.mrb[0].mxu0
        %v6471 = vadd.f32 %v3565, %v6470
        %v6472 = vpop.f32.mrb[0].mxu0
        %v6473 = vadd.f32 %v3569, %v6472
        %v6474 = vpop.f32.mrb[0].mxu0
        %v6475 = vadd.f32 %v3565, %v6474
        %v6476 = vpop.f32.mrb[0].mxu0
        %v6477 = vadd.f32 %v3569, %v6476
        %6478 = vdwg.mxu0
        %6479 = vmatprep.subr.bf16.mxu0 %v5417
        %6480 = vmatpush1.bf16.msra.mxu0 %v5416
        %6481 = vmatprep.subr.bf16.mxu0 %v5433
        %6482 = vmatpush1.bf16.msra.mxu0 %v5432
        %6483 = vmatprep.subr.bf16.mxu0 %v5449
        %6484 = vmatpush1.bf16.msra.mxu0 %v5448
        %6485 = vmatprep.subr.bf16.mxu0 %v5465
        %6486 = vmatpush1.bf16.msra.mxu0 %v5464
        %6487 = vmatprep.subr.bf16.mxu0 %v5481
        %6488 = vmatpush1.bf16.msra.mxu0 %v5480
        %6489 = vmatprep.subr.bf16.mxu0 %v5497
        %6490 = vmatpush1.bf16.msra.mxu0 %v5496
        %6491 = vmatprep.subr.bf16.mxu0 %v5513
        %6492 = vmatpush1.bf16.msra.mxu0 %v5512
        %6493 = vmatprep.subr.bf16.mxu0 %v5529
        %6494 = vmatpush1.bf16.msra.mxu0 %v5528
        %6495 = vmatprep.subr.bf16.mxu0 %v5545
        %6496 = vmatpush1.bf16.msra.mxu0 %v5544
        %6497 = vmatprep.subr.bf16.mxu0 %v5561
        %6498 = vmatpush1.bf16.msra.mxu0 %v5560
        %6499 = vmatprep.subr.bf16.mxu0 %v5577
        %6500 = vmatpush1.bf16.msra.mxu0 %v5576
        %6501 = vmatprep.subr.bf16.mxu0 %v5593
        %6502 = vmatpush1.bf16.msra.mxu0 %v5592
        %6503 = vmatprep.subr.bf16.mxu0 %v5609
        %6504 = vmatpush1.bf16.msra.mxu0 %v5608
        %6505 = vmatprep.subr.bf16.mxu0 %v5625
        %6506 = vmatpush1.bf16.msra.mxu0 %v5624
        %6507 = vmatprep.subr.bf16.mxu0 %v5641
        %6508 = vmatpush1.bf16.msra.mxu0 %v5640
        %6509 = vmatprep.subr.bf16.mxu0 %v5657
        %6510 = vmatpush1.bf16.msra.mxu0 %v5656
        %6511 = vmatprep.mubr.bf16.mxu0 %v3021
        %6512 = vmatmul.mubr.bf16.gmra.mrb[0].mxu0 %v3020
        %v6513 = vpop.f32.mrb[0].mxu0
        %v6514 = vadd.f32 %v6471, %v6513
        %v6515 = vpop.f32.mrb[0].mxu0
        %v6516 = vadd.f32 %v6473, %v6515
        %v6517 = vpop.f32.mrb[0].mxu0
        %v6518 = vadd.f32 %v6475, %v6517
        %v6519 = vpop.f32.mrb[0].mxu0
        %v6520 = vadd.f32 %v6477, %v6519
        %6521 = vdwg.mxu0
        %6522 = vmatprep.subr.bf16.mxu0 %v5163
        %6523 = vmatpush1.bf16.msra.mxu0 %v5162
        %6524 = vmatprep.subr.bf16.mxu0 %v5179
        %6525 = vmatpush1.bf16.msra.mxu0 %v5178
        %6526 = vmatprep.subr.bf16.mxu0 %v5195
        %6527 = vmatpush1.bf16.msra.mxu0 %v5194
        %6528 = vmatprep.subr.bf16.mxu0 %v5211
        %6529 = vmatpush1.bf16.msra.mxu0 %v5210
        %6530 = vmatprep.subr.bf16.mxu0 %v5227
        %6531 = vmatpush1.bf16.msra.mxu0 %v5226
        %6532 = vmatprep.subr.bf16.mxu0 %v5243
        %6533 = vmatpush1.bf16.msra.mxu0 %v5242
        %6534 = vmatprep.subr.bf16.mxu0 %v5259
        %6535 = vmatpush1.bf16.msra.mxu0 %v5258
        %6536 = vmatprep.subr.bf16.mxu0 %v5275
        %6537 = vmatpush1.bf16.msra.mxu0 %v5274
        %6538 = vmatprep.subr.bf16.mxu0 %v5291
        %6539 = vmatpush1.bf16.msra.mxu0 %v5290
        %6540 = vmatprep.subr.bf16.mxu0 %v5307
        %6541 = vmatpush1.bf16.msra.mxu0 %v5306
        %6542 = vmatprep.subr.bf16.mxu0 %v5323
        %6543 = vmatpush1.bf16.msra.mxu0 %v5322
        %6544 = vmatprep.subr.bf16.mxu0 %v5339
        %6545 = vmatpush1.bf16.msra.mxu0 %v5338
        %6546 = vmatprep.subr.bf16.mxu0 %v5355
        %6547 = vmatpush1.bf16.msra.mxu0 %v5354
        %6548 = vmatprep.subr.bf16.mxu0 %v5371
        %6549 = vmatpush1.bf16.msra.mxu0 %v5370
        %6550 = vmatprep.subr.bf16.mxu0 %v5387
        %6551 = vmatpush1.bf16.msra.mxu0 %v5386
        %6552 = vmatprep.subr.bf16.mxu0 %v5403
        %6553 = vmatpush1.bf16.msra.mxu0 %v5402
        %6554 = vmatprep.mubr.bf16.mxu0 %v3019
        %6555 = vmatmul.mubr.bf16.gmra.mrb[0].mxu0 %v3018
        %v6556 = vpop.f32.mrb[0].mxu0
        %v6557 = vadd.f32 %v3573, %v6556
        %v6558 = vpop.f32.mrb[0].mxu0
        %v6559 = vadd.f32 %v3577, %v6558
        %v6560 = vpop.f32.mrb[0].mxu0
        %v6561 = vadd.f32 %v3573, %v6560
        %v6562 = vpop.f32.mrb[0].mxu0
        %v6563 = vadd.f32 %v3577, %v6562
        %6564 = vdwg.mxu0
        %6565 = vmatprep.subr.bf16.mxu0 %v5419
        %6566 = vmatpush1.bf16.msra.mxu0 %v5418
        %6567 = vmatprep.subr.bf16.mxu0 %v5435
        %6568 = vmatpush1.bf16.msra.mxu0 %v5434
        %6569 = vmatprep.subr.bf16.mxu0 %v5451
        %6570 = vmatpush1.bf16.msra.mxu0 %v5450
        %6571 = vmatprep.subr.bf16.mxu0 %v5467
        %6572 = vmatpush1.bf16.msra.mxu0 %v5466
        %6573 = vmatprep.subr.bf16.mxu0 %v5483
        %6574 = vmatpush1.bf16.msra.mxu0 %v5482
        %6575 = vmatprep.subr.bf16.mxu0 %v5499
        %6576 = vmatpush1.bf16.msra.mxu0 %v5498
        %6577 = vmatprep.subr.bf16.mxu0 %v5515
        %6578 = vmatpush1.bf16.msra.mxu0 %v5514
        %6579 = vmatprep.subr.bf16.mxu0 %v5531
        %6580 = vmatpush1.bf16.msra.mxu0 %v5530
        %6581 = vmatprep.subr.bf16.mxu0 %v5547
        %6582 = vmatpush1.bf16.msra.mxu0 %v5546
        %6583 = vmatprep.subr.bf16.mxu0 %v5563
        %6584 = vmatpush1.bf16.msra.mxu0 %v5562
        %6585 = vmatprep.subr.bf16.mxu0 %v5579
        %6586 = vmatpush1.bf16.msra.mxu0 %v5578
        %6587 = vmatprep.subr.bf16.mxu0 %v5595
        %6588 = vmatpush1.bf16.msra.mxu0 %v5594
        %6589 = vmatprep.subr.bf16.mxu0 %v5611
        %6590 = vmatpush1.bf16.msra.mxu0 %v5610
        %6591 = vmatprep.subr.bf16.mxu0 %v5627
        %6592 = vmatpush1.bf16.msra.mxu0 %v5626
        %6593 = vmatprep.subr.bf16.mxu0 %v5643
        %6594 = vmatpush1.bf16.msra.mxu0 %v5642
        %6595 = vmatprep.subr.bf16.mxu0 %v5659
        %6596 = vmatpush1.bf16.msra.mxu0 %v5658
        %6597 = vmatprep.mubr.bf16.mxu0 %v3021
        %6598 = vmatmul.mubr.bf16.gmra.mrb[0].mxu0 %v3020
        %v6599 = vpop.f32.mrb[0].mxu0
        %v6600 = vadd.f32 %v6557, %v6599
        %v6601 = vpop.f32.mrb[0].mxu0
        %v6602 = vadd.f32 %v6559, %v6601
        %v6603 = vpop.f32.mrb[0].mxu0
        %v6604 = vadd.f32 %v6561, %v6603
        %v6605 = vpop.f32.mrb[0].mxu0
        %v6606 = vadd.f32 %v6563, %v6605
        %6607 = vdwg.mxu0
        %6608 = vmatprep.subr.bf16.mxu0 %v5165
        %6609 = vmatpush1.bf16.msra.mxu0 %v5164
        %6610 = vmatprep.subr.bf16.mxu0 %v5181
        %6611 = vmatpush1.bf16.msra.mxu0 %v5180
        %6612 = vmatprep.subr.bf16.mxu0 %v5197
        %6613 = vmatpush1.bf16.msra.mxu0 %v5196
        %6614 = vmatprep.subr.bf16.mxu0 %v5213
        %6615 = vmatpush1.bf16.msra.mxu0 %v5212
        %6616 = vmatprep.subr.bf16.mxu0 %v5229
        %6617 = vmatpush1.bf16.msra.mxu0 %v5228
        %6618 = vmatprep.subr.bf16.mxu0 %v5245
        %6619 = vmatpush1.bf16.msra.mxu0 %v5244
        %6620 = vmatprep.subr.bf16.mxu0 %v5261
        %6621 = vmatpush1.bf16.msra.mxu0 %v5260
        %6622 = vmatprep.subr.bf16.mxu0 %v5277
        %6623 = vmatpush1.bf16.msra.mxu0 %v5276
        %6624 = vmatprep.subr.bf16.mxu0 %v5293
        %6625 = vmatpush1.bf16.msra.mxu0 %v5292
        %6626 = vmatprep.subr.bf16.mxu0 %v5309
        %6627 = vmatpush1.bf16.msra.mxu0 %v5308
        %6628 = vmatprep.subr.bf16.mxu0 %v5325
        %6629 = vmatpush1.bf16.msra.mxu0 %v5324
        %6630 = vmatprep.subr.bf16.mxu0 %v5341
        %6631 = vmatpush1.bf16.msra.mxu0 %v5340
        %6632 = vmatprep.subr.bf16.mxu0 %v5357
        %6633 = vmatpush1.bf16.msra.mxu0 %v5356
        %6634 = vmatprep.subr.bf16.mxu0 %v5373
        %6635 = vmatpush1.bf16.msra.mxu0 %v5372
        %6636 = vmatprep.subr.bf16.mxu0 %v5389
        %6637 = vmatpush1.bf16.msra.mxu0 %v5388
        %6638 = vmatprep.subr.bf16.mxu0 %v5405
        %6639 = vmatpush1.bf16.msra.mxu0 %v5404
        %6640 = vmatprep.mubr.bf16.mxu0 %v3019
        %6641 = vmatmul.mubr.bf16.gmra.mrb[0].mxu0 %v3018
        %v6642 = vpop.f32.mrb[0].mxu0
        %v6643 = vadd.f32 %v3581, %v6642
        %v6644 = vpop.f32.mrb[0].mxu0
        %v6645 = vadd.f32 %v3585, %v6644
        %v6646 = vpop.f32.mrb[0].mxu0
        %v6647 = vadd.f32 %v3581, %v6646
        %v6648 = vpop.f32.mrb[0].mxu0
        %v6649 = vadd.f32 %v3585, %v6648
        %6650 = vdwg.mxu0
        %6651 = vmatprep.subr.bf16.mxu0 %v5421
        %6652 = vmatpush1.bf16.msra.mxu0 %v5420
        %6653 = vmatprep.subr.bf16.mxu0 %v5437
        %6654 = vmatpush1.bf16.msra.mxu0 %v5436
        %6655 = vmatprep.subr.bf16.mxu0 %v5453
        %6656 = vmatpush1.bf16.msra.mxu0 %v5452
        %6657 = vmatprep.subr.bf16.mxu0 %v5469
        %6658 = vmatpush1.bf16.msra.mxu0 %v5468
        %6659 = vmatprep.subr.bf16.mxu0 %v5485
        %6660 = vmatpush1.bf16.msra.mxu0 %v5484
        %6661 = vmatprep.subr.bf16.mxu0 %v5501
        %6662 = vmatpush1.bf16.msra.mxu0 %v5500
        %6663 = vmatprep.subr.bf16.mxu0 %v5517
        %6664 = vmatpush1.bf16.msra.mxu0 %v5516
        %6665 = vmatprep.subr.bf16.mxu0 %v5533
        %6666 = vmatpush1.bf16.msra.mxu0 %v5532
        %6667 = vmatprep.subr.bf16.mxu0 %v5549
        %6668 = vmatpush1.bf16.msra.mxu0 %v5548
        %6669 = vmatprep.subr.bf16.mxu0 %v5565
        %6670 = vmatpush1.bf16.msra.mxu0 %v5564
        %6671 = vmatprep.subr.bf16.mxu0 %v5581
        %6672 = vmatpush1.bf16.msra.mxu0 %v5580
        %6673 = vmatprep.subr.bf16.mxu0 %v5597
        %6674 = vmatpush1.bf16.msra.mxu0 %v5596
        %6675 = vmatprep.subr.bf16.mxu0 %v5613
        %6676 = vmatpush1.bf16.msra.mxu0 %v5612
        %6677 = vmatprep.subr.bf16.mxu0 %v5629
        %6678 = vmatpush1.bf16.msra.mxu0 %v5628
        %6679 = vmatprep.subr.bf16.mxu0 %v5645
        %6680 = vmatpush1.bf16.msra.mxu0 %v5644
        %6681 = vmatprep.subr.bf16.mxu0 %v5661
        %6682 = vmatpush1.bf16.msra.mxu0 %v5660
        %6683 = vmatprep.mubr.bf16.mxu0 %v3021
        %6684 = vmatmul.mubr.bf16.gmra.mrb[0].mxu0 %v3020
        %v6685 = vpop.f32.mrb[0].mxu0
        %v6686 = vadd.f32 %v6643, %v6685
        %v6687 = vpop.f32.mrb[0].mxu0
        %v6688 = vadd.f32 %v6645, %v6687
        %v6689 = vpop.f32.mrb[0].mxu0
        %v6690 = vadd.f32 %v6647, %v6689
        %v6691 = vpop.f32.mrb[0].mxu0
        %v6692 = vadd.f32 %v6649, %v6691
        %6693 = vdwg.mxu0
        %6694 = vmatprep.subr.bf16.mxu0 %v5167
        %6695 = vmatpush1.bf16.msra.mxu0 %v5166
        %6696 = vmatprep.subr.bf16.mxu0 %v5183
        %6697 = vmatpush1.bf16.msra.mxu0 %v5182
        %6698 = vmatprep.subr.bf16.mxu0 %v5199
        %6699 = vmatpush1.bf16.msra.mxu0 %v5198
        %6700 = vmatprep.subr.bf16.mxu0 %v5215
        %6701 = vmatpush1.bf16.msra.mxu0 %v5214
        %6702 = vmatprep.subr.bf16.mxu0 %v5231
        %6703 = vmatpush1.bf16.msra.mxu0 %v5230
        %6704 = vmatprep.subr.bf16.mxu0 %v5247
        %6705 = vmatpush1.bf16.msra.mxu0 %v5246
        %6706 = vmatprep.subr.bf16.mxu0 %v5263
        %6707 = vmatpush1.bf16.msra.mxu0 %v5262
        %6708 = vmatprep.subr.bf16.mxu0 %v5279
        %6709 = vmatpush1.bf16.msra.mxu0 %v5278
        %6710 = vmatprep.subr.bf16.mxu0 %v5295
        %6711 = vmatpush1.bf16.msra.mxu0 %v5294
        %6712 = vmatprep.subr.bf16.mxu0 %v5311
        %6713 = vmatpush1.bf16.msra.mxu0 %v5310
        %6714 = vmatprep.subr.bf16.mxu0 %v5327
        %6715 = vmatpush1.bf16.msra.mxu0 %v5326
        %6716 = vmatprep.subr.bf16.mxu0 %v5343
        %6717 = vmatpush1.bf16.msra.mxu0 %v5342
        %6718 = vmatprep.subr.bf16.mxu0 %v5359
        %6719 = vmatpush1.bf16.msra.mxu0 %v5358
        %6720 = vmatprep.subr.bf16.mxu0 %v5375
        %6721 = vmatpush1.bf16.msra.mxu0 %v5374
        %6722 = vmatprep.subr.bf16.mxu0 %v5391
        %6723 = vmatpush1.bf16.msra.mxu0 %v5390
        %6724 = vmatprep.subr.bf16.mxu0 %v5407
        %6725 = vmatpush1.bf16.msra.mxu0 %v5406
        %6726 = vmatprep.mubr.bf16.mxu0 %v3019
        %6727 = vmatmul.mubr.bf16.gmra.mrb[0].mxu0 %v3018
        %v6728 = vpop.f32.mrb[0].mxu0
        %v6729 = vadd.f32 %v3589, %v6728
        %v6730 = vpop.f32.mrb[0].mxu0
        %v6731 = vadd.f32 %v3593, %v6730
        %v6732 = vpop.f32.mrb[0].mxu0
        %v6733 = vadd.f32 %v3589, %v6732
        %v6734 = vpop.f32.mrb[0].mxu0
        %v6735 = vadd.f32 %v3593, %v6734
        %6736 = vdwg.mxu0
        %6737 = vmatprep.subr.bf16.mxu0 %v5423
        %6738 = vmatpush1.bf16.msra.mxu0 %v5422
        %6739 = vmatprep.subr.bf16.mxu0 %v5439
        %6740 = vmatpush1.bf16.msra.mxu0 %v5438
        %6741 = vmatprep.subr.bf16.mxu0 %v5455
        %6742 = vmatpush1.bf16.msra.mxu0 %v5454
        %6743 = vmatprep.subr.bf16.mxu0 %v5471
        %6744 = vmatpush1.bf16.msra.mxu0 %v5470
        %6745 = vmatprep.subr.bf16.mxu0 %v5487
        %6746 = vmatpush1.bf16.msra.mxu0 %v5486
        %6747 = vmatprep.subr.bf16.mxu0 %v5503
        %6748 = vmatpush1.bf16.msra.mxu0 %v5502
        %6749 = vmatprep.subr.bf16.mxu0 %v5519
        %6750 = vmatpush1.bf16.msra.mxu0 %v5518
        %6751 = vmatprep.subr.bf16.mxu0 %v5535
        %6752 = vmatpush1.bf16.msra.mxu0 %v5534
        %6753 = vmatprep.subr.bf16.mxu0 %v5551
        %6754 = vmatpush1.bf16.msra.mxu0 %v5550
        %6755 = vmatprep.subr.bf16.mxu0 %v5567
        %6756 = vmatpush1.bf16.msra.mxu0 %v5566
        %6757 = vmatprep.subr.bf16.mxu0 %v5583
        %6758 = vmatpush1.bf16.msra.mxu0 %v5582
        %6759 = vmatprep.subr.bf16.mxu0 %v5599
        %6760 = vmatpush1.bf16.msra.mxu0 %v5598
        %6761 = vmatprep.subr.bf16.mxu0 %v5615
        %6762 = vmatpush1.bf16.msra.mxu0 %v5614
        %6763 = vmatprep.subr.bf16.mxu0 %v5631
        %6764 = vmatpush1.bf16.msra.mxu0 %v5630
        %6765 = vmatprep.subr.bf16.mxu0 %v5647
        %6766 = vmatpush1.bf16.msra.mxu0 %v5646
        %6767 = vmatprep.subr.bf16.mxu0 %v5663
        %6768 = vmatpush1.bf16.msra.mxu0 %v5662
        %6769 = vmatprep.mubr.bf16.mxu0 %v3021
        %6770 = vmatmul.mubr.bf16.gmra.mrb[0].mxu0 %v3020
        %v6771 = vpop.f32.mrb[0].mxu0
        %v6772 = vadd.f32 %v6729, %v6771
        %v6773 = vpop.f32.mrb[0].mxu0
        %v6774 = vadd.f32 %v6731, %v6773
        %v6775 = vpop.f32.mrb[0].mxu0
        %v6776 = vadd.f32 %v6733, %v6775
        %v6777 = vpop.f32.mrb[0].mxu0
        %v6778 = vadd.f32 %v6735, %v6777
        %6779 = vdwg.mxu0
        %6780 = vmatprep.subr.bf16.mxu0 %v5169
        %6781 = vmatpush1.bf16.msra.mxu0 %v5168
        %6782 = vmatprep.subr.bf16.mxu0 %v5185
        %6783 = vmatpush1.bf16.msra.mxu0 %v5184
        %6784 = vmatprep.subr.bf16.mxu0 %v5201
        %6785 = vmatpush1.bf16.msra.mxu0 %v5200
        %6786 = vmatprep.subr.bf16.mxu0 %v5217
        %6787 = vmatpush1.bf16.msra.mxu0 %v5216
        %6788 = vmatprep.subr.bf16.mxu0 %v5233
        %6789 = vmatpush1.bf16.msra.mxu0 %v5232
        %6790 = vmatprep.subr.bf16.mxu0 %v5249
        %6791 = vmatpush1.bf16.msra.mxu0 %v5248
        %6792 = vmatprep.subr.bf16.mxu0 %v5265
        %6793 = vmatpush1.bf16.msra.mxu0 %v5264
        %6794 = vmatprep.subr.bf16.mxu0 %v5281
        %6795 = vmatpush1.bf16.msra.mxu0 %v5280
        %6796 = vmatprep.subr.bf16.mxu0 %v5297
        %6797 = vmatpush1.bf16.msra.mxu0 %v5296
        %6798 = vmatprep.subr.bf16.mxu0 %v5313
        %6799 = vmatpush1.bf16.msra.mxu0 %v5312
        %6800 = vmatprep.subr.bf16.mxu0 %v5329
        %6801 = vmatpush1.bf16.msra.mxu0 %v5328
        %6802 = vmatprep.subr.bf16.mxu0 %v5345
        %6803 = vmatpush1.bf16.msra.mxu0 %v5344
        %6804 = vmatprep.subr.bf16.mxu0 %v5361
        %6805 = vmatpush1.bf16.msra.mxu0 %v5360
        %6806 = vmatprep.subr.bf16.mxu0 %v5377
        %6807 = vmatpush1.bf16.msra.mxu0 %v5376
        %6808 = vmatprep.subr.bf16.mxu0 %v5393
        %6809 = vmatpush1.bf16.msra.mxu0 %v5392
        %6810 = vmatprep.subr.bf16.mxu0 %v5409
        %6811 = vmatpush1.bf16.msra.mxu0 %v5408
        %6812 = vmatprep.mubr.bf16.mxu0 %v3019
        %6813 = vmatmul.mubr.bf16.gmra.mrb[0].mxu0 %v3018
        %v6814 = vpop.f32.mrb[0].mxu0
        %v6815 = vadd.f32 %v3597, %v6814
        %v6816 = vpop.f32.mrb[0].mxu0
        %v6817 = vadd.f32 %v3601, %v6816
        %v6818 = vpop.f32.mrb[0].mxu0
        %v6819 = vadd.f32 %v3597, %v6818
        %v6820 = vpop.f32.mrb[0].mxu0
        %v6821 = vadd.f32 %v3601, %v6820
        %6822 = vdwg.mxu0
        %6823 = vmatprep.subr.bf16.mxu0 %v5425
        %6824 = vmatpush1.bf16.msra.mxu0 %v5424
        %6825 = vmatprep.subr.bf16.mxu0 %v5441
        %6826 = vmatpush1.bf16.msra.mxu0 %v5440
        %6827 = vmatprep.subr.bf16.mxu0 %v5457
        %6828 = vmatpush1.bf16.msra.mxu0 %v5456
        %6829 = vmatprep.subr.bf16.mxu0 %v5473
        %6830 = vmatpush1.bf16.msra.mxu0 %v5472
        %6831 = vmatprep.subr.bf16.mxu0 %v5489
        %6832 = vmatpush1.bf16.msra.mxu0 %v5488
        %6833 = vmatprep.subr.bf16.mxu0 %v5505
        %6834 = vmatpush1.bf16.msra.mxu0 %v5504
        %6835 = vmatprep.subr.bf16.mxu0 %v5521
        %6836 = vmatpush1.bf16.msra.mxu0 %v5520
        %6837 = vmatprep.subr.bf16.mxu0 %v5537
        %6838 = vmatpush1.bf16.msra.mxu0 %v5536
        %6839 = vmatprep.subr.bf16.mxu0 %v5553
        %6840 = vmatpush1.bf16.msra.mxu0 %v5552
        %6841 = vmatprep.subr.bf16.mxu0 %v5569
        %6842 = vmatpush1.bf16.msra.mxu0 %v5568
        %6843 = vmatprep.subr.bf16.mxu0 %v5585
        %6844 = vmatpush1.bf16.msra.mxu0 %v5584
        %6845 = vmatprep.subr.bf16.mxu0 %v5601
        %6846 = vmatpush1.bf16.msra.mxu0 %v5600
        %6847 = vmatprep.subr.bf16.mxu0 %v5617
        %6848 = vmatpush1.bf16.msra.mxu0 %v5616
        %6849 = vmatprep.subr.bf16.mxu0 %v5633
        %6850 = vmatpush1.bf16.msra.mxu0 %v5632
        %6851 = vmatprep.subr.bf16.mxu0 %v5649
        %6852 = vmatpush1.bf16.msra.mxu0 %v5648
        %6853 = vmatprep.subr.bf16.mxu0 %v5665
        %6854 = vmatpush1.bf16.msra.mxu0 %v5664
        %6855 = vmatprep.mubr.bf16.mxu0 %v3021
        %6856 = vmatmul.mubr.bf16.gmra.mrb[0].mxu0 %v3020
        %v6857 = vpop.f32.mrb[0].mxu0
        %v6858 = vadd.f32 %v6815, %v6857
        %v6859 = vpop.f32.mrb[0].mxu0
        %v6860 = vadd.f32 %v6817, %v6859
        %v6861 = vpop.f32.mrb[0].mxu0
        %v6862 = vadd.f32 %v6819, %v6861
        %v6863 = vpop.f32.mrb[0].mxu0
        %v6864 = vadd.f32 %v6821, %v6863
        %6865 = vdwg.mxu0
        %v6866 = vmax.f32 %v6256, 0.0
        %v6867 = vmax.f32 %v6258, 0.0
        %v6868 = vmax.f32 %v6342, 0.0
        %v6869 = vmax.f32 %v6344, 0.0
        %v6870 = vmax.f32 %v6428, 0.0
        %v6871 = vmax.f32 %v6430, 0.0
        %v6872 = vmax.f32 %v6514, 0.0
        %v6873 = vmax.f32 %v6516, 0.0
        %v6874 = vmax.f32 %v6600, 0.0
        %v6875 = vmax.f32 %v6602, 0.0
        %v6876 = vmax.f32 %v6686, 0.0
        %v6877 = vmax.f32 %v6688, 0.0
        %v6878 = vmax.f32 %v6772, 0.0
        %v6879 = vmax.f32 %v6774, 0.0
        %v6880 = vmax.f32 %v6858, 0.0
        %v6881 = vmax.f32 %v6860, 0.0
        %v6882 = vmax.f32 %v6260, 0.0
        %v6883 = vmax.f32 %v6262, 0.0
        %v6884 = vmax.f32 %v6346, 0.0
        %v6885 = vmax.f32 %v6348, 0.0
        %v6886 = vmax.f32 %v6432, 0.0
        %v6887 = vmax.f32 %v6434, 0.0
        %v6888 = vmax.f32 %v6518, 0.0
        %v6889 = vmax.f32 %v6520, 0.0
        %v6890 = vmax.f32 %v6604, 0.0
        %v6891 = vmax.f32 %v6606, 0.0
        %v6892 = vmax.f32 %v6690, 0.0
        %v6893 = vmax.f32 %v6692, 0.0
        %v6894 = vmax.f32 %v6776, 0.0
        %v6895 = vmax.f32 %v6778, 0.0
        %v6896 = vmax.f32 %v6862, 0.0
        %v6897 = vmax.f32 %v6864, 0.0
        %v6898 = vpack.c.bf16 %v6882, %v6866
        %v6899 = vpack.c.bf16 %v6883, %v6867
        %v6900 = vpack.c.bf16 %v6884, %v6868
        %v6901 = vpack.c.bf16 %v6885, %v6869
        %v6902 = vpack.c.bf16 %v6886, %v6870
        %v6903 = vpack.c.bf16 %v6887, %v6871
        %v6904 = vpack.c.bf16 %v6888, %v6872
        %v6905 = vpack.c.bf16 %v6889, %v6873
        %v6906 = vpack.c.bf16 %v6890, %v6874
        %v6907 = vpack.c.bf16 %v6891, %v6875
        %v6908 = vpack.c.bf16 %v6892, %v6876
        %v6909 = vpack.c.bf16 %v6893, %v6877
        %v6910 = vpack.c.bf16 %v6894, %v6878
        %v6911 = vpack.c.bf16 %v6895, %v6879
        %v6912 = vpack.c.bf16 %v6896, %v6880
        %v6913 = vpack.c.bf16 %v6897, %v6881
        %v6914 = vld [vmem:[#allocation23] sm:$0xff]
        %v6915 = vld [vmem:[#allocation23 + $0x8] sm:$0xff]
        %v6916 = vld [vmem:[#allocation23 + $0x10] sm:$0xff]
        %v6917 = vld [vmem:[#allocation23 + $0x18] sm:$0xff]
        %v6918 = vld [vmem:[#allocation23 + $0x20] sm:$0xff]
        %v6919 = vld [vmem:[#allocation23 + $0x28] sm:$0xff]
        %v6920 = vld [vmem:[#allocation23 + $0x30] sm:$0xff]
        %v6921 = vld [vmem:[#allocation23 + $0x38] sm:$0xff]
        %v6922 = vld [vmem:[#allocation23 + $0x40] sm:$0xff]
        %v6923 = vld [vmem:[#allocation23 + $0x48] sm:$0xff]
        %v6924 = vld [vmem:[#allocation23 + $0x50] sm:$0xff]
        %v6925 = vld [vmem:[#allocation23 + $0x58] sm:$0xff]
        %v6926 = vld [vmem:[#allocation23 + $0x60] sm:$0xff]
        %v6927 = vld [vmem:[#allocation23 + $0x68] sm:$0xff]
        %v6928 = vld [vmem:[#allocation23 + $0x70] sm:$0xff]
        %v6929 = vld [vmem:[#allocation23 + $0x78] sm:$0xff]
        %v6930 = vld [vmem:[#allocation23 + $0x80] sm:$0xff]
        %v6931 = vld [vmem:[#allocation23 + $0x88] sm:$0xff]
        %v6932 = vld [vmem:[#allocation23 + $0x90] sm:$0xff]
        %v6933 = vld [vmem:[#allocation23 + $0x98] sm:$0xff]
        %v6934 = vld [vmem:[#allocation23 + $0xa0] sm:$0xff]
        %v6935 = vld [vmem:[#allocation23 + $0xa8] sm:$0xff]
        %v6936 = vld [vmem:[#allocation23 + $0xb0] sm:$0xff]
        %v6937 = vld [vmem:[#allocation23 + $0xb8] sm:$0xff]
        %v6938 = vld [vmem:[#allocation23 + $0xc0] sm:$0xff]
        %v6939 = vld [vmem:[#allocation23 + $0xc8] sm:$0xff]
        %v6940 = vld [vmem:[#allocation23 + $0xd0] sm:$0xff]
        %v6941 = vld [vmem:[#allocation23 + $0xd8] sm:$0xff]
        %v6942 = vld [vmem:[#allocation23 + $0xe0] sm:$0xff]
        %v6943 = vld [vmem:[#allocation23 + $0xe8] sm:$0xff]
        %v6944 = vld [vmem:[#allocation23 + $0xf0] sm:$0xff]
        %v6945 = vld [vmem:[#allocation23 + $0xf8] sm:$0xff]
        %v6946 = vld [vmem:[#allocation23 + $0x100] sm:$0xff]
        %v6947 = vld [vmem:[#allocation23 + $0x108] sm:$0xff]
        %v6948 = vld [vmem:[#allocation23 + $0x110] sm:$0xff]
        %v6949 = vld [vmem:[#allocation23 + $0x118] sm:$0xff]
        %v6950 = vld [vmem:[#allocation23 + $0x120] sm:$0xff]
        %v6951 = vld [vmem:[#allocation23 + $0x128] sm:$0xff]
        %v6952 = vld [vmem:[#allocation23 + $0x130] sm:$0xff]
        %v6953 = vld [vmem:[#allocation23 + $0x138] sm:$0xff]
        %v6954 = vld [vmem:[#allocation23 + $0x140] sm:$0xff]
        %v6955 = vld [vmem:[#allocation23 + $0x148] sm:$0xff]
        %v6956 = vld [vmem:[#allocation23 + $0x150] sm:$0xff]
        %v6957 = vld [vmem:[#allocation23 + $0x158] sm:$0xff]
        %v6958 = vld [vmem:[#allocation23 + $0x160] sm:$0xff]
        %v6959 = vld [vmem:[#allocation23 + $0x168] sm:$0xff]
        %v6960 = vld [vmem:[#allocation23 + $0x170] sm:$0xff]
        %v6961 = vld [vmem:[#allocation23 + $0x178] sm:$0xff]
        %v6962 = vld [vmem:[#allocation23 + $0x180] sm:$0xff]
        %v6963 = vld [vmem:[#allocation23 + $0x188] sm:$0xff]
        %v6964 = vld [vmem:[#allocation23 + $0x190] sm:$0xff]
        %v6965 = vld [vmem:[#allocation23 + $0x198] sm:$0xff]
        %v6966 = vld [vmem:[#allocation23 + $0x1a0] sm:$0xff]
        %v6967 = vld [vmem:[#allocation23 + $0x1a8] sm:$0xff]
        %v6968 = vld [vmem:[#allocation23 + $0x1b0] sm:$0xff]
        %v6969 = vld [vmem:[#allocation23 + $0x1b8] sm:$0xff]
        %v6970 = vld [vmem:[#allocation23 + $0x1c0] sm:$0xff]
        %v6971 = vld [vmem:[#allocation23 + $0x1c8] sm:$0xff]
        %v6972 = vld [vmem:[#allocation23 + $0x1d0] sm:$0xff]
        %v6973 = vld [vmem:[#allocation23 + $0x1d8] sm:$0xff]
        %v6974 = vld [vmem:[#allocation23 + $0x1e0] sm:$0xff]
        %v6975 = vld [vmem:[#allocation23 + $0x1e8] sm:$0xff]
        %v6976 = vld [vmem:[#allocation23 + $0x1f0] sm:$0xff]
        %v6977 = vld [vmem:[#allocation23 + $0x1f8] sm:$0xff]
        %v6978 = vld [vmem:[#allocation23 + $0x200] sm:$0xff]
        %v6979 = vld [vmem:[#allocation23 + $0x208] sm:$0xff]
        %v6980 = vld [vmem:[#allocation23 + $0x210] sm:$0xff]
        %v6981 = vld [vmem:[#allocation23 + $0x218] sm:$0xff]
        %v6982 = vld [vmem:[#allocation23 + $0x220] sm:$0xff]
        %v6983 = vld [vmem:[#allocation23 + $0x228] sm:$0xff]
        %v6984 = vld [vmem:[#allocation23 + $0x230] sm:$0xff]
        %v6985 = vld [vmem:[#allocation23 + $0x238] sm:$0xff]
        %v6986 = vld [vmem:[#allocation23 + $0x240] sm:$0xff]
        %v6987 = vld [vmem:[#allocation23 + $0x248] sm:$0xff]
        %v6988 = vld [vmem:[#allocation23 + $0x250] sm:$0xff]
        %v6989 = vld [vmem:[#allocation23 + $0x258] sm:$0xff]
        %v6990 = vld [vmem:[#allocation23 + $0x260] sm:$0xff]
        %v6991 = vld [vmem:[#allocation23 + $0x268] sm:$0xff]
        %v6992 = vld [vmem:[#allocation23 + $0x270] sm:$0xff]
        %v6993 = vld [vmem:[#allocation23 + $0x278] sm:$0xff]
        %v6994 = vld [vmem:[#allocation23 + $0x280] sm:$0xff]
        %v6995 = vld [vmem:[#allocation23 + $0x288] sm:$0xff]
        %v6996 = vld [vmem:[#allocation23 + $0x290] sm:$0xff]
        %v6997 = vld [vmem:[#allocation23 + $0x298] sm:$0xff]
        %v6998 = vld [vmem:[#allocation23 + $0x2a0] sm:$0xff]
        %v6999 = vld [vmem:[#allocation23 + $0x2a8] sm:$0xff]
        %v7000 = vld [vmem:[#allocation23 + $0x2b0] sm:$0xff]
        %v7001 = vld [vmem:[#allocation23 + $0x2b8] sm:$0xff]
        %v7002 = vld [vmem:[#allocation23 + $0x2c0] sm:$0xff]
        %v7003 = vld [vmem:[#allocation23 + $0x2c8] sm:$0xff]
        %v7004 = vld [vmem:[#allocation23 + $0x2d0] sm:$0xff]
        %v7005 = vld [vmem:[#allocation23 + $0x2d8] sm:$0xff]
        %v7006 = vld [vmem:[#allocation23 + $0x2e0] sm:$0xff]
        %v7007 = vld [vmem:[#allocation23 + $0x2e8] sm:$0xff]
        %v7008 = vld [vmem:[#allocation23 + $0x2f0] sm:$0xff]
        %v7009 = vld [vmem:[#allocation23 + $0x2f8] sm:$0xff]
        %v7010 = vld [vmem:[#allocation23 + $0x300] sm:$0xff]
        %v7011 = vld [vmem:[#allocation23 + $0x308] sm:$0xff]
        %v7012 = vld [vmem:[#allocation23 + $0x310] sm:$0xff]
        %v7013 = vld [vmem:[#allocation23 + $0x318] sm:$0xff]
        %v7014 = vld [vmem:[#allocation23 + $0x320] sm:$0xff]
        %v7015 = vld [vmem:[#allocation23 + $0x328] sm:$0xff]
        %v7016 = vld [vmem:[#allocation23 + $0x330] sm:$0xff]
        %v7017 = vld [vmem:[#allocation23 + $0x338] sm:$0xff]
        %v7018 = vld [vmem:[#allocation23 + $0x340] sm:$0xff]
        %v7019 = vld [vmem:[#allocation23 + $0x348] sm:$0xff]
        %v7020 = vld [vmem:[#allocation23 + $0x350] sm:$0xff]
        %v7021 = vld [vmem:[#allocation23 + $0x358] sm:$0xff]
        %v7022 = vld [vmem:[#allocation23 + $0x360] sm:$0xff]
        %v7023 = vld [vmem:[#allocation23 + $0x368] sm:$0xff]
        %v7024 = vld [vmem:[#allocation23 + $0x370] sm:$0xff]
        %v7025 = vld [vmem:[#allocation23 + $0x378] sm:$0xff]
        %v7026 = vld [vmem:[#allocation23 + $0x380] sm:$0xff]
        %v7027 = vld [vmem:[#allocation23 + $0x388] sm:$0xff]
        %v7028 = vld [vmem:[#allocation23 + $0x390] sm:$0xff]
        %v7029 = vld [vmem:[#allocation23 + $0x398] sm:$0xff]
        %v7030 = vld [vmem:[#allocation23 + $0x3a0] sm:$0xff]
        %v7031 = vld [vmem:[#allocation23 + $0x3a8] sm:$0xff]
        %v7032 = vld [vmem:[#allocation23 + $0x3b0] sm:$0xff]
        %v7033 = vld [vmem:[#allocation23 + $0x3b8] sm:$0xff]
        %v7034 = vld [vmem:[#allocation23 + $0x3c0] sm:$0xff]
        %v7035 = vld [vmem:[#allocation23 + $0x3c8] sm:$0xff]
        %v7036 = vld [vmem:[#allocation23 + $0x3d0] sm:$0xff]
        %v7037 = vld [vmem:[#allocation23 + $0x3d8] sm:$0xff]
        %v7038 = vld [vmem:[#allocation23 + $0x3e0] sm:$0xff]
        %v7039 = vld [vmem:[#allocation23 + $0x3e8] sm:$0xff]
        %v7040 = vld [vmem:[#allocation23 + $0x3f0] sm:$0xff]
        %v7041 = vld [vmem:[#allocation23 + $0x3f8] sm:$0xff]
        %v7042 = vld [vmem:[#allocation23 + $0x400] sm:$0xff]
        %v7043 = vld [vmem:[#allocation23 + $0x408] sm:$0xff]
        %v7044 = vld [vmem:[#allocation23 + $0x410] sm:$0xff]
        %v7045 = vld [vmem:[#allocation23 + $0x418] sm:$0xff]
        %v7046 = vld [vmem:[#allocation23 + $0x420] sm:$0xff]
        %v7047 = vld [vmem:[#allocation23 + $0x428] sm:$0xff]
        %v7048 = vld [vmem:[#allocation23 + $0x430] sm:$0xff]
        %v7049 = vld [vmem:[#allocation23 + $0x438] sm:$0xff]
        %v7050 = vld [vmem:[#allocation23 + $0x440] sm:$0xff]
        %v7051 = vld [vmem:[#allocation23 + $0x448] sm:$0xff]
        %v7052 = vld [vmem:[#allocation23 + $0x450] sm:$0xff]
        %v7053 = vld [vmem:[#allocation23 + $0x458] sm:$0xff]
        %v7054 = vld [vmem:[#allocation23 + $0x460] sm:$0xff]
        %v7055 = vld [vmem:[#allocation23 + $0x468] sm:$0xff]
        %v7056 = vld [vmem:[#allocation23 + $0x470] sm:$0xff]
        %v7057 = vld [vmem:[#allocation23 + $0x478] sm:$0xff]
        %v7058 = vld [vmem:[#allocation23 + $0x480] sm:$0xff]
        %v7059 = vld [vmem:[#allocation23 + $0x488] sm:$0xff]
        %v7060 = vld [vmem:[#allocation23 + $0x490] sm:$0xff]
        %v7061 = vld [vmem:[#allocation23 + $0x498] sm:$0xff]
        %v7062 = vld [vmem:[#allocation23 + $0x4a0] sm:$0xff]
        %v7063 = vld [vmem:[#allocation23 + $0x4a8] sm:$0xff]
        %v7064 = vld [vmem:[#allocation23 + $0x4b0] sm:$0xff]
        %v7065 = vld [vmem:[#allocation23 + $0x4b8] sm:$0xff]
        %v7066 = vld [vmem:[#allocation23 + $0x4c0] sm:$0xff]
        %v7067 = vld [vmem:[#allocation23 + $0x4c8] sm:$0xff]
        %v7068 = vld [vmem:[#allocation23 + $0x4d0] sm:$0xff]
        %v7069 = vld [vmem:[#allocation23 + $0x4d8] sm:$0xff]
        %v7070 = vld [vmem:[#allocation23 + $0x4e0] sm:$0xff]
        %v7071 = vld [vmem:[#allocation23 + $0x4e8] sm:$0xff]
        %v7072 = vld [vmem:[#allocation23 + $0x4f0] sm:$0xff]
        %v7073 = vld [vmem:[#allocation23 + $0x4f8] sm:$0xff]
        %v7074 = vld [vmem:[#allocation23 + $0x500] sm:$0xff]
        %v7075 = vld [vmem:[#allocation23 + $0x508] sm:$0xff]
        %v7076 = vld [vmem:[#allocation23 + $0x510] sm:$0xff]
        %v7077 = vld [vmem:[#allocation23 + $0x518] sm:$0xff]
        %v7078 = vld [vmem:[#allocation23 + $0x520] sm:$0xff]
        %v7079 = vld [vmem:[#allocation23 + $0x528] sm:$0xff]
        %v7080 = vld [vmem:[#allocation23 + $0x530] sm:$0xff]
        %v7081 = vld [vmem:[#allocation23 + $0x538] sm:$0xff]
        %v7082 = vld [vmem:[#allocation23 + $0x540] sm:$0xff]
        %v7083 = vld [vmem:[#allocation23 + $0x548] sm:$0xff]
        %v7084 = vld [vmem:[#allocation23 + $0x550] sm:$0xff]
        %v7085 = vld [vmem:[#allocation23 + $0x558] sm:$0xff]
        %v7086 = vld [vmem:[#allocation23 + $0x560] sm:$0xff]
        %v7087 = vld [vmem:[#allocation23 + $0x568] sm:$0xff]
        %v7088 = vld [vmem:[#allocation23 + $0x570] sm:$0xff]
        %v7089 = vld [vmem:[#allocation23 + $0x578] sm:$0xff]
        %v7090 = vld [vmem:[#allocation23 + $0x580] sm:$0xff]
        %v7091 = vld [vmem:[#allocation23 + $0x588] sm:$0xff]
        %v7092 = vld [vmem:[#allocation23 + $0x590] sm:$0xff]
        %v7093 = vld [vmem:[#allocation23 + $0x598] sm:$0xff]
        %v7094 = vld [vmem:[#allocation23 + $0x5a0] sm:$0xff]
        %v7095 = vld [vmem:[#allocation23 + $0x5a8] sm:$0xff]
        %v7096 = vld [vmem:[#allocation23 + $0x5b0] sm:$0xff]
        %v7097 = vld [vmem:[#allocation23 + $0x5b8] sm:$0xff]
        %v7098 = vld [vmem:[#allocation23 + $0x5c0] sm:$0xff]
        %v7099 = vld [vmem:[#allocation23 + $0x5c8] sm:$0xff]
        %v7100 = vld [vmem:[#allocation23 + $0x5d0] sm:$0xff]
        %v7101 = vld [vmem:[#allocation23 + $0x5d8] sm:$0xff]
        %v7102 = vld [vmem:[#allocation23 + $0x5e0] sm:$0xff]
        %v7103 = vld [vmem:[#allocation23 + $0x5e8] sm:$0xff]
        %v7104 = vld [vmem:[#allocation23 + $0x5f0] sm:$0xff]
        %v7105 = vld [vmem:[#allocation23 + $0x5f8] sm:$0xff]
        %v7106 = vld [vmem:[#allocation23 + $0x600] sm:$0xff]
        %v7107 = vld [vmem:[#allocation23 + $0x608] sm:$0xff]
        %v7108 = vld [vmem:[#allocation23 + $0x610] sm:$0xff]
        %v7109 = vld [vmem:[#allocation23 + $0x618] sm:$0xff]
        %v7110 = vld [vmem:[#allocation23 + $0x620] sm:$0xff]
        %v7111 = vld [vmem:[#allocation23 + $0x628] sm:$0xff]
        %v7112 = vld [vmem:[#allocation23 + $0x630] sm:$0xff]
        %v7113 = vld [vmem:[#allocation23 + $0x638] sm:$0xff]
        %v7114 = vld [vmem:[#allocation23 + $0x640] sm:$0xff]
        %v7115 = vld [vmem:[#allocation23 + $0x648] sm:$0xff]
        %v7116 = vld [vmem:[#allocation23 + $0x650] sm:$0xff]
        %v7117 = vld [vmem:[#allocation23 + $0x658] sm:$0xff]
        %v7118 = vld [vmem:[#allocation23 + $0x660] sm:$0xff]
        %v7119 = vld [vmem:[#allocation23 + $0x668] sm:$0xff]
        %v7120 = vld [vmem:[#allocation23 + $0x670] sm:$0xff]
        %v7121 = vld [vmem:[#allocation23 + $0x678] sm:$0xff]
        %v7122 = vld [vmem:[#allocation23 + $0x680] sm:$0xff]
        %v7123 = vld [vmem:[#allocation23 + $0x688] sm:$0xff]
        %v7124 = vld [vmem:[#allocation23 + $0x690] sm:$0xff]
        %v7125 = vld [vmem:[#allocation23 + $0x698] sm:$0xff]
        %v7126 = vld [vmem:[#allocation23 + $0x6a0] sm:$0xff]
        %v7127 = vld [vmem:[#allocation23 + $0x6a8] sm:$0xff]
        %v7128 = vld [vmem:[#allocation23 + $0x6b0] sm:$0xff]
        %v7129 = vld [vmem:[#allocation23 + $0x6b8] sm:$0xff]
        %v7130 = vld [vmem:[#allocation23 + $0x6c0] sm:$0xff]
        %v7131 = vld [vmem:[#allocation23 + $0x6c8] sm:$0xff]
        %v7132 = vld [vmem:[#allocation23 + $0x6d0] sm:$0xff]
        %v7133 = vld [vmem:[#allocation23 + $0x6d8] sm:$0xff]
        %v7134 = vld [vmem:[#allocation23 + $0x6e0] sm:$0xff]
        %v7135 = vld [vmem:[#allocation23 + $0x6e8] sm:$0xff]
        %v7136 = vld [vmem:[#allocation23 + $0x6f0] sm:$0xff]
        %v7137 = vld [vmem:[#allocation23 + $0x6f8] sm:$0xff]
        %v7138 = vld [vmem:[#allocation23 + $0x700] sm:$0xff]
        %v7139 = vld [vmem:[#allocation23 + $0x708] sm:$0xff]
        %v7140 = vld [vmem:[#allocation23 + $0x710] sm:$0xff]
        %v7141 = vld [vmem:[#allocation23 + $0x718] sm:$0xff]
        %v7142 = vld [vmem:[#allocation23 + $0x720] sm:$0xff]
        %v7143 = vld [vmem:[#allocation23 + $0x728] sm:$0xff]
        %v7144 = vld [vmem:[#allocation23 + $0x730] sm:$0xff]
        %v7145 = vld [vmem:[#allocation23 + $0x738] sm:$0xff]
        %v7146 = vld [vmem:[#allocation23 + $0x740] sm:$0xff]
        %v7147 = vld [vmem:[#allocation23 + $0x748] sm:$0xff]
        %v7148 = vld [vmem:[#allocation23 + $0x750] sm:$0xff]
        %v7149 = vld [vmem:[#allocation23 + $0x758] sm:$0xff]
        %v7150 = vld [vmem:[#allocation23 + $0x760] sm:$0xff]
        %v7151 = vld [vmem:[#allocation23 + $0x768] sm:$0xff]
        %v7152 = vld [vmem:[#allocation23 + $0x770] sm:$0xff]
        %v7153 = vld [vmem:[#allocation23 + $0x778] sm:$0xff]
        %v7154 = vld [vmem:[#allocation23 + $0x780] sm:$0xff]
        %v7155 = vld [vmem:[#allocation23 + $0x788] sm:$0xff]
        %v7156 = vld [vmem:[#allocation23 + $0x790] sm:$0xff]
        %v7157 = vld [vmem:[#allocation23 + $0x798] sm:$0xff]
        %v7158 = vld [vmem:[#allocation23 + $0x7a0] sm:$0xff]
        %v7159 = vld [vmem:[#allocation23 + $0x7a8] sm:$0xff]
        %v7160 = vld [vmem:[#allocation23 + $0x7b0] sm:$0xff]
        %v7161 = vld [vmem:[#allocation23 + $0x7b8] sm:$0xff]
        %v7162 = vld [vmem:[#allocation23 + $0x7c0] sm:$0xff]
        %v7163 = vld [vmem:[#allocation23 + $0x7c8] sm:$0xff]
        %v7164 = vld [vmem:[#allocation23 + $0x7d0] sm:$0xff]
        %v7165 = vld [vmem:[#allocation23 + $0x7d8] sm:$0xff]
        %v7166 = vld [vmem:[#allocation23 + $0x7e0] sm:$0xff]
        %v7167 = vld [vmem:[#allocation23 + $0x7e8] sm:$0xff]
        %v7168 = vld [vmem:[#allocation23 + $0x7f0] sm:$0xff]
        %v7169 = vld [vmem:[#allocation23 + $0x7f8] sm:$0xff]
        %v7170 = vld [vmem:[#allocation23 + $0x800] sm:$0xff]
        %v7171 = vld [vmem:[#allocation23 + $0x808] sm:$0xff]
        %v7172 = vld [vmem:[#allocation23 + $0x810] sm:$0xff]
        %v7173 = vld [vmem:[#allocation23 + $0x818] sm:$0xff]
        %v7174 = vld [vmem:[#allocation23 + $0x820] sm:$0xff]
        %v7175 = vld [vmem:[#allocation23 + $0x828] sm:$0xff]
        %v7176 = vld [vmem:[#allocation23 + $0x830] sm:$0xff]
        %v7177 = vld [vmem:[#allocation23 + $0x838] sm:$0xff]
        %v7178 = vld [vmem:[#allocation23 + $0x840] sm:$0xff]
        %v7179 = vld [vmem:[#allocation23 + $0x848] sm:$0xff]
        %v7180 = vld [vmem:[#allocation23 + $0x850] sm:$0xff]
        %v7181 = vld [vmem:[#allocation23 + $0x858] sm:$0xff]
        %v7182 = vld [vmem:[#allocation23 + $0x860] sm:$0xff]
        %v7183 = vld [vmem:[#allocation23 + $0x868] sm:$0xff]
        %v7184 = vld [vmem:[#allocation23 + $0x870] sm:$0xff]
        %v7185 = vld [vmem:[#allocation23 + $0x878] sm:$0xff]
        %v7186 = vld [vmem:[#allocation23 + $0x880] sm:$0xff]
        %v7187 = vld [vmem:[#allocation23 + $0x888] sm:$0xff]
        %v7188 = vld [vmem:[#allocation23 + $0x890] sm:$0xff]
        %v7189 = vld [vmem:[#allocation23 + $0x898] sm:$0xff]
        %v7190 = vld [vmem:[#allocation23 + $0x8a0] sm:$0xff]
        %v7191 = vld [vmem:[#allocation23 + $0x8a8] sm:$0xff]
        %v7192 = vld [vmem:[#allocation23 + $0x8b0] sm:$0xff]
        %v7193 = vld [vmem:[#allocation23 + $0x8b8] sm:$0xff]
        %v7194 = vld [vmem:[#allocation23 + $0x8c0] sm:$0xff]
        %v7195 = vld [vmem:[#allocation23 + $0x8c8] sm:$0xff]
        %v7196 = vld [vmem:[#allocation23 + $0x8d0] sm:$0xff]
        %v7197 = vld [vmem:[#allocation23 + $0x8d8] sm:$0xff]
        %v7198 = vld [vmem:[#allocation23 + $0x8e0] sm:$0xff]
        %v7199 = vld [vmem:[#allocation23 + $0x8e8] sm:$0xff]
        %v7200 = vld [vmem:[#allocation23 + $0x8f0] sm:$0xff]
        %v7201 = vld [vmem:[#allocation23 + $0x8f8] sm:$0xff]
        %v7202 = vld [vmem:[#allocation23 + $0x900] sm:$0xff]
        %v7203 = vld [vmem:[#allocation23 + $0x908] sm:$0xff]
        %v7204 = vld [vmem:[#allocation23 + $0x910] sm:$0xff]
        %v7205 = vld [vmem:[#allocation23 + $0x918] sm:$0xff]
        %v7206 = vld [vmem:[#allocation23 + $0x920] sm:$0xff]
        %v7207 = vld [vmem:[#allocation23 + $0x928] sm:$0xff]
        %v7208 = vld [vmem:[#allocation23 + $0x930] sm:$0xff]
        %v7209 = vld [vmem:[#allocation23 + $0x938] sm:$0xff]
        %v7210 = vld [vmem:[#allocation23 + $0x940] sm:$0xff]
        %v7211 = vld [vmem:[#allocation23 + $0x948] sm:$0xff]
        %v7212 = vld [vmem:[#allocation23 + $0x950] sm:$0xff]
        %v7213 = vld [vmem:[#allocation23 + $0x958] sm:$0xff]
        %v7214 = vld [vmem:[#allocation23 + $0x960] sm:$0xff]
        %v7215 = vld [vmem:[#allocation23 + $0x968] sm:$0xff]
        %v7216 = vld [vmem:[#allocation23 + $0x970] sm:$0xff]
        %v7217 = vld [vmem:[#allocation23 + $0x978] sm:$0xff]
        %v7218 = vld [vmem:[#allocation23 + $0x980] sm:$0xff]
        %v7219 = vld [vmem:[#allocation23 + $0x988] sm:$0xff]
        %v7220 = vld [vmem:[#allocation23 + $0x990] sm:$0xff]
        %v7221 = vld [vmem:[#allocation23 + $0x998] sm:$0xff]
        %v7222 = vld [vmem:[#allocation23 + $0x9a0] sm:$0xff]
        %v7223 = vld [vmem:[#allocation23 + $0x9a8] sm:$0xff]
        %v7224 = vld [vmem:[#allocation23 + $0x9b0] sm:$0xff]
        %v7225 = vld [vmem:[#allocation23 + $0x9b8] sm:$0xff]
        %v7226 = vld [vmem:[#allocation23 + $0x9c0] sm:$0xff]
        %v7227 = vld [vmem:[#allocation23 + $0x9c8] sm:$0xff]
        %v7228 = vld [vmem:[#allocation23 + $0x9d0] sm:$0xff]
        %v7229 = vld [vmem:[#allocation23 + $0x9d8] sm:$0xff]
        %v7230 = vld [vmem:[#allocation23 + $0x9e0] sm:$0xff]
        %v7231 = vld [vmem:[#allocation23 + $0x9e8] sm:$0xff]
        %v7232 = vld [vmem:[#allocation23 + $0x9f0] sm:$0xff]
        %v7233 = vld [vmem:[#allocation23 + $0x9f8] sm:$0xff]
        %v7234 = vld [vmem:[#allocation23 + $0xa00] sm:$0xff]
        %v7235 = vld [vmem:[#allocation23 + $0xa08] sm:$0xff]
        %v7236 = vld [vmem:[#allocation23 + $0xa10] sm:$0xff]
        %v7237 = vld [vmem:[#allocation23 + $0xa18] sm:$0xff]
        %v7238 = vld [vmem:[#allocation23 + $0xa20] sm:$0xff]
        %v7239 = vld [vmem:[#allocation23 + $0xa28] sm:$0xff]
        %v7240 = vld [vmem:[#allocation23 + $0xa30] sm:$0xff]
        %v7241 = vld [vmem:[#allocation23 + $0xa38] sm:$0xff]
        %v7242 = vld [vmem:[#allocation23 + $0xa40] sm:$0xff]
        %v7243 = vld [vmem:[#allocation23 + $0xa48] sm:$0xff]
        %v7244 = vld [vmem:[#allocation23 + $0xa50] sm:$0xff]
        %v7245 = vld [vmem:[#allocation23 + $0xa58] sm:$0xff]
        %v7246 = vld [vmem:[#allocation23 + $0xa60] sm:$0xff]
        %v7247 = vld [vmem:[#allocation23 + $0xa68] sm:$0xff]
        %v7248 = vld [vmem:[#allocation23 + $0xa70] sm:$0xff]
        %v7249 = vld [vmem:[#allocation23 + $0xa78] sm:$0xff]
        %v7250 = vld [vmem:[#allocation23 + $0xa80] sm:$0xff]
        %v7251 = vld [vmem:[#allocation23 + $0xa88] sm:$0xff]
        %v7252 = vld [vmem:[#allocation23 + $0xa90] sm:$0xff]
        %v7253 = vld [vmem:[#allocation23 + $0xa98] sm:$0xff]
        %v7254 = vld [vmem:[#allocation23 + $0xaa0] sm:$0xff]
        %v7255 = vld [vmem:[#allocation23 + $0xaa8] sm:$0xff]
        %v7256 = vld [vmem:[#allocation23 + $0xab0] sm:$0xff]
        %v7257 = vld [vmem:[#allocation23 + $0xab8] sm:$0xff]
        %v7258 = vld [vmem:[#allocation23 + $0xac0] sm:$0xff]
        %v7259 = vld [vmem:[#allocation23 + $0xac8] sm:$0xff]
        %v7260 = vld [vmem:[#allocation23 + $0xad0] sm:$0xff]
        %v7261 = vld [vmem:[#allocation23 + $0xad8] sm:$0xff]
        %v7262 = vld [vmem:[#allocation23 + $0xae0] sm:$0xff]
        %v7263 = vld [vmem:[#allocation23 + $0xae8] sm:$0xff]
        %v7264 = vld [vmem:[#allocation23 + $0xaf0] sm:$0xff]
        %v7265 = vld [vmem:[#allocation23 + $0xaf8] sm:$0xff]
        %v7266 = vld [vmem:[#allocation23 + $0xb00] sm:$0xff]
        %v7267 = vld [vmem:[#allocation23 + $0xb08] sm:$0xff]
        %v7268 = vld [vmem:[#allocation23 + $0xb10] sm:$0xff]
        %v7269 = vld [vmem:[#allocation23 + $0xb18] sm:$0xff]
        %v7270 = vld [vmem:[#allocation23 + $0xb20] sm:$0xff]
        %v7271 = vld [vmem:[#allocation23 + $0xb28] sm:$0xff]
        %v7272 = vld [vmem:[#allocation23 + $0xb30] sm:$0xff]
        %v7273 = vld [vmem:[#allocation23 + $0xb38] sm:$0xff]
        %v7274 = vld [vmem:[#allocation23 + $0xb40] sm:$0xff]
        %v7275 = vld [vmem:[#allocation23 + $0xb48] sm:$0xff]
        %v7276 = vld [vmem:[#allocation23 + $0xb50] sm:$0xff]
        %v7277 = vld [vmem:[#allocation23 + $0xb58] sm:$0xff]
        %v7278 = vld [vmem:[#allocation23 + $0xb60] sm:$0xff]
        %v7279 = vld [vmem:[#allocation23 + $0xb68] sm:$0xff]
        %v7280 = vld [vmem:[#allocation23 + $0xb70] sm:$0xff]
        %v7281 = vld [vmem:[#allocation23 + $0xb78] sm:$0xff]
        %v7282 = vld [vmem:[#allocation23 + $0xb80] sm:$0xff]
        %v7283 = vld [vmem:[#allocation23 + $0xb88] sm:$0xff]
        %v7284 = vld [vmem:[#allocation23 + $0xb90] sm:$0xff]
        %v7285 = vld [vmem:[#allocation23 + $0xb98] sm:$0xff]
        %v7286 = vld [vmem:[#allocation23 + $0xba0] sm:$0xff]
        %v7287 = vld [vmem:[#allocation23 + $0xba8] sm:$0xff]
        %v7288 = vld [vmem:[#allocation23 + $0xbb0] sm:$0xff]
        %v7289 = vld [vmem:[#allocation23 + $0xbb8] sm:$0xff]
        %v7290 = vld [vmem:[#allocation23 + $0xbc0] sm:$0xff]
        %v7291 = vld [vmem:[#allocation23 + $0xbc8] sm:$0xff]
        %v7292 = vld [vmem:[#allocation23 + $0xbd0] sm:$0xff]
        %v7293 = vld [vmem:[#allocation23 + $0xbd8] sm:$0xff]
        %v7294 = vld [vmem:[#allocation23 + $0xbe0] sm:$0xff]
        %v7295 = vld [vmem:[#allocation23 + $0xbe8] sm:$0xff]
        %v7296 = vld [vmem:[#allocation23 + $0xbf0] sm:$0xff]
        %v7297 = vld [vmem:[#allocation23 + $0xbf8] sm:$0xff]
        %v7298 = vld [vmem:[#allocation23 + $0xc00] sm:$0xff]
        %v7299 = vld [vmem:[#allocation23 + $0xc08] sm:$0xff]
        %v7300 = vld [vmem:[#allocation23 + $0xc10] sm:$0xff]
        %v7301 = vld [vmem:[#allocation23 + $0xc18] sm:$0xff]
        %v7302 = vld [vmem:[#allocation23 + $0xc20] sm:$0xff]
        %v7303 = vld [vmem:[#allocation23 + $0xc28] sm:$0xff]
        %v7304 = vld [vmem:[#allocation23 + $0xc30] sm:$0xff]
        %v7305 = vld [vmem:[#allocation23 + $0xc38] sm:$0xff]
        %v7306 = vld [vmem:[#allocation23 + $0xc40] sm:$0xff]
        %v7307 = vld [vmem:[#allocation23 + $0xc48] sm:$0xff]
        %v7308 = vld [vmem:[#allocation23 + $0xc50] sm:$0xff]
        %v7309 = vld [vmem:[#allocation23 + $0xc58] sm:$0xff]
        %v7310 = vld [vmem:[#allocation23 + $0xc60] sm:$0xff]
        %v7311 = vld [vmem:[#allocation23 + $0xc68] sm:$0xff]
        %v7312 = vld [vmem:[#allocation23 + $0xc70] sm:$0xff]
        %v7313 = vld [vmem:[#allocation23 + $0xc78] sm:$0xff]
        %v7314 = vld [vmem:[#allocation23 + $0xc80] sm:$0xff]
        %v7315 = vld [vmem:[#allocation23 + $0xc88] sm:$0xff]
        %v7316 = vld [vmem:[#allocation23 + $0xc90] sm:$0xff]
        %v7317 = vld [vmem:[#allocation23 + $0xc98] sm:$0xff]
        %v7318 = vld [vmem:[#allocation23 + $0xca0] sm:$0xff]
        %v7319 = vld [vmem:[#allocation23 + $0xca8] sm:$0xff]
        %v7320 = vld [vmem:[#allocation23 + $0xcb0] sm:$0xff]
        %v7321 = vld [vmem:[#allocation23 + $0xcb8] sm:$0xff]
        %v7322 = vld [vmem:[#allocation23 + $0xcc0] sm:$0xff]
        %v7323 = vld [vmem:[#allocation23 + $0xcc8] sm:$0xff]
        %v7324 = vld [vmem:[#allocation23 + $0xcd0] sm:$0xff]
        %v7325 = vld [vmem:[#allocation23 + $0xcd8] sm:$0xff]
        %v7326 = vld [vmem:[#allocation23 + $0xce0] sm:$0xff]
        %v7327 = vld [vmem:[#allocation23 + $0xce8] sm:$0xff]
        %v7328 = vld [vmem:[#allocation23 + $0xcf0] sm:$0xff]
        %v7329 = vld [vmem:[#allocation23 + $0xcf8] sm:$0xff]
        %v7330 = vld [vmem:[#allocation23 + $0xd00] sm:$0xff]
        %v7331 = vld [vmem:[#allocation23 + $0xd08] sm:$0xff]
        %v7332 = vld [vmem:[#allocation23 + $0xd10] sm:$0xff]
        %v7333 = vld [vmem:[#allocation23 + $0xd18] sm:$0xff]
        %v7334 = vld [vmem:[#allocation23 + $0xd20] sm:$0xff]
        %v7335 = vld [vmem:[#allocation23 + $0xd28] sm:$0xff]
        %v7336 = vld [vmem:[#allocation23 + $0xd30] sm:$0xff]
        %v7337 = vld [vmem:[#allocation23 + $0xd38] sm:$0xff]
        %v7338 = vld [vmem:[#allocation23 + $0xd40] sm:$0xff]
        %v7339 = vld [vmem:[#allocation23 + $0xd48] sm:$0xff]
        %v7340 = vld [vmem:[#allocation23 + $0xd50] sm:$0xff]
        %v7341 = vld [vmem:[#allocation23 + $0xd58] sm:$0xff]
        %v7342 = vld [vmem:[#allocation23 + $0xd60] sm:$0xff]
        %v7343 = vld [vmem:[#allocation23 + $0xd68] sm:$0xff]
        %v7344 = vld [vmem:[#allocation23 + $0xd70] sm:$0xff]
        %v7345 = vld [vmem:[#allocation23 + $0xd78] sm:$0xff]
        %v7346 = vld [vmem:[#allocation23 + $0xd80] sm:$0xff]
        %v7347 = vld [vmem:[#allocation23 + $0xd88] sm:$0xff]
        %v7348 = vld [vmem:[#allocation23 + $0xd90] sm:$0xff]
        %v7349 = vld [vmem:[#allocation23 + $0xd98] sm:$0xff]
        %v7350 = vld [vmem:[#allocation23 + $0xda0] sm:$0xff]
        %v7351 = vld [vmem:[#allocation23 + $0xda8] sm:$0xff]
        %v7352 = vld [vmem:[#allocation23 + $0xdb0] sm:$0xff]
        %v7353 = vld [vmem:[#allocation23 + $0xdb8] sm:$0xff]
        %v7354 = vld [vmem:[#allocation23 + $0xdc0] sm:$0xff]
        %v7355 = vld [vmem:[#allocation23 + $0xdc8] sm:$0xff]
        %v7356 = vld [vmem:[#allocation23 + $0xdd0] sm:$0xff]
        %v7357 = vld [vmem:[#allocation23 + $0xdd8] sm:$0xff]
        %v7358 = vld [vmem:[#allocation23 + $0xde0] sm:$0xff]
        %v7359 = vld [vmem:[#allocation23 + $0xde8] sm:$0xff]
        %v7360 = vld [vmem:[#allocation23 + $0xdf0] sm:$0xff]
        %v7361 = vld [vmem:[#allocation23 + $0xdf8] sm:$0xff]
        %v7362 = vld [vmem:[#allocation23 + $0xe00] sm:$0xff]
        %v7363 = vld [vmem:[#allocation23 + $0xe08] sm:$0xff]
        %v7364 = vld [vmem:[#allocation23 + $0xe10] sm:$0xff]
        %v7365 = vld [vmem:[#allocation23 + $0xe18] sm:$0xff]
        %v7366 = vld [vmem:[#allocation23 + $0xe20] sm:$0xff]
        %v7367 = vld [vmem:[#allocation23 + $0xe28] sm:$0xff]
        %v7368 = vld [vmem:[#allocation23 + $0xe30] sm:$0xff]
        %v7369 = vld [vmem:[#allocation23 + $0xe38] sm:$0xff]
        %v7370 = vld [vmem:[#allocation23 + $0xe40] sm:$0xff]
        %v7371 = vld [vmem:[#allocation23 + $0xe48] sm:$0xff]
        %v7372 = vld [vmem:[#allocation23 + $0xe50] sm:$0xff]
        %v7373 = vld [vmem:[#allocation23 + $0xe58] sm:$0xff]
        %v7374 = vld [vmem:[#allocation23 + $0xe60] sm:$0xff]
        %v7375 = vld [vmem:[#allocation23 + $0xe68] sm:$0xff]
        %v7376 = vld [vmem:[#allocation23 + $0xe70] sm:$0xff]
        %v7377 = vld [vmem:[#allocation23 + $0xe78] sm:$0xff]
        %v7378 = vld [vmem:[#allocation23 + $0xe80] sm:$0xff]
        %v7379 = vld [vmem:[#allocation23 + $0xe88] sm:$0xff]
        %v7380 = vld [vmem:[#allocation23 + $0xe90] sm:$0xff]
        %v7381 = vld [vmem:[#allocation23 + $0xe98] sm:$0xff]
        %v7382 = vld [vmem:[#allocation23 + $0xea0] sm:$0xff]
        %v7383 = vld [vmem:[#allocation23 + $0xea8] sm:$0xff]
        %v7384 = vld [vmem:[#allocation23 + $0xeb0] sm:$0xff]
        %v7385 = vld [vmem:[#allocation23 + $0xeb8] sm:$0xff]
        %v7386 = vld [vmem:[#allocation23 + $0xec0] sm:$0xff]
        %v7387 = vld [vmem:[#allocation23 + $0xec8] sm:$0xff]
        %v7388 = vld [vmem:[#allocation23 + $0xed0] sm:$0xff]
        %v7389 = vld [vmem:[#allocation23 + $0xed8] sm:$0xff]
        %v7390 = vld [vmem:[#allocation23 + $0xee0] sm:$0xff]
        %v7391 = vld [vmem:[#allocation23 + $0xee8] sm:$0xff]
        %v7392 = vld [vmem:[#allocation23 + $0xef0] sm:$0xff]
        %v7393 = vld [vmem:[#allocation23 + $0xef8] sm:$0xff]
        %v7394 = vld [vmem:[#allocation23 + $0xf00] sm:$0xff]
        %v7395 = vld [vmem:[#allocation23 + $0xf08] sm:$0xff]
        %v7396 = vld [vmem:[#allocation23 + $0xf10] sm:$0xff]
        %v7397 = vld [vmem:[#allocation23 + $0xf18] sm:$0xff]
        %v7398 = vld [vmem:[#allocation23 + $0xf20] sm:$0xff]
        %v7399 = vld [vmem:[#allocation23 + $0xf28] sm:$0xff]
        %v7400 = vld [vmem:[#allocation23 + $0xf30] sm:$0xff]
        %v7401 = vld [vmem:[#allocation23 + $0xf38] sm:$0xff]
        %v7402 = vld [vmem:[#allocation23 + $0xf40] sm:$0xff]
        %v7403 = vld [vmem:[#allocation23 + $0xf48] sm:$0xff]
        %v7404 = vld [vmem:[#allocation23 + $0xf50] sm:$0xff]
        %v7405 = vld [vmem:[#allocation23 + $0xf58] sm:$0xff]
        %v7406 = vld [vmem:[#allocation23 + $0xf60] sm:$0xff]
        %v7407 = vld [vmem:[#allocation23 + $0xf68] sm:$0xff]
        %v7408 = vld [vmem:[#allocation23 + $0xf70] sm:$0xff]
        %v7409 = vld [vmem:[#allocation23 + $0xf78] sm:$0xff]
        %v7410 = vld [vmem:[#allocation23 + $0xf80] sm:$0xff]
        %v7411 = vld [vmem:[#allocation23 + $0xf88] sm:$0xff]
        %v7412 = vld [vmem:[#allocation23 + $0xf90] sm:$0xff]
        %v7413 = vld [vmem:[#allocation23 + $0xf98] sm:$0xff]
        %v7414 = vld [vmem:[#allocation23 + $0xfa0] sm:$0xff]
        %v7415 = vld [vmem:[#allocation23 + $0xfa8] sm:$0xff]
        %v7416 = vld [vmem:[#allocation23 + $0xfb0] sm:$0xff]
        %v7417 = vld [vmem:[#allocation23 + $0xfb8] sm:$0xff]
        %v7418 = vld [vmem:[#allocation23 + $0xfc0] sm:$0xff]
        %v7419 = vld [vmem:[#allocation23 + $0xfc8] sm:$0xff]
        %v7420 = vld [vmem:[#allocation23 + $0xfd0] sm:$0xff]
        %v7421 = vld [vmem:[#allocation23 + $0xfd8] sm:$0xff]
        %v7422 = vld [vmem:[#allocation23 + $0xfe0] sm:$0xff]
        %v7423 = vld [vmem:[#allocation23 + $0xfe8] sm:$0xff]
        %v7424 = vld [vmem:[#allocation23 + $0xff0] sm:$0xff]
        %v7425 = vld [vmem:[#allocation23 + $0xff8] sm:$0xff]
        %v7426 = vld [vmem:[#allocation25] sm:$0xf]
        %v7428 = vlaneseq
        %v7429 = vshrl.u32 %v7428, 7
        %v7430 = vsub.s32 0, %v7429
        %v7431 = vrot.slane %v7426, %v7430
        %v7432 = vlaneseq
        %v7433 = vshrl.u32 %v7432, 7
        %v7434 = vsub.s32 1, %v7433
        %v7435 = vrot.slane %v7426, %v7434
        %v7436 = vlaneseq
        %v7437 = vshrl.u32 %v7436, 7
        %v7438 = vsub.s32 2, %v7437
        %v7439 = vrot.slane %v7426, %v7438
        %v7440 = vlaneseq
        %v7441 = vshrl.u32 %v7440, 7
        %v7442 = vsub.s32 3, %v7441
        %v7443 = vrot.slane %v7426, %v7442
        %v7960 = vunpack.c.l.b16 %v6914
        %v7961 = vunpack.c.h.b16 %v6914
        %v7962 = vunpack.c.l.b16 %v6915
        %v7963 = vunpack.c.h.b16 %v6915
        %v7964 = vunpack.c.l.b16 %v6916
        %v7965 = vunpack.c.h.b16 %v6916
        %v7966 = vunpack.c.l.b16 %v6917
        %v7967 = vunpack.c.h.b16 %v6917
        %v7968 = vunpack.c.l.b16 %v6918
        %v7969 = vunpack.c.h.b16 %v6918
        %v7970 = vunpack.c.l.b16 %v6919
        %v7971 = vunpack.c.h.b16 %v6919
        %v7972 = vunpack.c.l.b16 %v6920
        %v7973 = vunpack.c.h.b16 %v6920
        %v7974 = vunpack.c.l.b16 %v6921
        %v7975 = vunpack.c.h.b16 %v6921
        %v7976 = vunpack.c.l.b16 %v6922
        %v7977 = vunpack.c.h.b16 %v6922
        %v7978 = vunpack.c.l.b16 %v6923
        %v7979 = vunpack.c.h.b16 %v6923
        %v7980 = vunpack.c.l.b16 %v6924
        %v7981 = vunpack.c.h.b16 %v6924
        %v7982 = vunpack.c.l.b16 %v6925
        %v7983 = vunpack.c.h.b16 %v6925
        %v7984 = vunpack.c.l.b16 %v6926
        %v7985 = vunpack.c.h.b16 %v6926
        %v7986 = vunpack.c.l.b16 %v6927
        %v7987 = vunpack.c.h.b16 %v6927
        %v7988 = vunpack.c.l.b16 %v6928
        %v7989 = vunpack.c.h.b16 %v6928
        %v7990 = vunpack.c.l.b16 %v6929
        %v7991 = vunpack.c.h.b16 %v6929
        %v7992 = vunpack.c.l.b16 %v6930
        %v7993 = vunpack.c.h.b16 %v6930
        %v7994 = vunpack.c.l.b16 %v6931
        %v7995 = vunpack.c.h.b16 %v6931
        %v7996 = vunpack.c.l.b16 %v6932
        %v7997 = vunpack.c.h.b16 %v6932
        %v7998 = vunpack.c.l.b16 %v6933
        %v7999 = vunpack.c.h.b16 %v6933
        %v8000 = vunpack.c.l.b16 %v6934
        %v8001 = vunpack.c.h.b16 %v6934
        %v8002 = vunpack.c.l.b16 %v6935
        %v8003 = vunpack.c.h.b16 %v6935
        %v8004 = vunpack.c.l.b16 %v6936
        %v8005 = vunpack.c.h.b16 %v6936
        %v8006 = vunpack.c.l.b16 %v6937
        %v8007 = vunpack.c.h.b16 %v6937
        %v8008 = vunpack.c.l.b16 %v6938
        %v8009 = vunpack.c.h.b16 %v6938
        %v8010 = vunpack.c.l.b16 %v6939
        %v8011 = vunpack.c.h.b16 %v6939
        %v8012 = vunpack.c.l.b16 %v6940
        %v8013 = vunpack.c.h.b16 %v6940
        %v8014 = vunpack.c.l.b16 %v6941
        %v8015 = vunpack.c.h.b16 %v6941
        %v8016 = vunpack.c.l.b16 %v6942
        %v8017 = vunpack.c.h.b16 %v6942
        %v8018 = vunpack.c.l.b16 %v6943
        %v8019 = vunpack.c.h.b16 %v6943
        %v8020 = vunpack.c.l.b16 %v6944
        %v8021 = vunpack.c.h.b16 %v6944
        %v8022 = vunpack.c.l.b16 %v6945
        %v8023 = vunpack.c.h.b16 %v6945
        %v8024 = vunpack.c.l.b16 %v6946
        %v8025 = vunpack.c.h.b16 %v6946
        %v8026 = vunpack.c.l.b16 %v6947
        %v8027 = vunpack.c.h.b16 %v6947
        %v8028 = vunpack.c.l.b16 %v6948
        %v8029 = vunpack.c.h.b16 %v6948
        %v8030 = vunpack.c.l.b16 %v6949
        %v8031 = vunpack.c.h.b16 %v6949
        %v8032 = vunpack.c.l.b16 %v6950
        %v8033 = vunpack.c.h.b16 %v6950
        %v8034 = vunpack.c.l.b16 %v6951
        %v8035 = vunpack.c.h.b16 %v6951
        %v8036 = vunpack.c.l.b16 %v6952
        %v8037 = vunpack.c.h.b16 %v6952
        %v8038 = vunpack.c.l.b16 %v6953
        %v8039 = vunpack.c.h.b16 %v6953
        %v8040 = vunpack.c.l.b16 %v6954
        %v8041 = vunpack.c.h.b16 %v6954
        %v8042 = vunpack.c.l.b16 %v6955
        %v8043 = vunpack.c.h.b16 %v6955
        %v8044 = vunpack.c.l.b16 %v6956
        %v8045 = vunpack.c.h.b16 %v6956
        %v8046 = vunpack.c.l.b16 %v6957
        %v8047 = vunpack.c.h.b16 %v6957
        %v8048 = vunpack.c.l.b16 %v6958
        %v8049 = vunpack.c.h.b16 %v6958
        %v8050 = vunpack.c.l.b16 %v6959
        %v8051 = vunpack.c.h.b16 %v6959
        %v8052 = vunpack.c.l.b16 %v6960
        %v8053 = vunpack.c.h.b16 %v6960
        %v8054 = vunpack.c.l.b16 %v6961
        %v8055 = vunpack.c.h.b16 %v6961
        %v8056 = vunpack.c.l.b16 %v6962
        %v8057 = vunpack.c.h.b16 %v6962
        %v8058 = vunpack.c.l.b16 %v6963
        %v8059 = vunpack.c.h.b16 %v6963
        %v8060 = vunpack.c.l.b16 %v6964
        %v8061 = vunpack.c.h.b16 %v6964
        %v8062 = vunpack.c.l.b16 %v6965
        %v8063 = vunpack.c.h.b16 %v6965
        %v8064 = vunpack.c.l.b16 %v6966
        %v8065 = vunpack.c.h.b16 %v6966
        %v8066 = vunpack.c.l.b16 %v6967
        %v8067 = vunpack.c.h.b16 %v6967
        %v8068 = vunpack.c.l.b16 %v6968
        %v8069 = vunpack.c.h.b16 %v6968
        %v8070 = vunpack.c.l.b16 %v6969
        %v8071 = vunpack.c.h.b16 %v6969
        %v8072 = vunpack.c.l.b16 %v6970
        %v8073 = vunpack.c.h.b16 %v6970
        %v8074 = vunpack.c.l.b16 %v6971
        %v8075 = vunpack.c.h.b16 %v6971
        %v8076 = vunpack.c.l.b16 %v6972
        %v8077 = vunpack.c.h.b16 %v6972
        %v8078 = vunpack.c.l.b16 %v6973
        %v8079 = vunpack.c.h.b16 %v6973
        %v8080 = vunpack.c.l.b16 %v6974
        %v8081 = vunpack.c.h.b16 %v6974
        %v8082 = vunpack.c.l.b16 %v6975
        %v8083 = vunpack.c.h.b16 %v6975
        %v8084 = vunpack.c.l.b16 %v6976
        %v8085 = vunpack.c.h.b16 %v6976
        %v8086 = vunpack.c.l.b16 %v6977
        %v8087 = vunpack.c.h.b16 %v6977
        %v8088 = vunpack.c.l.b16 %v6978
        %v8089 = vunpack.c.h.b16 %v6978
        %v8090 = vunpack.c.l.b16 %v6979
        %v8091 = vunpack.c.h.b16 %v6979
        %v8092 = vunpack.c.l.b16 %v6980
        %v8093 = vunpack.c.h.b16 %v6980
        %v8094 = vunpack.c.l.b16 %v6981
        %v8095 = vunpack.c.h.b16 %v6981
        %v8096 = vunpack.c.l.b16 %v6982
        %v8097 = vunpack.c.h.b16 %v6982
        %v8098 = vunpack.c.l.b16 %v6983
        %v8099 = vunpack.c.h.b16 %v6983
        %v8100 = vunpack.c.l.b16 %v6984
        %v8101 = vunpack.c.h.b16 %v6984
        %v8102 = vunpack.c.l.b16 %v6985
        %v8103 = vunpack.c.h.b16 %v6985
        %v8104 = vunpack.c.l.b16 %v6986
        %v8105 = vunpack.c.h.b16 %v6986
        %v8106 = vunpack.c.l.b16 %v6987
        %v8107 = vunpack.c.h.b16 %v6987
        %v8108 = vunpack.c.l.b16 %v6988
        %v8109 = vunpack.c.h.b16 %v6988
        %v8110 = vunpack.c.l.b16 %v6989
        %v8111 = vunpack.c.h.b16 %v6989
        %v8112 = vunpack.c.l.b16 %v6990
        %v8113 = vunpack.c.h.b16 %v6990
        %v8114 = vunpack.c.l.b16 %v6991
        %v8115 = vunpack.c.h.b16 %v6991
        %v8116 = vunpack.c.l.b16 %v6992
        %v8117 = vunpack.c.h.b16 %v6992
        %v8118 = vunpack.c.l.b16 %v6993
        %v8119 = vunpack.c.h.b16 %v6993
        %v8120 = vunpack.c.l.b16 %v6994
        %v8121 = vunpack.c.h.b16 %v6994
        %v8122 = vunpack.c.l.b16 %v6995
        %v8123 = vunpack.c.h.b16 %v6995
        %v8124 = vunpack.c.l.b16 %v6996
        %v8125 = vunpack.c.h.b16 %v6996
        %v8126 = vunpack.c.l.b16 %v6997
        %v8127 = vunpack.c.h.b16 %v6997
        %v8128 = vunpack.c.l.b16 %v6998
        %v8129 = vunpack.c.h.b16 %v6998
        %v8130 = vunpack.c.l.b16 %v6999
        %v8131 = vunpack.c.h.b16 %v6999
        %v8132 = vunpack.c.l.b16 %v7000
        %v8133 = vunpack.c.h.b16 %v7000
        %v8134 = vunpack.c.l.b16 %v7001
        %v8135 = vunpack.c.h.b16 %v7001
        %v8136 = vunpack.c.l.b16 %v7002
        %v8137 = vunpack.c.h.b16 %v7002
        %v8138 = vunpack.c.l.b16 %v7003
        %v8139 = vunpack.c.h.b16 %v7003
        %v8140 = vunpack.c.l.b16 %v7004
        %v8141 = vunpack.c.h.b16 %v7004
        %v8142 = vunpack.c.l.b16 %v7005
        %v8143 = vunpack.c.h.b16 %v7005
        %v8144 = vunpack.c.l.b16 %v7006
        %v8145 = vunpack.c.h.b16 %v7006
        %v8146 = vunpack.c.l.b16 %v7007
        %v8147 = vunpack.c.h.b16 %v7007
        %v8148 = vunpack.c.l.b16 %v7008
        %v8149 = vunpack.c.h.b16 %v7008
        %v8150 = vunpack.c.l.b16 %v7009
        %v8151 = vunpack.c.h.b16 %v7009
        %v8152 = vunpack.c.l.b16 %v7010
        %v8153 = vunpack.c.h.b16 %v7010
        %v8154 = vunpack.c.l.b16 %v7011
        %v8155 = vunpack.c.h.b16 %v7011
        %v8156 = vunpack.c.l.b16 %v7012
        %v8157 = vunpack.c.h.b16 %v7012
        %v8158 = vunpack.c.l.b16 %v7013
        %v8159 = vunpack.c.h.b16 %v7013
        %v8160 = vunpack.c.l.b16 %v7014
        %v8161 = vunpack.c.h.b16 %v7014
        %v8162 = vunpack.c.l.b16 %v7015
        %v8163 = vunpack.c.h.b16 %v7015
        %v8164 = vunpack.c.l.b16 %v7016
        %v8165 = vunpack.c.h.b16 %v7016
        %v8166 = vunpack.c.l.b16 %v7017
        %v8167 = vunpack.c.h.b16 %v7017
        %v8168 = vunpack.c.l.b16 %v7018
        %v8169 = vunpack.c.h.b16 %v7018
        %v8170 = vunpack.c.l.b16 %v7019
        %v8171 = vunpack.c.h.b16 %v7019
        %v8172 = vunpack.c.l.b16 %v7020
        %v8173 = vunpack.c.h.b16 %v7020
        %v8174 = vunpack.c.l.b16 %v7021
        %v8175 = vunpack.c.h.b16 %v7021
        %v8176 = vunpack.c.l.b16 %v7022
        %v8177 = vunpack.c.h.b16 %v7022
        %v8178 = vunpack.c.l.b16 %v7023
        %v8179 = vunpack.c.h.b16 %v7023
        %v8180 = vunpack.c.l.b16 %v7024
        %v8181 = vunpack.c.h.b16 %v7024
        %v8182 = vunpack.c.l.b16 %v7025
        %v8183 = vunpack.c.h.b16 %v7025
        %v8184 = vunpack.c.l.b16 %v7026
        %v8185 = vunpack.c.h.b16 %v7026
        %v8186 = vunpack.c.l.b16 %v7027
        %v8187 = vunpack.c.h.b16 %v7027
        %v8188 = vunpack.c.l.b16 %v7028
        %v8189 = vunpack.c.h.b16 %v7028
        %v8190 = vunpack.c.l.b16 %v7029
        %v8191 = vunpack.c.h.b16 %v7029
        %v8192 = vunpack.c.l.b16 %v7030
        %v8193 = vunpack.c.h.b16 %v7030
        %v8194 = vunpack.c.l.b16 %v7031
        %v8195 = vunpack.c.h.b16 %v7031
        %v8196 = vunpack.c.l.b16 %v7032
        %v8197 = vunpack.c.h.b16 %v7032
        %v8198 = vunpack.c.l.b16 %v7033
        %v8199 = vunpack.c.h.b16 %v7033
        %v8200 = vunpack.c.l.b16 %v7034
        %v8201 = vunpack.c.h.b16 %v7034
        %v8202 = vunpack.c.l.b16 %v7035
        %v8203 = vunpack.c.h.b16 %v7035
        %v8204 = vunpack.c.l.b16 %v7036
        %v8205 = vunpack.c.h.b16 %v7036
        %v8206 = vunpack.c.l.b16 %v7037
        %v8207 = vunpack.c.h.b16 %v7037
        %v8208 = vunpack.c.l.b16 %v7038
        %v8209 = vunpack.c.h.b16 %v7038
        %v8210 = vunpack.c.l.b16 %v7039
        %v8211 = vunpack.c.h.b16 %v7039
        %v8212 = vunpack.c.l.b16 %v7040
        %v8213 = vunpack.c.h.b16 %v7040
        %v8214 = vunpack.c.l.b16 %v7041
        %v8215 = vunpack.c.h.b16 %v7041
        %v8216 = vunpack.c.l.b16 %v7042
        %v8217 = vunpack.c.h.b16 %v7042
        %v8218 = vunpack.c.l.b16 %v7043
        %v8219 = vunpack.c.h.b16 %v7043
        %v8220 = vunpack.c.l.b16 %v7044
        %v8221 = vunpack.c.h.b16 %v7044
        %v8222 = vunpack.c.l.b16 %v7045
        %v8223 = vunpack.c.h.b16 %v7045
        %v8224 = vunpack.c.l.b16 %v7046
        %v8225 = vunpack.c.h.b16 %v7046
        %v8226 = vunpack.c.l.b16 %v7047
        %v8227 = vunpack.c.h.b16 %v7047
        %v8228 = vunpack.c.l.b16 %v7048
        %v8229 = vunpack.c.h.b16 %v7048
        %v8230 = vunpack.c.l.b16 %v7049
        %v8231 = vunpack.c.h.b16 %v7049
        %v8232 = vunpack.c.l.b16 %v7050
        %v8233 = vunpack.c.h.b16 %v7050
        %v8234 = vunpack.c.l.b16 %v7051
        %v8235 = vunpack.c.h.b16 %v7051
        %v8236 = vunpack.c.l.b16 %v7052
        %v8237 = vunpack.c.h.b16 %v7052
        %v8238 = vunpack.c.l.b16 %v7053
        %v8239 = vunpack.c.h.b16 %v7053
        %v8240 = vunpack.c.l.b16 %v7054
        %v8241 = vunpack.c.h.b16 %v7054
        %v8242 = vunpack.c.l.b16 %v7055
        %v8243 = vunpack.c.h.b16 %v7055
        %v8244 = vunpack.c.l.b16 %v7056
        %v8245 = vunpack.c.h.b16 %v7056
        %v8246 = vunpack.c.l.b16 %v7057
        %v8247 = vunpack.c.h.b16 %v7057
        %v8248 = vunpack.c.l.b16 %v7058
        %v8249 = vunpack.c.h.b16 %v7058
        %v8250 = vunpack.c.l.b16 %v7059
        %v8251 = vunpack.c.h.b16 %v7059
        %v8252 = vunpack.c.l.b16 %v7060
        %v8253 = vunpack.c.h.b16 %v7060
        %v8254 = vunpack.c.l.b16 %v7061
        %v8255 = vunpack.c.h.b16 %v7061
        %v8256 = vunpack.c.l.b16 %v7062
        %v8257 = vunpack.c.h.b16 %v7062
        %v8258 = vunpack.c.l.b16 %v7063
        %v8259 = vunpack.c.h.b16 %v7063
        %v8260 = vunpack.c.l.b16 %v7064
        %v8261 = vunpack.c.h.b16 %v7064
        %v8262 = vunpack.c.l.b16 %v7065
        %v8263 = vunpack.c.h.b16 %v7065
        %v8264 = vunpack.c.l.b16 %v7066
        %v8265 = vunpack.c.h.b16 %v7066
        %v8266 = vunpack.c.l.b16 %v7067
        %v8267 = vunpack.c.h.b16 %v7067
        %v8268 = vunpack.c.l.b16 %v7068
        %v8269 = vunpack.c.h.b16 %v7068
        %v8270 = vunpack.c.l.b16 %v7069
        %v8271 = vunpack.c.h.b16 %v7069
        %v8272 = vunpack.c.l.b16 %v7070
        %v8273 = vunpack.c.h.b16 %v7070
        %v8274 = vunpack.c.l.b16 %v7071
        %v8275 = vunpack.c.h.b16 %v7071
        %v8276 = vunpack.c.l.b16 %v7072
        %v8277 = vunpack.c.h.b16 %v7072
        %v8278 = vunpack.c.l.b16 %v7073
        %v8279 = vunpack.c.h.b16 %v7073
        %v8280 = vunpack.c.l.b16 %v7074
        %v8281 = vunpack.c.h.b16 %v7074
        %v8282 = vunpack.c.l.b16 %v7075
        %v8283 = vunpack.c.h.b16 %v7075
        %v8284 = vunpack.c.l.b16 %v7076
        %v8285 = vunpack.c.h.b16 %v7076
        %v8286 = vunpack.c.l.b16 %v7077
        %v8287 = vunpack.c.h.b16 %v7077
        %v8288 = vunpack.c.l.b16 %v7078
        %v8289 = vunpack.c.h.b16 %v7078
        %v8290 = vunpack.c.l.b16 %v7079
        %v8291 = vunpack.c.h.b16 %v7079
        %v8292 = vunpack.c.l.b16 %v7080
        %v8293 = vunpack.c.h.b16 %v7080
        %v8294 = vunpack.c.l.b16 %v7081
        %v8295 = vunpack.c.h.b16 %v7081
        %v8296 = vunpack.c.l.b16 %v7082
        %v8297 = vunpack.c.h.b16 %v7082
        %v8298 = vunpack.c.l.b16 %v7083
        %v8299 = vunpack.c.h.b16 %v7083
        %v8300 = vunpack.c.l.b16 %v7084
        %v8301 = vunpack.c.h.b16 %v7084
        %v8302 = vunpack.c.l.b16 %v7085
        %v8303 = vunpack.c.h.b16 %v7085
        %v8304 = vunpack.c.l.b16 %v7086
        %v8305 = vunpack.c.h.b16 %v7086
        %v8306 = vunpack.c.l.b16 %v7087
        %v8307 = vunpack.c.h.b16 %v7087
        %v8308 = vunpack.c.l.b16 %v7088
        %v8309 = vunpack.c.h.b16 %v7088
        %v8310 = vunpack.c.l.b16 %v7089
        %v8311 = vunpack.c.h.b16 %v7089
        %v8312 = vunpack.c.l.b16 %v7090
        %v8313 = vunpack.c.h.b16 %v7090
        %v8314 = vunpack.c.l.b16 %v7091
        %v8315 = vunpack.c.h.b16 %v7091
        %v8316 = vunpack.c.l.b16 %v7092
        %v8317 = vunpack.c.h.b16 %v7092
        %v8318 = vunpack.c.l.b16 %v7093
        %v8319 = vunpack.c.h.b16 %v7093
        %v8320 = vunpack.c.l.b16 %v7094
        %v8321 = vunpack.c.h.b16 %v7094
        %v8322 = vunpack.c.l.b16 %v7095
        %v8323 = vunpack.c.h.b16 %v7095
        %v8324 = vunpack.c.l.b16 %v7096
        %v8325 = vunpack.c.h.b16 %v7096
        %v8326 = vunpack.c.l.b16 %v7097
        %v8327 = vunpack.c.h.b16 %v7097
        %v8328 = vunpack.c.l.b16 %v7098
        %v8329 = vunpack.c.h.b16 %v7098
        %v8330 = vunpack.c.l.b16 %v7099
        %v8331 = vunpack.c.h.b16 %v7099
        %v8332 = vunpack.c.l.b16 %v7100
        %v8333 = vunpack.c.h.b16 %v7100
        %v8334 = vunpack.c.l.b16 %v7101
        %v8335 = vunpack.c.h.b16 %v7101
        %v8336 = vunpack.c.l.b16 %v7102
        %v8337 = vunpack.c.h.b16 %v7102
        %v8338 = vunpack.c.l.b16 %v7103
        %v8339 = vunpack.c.h.b16 %v7103
        %v8340 = vunpack.c.l.b16 %v7104
        %v8341 = vunpack.c.h.b16 %v7104
        %v8342 = vunpack.c.l.b16 %v7105
        %v8343 = vunpack.c.h.b16 %v7105
        %v8344 = vunpack.c.l.b16 %v7106
        %v8345 = vunpack.c.h.b16 %v7106
        %v8346 = vunpack.c.l.b16 %v7107
        %v8347 = vunpack.c.h.b16 %v7107
        %v8348 = vunpack.c.l.b16 %v7108
        %v8349 = vunpack.c.h.b16 %v7108
        %v8350 = vunpack.c.l.b16 %v7109
        %v8351 = vunpack.c.h.b16 %v7109
        %v8352 = vunpack.c.l.b16 %v7110
        %v8353 = vunpack.c.h.b16 %v7110
        %v8354 = vunpack.c.l.b16 %v7111
        %v8355 = vunpack.c.h.b16 %v7111
        %v8356 = vunpack.c.l.b16 %v7112
        %v8357 = vunpack.c.h.b16 %v7112
        %v8358 = vunpack.c.l.b16 %v7113
        %v8359 = vunpack.c.h.b16 %v7113
        %v8360 = vunpack.c.l.b16 %v7114
        %v8361 = vunpack.c.h.b16 %v7114
        %v8362 = vunpack.c.l.b16 %v7115
        %v8363 = vunpack.c.h.b16 %v7115
        %v8364 = vunpack.c.l.b16 %v7116
        %v8365 = vunpack.c.h.b16 %v7116
        %v8366 = vunpack.c.l.b16 %v7117
        %v8367 = vunpack.c.h.b16 %v7117
        %v8368 = vunpack.c.l.b16 %v7118
        %v8369 = vunpack.c.h.b16 %v7118
        %v8370 = vunpack.c.l.b16 %v7119
        %v8371 = vunpack.c.h.b16 %v7119
        %v8372 = vunpack.c.l.b16 %v7120
        %v8373 = vunpack.c.h.b16 %v7120
        %v8374 = vunpack.c.l.b16 %v7121
        %v8375 = vunpack.c.h.b16 %v7121
        %v8376 = vunpack.c.l.b16 %v7122
        %v8377 = vunpack.c.h.b16 %v7122
        %v8378 = vunpack.c.l.b16 %v7123
        %v8379 = vunpack.c.h.b16 %v7123
        %v8380 = vunpack.c.l.b16 %v7124
        %v8381 = vunpack.c.h.b16 %v7124
        %v8382 = vunpack.c.l.b16 %v7125
        %v8383 = vunpack.c.h.b16 %v7125
        %v8384 = vunpack.c.l.b16 %v7126
        %v8385 = vunpack.c.h.b16 %v7126
        %v8386 = vunpack.c.l.b16 %v7127
        %v8387 = vunpack.c.h.b16 %v7127
        %v8388 = vunpack.c.l.b16 %v7128
        %v8389 = vunpack.c.h.b16 %v7128
        %v8390 = vunpack.c.l.b16 %v7129
        %v8391 = vunpack.c.h.b16 %v7129
        %v8392 = vunpack.c.l.b16 %v7130
        %v8393 = vunpack.c.h.b16 %v7130
        %v8394 = vunpack.c.l.b16 %v7131
        %v8395 = vunpack.c.h.b16 %v7131
        %v8396 = vunpack.c.l.b16 %v7132
        %v8397 = vunpack.c.h.b16 %v7132
        %v8398 = vunpack.c.l.b16 %v7133
        %v8399 = vunpack.c.h.b16 %v7133
        %v8400 = vunpack.c.l.b16 %v7134
        %v8401 = vunpack.c.h.b16 %v7134
        %v8402 = vunpack.c.l.b16 %v7135
        %v8403 = vunpack.c.h.b16 %v7135
        %v8404 = vunpack.c.l.b16 %v7136
        %v8405 = vunpack.c.h.b16 %v7136
        %v8406 = vunpack.c.l.b16 %v7137
        %v8407 = vunpack.c.h.b16 %v7137
        %v8408 = vunpack.c.l.b16 %v7138
        %v8409 = vunpack.c.h.b16 %v7138
        %v8410 = vunpack.c.l.b16 %v7139
        %v8411 = vunpack.c.h.b16 %v7139
        %v8412 = vunpack.c.l.b16 %v7140
        %v8413 = vunpack.c.h.b16 %v7140
        %v8414 = vunpack.c.l.b16 %v7141
        %v8415 = vunpack.c.h.b16 %v7141
        %v8416 = vunpack.c.l.b16 %v7142
        %v8417 = vunpack.c.h.b16 %v7142
        %v8418 = vunpack.c.l.b16 %v7143
        %v8419 = vunpack.c.h.b16 %v7143
        %v8420 = vunpack.c.l.b16 %v7144
        %v8421 = vunpack.c.h.b16 %v7144
        %v8422 = vunpack.c.l.b16 %v7145
        %v8423 = vunpack.c.h.b16 %v7145
        %v8424 = vunpack.c.l.b16 %v7146
        %v8425 = vunpack.c.h.b16 %v7146
        %v8426 = vunpack.c.l.b16 %v7147
        %v8427 = vunpack.c.h.b16 %v7147
        %v8428 = vunpack.c.l.b16 %v7148
        %v8429 = vunpack.c.h.b16 %v7148
        %v8430 = vunpack.c.l.b16 %v7149
        %v8431 = vunpack.c.h.b16 %v7149
        %v8432 = vunpack.c.l.b16 %v7150
        %v8433 = vunpack.c.h.b16 %v7150
        %v8434 = vunpack.c.l.b16 %v7151
        %v8435 = vunpack.c.h.b16 %v7151
        %v8436 = vunpack.c.l.b16 %v7152
        %v8437 = vunpack.c.h.b16 %v7152
        %v8438 = vunpack.c.l.b16 %v7153
        %v8439 = vunpack.c.h.b16 %v7153
        %v8440 = vunpack.c.l.b16 %v7154
        %v8441 = vunpack.c.h.b16 %v7154
        %v8442 = vunpack.c.l.b16 %v7155
        %v8443 = vunpack.c.h.b16 %v7155
        %v8444 = vunpack.c.l.b16 %v7156
        %v8445 = vunpack.c.h.b16 %v7156
        %v8446 = vunpack.c.l.b16 %v7157
        %v8447 = vunpack.c.h.b16 %v7157
        %v8448 = vunpack.c.l.b16 %v7158
        %v8449 = vunpack.c.h.b16 %v7158
        %v8450 = vunpack.c.l.b16 %v7159
        %v8451 = vunpack.c.h.b16 %v7159
        %v8452 = vunpack.c.l.b16 %v7160
        %v8453 = vunpack.c.h.b16 %v7160
        %v8454 = vunpack.c.l.b16 %v7161
        %v8455 = vunpack.c.h.b16 %v7161
        %v8456 = vunpack.c.l.b16 %v7162
        %v8457 = vunpack.c.h.b16 %v7162
        %v8458 = vunpack.c.l.b16 %v7163
        %v8459 = vunpack.c.h.b16 %v7163
        %v8460 = vunpack.c.l.b16 %v7164
        %v8461 = vunpack.c.h.b16 %v7164
        %v8462 = vunpack.c.l.b16 %v7165
        %v8463 = vunpack.c.h.b16 %v7165
        %v8464 = vunpack.c.l.b16 %v7166
        %v8465 = vunpack.c.h.b16 %v7166
        %v8466 = vunpack.c.l.b16 %v7167
        %v8467 = vunpack.c.h.b16 %v7167
        %v8468 = vunpack.c.l.b16 %v7168
        %v8469 = vunpack.c.h.b16 %v7168
        %v8470 = vunpack.c.l.b16 %v7169
        %v8471 = vunpack.c.h.b16 %v7169
        %v8472 = vunpack.c.l.b16 %v7170
        %v8473 = vunpack.c.h.b16 %v7170
        %v8474 = vunpack.c.l.b16 %v7171
        %v8475 = vunpack.c.h.b16 %v7171
        %v8476 = vunpack.c.l.b16 %v7172
        %v8477 = vunpack.c.h.b16 %v7172
        %v8478 = vunpack.c.l.b16 %v7173
        %v8479 = vunpack.c.h.b16 %v7173
        %v8480 = vunpack.c.l.b16 %v7174
        %v8481 = vunpack.c.h.b16 %v7174
        %v8482 = vunpack.c.l.b16 %v7175
        %v8483 = vunpack.c.h.b16 %v7175
        %v8484 = vunpack.c.l.b16 %v7176
        %v8485 = vunpack.c.h.b16 %v7176
        %v8486 = vunpack.c.l.b16 %v7177
        %v8487 = vunpack.c.h.b16 %v7177
        %v8488 = vunpack.c.l.b16 %v7178
        %v8489 = vunpack.c.h.b16 %v7178
        %v8490 = vunpack.c.l.b16 %v7179
        %v8491 = vunpack.c.h.b16 %v7179
        %v8492 = vunpack.c.l.b16 %v7180
        %v8493 = vunpack.c.h.b16 %v7180
        %v8494 = vunpack.c.l.b16 %v7181
        %v8495 = vunpack.c.h.b16 %v7181
        %v8496 = vunpack.c.l.b16 %v7182
        %v8497 = vunpack.c.h.b16 %v7182
        %v8498 = vunpack.c.l.b16 %v7183
        %v8499 = vunpack.c.h.b16 %v7183
        %v8500 = vunpack.c.l.b16 %v7184
        %v8501 = vunpack.c.h.b16 %v7184
        %v8502 = vunpack.c.l.b16 %v7185
        %v8503 = vunpack.c.h.b16 %v7185
        %v8504 = vunpack.c.l.b16 %v7186
        %v8505 = vunpack.c.h.b16 %v7186
        %v8506 = vunpack.c.l.b16 %v7187
        %v8507 = vunpack.c.h.b16 %v7187
        %v8508 = vunpack.c.l.b16 %v7188
        %v8509 = vunpack.c.h.b16 %v7188
        %v8510 = vunpack.c.l.b16 %v7189
        %v8511 = vunpack.c.h.b16 %v7189
        %v8512 = vunpack.c.l.b16 %v7190
        %v8513 = vunpack.c.h.b16 %v7190
        %v8514 = vunpack.c.l.b16 %v7191
        %v8515 = vunpack.c.h.b16 %v7191
        %v8516 = vunpack.c.l.b16 %v7192
        %v8517 = vunpack.c.h.b16 %v7192
        %v8518 = vunpack.c.l.b16 %v7193
        %v8519 = vunpack.c.h.b16 %v7193
        %v8520 = vunpack.c.l.b16 %v7194
        %v8521 = vunpack.c.h.b16 %v7194
        %v8522 = vunpack.c.l.b16 %v7195
        %v8523 = vunpack.c.h.b16 %v7195
        %v8524 = vunpack.c.l.b16 %v7196
        %v8525 = vunpack.c.h.b16 %v7196
        %v8526 = vunpack.c.l.b16 %v7197
        %v8527 = vunpack.c.h.b16 %v7197
        %v8528 = vunpack.c.l.b16 %v7198
        %v8529 = vunpack.c.h.b16 %v7198
        %v8530 = vunpack.c.l.b16 %v7199
        %v8531 = vunpack.c.h.b16 %v7199
        %v8532 = vunpack.c.l.b16 %v7200
        %v8533 = vunpack.c.h.b16 %v7200
        %v8534 = vunpack.c.l.b16 %v7201
        %v8535 = vunpack.c.h.b16 %v7201
        %v8536 = vunpack.c.l.b16 %v7202
        %v8537 = vunpack.c.h.b16 %v7202
        %v8538 = vunpack.c.l.b16 %v7203
        %v8539 = vunpack.c.h.b16 %v7203
        %v8540 = vunpack.c.l.b16 %v7204
        %v8541 = vunpack.c.h.b16 %v7204
        %v8542 = vunpack.c.l.b16 %v7205
        %v8543 = vunpack.c.h.b16 %v7205
        %v8544 = vunpack.c.l.b16 %v7206
        %v8545 = vunpack.c.h.b16 %v7206
        %v8546 = vunpack.c.l.b16 %v7207
        %v8547 = vunpack.c.h.b16 %v7207
        %v8548 = vunpack.c.l.b16 %v7208
        %v8549 = vunpack.c.h.b16 %v7208
        %v8550 = vunpack.c.l.b16 %v7209
        %v8551 = vunpack.c.h.b16 %v7209
        %v8552 = vunpack.c.l.b16 %v7210
        %v8553 = vunpack.c.h.b16 %v7210
        %v8554 = vunpack.c.l.b16 %v7211
        %v8555 = vunpack.c.h.b16 %v7211
        %v8556 = vunpack.c.l.b16 %v7212
        %v8557 = vunpack.c.h.b16 %v7212
        %v8558 = vunpack.c.l.b16 %v7213
        %v8559 = vunpack.c.h.b16 %v7213
        %v8560 = vunpack.c.l.b16 %v7214
        %v8561 = vunpack.c.h.b16 %v7214
        %v8562 = vunpack.c.l.b16 %v7215
        %v8563 = vunpack.c.h.b16 %v7215
        %v8564 = vunpack.c.l.b16 %v7216
        %v8565 = vunpack.c.h.b16 %v7216
        %v8566 = vunpack.c.l.b16 %v7217
        %v8567 = vunpack.c.h.b16 %v7217
        %v8568 = vunpack.c.l.b16 %v7218
        %v8569 = vunpack.c.h.b16 %v7218
        %v8570 = vunpack.c.l.b16 %v7219
        %v8571 = vunpack.c.h.b16 %v7219
        %v8572 = vunpack.c.l.b16 %v7220
        %v8573 = vunpack.c.h.b16 %v7220
        %v8574 = vunpack.c.l.b16 %v7221
        %v8575 = vunpack.c.h.b16 %v7221
        %v8576 = vunpack.c.l.b16 %v7222
        %v8577 = vunpack.c.h.b16 %v7222
        %v8578 = vunpack.c.l.b16 %v7223
        %v8579 = vunpack.c.h.b16 %v7223
        %v8580 = vunpack.c.l.b16 %v7224
        %v8581 = vunpack.c.h.b16 %v7224
        %v8582 = vunpack.c.l.b16 %v7225
        %v8583 = vunpack.c.h.b16 %v7225
        %v8584 = vunpack.c.l.b16 %v7226
        %v8585 = vunpack.c.h.b16 %v7226
        %v8586 = vunpack.c.l.b16 %v7227
        %v8587 = vunpack.c.h.b16 %v7227
        %v8588 = vunpack.c.l.b16 %v7228
        %v8589 = vunpack.c.h.b16 %v7228
        %v8590 = vunpack.c.l.b16 %v7229
        %v8591 = vunpack.c.h.b16 %v7229
        %v8592 = vunpack.c.l.b16 %v7230
        %v8593 = vunpack.c.h.b16 %v7230
        %v8594 = vunpack.c.l.b16 %v7231
        %v8595 = vunpack.c.h.b16 %v7231
        %v8596 = vunpack.c.l.b16 %v7232
        %v8597 = vunpack.c.h.b16 %v7232
        %v8598 = vunpack.c.l.b16 %v7233
        %v8599 = vunpack.c.h.b16 %v7233
        %v8600 = vunpack.c.l.b16 %v7234
        %v8601 = vunpack.c.h.b16 %v7234
        %v8602 = vunpack.c.l.b16 %v7235
        %v8603 = vunpack.c.h.b16 %v7235
        %v8604 = vunpack.c.l.b16 %v7236
        %v8605 = vunpack.c.h.b16 %v7236
        %v8606 = vunpack.c.l.b16 %v7237
        %v8607 = vunpack.c.h.b16 %v7237
        %v8608 = vunpack.c.l.b16 %v7238
        %v8609 = vunpack.c.h.b16 %v7238
        %v8610 = vunpack.c.l.b16 %v7239
        %v8611 = vunpack.c.h.b16 %v7239
        %v8612 = vunpack.c.l.b16 %v7240
        %v8613 = vunpack.c.h.b16 %v7240
        %v8614 = vunpack.c.l.b16 %v7241
        %v8615 = vunpack.c.h.b16 %v7241
        %v8616 = vunpack.c.l.b16 %v7242
        %v8617 = vunpack.c.h.b16 %v7242
        %v8618 = vunpack.c.l.b16 %v7243
        %v8619 = vunpack.c.h.b16 %v7243
        %v8620 = vunpack.c.l.b16 %v7244
        %v8621 = vunpack.c.h.b16 %v7244
        %v8622 = vunpack.c.l.b16 %v7245
        %v8623 = vunpack.c.h.b16 %v7245
        %v8624 = vunpack.c.l.b16 %v7246
        %v8625 = vunpack.c.h.b16 %v7246
        %v8626 = vunpack.c.l.b16 %v7247
        %v8627 = vunpack.c.h.b16 %v7247
        %v8628 = vunpack.c.l.b16 %v7248
        %v8629 = vunpack.c.h.b16 %v7248
        %v8630 = vunpack.c.l.b16 %v7249
        %v8631 = vunpack.c.h.b16 %v7249
        %v8632 = vunpack.c.l.b16 %v7250
        %v8633 = vunpack.c.h.b16 %v7250
        %v8634 = vunpack.c.l.b16 %v7251
        %v8635 = vunpack.c.h.b16 %v7251
        %v8636 = vunpack.c.l.b16 %v7252
        %v8637 = vunpack.c.h.b16 %v7252
        %v8638 = vunpack.c.l.b16 %v7253
        %v8639 = vunpack.c.h.b16 %v7253
        %v8640 = vunpack.c.l.b16 %v7254
        %v8641 = vunpack.c.h.b16 %v7254
        %v8642 = vunpack.c.l.b16 %v7255
        %v8643 = vunpack.c.h.b16 %v7255
        %v8644 = vunpack.c.l.b16 %v7256
        %v8645 = vunpack.c.h.b16 %v7256
        %v8646 = vunpack.c.l.b16 %v7257
        %v8647 = vunpack.c.h.b16 %v7257
        %v8648 = vunpack.c.l.b16 %v7258
        %v8649 = vunpack.c.h.b16 %v7258
        %v8650 = vunpack.c.l.b16 %v7259
        %v8651 = vunpack.c.h.b16 %v7259
        %v8652 = vunpack.c.l.b16 %v7260
        %v8653 = vunpack.c.h.b16 %v7260
        %v8654 = vunpack.c.l.b16 %v7261
        %v8655 = vunpack.c.h.b16 %v7261
        %v8656 = vunpack.c.l.b16 %v7262
        %v8657 = vunpack.c.h.b16 %v7262
        %v8658 = vunpack.c.l.b16 %v7263
        %v8659 = vunpack.c.h.b16 %v7263
        %v8660 = vunpack.c.l.b16 %v7264
        %v8661 = vunpack.c.h.b16 %v7264
        %v8662 = vunpack.c.l.b16 %v7265
        %v8663 = vunpack.c.h.b16 %v7265
        %v8664 = vunpack.c.l.b16 %v7266
        %v8665 = vunpack.c.h.b16 %v7266
        %v8666 = vunpack.c.l.b16 %v7267
        %v8667 = vunpack.c.h.b16 %v7267
        %v8668 = vunpack.c.l.b16 %v7268
        %v8669 = vunpack.c.h.b16 %v7268
        %v8670 = vunpack.c.l.b16 %v7269
        %v8671 = vunpack.c.h.b16 %v7269
        %v8672 = vunpack.c.l.b16 %v7270
        %v8673 = vunpack.c.h.b16 %v7270
        %v8674 = vunpack.c.l.b16 %v7271
        %v8675 = vunpack.c.h.b16 %v7271
        %v8676 = vunpack.c.l.b16 %v7272
        %v8677 = vunpack.c.h.b16 %v7272
        %v8678 = vunpack.c.l.b16 %v7273
        %v8679 = vunpack.c.h.b16 %v7273
        %v8680 = vunpack.c.l.b16 %v7274
        %v8681 = vunpack.c.h.b16 %v7274
        %v8682 = vunpack.c.l.b16 %v7275
        %v8683 = vunpack.c.h.b16 %v7275
        %v8684 = vunpack.c.l.b16 %v7276
        %v8685 = vunpack.c.h.b16 %v7276
        %v8686 = vunpack.c.l.b16 %v7277
        %v8687 = vunpack.c.h.b16 %v7277
        %v8688 = vunpack.c.l.b16 %v7278
        %v8689 = vunpack.c.h.b16 %v7278
        %v8690 = vunpack.c.l.b16 %v7279
        %v8691 = vunpack.c.h.b16 %v7279
        %v8692 = vunpack.c.l.b16 %v7280
        %v8693 = vunpack.c.h.b16 %v7280
        %v8694 = vunpack.c.l.b16 %v7281
        %v8695 = vunpack.c.h.b16 %v7281
        %v8696 = vunpack.c.l.b16 %v7282
        %v8697 = vunpack.c.h.b16 %v7282
        %v8698 = vunpack.c.l.b16 %v7283
        %v8699 = vunpack.c.h.b16 %v7283
        %v8700 = vunpack.c.l.b16 %v7284
        %v8701 = vunpack.c.h.b16 %v7284
        %v8702 = vunpack.c.l.b16 %v7285
        %v8703 = vunpack.c.h.b16 %v7285
        %v8704 = vunpack.c.l.b16 %v7286
        %v8705 = vunpack.c.h.b16 %v7286
        %v8706 = vunpack.c.l.b16 %v7287
        %v8707 = vunpack.c.h.b16 %v7287
        %v8708 = vunpack.c.l.b16 %v7288
        %v8709 = vunpack.c.h.b16 %v7288
        %v8710 = vunpack.c.l.b16 %v7289
        %v8711 = vunpack.c.h.b16 %v7289
        %v8712 = vunpack.c.l.b16 %v7290
        %v8713 = vunpack.c.h.b16 %v7290
        %v8714 = vunpack.c.l.b16 %v7291
        %v8715 = vunpack.c.h.b16 %v7291
        %v8716 = vunpack.c.l.b16 %v7292
        %v8717 = vunpack.c.h.b16 %v7292
        %v8718 = vunpack.c.l.b16 %v7293
        %v8719 = vunpack.c.h.b16 %v7293
        %v8720 = vunpack.c.l.b16 %v7294
        %v8721 = vunpack.c.h.b16 %v7294
        %v8722 = vunpack.c.l.b16 %v7295
        %v8723 = vunpack.c.h.b16 %v7295
        %v8724 = vunpack.c.l.b16 %v7296
        %v8725 = vunpack.c.h.b16 %v7296
        %v8726 = vunpack.c.l.b16 %v7297
        %v8727 = vunpack.c.h.b16 %v7297
        %v8728 = vunpack.c.l.b16 %v7298
        %v8729 = vunpack.c.h.b16 %v7298
        %v8730 = vunpack.c.l.b16 %v7299
        %v8731 = vunpack.c.h.b16 %v7299
        %v8732 = vunpack.c.l.b16 %v7300
        %v8733 = vunpack.c.h.b16 %v7300
        %v8734 = vunpack.c.l.b16 %v7301
        %v8735 = vunpack.c.h.b16 %v7301
        %v8736 = vunpack.c.l.b16 %v7302
        %v8737 = vunpack.c.h.b16 %v7302
        %v8738 = vunpack.c.l.b16 %v7303
        %v8739 = vunpack.c.h.b16 %v7303
        %v8740 = vunpack.c.l.b16 %v7304
        %v8741 = vunpack.c.h.b16 %v7304
        %v8742 = vunpack.c.l.b16 %v7305
        %v8743 = vunpack.c.h.b16 %v7305
        %v8744 = vunpack.c.l.b16 %v7306
        %v8745 = vunpack.c.h.b16 %v7306
        %v8746 = vunpack.c.l.b16 %v7307
        %v8747 = vunpack.c.h.b16 %v7307
        %v8748 = vunpack.c.l.b16 %v7308
        %v8749 = vunpack.c.h.b16 %v7308
        %v8750 = vunpack.c.l.b16 %v7309
        %v8751 = vunpack.c.h.b16 %v7309
        %v8752 = vunpack.c.l.b16 %v7310
        %v8753 = vunpack.c.h.b16 %v7310
        %v8754 = vunpack.c.l.b16 %v7311
        %v8755 = vunpack.c.h.b16 %v7311
        %v8756 = vunpack.c.l.b16 %v7312
        %v8757 = vunpack.c.h.b16 %v7312
        %v8758 = vunpack.c.l.b16 %v7313
        %v8759 = vunpack.c.h.b16 %v7313
        %v8760 = vunpack.c.l.b16 %v7314
        %v8761 = vunpack.c.h.b16 %v7314
        %v8762 = vunpack.c.l.b16 %v7315
        %v8763 = vunpack.c.h.b16 %v7315
        %v8764 = vunpack.c.l.b16 %v7316
        %v8765 = vunpack.c.h.b16 %v7316
        %v8766 = vunpack.c.l.b16 %v7317
        %v8767 = vunpack.c.h.b16 %v7317
        %v8768 = vunpack.c.l.b16 %v7318
        %v8769 = vunpack.c.h.b16 %v7318
        %v8770 = vunpack.c.l.b16 %v7319
        %v8771 = vunpack.c.h.b16 %v7319
        %v8772 = vunpack.c.l.b16 %v7320
        %v8773 = vunpack.c.h.b16 %v7320
        %v8774 = vunpack.c.l.b16 %v7321
        %v8775 = vunpack.c.h.b16 %v7321
        %v8776 = vunpack.c.l.b16 %v7322
        %v8777 = vunpack.c.h.b16 %v7322
        %v8778 = vunpack.c.l.b16 %v7323
        %v8779 = vunpack.c.h.b16 %v7323
        %v8780 = vunpack.c.l.b16 %v7324
        %v8781 = vunpack.c.h.b16 %v7324
        %v8782 = vunpack.c.l.b16 %v7325
        %v8783 = vunpack.c.h.b16 %v7325
        %v8784 = vunpack.c.l.b16 %v7326
        %v8785 = vunpack.c.h.b16 %v7326
        %v8786 = vunpack.c.l.b16 %v7327
        %v8787 = vunpack.c.h.b16 %v7327
        %v8788 = vunpack.c.l.b16 %v7328
        %v8789 = vunpack.c.h.b16 %v7328
        %v8790 = vunpack.c.l.b16 %v7329
        %v8791 = vunpack.c.h.b16 %v7329
        %v8792 = vunpack.c.l.b16 %v7330
        %v8793 = vunpack.c.h.b16 %v7330
        %v8794 = vunpack.c.l.b16 %v7331
        %v8795 = vunpack.c.h.b16 %v7331
        %v8796 = vunpack.c.l.b16 %v7332
        %v8797 = vunpack.c.h.b16 %v7332
        %v8798 = vunpack.c.l.b16 %v7333
        %v8799 = vunpack.c.h.b16 %v7333
        %v8800 = vunpack.c.l.b16 %v7334
        %v8801 = vunpack.c.h.b16 %v7334
        %v8802 = vunpack.c.l.b16 %v7335
        %v8803 = vunpack.c.h.b16 %v7335
        %v8804 = vunpack.c.l.b16 %v7336
        %v8805 = vunpack.c.h.b16 %v7336
        %v8806 = vunpack.c.l.b16 %v7337
        %v8807 = vunpack.c.h.b16 %v7337
        %v8808 = vunpack.c.l.b16 %v7338
        %v8809 = vunpack.c.h.b16 %v7338
        %v8810 = vunpack.c.l.b16 %v7339
        %v8811 = vunpack.c.h.b16 %v7339
        %v8812 = vunpack.c.l.b16 %v7340
        %v8813 = vunpack.c.h.b16 %v7340
        %v8814 = vunpack.c.l.b16 %v7341
        %v8815 = vunpack.c.h.b16 %v7341
        %v8816 = vunpack.c.l.b16 %v7342
        %v8817 = vunpack.c.h.b16 %v7342
        %v8818 = vunpack.c.l.b16 %v7343
        %v8819 = vunpack.c.h.b16 %v7343
        %v8820 = vunpack.c.l.b16 %v7344
        %v8821 = vunpack.c.h.b16 %v7344
        %v8822 = vunpack.c.l.b16 %v7345
        %v8823 = vunpack.c.h.b16 %v7345
        %v8824 = vunpack.c.l.b16 %v7346
        %v8825 = vunpack.c.h.b16 %v7346
        %v8826 = vunpack.c.l.b16 %v7347
        %v8827 = vunpack.c.h.b16 %v7347
        %v8828 = vunpack.c.l.b16 %v7348
        %v8829 = vunpack.c.h.b16 %v7348
        %v8830 = vunpack.c.l.b16 %v7349
        %v8831 = vunpack.c.h.b16 %v7349
        %v8832 = vunpack.c.l.b16 %v7350
        %v8833 = vunpack.c.h.b16 %v7350
        %v8834 = vunpack.c.l.b16 %v7351
        %v8835 = vunpack.c.h.b16 %v7351
        %v8836 = vunpack.c.l.b16 %v7352
        %v8837 = vunpack.c.h.b16 %v7352
        %v8838 = vunpack.c.l.b16 %v7353
        %v8839 = vunpack.c.h.b16 %v7353
        %v8840 = vunpack.c.l.b16 %v7354
        %v8841 = vunpack.c.h.b16 %v7354
        %v8842 = vunpack.c.l.b16 %v7355
        %v8843 = vunpack.c.h.b16 %v7355
        %v8844 = vunpack.c.l.b16 %v7356
        %v8845 = vunpack.c.h.b16 %v7356
        %v8846 = vunpack.c.l.b16 %v7357
        %v8847 = vunpack.c.h.b16 %v7357
        %v8848 = vunpack.c.l.b16 %v7358
        %v8849 = vunpack.c.h.b16 %v7358
        %v8850 = vunpack.c.l.b16 %v7359
        %v8851 = vunpack.c.h.b16 %v7359
        %v8852 = vunpack.c.l.b16 %v7360
        %v8853 = vunpack.c.h.b16 %v7360
        %v8854 = vunpack.c.l.b16 %v7361
        %v8855 = vunpack.c.h.b16 %v7361
        %v8856 = vunpack.c.l.b16 %v7362
        %v8857 = vunpack.c.h.b16 %v7362
        %v8858 = vunpack.c.l.b16 %v7363
        %v8859 = vunpack.c.h.b16 %v7363
        %v8860 = vunpack.c.l.b16 %v7364
        %v8861 = vunpack.c.h.b16 %v7364
        %v8862 = vunpack.c.l.b16 %v7365
        %v8863 = vunpack.c.h.b16 %v7365
        %v8864 = vunpack.c.l.b16 %v7366
        %v8865 = vunpack.c.h.b16 %v7366
        %v8866 = vunpack.c.l.b16 %v7367
        %v8867 = vunpack.c.h.b16 %v7367
        %v8868 = vunpack.c.l.b16 %v7368
        %v8869 = vunpack.c.h.b16 %v7368
        %v8870 = vunpack.c.l.b16 %v7369
        %v8871 = vunpack.c.h.b16 %v7369
        %v8872 = vunpack.c.l.b16 %v7370
        %v8873 = vunpack.c.h.b16 %v7370
        %v8874 = vunpack.c.l.b16 %v7371
        %v8875 = vunpack.c.h.b16 %v7371
        %v8876 = vunpack.c.l.b16 %v7372
        %v8877 = vunpack.c.h.b16 %v7372
        %v8878 = vunpack.c.l.b16 %v7373
        %v8879 = vunpack.c.h.b16 %v7373
        %v8880 = vunpack.c.l.b16 %v7374
        %v8881 = vunpack.c.h.b16 %v7374
        %v8882 = vunpack.c.l.b16 %v7375
        %v8883 = vunpack.c.h.b16 %v7375
        %v8884 = vunpack.c.l.b16 %v7376
        %v8885 = vunpack.c.h.b16 %v7376
        %v8886 = vunpack.c.l.b16 %v7377
        %v8887 = vunpack.c.h.b16 %v7377
        %v8888 = vunpack.c.l.b16 %v7378
        %v8889 = vunpack.c.h.b16 %v7378
        %v8890 = vunpack.c.l.b16 %v7379
        %v8891 = vunpack.c.h.b16 %v7379
        %v8892 = vunpack.c.l.b16 %v7380
        %v8893 = vunpack.c.h.b16 %v7380
        %v8894 = vunpack.c.l.b16 %v7381
        %v8895 = vunpack.c.h.b16 %v7381
        %v8896 = vunpack.c.l.b16 %v7382
        %v8897 = vunpack.c.h.b16 %v7382
        %v8898 = vunpack.c.l.b16 %v7383
        %v8899 = vunpack.c.h.b16 %v7383
        %v8900 = vunpack.c.l.b16 %v7384
        %v8901 = vunpack.c.h.b16 %v7384
        %v8902 = vunpack.c.l.b16 %v7385
        %v8903 = vunpack.c.h.b16 %v7385
        %v8904 = vunpack.c.l.b16 %v7386
        %v8905 = vunpack.c.h.b16 %v7386
        %v8906 = vunpack.c.l.b16 %v7387
        %v8907 = vunpack.c.h.b16 %v7387
        %v8908 = vunpack.c.l.b16 %v7388
        %v8909 = vunpack.c.h.b16 %v7388
        %v8910 = vunpack.c.l.b16 %v7389
        %v8911 = vunpack.c.h.b16 %v7389
        %v8912 = vunpack.c.l.b16 %v7390
        %v8913 = vunpack.c.h.b16 %v7390
        %v8914 = vunpack.c.l.b16 %v7391
        %v8915 = vunpack.c.h.b16 %v7391
        %v8916 = vunpack.c.l.b16 %v7392
        %v8917 = vunpack.c.h.b16 %v7392
        %v8918 = vunpack.c.l.b16 %v7393
        %v8919 = vunpack.c.h.b16 %v7393
        %v8920 = vunpack.c.l.b16 %v7394
        %v8921 = vunpack.c.h.b16 %v7394
        %v8922 = vunpack.c.l.b16 %v7395
        %v8923 = vunpack.c.h.b16 %v7395
        %v8924 = vunpack.c.l.b16 %v7396
        %v8925 = vunpack.c.h.b16 %v7396
        %v8926 = vunpack.c.l.b16 %v7397
        %v8927 = vunpack.c.h.b16 %v7397
        %v8928 = vunpack.c.l.b16 %v7398
        %v8929 = vunpack.c.h.b16 %v7398
        %v8930 = vunpack.c.l.b16 %v7399
        %v8931 = vunpack.c.h.b16 %v7399
        %v8932 = vunpack.c.l.b16 %v7400
        %v8933 = vunpack.c.h.b16 %v7400
        %v8934 = vunpack.c.l.b16 %v7401
        %v8935 = vunpack.c.h.b16 %v7401
        %v8936 = vunpack.c.l.b16 %v7402
        %v8937 = vunpack.c.h.b16 %v7402
        %v8938 = vunpack.c.l.b16 %v7403
        %v8939 = vunpack.c.h.b16 %v7403
        %v8940 = vunpack.c.l.b16 %v7404
        %v8941 = vunpack.c.h.b16 %v7404
        %v8942 = vunpack.c.l.b16 %v7405
        %v8943 = vunpack.c.h.b16 %v7405
        %v8944 = vunpack.c.l.b16 %v7406
        %v8945 = vunpack.c.h.b16 %v7406
        %v8946 = vunpack.c.l.b16 %v7407
        %v8947 = vunpack.c.h.b16 %v7407
        %v8948 = vunpack.c.l.b16 %v7408
        %v8949 = vunpack.c.h.b16 %v7408
        %v8950 = vunpack.c.l.b16 %v7409
        %v8951 = vunpack.c.h.b16 %v7409
        %v8952 = vunpack.c.l.b16 %v7410
        %v8953 = vunpack.c.h.b16 %v7410
        %v8954 = vunpack.c.l.b16 %v7411
        %v8955 = vunpack.c.h.b16 %v7411
        %v8956 = vunpack.c.l.b16 %v7412
        %v8957 = vunpack.c.h.b16 %v7412
        %v8958 = vunpack.c.l.b16 %v7413
        %v8959 = vunpack.c.h.b16 %v7413
        %v8960 = vunpack.c.l.b16 %v7414
        %v8961 = vunpack.c.h.b16 %v7414
        %v8962 = vunpack.c.l.b16 %v7415
        %v8963 = vunpack.c.h.b16 %v7415
        %v8964 = vunpack.c.l.b16 %v7416
        %v8965 = vunpack.c.h.b16 %v7416
        %v8966 = vunpack.c.l.b16 %v7417
        %v8967 = vunpack.c.h.b16 %v7417
        %v8968 = vunpack.c.l.b16 %v7418
        %v8969 = vunpack.c.h.b16 %v7418
        %v8970 = vunpack.c.l.b16 %v7419
        %v8971 = vunpack.c.h.b16 %v7419
        %v8972 = vunpack.c.l.b16 %v7420
        %v8973 = vunpack.c.h.b16 %v7420
        %v8974 = vunpack.c.l.b16 %v7421
        %v8975 = vunpack.c.h.b16 %v7421
        %v8976 = vunpack.c.l.b16 %v7422
        %v8977 = vunpack.c.h.b16 %v7422
        %v8978 = vunpack.c.l.b16 %v7423
        %v8979 = vunpack.c.h.b16 %v7423
        %v8980 = vunpack.c.l.b16 %v7424
        %v8981 = vunpack.c.h.b16 %v7424
        %v8982 = vunpack.c.l.b16 %v7425
        %v8983 = vunpack.c.h.b16 %v7425
        %v8984 = vpack.c.b16 %v7964, %v7960
        %v8985 = vpack.c.b16 %v7965, %v7961
        %v8986 = vpack.c.b16 %v7966, %v7962
        %v8987 = vpack.c.b16 %v7967, %v7963
        %v8988 = vpack.c.b16 %v7972, %v7968
        %v8989 = vpack.c.b16 %v7973, %v7969
        %v8990 = vpack.c.b16 %v7974, %v7970
        %v8991 = vpack.c.b16 %v7975, %v7971
        %v8992 = vpack.c.b16 %v7980, %v7976
        %v8993 = vpack.c.b16 %v7981, %v7977
        %v8994 = vpack.c.b16 %v7982, %v7978
        %v8995 = vpack.c.b16 %v7983, %v7979
        %v8996 = vpack.c.b16 %v7988, %v7984
        %v8997 = vpack.c.b16 %v7989, %v7985
        %v8998 = vpack.c.b16 %v7990, %v7986
        %v8999 = vpack.c.b16 %v7991, %v7987
        %v9000 = vpack.c.b16 %v7996, %v7992
        %v9001 = vpack.c.b16 %v7997, %v7993
        %v9002 = vpack.c.b16 %v7998, %v7994
        %v9003 = vpack.c.b16 %v7999, %v7995
        %v9004 = vpack.c.b16 %v8004, %v8000
        %v9005 = vpack.c.b16 %v8005, %v8001
        %v9006 = vpack.c.b16 %v8006, %v8002
        %v9007 = vpack.c.b16 %v8007, %v8003
        %v9008 = vpack.c.b16 %v8012, %v8008
        %v9009 = vpack.c.b16 %v8013, %v8009
        %v9010 = vpack.c.b16 %v8014, %v8010
        %v9011 = vpack.c.b16 %v8015, %v8011
        %v9012 = vpack.c.b16 %v8020, %v8016
        %v9013 = vpack.c.b16 %v8021, %v8017
        %v9014 = vpack.c.b16 %v8022, %v8018
        %v9015 = vpack.c.b16 %v8023, %v8019
        %v9016 = vpack.c.b16 %v8028, %v8024
        %v9017 = vpack.c.b16 %v8029, %v8025
        %v9018 = vpack.c.b16 %v8030, %v8026
        %v9019 = vpack.c.b16 %v8031, %v8027
        %v9020 = vpack.c.b16 %v8036, %v8032
        %v9021 = vpack.c.b16 %v8037, %v8033
        %v9022 = vpack.c.b16 %v8038, %v8034
        %v9023 = vpack.c.b16 %v8039, %v8035
        %v9024 = vpack.c.b16 %v8044, %v8040
        %v9025 = vpack.c.b16 %v8045, %v8041
        %v9026 = vpack.c.b16 %v8046, %v8042
        %v9027 = vpack.c.b16 %v8047, %v8043
        %v9028 = vpack.c.b16 %v8052, %v8048
        %v9029 = vpack.c.b16 %v8053, %v8049
        %v9030 = vpack.c.b16 %v8054, %v8050
        %v9031 = vpack.c.b16 %v8055, %v8051
        %v9032 = vpack.c.b16 %v8060, %v8056
        %v9033 = vpack.c.b16 %v8061, %v8057
        %v9034 = vpack.c.b16 %v8062, %v8058
        %v9035 = vpack.c.b16 %v8063, %v8059
        %v9036 = vpack.c.b16 %v8068, %v8064
        %v9037 = vpack.c.b16 %v8069, %v8065
        %v9038 = vpack.c.b16 %v8070, %v8066
        %v9039 = vpack.c.b16 %v8071, %v8067
        %v9040 = vpack.c.b16 %v8076, %v8072
        %v9041 = vpack.c.b16 %v8077, %v8073
        %v9042 = vpack.c.b16 %v8078, %v8074
        %v9043 = vpack.c.b16 %v8079, %v8075
        %v9044 = vpack.c.b16 %v8084, %v8080
        %v9045 = vpack.c.b16 %v8085, %v8081
        %v9046 = vpack.c.b16 %v8086, %v8082
        %v9047 = vpack.c.b16 %v8087, %v8083
        %v9048 = vpack.c.b16 %v8092, %v8088
        %v9049 = vpack.c.b16 %v8093, %v8089
        %v9050 = vpack.c.b16 %v8094, %v8090
        %v9051 = vpack.c.b16 %v8095, %v8091
        %v9052 = vpack.c.b16 %v8100, %v8096
        %v9053 = vpack.c.b16 %v8101, %v8097
        %v9054 = vpack.c.b16 %v8102, %v8098
        %v9055 = vpack.c.b16 %v8103, %v8099
        %v9056 = vpack.c.b16 %v8108, %v8104
        %v9057 = vpack.c.b16 %v8109, %v8105
        %v9058 = vpack.c.b16 %v8110, %v8106
        %v9059 = vpack.c.b16 %v8111, %v8107
        %v9060 = vpack.c.b16 %v8116, %v8112
        %v9061 = vpack.c.b16 %v8117, %v8113
        %v9062 = vpack.c.b16 %v8118, %v8114
        %v9063 = vpack.c.b16 %v8119, %v8115
        %v9064 = vpack.c.b16 %v8124, %v8120
        %v9065 = vpack.c.b16 %v8125, %v8121
        %v9066 = vpack.c.b16 %v8126, %v8122
        %v9067 = vpack.c.b16 %v8127, %v8123
        %v9068 = vpack.c.b16 %v8132, %v8128
        %v9069 = vpack.c.b16 %v8133, %v8129
        %v9070 = vpack.c.b16 %v8134, %v8130
        %v9071 = vpack.c.b16 %v8135, %v8131
        %v9072 = vpack.c.b16 %v8140, %v8136
        %v9073 = vpack.c.b16 %v8141, %v8137
        %v9074 = vpack.c.b16 %v8142, %v8138
        %v9075 = vpack.c.b16 %v8143, %v8139
        %v9076 = vpack.c.b16 %v8148, %v8144
        %v9077 = vpack.c.b16 %v8149, %v8145
        %v9078 = vpack.c.b16 %v8150, %v8146
        %v9079 = vpack.c.b16 %v8151, %v8147
        %v9080 = vpack.c.b16 %v8156, %v8152
        %v9081 = vpack.c.b16 %v8157, %v8153
        %v9082 = vpack.c.b16 %v8158, %v8154
        %v9083 = vpack.c.b16 %v8159, %v8155
        %v9084 = vpack.c.b16 %v8164, %v8160
        %v9085 = vpack.c.b16 %v8165, %v8161
        %v9086 = vpack.c.b16 %v8166, %v8162
        %v9087 = vpack.c.b16 %v8167, %v8163
        %v9088 = vpack.c.b16 %v8172, %v8168
        %v9089 = vpack.c.b16 %v8173, %v8169
        %v9090 = vpack.c.b16 %v8174, %v8170
        %v9091 = vpack.c.b16 %v8175, %v8171
        %v9092 = vpack.c.b16 %v8180, %v8176
        %v9093 = vpack.c.b16 %v8181, %v8177
        %v9094 = vpack.c.b16 %v8182, %v8178
        %v9095 = vpack.c.b16 %v8183, %v8179
        %v9096 = vpack.c.b16 %v8188, %v8184
        %v9097 = vpack.c.b16 %v8189, %v8185
        %v9098 = vpack.c.b16 %v8190, %v8186
        %v9099 = vpack.c.b16 %v8191, %v8187
        %v9100 = vpack.c.b16 %v8196, %v8192
        %v9101 = vpack.c.b16 %v8197, %v8193
        %v9102 = vpack.c.b16 %v8198, %v8194
        %v9103 = vpack.c.b16 %v8199, %v8195
        %v9104 = vpack.c.b16 %v8204, %v8200
        %v9105 = vpack.c.b16 %v8205, %v8201
        %v9106 = vpack.c.b16 %v8206, %v8202
        %v9107 = vpack.c.b16 %v8207, %v8203
        %v9108 = vpack.c.b16 %v8212, %v8208
        %v9109 = vpack.c.b16 %v8213, %v8209
        %v9110 = vpack.c.b16 %v8214, %v8210
        %v9111 = vpack.c.b16 %v8215, %v8211
        %v9112 = vpack.c.b16 %v8220, %v8216
        %v9113 = vpack.c.b16 %v8221, %v8217
        %v9114 = vpack.c.b16 %v8222, %v8218
        %v9115 = vpack.c.b16 %v8223, %v8219
        %v9116 = vpack.c.b16 %v8228, %v8224
        %v9117 = vpack.c.b16 %v8229, %v8225
        %v9118 = vpack.c.b16 %v8230, %v8226
        %v9119 = vpack.c.b16 %v8231, %v8227
        %v9120 = vpack.c.b16 %v8236, %v8232
        %v9121 = vpack.c.b16 %v8237, %v8233
        %v9122 = vpack.c.b16 %v8238, %v8234
        %v9123 = vpack.c.b16 %v8239, %v8235
        %v9124 = vpack.c.b16 %v8244, %v8240
        %v9125 = vpack.c.b16 %v8245, %v8241
        %v9126 = vpack.c.b16 %v8246, %v8242
        %v9127 = vpack.c.b16 %v8247, %v8243
        %v9128 = vpack.c.b16 %v8252, %v8248
        %v9129 = vpack.c.b16 %v8253, %v8249
        %v9130 = vpack.c.b16 %v8254, %v8250
        %v9131 = vpack.c.b16 %v8255, %v8251
        %v9132 = vpack.c.b16 %v8260, %v8256
        %v9133 = vpack.c.b16 %v8261, %v8257
        %v9134 = vpack.c.b16 %v8262, %v8258
        %v9135 = vpack.c.b16 %v8263, %v8259
        %v9136 = vpack.c.b16 %v8268, %v8264
        %v9137 = vpack.c.b16 %v8269, %v8265
        %v9138 = vpack.c.b16 %v8270, %v8266
        %v9139 = vpack.c.b16 %v8271, %v8267
        %v9140 = vpack.c.b16 %v8276, %v8272
        %v9141 = vpack.c.b16 %v8277, %v8273
        %v9142 = vpack.c.b16 %v8278, %v8274
        %v9143 = vpack.c.b16 %v8279, %v8275
        %v9144 = vpack.c.b16 %v8284, %v8280
        %v9145 = vpack.c.b16 %v8285, %v8281
        %v9146 = vpack.c.b16 %v8286, %v8282
        %v9147 = vpack.c.b16 %v8287, %v8283
        %v9148 = vpack.c.b16 %v8292, %v8288
        %v9149 = vpack.c.b16 %v8293, %v8289
        %v9150 = vpack.c.b16 %v8294, %v8290
        %v9151 = vpack.c.b16 %v8295, %v8291
        %v9152 = vpack.c.b16 %v8300, %v8296
        %v9153 = vpack.c.b16 %v8301, %v8297
        %v9154 = vpack.c.b16 %v8302, %v8298
        %v9155 = vpack.c.b16 %v8303, %v8299
        %v9156 = vpack.c.b16 %v8308, %v8304
        %v9157 = vpack.c.b16 %v8309, %v8305
        %v9158 = vpack.c.b16 %v8310, %v8306
        %v9159 = vpack.c.b16 %v8311, %v8307
        %v9160 = vpack.c.b16 %v8316, %v8312
        %v9161 = vpack.c.b16 %v8317, %v8313
        %v9162 = vpack.c.b16 %v8318, %v8314
        %v9163 = vpack.c.b16 %v8319, %v8315
        %v9164 = vpack.c.b16 %v8324, %v8320
        %v9165 = vpack.c.b16 %v8325, %v8321
        %v9166 = vpack.c.b16 %v8326, %v8322
        %v9167 = vpack.c.b16 %v8327, %v8323
        %v9168 = vpack.c.b16 %v8332, %v8328
        %v9169 = vpack.c.b16 %v8333, %v8329
        %v9170 = vpack.c.b16 %v8334, %v8330
        %v9171 = vpack.c.b16 %v8335, %v8331
        %v9172 = vpack.c.b16 %v8340, %v8336
        %v9173 = vpack.c.b16 %v8341, %v8337
        %v9174 = vpack.c.b16 %v8342, %v8338
        %v9175 = vpack.c.b16 %v8343, %v8339
        %v9176 = vpack.c.b16 %v8348, %v8344
        %v9177 = vpack.c.b16 %v8349, %v8345
        %v9178 = vpack.c.b16 %v8350, %v8346
        %v9179 = vpack.c.b16 %v8351, %v8347
        %v9180 = vpack.c.b16 %v8356, %v8352
        %v9181 = vpack.c.b16 %v8357, %v8353
        %v9182 = vpack.c.b16 %v8358, %v8354
        %v9183 = vpack.c.b16 %v8359, %v8355
        %v9184 = vpack.c.b16 %v8364, %v8360
        %v9185 = vpack.c.b16 %v8365, %v8361
        %v9186 = vpack.c.b16 %v8366, %v8362
        %v9187 = vpack.c.b16 %v8367, %v8363
        %v9188 = vpack.c.b16 %v8372, %v8368
        %v9189 = vpack.c.b16 %v8373, %v8369
        %v9190 = vpack.c.b16 %v8374, %v8370
        %v9191 = vpack.c.b16 %v8375, %v8371
        %v9192 = vpack.c.b16 %v8380, %v8376
        %v9193 = vpack.c.b16 %v8381, %v8377
        %v9194 = vpack.c.b16 %v8382, %v8378
        %v9195 = vpack.c.b16 %v8383, %v8379
        %v9196 = vpack.c.b16 %v8388, %v8384
        %v9197 = vpack.c.b16 %v8389, %v8385
        %v9198 = vpack.c.b16 %v8390, %v8386
        %v9199 = vpack.c.b16 %v8391, %v8387
        %v9200 = vpack.c.b16 %v8396, %v8392
        %v9201 = vpack.c.b16 %v8397, %v8393
        %v9202 = vpack.c.b16 %v8398, %v8394
        %v9203 = vpack.c.b16 %v8399, %v8395
        %v9204 = vpack.c.b16 %v8404, %v8400
        %v9205 = vpack.c.b16 %v8405, %v8401
        %v9206 = vpack.c.b16 %v8406, %v8402
        %v9207 = vpack.c.b16 %v8407, %v8403
        %v9208 = vpack.c.b16 %v8412, %v8408
        %v9209 = vpack.c.b16 %v8413, %v8409
        %v9210 = vpack.c.b16 %v8414, %v8410
        %v9211 = vpack.c.b16 %v8415, %v8411
        %v9212 = vpack.c.b16 %v8420, %v8416
        %v9213 = vpack.c.b16 %v8421, %v8417
        %v9214 = vpack.c.b16 %v8422, %v8418
        %v9215 = vpack.c.b16 %v8423, %v8419
        %v9216 = vpack.c.b16 %v8428, %v8424
        %v9217 = vpack.c.b16 %v8429, %v8425
        %v9218 = vpack.c.b16 %v8430, %v8426
        %v9219 = vpack.c.b16 %v8431, %v8427
        %v9220 = vpack.c.b16 %v8436, %v8432
        %v9221 = vpack.c.b16 %v8437, %v8433
        %v9222 = vpack.c.b16 %v8438, %v8434
        %v9223 = vpack.c.b16 %v8439, %v8435
        %v9224 = vpack.c.b16 %v8444, %v8440
        %v9225 = vpack.c.b16 %v8445, %v8441
        %v9226 = vpack.c.b16 %v8446, %v8442
        %v9227 = vpack.c.b16 %v8447, %v8443
        %v9228 = vpack.c.b16 %v8452, %v8448
        %v9229 = vpack.c.b16 %v8453, %v8449
        %v9230 = vpack.c.b16 %v8454, %v8450
        %v9231 = vpack.c.b16 %v8455, %v8451
        %v9232 = vpack.c.b16 %v8460, %v8456
        %v9233 = vpack.c.b16 %v8461, %v8457
        %v9234 = vpack.c.b16 %v8462, %v8458
        %v9235 = vpack.c.b16 %v8463, %v8459
        %v9236 = vpack.c.b16 %v8468, %v8464
        %v9237 = vpack.c.b16 %v8469, %v8465
        %v9238 = vpack.c.b16 %v8470, %v8466
        %v9239 = vpack.c.b16 %v8471, %v8467
        %v9240 = vpack.c.b16 %v8476, %v8472
        %v9241 = vpack.c.b16 %v8477, %v8473
        %v9242 = vpack.c.b16 %v8478, %v8474
        %v9243 = vpack.c.b16 %v8479, %v8475
        %v9244 = vpack.c.b16 %v8484, %v8480
        %v9245 = vpack.c.b16 %v8485, %v8481
        %v9246 = vpack.c.b16 %v8486, %v8482
        %v9247 = vpack.c.b16 %v8487, %v8483
        %v9248 = vpack.c.b16 %v8492, %v8488
        %v9249 = vpack.c.b16 %v8493, %v8489
        %v9250 = vpack.c.b16 %v8494, %v8490
        %v9251 = vpack.c.b16 %v8495, %v8491
        %v9252 = vpack.c.b16 %v8500, %v8496
        %v9253 = vpack.c.b16 %v8501, %v8497
        %v9254 = vpack.c.b16 %v8502, %v8498
        %v9255 = vpack.c.b16 %v8503, %v8499
        %v9256 = vpack.c.b16 %v8508, %v8504
        %v9257 = vpack.c.b16 %v8509, %v8505
        %v9258 = vpack.c.b16 %v8510, %v8506
        %v9259 = vpack.c.b16 %v8511, %v8507
        %v9260 = vpack.c.b16 %v8516, %v8512
        %v9261 = vpack.c.b16 %v8517, %v8513
        %v9262 = vpack.c.b16 %v8518, %v8514
        %v9263 = vpack.c.b16 %v8519, %v8515
        %v9264 = vpack.c.b16 %v8524, %v8520
        %v9265 = vpack.c.b16 %v8525, %v8521
        %v9266 = vpack.c.b16 %v8526, %v8522
        %v9267 = vpack.c.b16 %v8527, %v8523
        %v9268 = vpack.c.b16 %v8532, %v8528
        %v9269 = vpack.c.b16 %v8533, %v8529
        %v9270 = vpack.c.b16 %v8534, %v8530
        %v9271 = vpack.c.b16 %v8535, %v8531
        %v9272 = vpack.c.b16 %v8540, %v8536
        %v9273 = vpack.c.b16 %v8541, %v8537
        %v9274 = vpack.c.b16 %v8542, %v8538
        %v9275 = vpack.c.b16 %v8543, %v8539
        %v9276 = vpack.c.b16 %v8548, %v8544
        %v9277 = vpack.c.b16 %v8549, %v8545
        %v9278 = vpack.c.b16 %v8550, %v8546
        %v9279 = vpack.c.b16 %v8551, %v8547
        %v9280 = vpack.c.b16 %v8556, %v8552
        %v9281 = vpack.c.b16 %v8557, %v8553
        %v9282 = vpack.c.b16 %v8558, %v8554
        %v9283 = vpack.c.b16 %v8559, %v8555
        %v9284 = vpack.c.b16 %v8564, %v8560
        %v9285 = vpack.c.b16 %v8565, %v8561
        %v9286 = vpack.c.b16 %v8566, %v8562
        %v9287 = vpack.c.b16 %v8567, %v8563
        %v9288 = vpack.c.b16 %v8572, %v8568
        %v9289 = vpack.c.b16 %v8573, %v8569
        %v9290 = vpack.c.b16 %v8574, %v8570
        %v9291 = vpack.c.b16 %v8575, %v8571
        %v9292 = vpack.c.b16 %v8580, %v8576
        %v9293 = vpack.c.b16 %v8581, %v8577
        %v9294 = vpack.c.b16 %v8582, %v8578
        %v9295 = vpack.c.b16 %v8583, %v8579
        %v9296 = vpack.c.b16 %v8588, %v8584
        %v9297 = vpack.c.b16 %v8589, %v8585
        %v9298 = vpack.c.b16 %v8590, %v8586
        %v9299 = vpack.c.b16 %v8591, %v8587
        %v9300 = vpack.c.b16 %v8596, %v8592
        %v9301 = vpack.c.b16 %v8597, %v8593
        %v9302 = vpack.c.b16 %v8598, %v8594
        %v9303 = vpack.c.b16 %v8599, %v8595
        %v9304 = vpack.c.b16 %v8604, %v8600
        %v9305 = vpack.c.b16 %v8605, %v8601
        %v9306 = vpack.c.b16 %v8606, %v8602
        %v9307 = vpack.c.b16 %v8607, %v8603
        %v9308 = vpack.c.b16 %v8612, %v8608
        %v9309 = vpack.c.b16 %v8613, %v8609
        %v9310 = vpack.c.b16 %v8614, %v8610
        %v9311 = vpack.c.b16 %v8615, %v8611
        %v9312 = vpack.c.b16 %v8620, %v8616
        %v9313 = vpack.c.b16 %v8621, %v8617
        %v9314 = vpack.c.b16 %v8622, %v8618
        %v9315 = vpack.c.b16 %v8623, %v8619
        %v9316 = vpack.c.b16 %v8628, %v8624
        %v9317 = vpack.c.b16 %v8629, %v8625
        %v9318 = vpack.c.b16 %v8630, %v8626
        %v9319 = vpack.c.b16 %v8631, %v8627
        %v9320 = vpack.c.b16 %v8636, %v8632
        %v9321 = vpack.c.b16 %v8637, %v8633
        %v9322 = vpack.c.b16 %v8638, %v8634
        %v9323 = vpack.c.b16 %v8639, %v8635
        %v9324 = vpack.c.b16 %v8644, %v8640
        %v9325 = vpack.c.b16 %v8645, %v8641
        %v9326 = vpack.c.b16 %v8646, %v8642
        %v9327 = vpack.c.b16 %v8647, %v8643
        %v9328 = vpack.c.b16 %v8652, %v8648
        %v9329 = vpack.c.b16 %v8653, %v8649
        %v9330 = vpack.c.b16 %v8654, %v8650
        %v9331 = vpack.c.b16 %v8655, %v8651
        %v9332 = vpack.c.b16 %v8660, %v8656
        %v9333 = vpack.c.b16 %v8661, %v8657
        %v9334 = vpack.c.b16 %v8662, %v8658
        %v9335 = vpack.c.b16 %v8663, %v8659
        %v9336 = vpack.c.b16 %v8668, %v8664
        %v9337 = vpack.c.b16 %v8669, %v8665
        %v9338 = vpack.c.b16 %v8670, %v8666
        %v9339 = vpack.c.b16 %v8671, %v8667
        %v9340 = vpack.c.b16 %v8676, %v8672
        %v9341 = vpack.c.b16 %v8677, %v8673
        %v9342 = vpack.c.b16 %v8678, %v8674
        %v9343 = vpack.c.b16 %v8679, %v8675
        %v9344 = vpack.c.b16 %v8684, %v8680
        %v9345 = vpack.c.b16 %v8685, %v8681
        %v9346 = vpack.c.b16 %v8686, %v8682
        %v9347 = vpack.c.b16 %v8687, %v8683
        %v9348 = vpack.c.b16 %v8692, %v8688
        %v9349 = vpack.c.b16 %v8693, %v8689
        %v9350 = vpack.c.b16 %v8694, %v8690
        %v9351 = vpack.c.b16 %v8695, %v8691
        %v9352 = vpack.c.b16 %v8700, %v8696
        %v9353 = vpack.c.b16 %v8701, %v8697
        %v9354 = vpack.c.b16 %v8702, %v8698
        %v9355 = vpack.c.b16 %v8703, %v8699
        %v9356 = vpack.c.b16 %v8708, %v8704
        %v9357 = vpack.c.b16 %v8709, %v8705
        %v9358 = vpack.c.b16 %v8710, %v8706
        %v9359 = vpack.c.b16 %v8711, %v8707
        %v9360 = vpack.c.b16 %v8716, %v8712
        %v9361 = vpack.c.b16 %v8717, %v8713
        %v9362 = vpack.c.b16 %v8718, %v8714
        %v9363 = vpack.c.b16 %v8719, %v8715
        %v9364 = vpack.c.b16 %v8724, %v8720
        %v9365 = vpack.c.b16 %v8725, %v8721
        %v9366 = vpack.c.b16 %v8726, %v8722
        %v9367 = vpack.c.b16 %v8727, %v8723
        %v9368 = vpack.c.b16 %v8732, %v8728
        %v9369 = vpack.c.b16 %v8733, %v8729
        %v9370 = vpack.c.b16 %v8734, %v8730
        %v9371 = vpack.c.b16 %v8735, %v8731
        %v9372 = vpack.c.b16 %v8740, %v8736
        %v9373 = vpack.c.b16 %v8741, %v8737
        %v9374 = vpack.c.b16 %v8742, %v8738
        %v9375 = vpack.c.b16 %v8743, %v8739
        %v9376 = vpack.c.b16 %v8748, %v8744
        %v9377 = vpack.c.b16 %v8749, %v8745
        %v9378 = vpack.c.b16 %v8750, %v8746
        %v9379 = vpack.c.b16 %v8751, %v8747
        %v9380 = vpack.c.b16 %v8756, %v8752
        %v9381 = vpack.c.b16 %v8757, %v8753
        %v9382 = vpack.c.b16 %v8758, %v8754
        %v9383 = vpack.c.b16 %v8759, %v8755
        %v9384 = vpack.c.b16 %v8764, %v8760
        %v9385 = vpack.c.b16 %v8765, %v8761
        %v9386 = vpack.c.b16 %v8766, %v8762
        %v9387 = vpack.c.b16 %v8767, %v8763
        %v9388 = vpack.c.b16 %v8772, %v8768
        %v9389 = vpack.c.b16 %v8773, %v8769
        %v9390 = vpack.c.b16 %v8774, %v8770
        %v9391 = vpack.c.b16 %v8775, %v8771
        %v9392 = vpack.c.b16 %v8780, %v8776
        %v9393 = vpack.c.b16 %v8781, %v8777
        %v9394 = vpack.c.b16 %v8782, %v8778
        %v9395 = vpack.c.b16 %v8783, %v8779
        %v9396 = vpack.c.b16 %v8788, %v8784
        %v9397 = vpack.c.b16 %v8789, %v8785
        %v9398 = vpack.c.b16 %v8790, %v8786
        %v9399 = vpack.c.b16 %v8791, %v8787
        %v9400 = vpack.c.b16 %v8796, %v8792
        %v9401 = vpack.c.b16 %v8797, %v8793
        %v9402 = vpack.c.b16 %v8798, %v8794
        %v9403 = vpack.c.b16 %v8799, %v8795
        %v9404 = vpack.c.b16 %v8804, %v8800
        %v9405 = vpack.c.b16 %v8805, %v8801
        %v9406 = vpack.c.b16 %v8806, %v8802
        %v9407 = vpack.c.b16 %v8807, %v8803
        %v9408 = vpack.c.b16 %v8812, %v8808
        %v9409 = vpack.c.b16 %v8813, %v8809
        %v9410 = vpack.c.b16 %v8814, %v8810
        %v9411 = vpack.c.b16 %v8815, %v8811
        %v9412 = vpack.c.b16 %v8820, %v8816
        %v9413 = vpack.c.b16 %v8821, %v8817
        %v9414 = vpack.c.b16 %v8822, %v8818
        %v9415 = vpack.c.b16 %v8823, %v8819
        %v9416 = vpack.c.b16 %v8828, %v8824
        %v9417 = vpack.c.b16 %v8829, %v8825
        %v9418 = vpack.c.b16 %v8830, %v8826
        %v9419 = vpack.c.b16 %v8831, %v8827
        %v9420 = vpack.c.b16 %v8836, %v8832
        %v9421 = vpack.c.b16 %v8837, %v8833
        %v9422 = vpack.c.b16 %v8838, %v8834
        %v9423 = vpack.c.b16 %v8839, %v8835
        %v9424 = vpack.c.b16 %v8844, %v8840
        %v9425 = vpack.c.b16 %v8845, %v8841
        %v9426 = vpack.c.b16 %v8846, %v8842
        %v9427 = vpack.c.b16 %v8847, %v8843
        %v9428 = vpack.c.b16 %v8852, %v8848
        %v9429 = vpack.c.b16 %v8853, %v8849
        %v9430 = vpack.c.b16 %v8854, %v8850
        %v9431 = vpack.c.b16 %v8855, %v8851
        %v9432 = vpack.c.b16 %v8860, %v8856
        %v9433 = vpack.c.b16 %v8861, %v8857
        %v9434 = vpack.c.b16 %v8862, %v8858
        %v9435 = vpack.c.b16 %v8863, %v8859
        %v9436 = vpack.c.b16 %v8868, %v8864
        %v9437 = vpack.c.b16 %v8869, %v8865
        %v9438 = vpack.c.b16 %v8870, %v8866
        %v9439 = vpack.c.b16 %v8871, %v8867
        %v9440 = vpack.c.b16 %v8876, %v8872
        %v9441 = vpack.c.b16 %v8877, %v8873
        %v9442 = vpack.c.b16 %v8878, %v8874
        %v9443 = vpack.c.b16 %v8879, %v8875
        %v9444 = vpack.c.b16 %v8884, %v8880
        %v9445 = vpack.c.b16 %v8885, %v8881
        %v9446 = vpack.c.b16 %v8886, %v8882
        %v9447 = vpack.c.b16 %v8887, %v8883
        %v9448 = vpack.c.b16 %v8892, %v8888
        %v9449 = vpack.c.b16 %v8893, %v8889
        %v9450 = vpack.c.b16 %v8894, %v8890
        %v9451 = vpack.c.b16 %v8895, %v8891
        %v9452 = vpack.c.b16 %v8900, %v8896
        %v9453 = vpack.c.b16 %v8901, %v8897
        %v9454 = vpack.c.b16 %v8902, %v8898
        %v9455 = vpack.c.b16 %v8903, %v8899
        %v9456 = vpack.c.b16 %v8908, %v8904
        %v9457 = vpack.c.b16 %v8909, %v8905
        %v9458 = vpack.c.b16 %v8910, %v8906
        %v9459 = vpack.c.b16 %v8911, %v8907
        %v9460 = vpack.c.b16 %v8916, %v8912
        %v9461 = vpack.c.b16 %v8917, %v8913
        %v9462 = vpack.c.b16 %v8918, %v8914
        %v9463 = vpack.c.b16 %v8919, %v8915
        %v9464 = vpack.c.b16 %v8924, %v8920
        %v9465 = vpack.c.b16 %v8925, %v8921
        %v9466 = vpack.c.b16 %v8926, %v8922
        %v9467 = vpack.c.b16 %v8927, %v8923
        %v9468 = vpack.c.b16 %v8932, %v8928
        %v9469 = vpack.c.b16 %v8933, %v8929
        %v9470 = vpack.c.b16 %v8934, %v8930
        %v9471 = vpack.c.b16 %v8935, %v8931
        %v9472 = vpack.c.b16 %v8940, %v8936
        %v9473 = vpack.c.b16 %v8941, %v8937
        %v9474 = vpack.c.b16 %v8942, %v8938
        %v9475 = vpack.c.b16 %v8943, %v8939
        %v9476 = vpack.c.b16 %v8948, %v8944
        %v9477 = vpack.c.b16 %v8949, %v8945
        %v9478 = vpack.c.b16 %v8950, %v8946
        %v9479 = vpack.c.b16 %v8951, %v8947
        %v9480 = vpack.c.b16 %v8956, %v8952
        %v9481 = vpack.c.b16 %v8957, %v8953
        %v9482 = vpack.c.b16 %v8958, %v8954
        %v9483 = vpack.c.b16 %v8959, %v8955
        %v9484 = vpack.c.b16 %v8964, %v8960
        %v9485 = vpack.c.b16 %v8965, %v8961
        %v9486 = vpack.c.b16 %v8966, %v8962
        %v9487 = vpack.c.b16 %v8967, %v8963
        %v9488 = vpack.c.b16 %v8972, %v8968
        %v9489 = vpack.c.b16 %v8973, %v8969
        %v9490 = vpack.c.b16 %v8974, %v8970
        %v9491 = vpack.c.b16 %v8975, %v8971
        %v9492 = vpack.c.b16 %v8980, %v8976
        %v9493 = vpack.c.b16 %v8981, %v8977
        %v9494 = vpack.c.b16 %v8982, %v8978
        %v9495 = vpack.c.b16 %v8983, %v8979
        %10008 = vmatprep.subr.bf16.mxu0 %v8985
        %10009 = vmatpush1.bf16.msra.mxu0 %v8984
        %10010 = vmatprep.subr.bf16.mxu0 %v8989
        %10011 = vmatpush1.bf16.msra.mxu0 %v8988
        %10012 = vmatprep.subr.bf16.mxu0 %v8993
        %10013 = vmatpush1.bf16.msra.mxu0 %v8992
        %10014 = vmatprep.subr.bf16.mxu0 %v8997
        %10015 = vmatpush1.bf16.msra.mxu0 %v8996
        %10016 = vmatprep.subr.bf16.mxu0 %v9001
        %10017 = vmatpush1.bf16.msra.mxu0 %v9000
        %10018 = vmatprep.subr.bf16.mxu0 %v9005
        %10019 = vmatpush1.bf16.msra.mxu0 %v9004
        %10020 = vmatprep.subr.bf16.mxu0 %v9009
        %10021 = vmatpush1.bf16.msra.mxu0 %v9008
        %10022 = vmatprep.subr.bf16.mxu0 %v9013
        %10023 = vmatpush1.bf16.msra.mxu0 %v9012
        %10024 = vmatprep.subr.bf16.mxu0 %v9017
        %10025 = vmatpush1.bf16.msra.mxu0 %v9016
        %10026 = vmatprep.subr.bf16.mxu0 %v9021
        %10027 = vmatpush1.bf16.msra.mxu0 %v9020
        %10028 = vmatprep.subr.bf16.mxu0 %v9025
        %10029 = vmatpush1.bf16.msra.mxu0 %v9024
        %10030 = vmatprep.subr.bf16.mxu0 %v9029
        %10031 = vmatpush1.bf16.msra.mxu0 %v9028
        %10032 = vmatprep.subr.bf16.mxu0 %v9033
        %10033 = vmatpush1.bf16.msra.mxu0 %v9032
        %10034 = vmatprep.subr.bf16.mxu0 %v9037
        %10035 = vmatpush1.bf16.msra.mxu0 %v9036
        %10036 = vmatprep.subr.bf16.mxu0 %v9041
        %10037 = vmatpush1.bf16.msra.mxu0 %v9040
        %10038 = vmatprep.subr.bf16.mxu0 %v9045
        %10039 = vmatpush1.bf16.msra.mxu0 %v9044
        %10040 = vmatprep.mubr.bf16.mxu0 %v6899
        %10041 = vmatmul.mubr.bf16.gmra.mrb[0].mxu0 %v6898
        %v10042 = vpop.f32.mrb[0].mxu0
        %v10043 = vadd.f32 %v7431, %v10042
        %v10044 = vpop.f32.mrb[0].mxu0
        %v10045 = vadd.f32 %v7435, %v10044
        %v10046 = vpop.f32.mrb[0].mxu0
        %v10047 = vadd.f32 %v7431, %v10046
        %v10048 = vpop.f32.mrb[0].mxu0
        %v10049 = vadd.f32 %v7435, %v10048
        %10050 = vdwg.mxu0
        %10051 = vmatprep.subr.bf16.mxu0 %v9049
        %10052 = vmatpush1.bf16.msra.mxu0 %v9048
        %10053 = vmatprep.subr.bf16.mxu0 %v9053
        %10054 = vmatpush1.bf16.msra.mxu0 %v9052
        %10055 = vmatprep.subr.bf16.mxu0 %v9057
        %10056 = vmatpush1.bf16.msra.mxu0 %v9056
        %10057 = vmatprep.subr.bf16.mxu0 %v9061
        %10058 = vmatpush1.bf16.msra.mxu0 %v9060
        %10059 = vmatprep.subr.bf16.mxu0 %v9065
        %10060 = vmatpush1.bf16.msra.mxu0 %v9064
        %10061 = vmatprep.subr.bf16.mxu0 %v9069
        %10062 = vmatpush1.bf16.msra.mxu0 %v9068
        %10063 = vmatprep.subr.bf16.mxu0 %v9073
        %10064 = vmatpush1.bf16.msra.mxu0 %v9072
        %10065 = vmatprep.subr.bf16.mxu0 %v9077
        %10066 = vmatpush1.bf16.msra.mxu0 %v9076
        %10067 = vmatprep.subr.bf16.mxu0 %v9081
        %10068 = vmatpush1.bf16.msra.mxu0 %v9080
        %10069 = vmatprep.subr.bf16.mxu0 %v9085
        %10070 = vmatpush1.bf16.msra.mxu0 %v9084
        %10071 = vmatprep.subr.bf16.mxu0 %v9089
        %10072 = vmatpush1.bf16.msra.mxu0 %v9088
        %10073 = vmatprep.subr.bf16.mxu0 %v9093
        %10074 = vmatpush1.bf16.msra.mxu0 %v9092
        %10075 = vmatprep.subr.bf16.mxu0 %v9097
        %10076 = vmatpush1.bf16.msra.mxu0 %v9096
        %10077 = vmatprep.subr.bf16.mxu0 %v9101
        %10078 = vmatpush1.bf16.msra.mxu0 %v9100
        %10079 = vmatprep.subr.bf16.mxu0 %v9105
        %10080 = vmatpush1.bf16.msra.mxu0 %v9104
        %10081 = vmatprep.subr.bf16.mxu0 %v9109
        %10082 = vmatpush1.bf16.msra.mxu0 %v9108
        %10083 = vmatprep.mubr.bf16.mxu0 %v6901
        %10084 = vmatmul.mubr.bf16.gmra.mrb[0].mxu0 %v6900
        %v10085 = vpop.f32.mrb[0].mxu0
        %v10086 = vadd.f32 %v10043, %v10085
        %v10087 = vpop.f32.mrb[0].mxu0
        %v10088 = vadd.f32 %v10045, %v10087
        %v10089 = vpop.f32.mrb[0].mxu0
        %v10090 = vadd.f32 %v10047, %v10089
        %v10091 = vpop.f32.mrb[0].mxu0
        %v10092 = vadd.f32 %v10049, %v10091
        %10093 = vdwg.mxu0
        %10094 = vmatprep.subr.bf16.mxu0 %v9113
        %10095 = vmatpush1.bf16.msra.mxu0 %v9112
        %10096 = vmatprep.subr.bf16.mxu0 %v9117
        %10097 = vmatpush1.bf16.msra.mxu0 %v9116
        %10098 = vmatprep.subr.bf16.mxu0 %v9121
        %10099 = vmatpush1.bf16.msra.mxu0 %v9120
        %10100 = vmatprep.subr.bf16.mxu0 %v9125
        %10101 = vmatpush1.bf16.msra.mxu0 %v9124
        %10102 = vmatprep.subr.bf16.mxu0 %v9129
        %10103 = vmatpush1.bf16.msra.mxu0 %v9128
        %10104 = vmatprep.subr.bf16.mxu0 %v9133
        %10105 = vmatpush1.bf16.msra.mxu0 %v9132
        %10106 = vmatprep.subr.bf16.mxu0 %v9137
        %10107 = vmatpush1.bf16.msra.mxu0 %v9136
        %10108 = vmatprep.subr.bf16.mxu0 %v9141
        %10109 = vmatpush1.bf16.msra.mxu0 %v9140
        %10110 = vmatprep.subr.bf16.mxu0 %v9145
        %10111 = vmatpush1.bf16.msra.mxu0 %v9144
        %10112 = vmatprep.subr.bf16.mxu0 %v9149
        %10113 = vmatpush1.bf16.msra.mxu0 %v9148
        %10114 = vmatprep.subr.bf16.mxu0 %v9153
        %10115 = vmatpush1.bf16.msra.mxu0 %v9152
        %10116 = vmatprep.subr.bf16.mxu0 %v9157
        %10117 = vmatpush1.bf16.msra.mxu0 %v9156
        %10118 = vmatprep.subr.bf16.mxu0 %v9161
        %10119 = vmatpush1.bf16.msra.mxu0 %v9160
        %10120 = vmatprep.subr.bf16.mxu0 %v9165
        %10121 = vmatpush1.bf16.msra.mxu0 %v9164
        %10122 = vmatprep.subr.bf16.mxu0 %v9169
        %10123 = vmatpush1.bf16.msra.mxu0 %v9168
        %10124 = vmatprep.subr.bf16.mxu0 %v9173
        %10125 = vmatpush1.bf16.msra.mxu0 %v9172
        %10126 = vmatprep.mubr.bf16.mxu0 %v6903
        %10127 = vmatmul.mubr.bf16.gmra.mrb[0].mxu0 %v6902
        %v10128 = vpop.f32.mrb[0].mxu0
        %v10129 = vadd.f32 %v10086, %v10128
        %v10130 = vpop.f32.mrb[0].mxu0
        %v10131 = vadd.f32 %v10088, %v10130
        %v10132 = vpop.f32.mrb[0].mxu0
        %v10133 = vadd.f32 %v10090, %v10132
        %v10134 = vpop.f32.mrb[0].mxu0
        %v10135 = vadd.f32 %v10092, %v10134
        %10136 = vdwg.mxu0
        %10137 = vmatprep.subr.bf16.mxu0 %v9177
        %10138 = vmatpush1.bf16.msra.mxu0 %v9176
        %10139 = vmatprep.subr.bf16.mxu0 %v9181
        %10140 = vmatpush1.bf16.msra.mxu0 %v9180
        %10141 = vmatprep.subr.bf16.mxu0 %v9185
        %10142 = vmatpush1.bf16.msra.mxu0 %v9184
        %10143 = vmatprep.subr.bf16.mxu0 %v9189
        %10144 = vmatpush1.bf16.msra.mxu0 %v9188
        %10145 = vmatprep.subr.bf16.mxu0 %v9193
        %10146 = vmatpush1.bf16.msra.mxu0 %v9192
        %10147 = vmatprep.subr.bf16.mxu0 %v9197
        %10148 = vmatpush1.bf16.msra.mxu0 %v9196
        %10149 = vmatprep.subr.bf16.mxu0 %v9201
        %10150 = vmatpush1.bf16.msra.mxu0 %v9200
        %10151 = vmatprep.subr.bf16.mxu0 %v9205
        %10152 = vmatpush1.bf16.msra.mxu0 %v9204
        %10153 = vmatprep.subr.bf16.mxu0 %v9209
        %10154 = vmatpush1.bf16.msra.mxu0 %v9208
        %10155 = vmatprep.subr.bf16.mxu0 %v9213
        %10156 = vmatpush1.bf16.msra.mxu0 %v9212
        %10157 = vmatprep.subr.bf16.mxu0 %v9217
        %10158 = vmatpush1.bf16.msra.mxu0 %v9216
        %10159 = vmatprep.subr.bf16.mxu0 %v9221
        %10160 = vmatpush1.bf16.msra.mxu0 %v9220
        %10161 = vmatprep.subr.bf16.mxu0 %v9225
        %10162 = vmatpush1.bf16.msra.mxu0 %v9224
        %10163 = vmatprep.subr.bf16.mxu0 %v9229
        %10164 = vmatpush1.bf16.msra.mxu0 %v9228
        %10165 = vmatprep.subr.bf16.mxu0 %v9233
        %10166 = vmatpush1.bf16.msra.mxu0 %v9232
        %10167 = vmatprep.subr.bf16.mxu0 %v9237
        %10168 = vmatpush1.bf16.msra.mxu0 %v9236
        %10169 = vmatprep.mubr.bf16.mxu0 %v6905
        %10170 = vmatmul.mubr.bf16.gmra.mrb[0].mxu0 %v6904
        %v10171 = vpop.f32.mrb[0].mxu0
        %v10172 = vadd.f32 %v10129, %v10171
        %v10173 = vpop.f32.mrb[0].mxu0
        %v10174 = vadd.f32 %v10131, %v10173
        %v10175 = vpop.f32.mrb[0].mxu0
        %v10176 = vadd.f32 %v10133, %v10175
        %v10177 = vpop.f32.mrb[0].mxu0
        %v10178 = vadd.f32 %v10135, %v10177
        %10179 = vdwg.mxu0
        %10180 = vmatprep.subr.bf16.mxu0 %v9241
        %10181 = vmatpush1.bf16.msra.mxu0 %v9240
        %10182 = vmatprep.subr.bf16.mxu0 %v9245
        %10183 = vmatpush1.bf16.msra.mxu0 %v9244
        %10184 = vmatprep.subr.bf16.mxu0 %v9249
        %10185 = vmatpush1.bf16.msra.mxu0 %v9248
        %10186 = vmatprep.subr.bf16.mxu0 %v9253
        %10187 = vmatpush1.bf16.msra.mxu0 %v9252
        %10188 = vmatprep.subr.bf16.mxu0 %v9257
        %10189 = vmatpush1.bf16.msra.mxu0 %v9256
        %10190 = vmatprep.subr.bf16.mxu0 %v9261
        %10191 = vmatpush1.bf16.msra.mxu0 %v9260
        %10192 = vmatprep.subr.bf16.mxu0 %v9265
        %10193 = vmatpush1.bf16.msra.mxu0 %v9264
        %10194 = vmatprep.subr.bf16.mxu0 %v9269
        %10195 = vmatpush1.bf16.msra.mxu0 %v9268
        %10196 = vmatprep.subr.bf16.mxu0 %v9273
        %10197 = vmatpush1.bf16.msra.mxu0 %v9272
        %10198 = vmatprep.subr.bf16.mxu0 %v9277
        %10199 = vmatpush1.bf16.msra.mxu0 %v9276
        %10200 = vmatprep.subr.bf16.mxu0 %v9281
        %10201 = vmatpush1.bf16.msra.mxu0 %v9280
        %10202 = vmatprep.subr.bf16.mxu0 %v9285
        %10203 = vmatpush1.bf16.msra.mxu0 %v9284
        %10204 = vmatprep.subr.bf16.mxu0 %v9289
        %10205 = vmatpush1.bf16.msra.mxu0 %v9288
        %10206 = vmatprep.subr.bf16.mxu0 %v9293
        %10207 = vmatpush1.bf16.msra.mxu0 %v9292
        %10208 = vmatprep.subr.bf16.mxu0 %v9297
        %10209 = vmatpush1.bf16.msra.mxu0 %v9296
        %10210 = vmatprep.subr.bf16.mxu0 %v9301
        %10211 = vmatpush1.bf16.msra.mxu0 %v9300
        %10212 = vmatprep.mubr.bf16.mxu0 %v6907
        %10213 = vmatmul.mubr.bf16.gmra.mrb[0].mxu0 %v6906
        %v10214 = vpop.f32.mrb[0].mxu0
        %v10215 = vadd.f32 %v10172, %v10214
        %v10216 = vpop.f32.mrb[0].mxu0
        %v10217 = vadd.f32 %v10174, %v10216
        %v10218 = vpop.f32.mrb[0].mxu0
        %v10219 = vadd.f32 %v10176, %v10218
        %v10220 = vpop.f32.mrb[0].mxu0
        %v10221 = vadd.f32 %v10178, %v10220
        %10222 = vdwg.mxu0
        %10223 = vmatprep.subr.bf16.mxu0 %v9305
        %10224 = vmatpush1.bf16.msra.mxu0 %v9304
        %10225 = vmatprep.subr.bf16.mxu0 %v9309
        %10226 = vmatpush1.bf16.msra.mxu0 %v9308
        %10227 = vmatprep.subr.bf16.mxu0 %v9313
        %10228 = vmatpush1.bf16.msra.mxu0 %v9312
        %10229 = vmatprep.subr.bf16.mxu0 %v9317
        %10230 = vmatpush1.bf16.msra.mxu0 %v9316
        %10231 = vmatprep.subr.bf16.mxu0 %v9321
        %10232 = vmatpush1.bf16.msra.mxu0 %v9320
        %10233 = vmatprep.subr.bf16.mxu0 %v9325
        %10234 = vmatpush1.bf16.msra.mxu0 %v9324
        %10235 = vmatprep.subr.bf16.mxu0 %v9329
        %10236 = vmatpush1.bf16.msra.mxu0 %v9328
        %10237 = vmatprep.subr.bf16.mxu0 %v9333
        %10238 = vmatpush1.bf16.msra.mxu0 %v9332
        %10239 = vmatprep.subr.bf16.mxu0 %v9337
        %10240 = vmatpush1.bf16.msra.mxu0 %v9336
        %10241 = vmatprep.subr.bf16.mxu0 %v9341
        %10242 = vmatpush1.bf16.msra.mxu0 %v9340
        %10243 = vmatprep.subr.bf16.mxu0 %v9345
        %10244 = vmatpush1.bf16.msra.mxu0 %v9344
        %10245 = vmatprep.subr.bf16.mxu0 %v9349
        %10246 = vmatpush1.bf16.msra.mxu0 %v9348
        %10247 = vmatprep.subr.bf16.mxu0 %v9353
        %10248 = vmatpush1.bf16.msra.mxu0 %v9352
        %10249 = vmatprep.subr.bf16.mxu0 %v9357
        %10250 = vmatpush1.bf16.msra.mxu0 %v9356
        %10251 = vmatprep.subr.bf16.mxu0 %v9361
        %10252 = vmatpush1.bf16.msra.mxu0 %v9360
        %10253 = vmatprep.subr.bf16.mxu0 %v9365
        %10254 = vmatpush1.bf16.msra.mxu0 %v9364
        %10255 = vmatprep.mubr.bf16.mxu0 %v6909
        %10256 = vmatmul.mubr.bf16.gmra.mrb[0].mxu0 %v6908
        %v10257 = vpop.f32.mrb[0].mxu0
        %v10258 = vadd.f32 %v10215, %v10257
        %v10259 = vpop.f32.mrb[0].mxu0
        %v10260 = vadd.f32 %v10217, %v10259
        %v10261 = vpop.f32.mrb[0].mxu0
        %v10262 = vadd.f32 %v10219, %v10261
        %v10263 = vpop.f32.mrb[0].mxu0
        %v10264 = vadd.f32 %v10221, %v10263
        %10265 = vdwg.mxu0
        %10266 = vmatprep.subr.bf16.mxu0 %v9369
        %10267 = vmatpush1.bf16.msra.mxu0 %v9368
        %10268 = vmatprep.subr.bf16.mxu0 %v9373
        %10269 = vmatpush1.bf16.msra.mxu0 %v9372
        %10270 = vmatprep.subr.bf16.mxu0 %v9377
        %10271 = vmatpush1.bf16.msra.mxu0 %v9376
        %10272 = vmatprep.subr.bf16.mxu0 %v9381
        %10273 = vmatpush1.bf16.msra.mxu0 %v9380
        %10274 = vmatprep.subr.bf16.mxu0 %v9385
        %10275 = vmatpush1.bf16.msra.mxu0 %v9384
        %10276 = vmatprep.subr.bf16.mxu0 %v9389
        %10277 = vmatpush1.bf16.msra.mxu0 %v9388
        %10278 = vmatprep.subr.bf16.mxu0 %v9393
        %10279 = vmatpush1.bf16.msra.mxu0 %v9392
        %10280 = vmatprep.subr.bf16.mxu0 %v9397
        %10281 = vmatpush1.bf16.msra.mxu0 %v9396
        %10282 = vmatprep.subr.bf16.mxu0 %v9401
        %10283 = vmatpush1.bf16.msra.mxu0 %v9400
        %10284 = vmatprep.subr.bf16.mxu0 %v9405
        %10285 = vmatpush1.bf16.msra.mxu0 %v9404
        %10286 = vmatprep.subr.bf16.mxu0 %v9409
        %10287 = vmatpush1.bf16.msra.mxu0 %v9408
        %10288 = vmatprep.subr.bf16.mxu0 %v9413
        %10289 = vmatpush1.bf16.msra.mxu0 %v9412
        %10290 = vmatprep.subr.bf16.mxu0 %v9417
        %10291 = vmatpush1.bf16.msra.mxu0 %v9416
        %10292 = vmatprep.subr.bf16.mxu0 %v9421
        %10293 = vmatpush1.bf16.msra.mxu0 %v9420
        %10294 = vmatprep.subr.bf16.mxu0 %v9425
        %10295 = vmatpush1.bf16.msra.mxu0 %v9424
        %10296 = vmatprep.subr.bf16.mxu0 %v9429
        %10297 = vmatpush1.bf16.msra.mxu0 %v9428
        %10298 = vmatprep.mubr.bf16.mxu0 %v6911
        %10299 = vmatmul.mubr.bf16.gmra.mrb[0].mxu0 %v6910
        %v10300 = vpop.f32.mrb[0].mxu0
        %v10301 = vadd.f32 %v10258, %v10300
        %v10302 = vpop.f32.mrb[0].mxu0
        %v10303 = vadd.f32 %v10260, %v10302
        %v10304 = vpop.f32.mrb[0].mxu0
        %v10305 = vadd.f32 %v10262, %v10304
        %v10306 = vpop.f32.mrb[0].mxu0
        %v10307 = vadd.f32 %v10264, %v10306
        %10308 = vdwg.mxu0
        %10309 = vmatprep.subr.bf16.mxu0 %v9433
        %10310 = vmatpush1.bf16.msra.mxu0 %v9432
        %10311 = vmatprep.subr.bf16.mxu0 %v9437
        %10312 = vmatpush1.bf16.msra.mxu0 %v9436
        %10313 = vmatprep.subr.bf16.mxu0 %v9441
        %10314 = vmatpush1.bf16.msra.mxu0 %v9440
        %10315 = vmatprep.subr.bf16.mxu0 %v9445
        %10316 = vmatpush1.bf16.msra.mxu0 %v9444
        %10317 = vmatprep.subr.bf16.mxu0 %v9449
        %10318 = vmatpush1.bf16.msra.mxu0 %v9448
        %10319 = vmatprep.subr.bf16.mxu0 %v9453
        %10320 = vmatpush1.bf16.msra.mxu0 %v9452
        %10321 = vmatprep.subr.bf16.mxu0 %v9457
        %10322 = vmatpush1.bf16.msra.mxu0 %v9456
        %10323 = vmatprep.subr.bf16.mxu0 %v9461
        %10324 = vmatpush1.bf16.msra.mxu0 %v9460
        %10325 = vmatprep.subr.bf16.mxu0 %v9465
        %10326 = vmatpush1.bf16.msra.mxu0 %v9464
        %10327 = vmatprep.subr.bf16.mxu0 %v9469
        %10328 = vmatpush1.bf16.msra.mxu0 %v9468
        %10329 = vmatprep.subr.bf16.mxu0 %v9473
        %10330 = vmatpush1.bf16.msra.mxu0 %v9472
        %10331 = vmatprep.subr.bf16.mxu0 %v9477
        %10332 = vmatpush1.bf16.msra.mxu0 %v9476
        %10333 = vmatprep.subr.bf16.mxu0 %v9481
        %10334 = vmatpush1.bf16.msra.mxu0 %v9480
        %10335 = vmatprep.subr.bf16.mxu0 %v9485
        %10336 = vmatpush1.bf16.msra.mxu0 %v9484
        %10337 = vmatprep.subr.bf16.mxu0 %v9489
        %10338 = vmatpush1.bf16.msra.mxu0 %v9488
        %10339 = vmatprep.subr.bf16.mxu0 %v9493
        %10340 = vmatpush1.bf16.msra.mxu0 %v9492
        %10341 = vmatprep.mubr.bf16.mxu0 %v6913
        %10342 = vmatmul.mubr.bf16.gmra.mrb[0].mxu0 %v6912
        %v10343 = vpop.f32.mrb[0].mxu0
        %v10344 = vadd.f32 %v10301, %v10343
        %v10345 = vpop.f32.mrb[0].mxu0
        %v10346 = vadd.f32 %v10303, %v10345
        %v10347 = vpop.f32.mrb[0].mxu0
        %v10348 = vadd.f32 %v10305, %v10347
        %v10349 = vpop.f32.mrb[0].mxu0
        %v10350 = vadd.f32 %v10307, %v10349
        %10351 = vdwg.mxu0
        %10352 = vmatprep.subr.bf16.mxu0 %v8987
        %10353 = vmatpush1.bf16.msra.mxu0 %v8986
        %10354 = vmatprep.subr.bf16.mxu0 %v8991
        %10355 = vmatpush1.bf16.msra.mxu0 %v8990
        %10356 = vmatprep.subr.bf16.mxu0 %v8995
        %10357 = vmatpush1.bf16.msra.mxu0 %v8994
        %10358 = vmatprep.subr.bf16.mxu0 %v8999
        %10359 = vmatpush1.bf16.msra.mxu0 %v8998
        %10360 = vmatprep.subr.bf16.mxu0 %v9003
        %10361 = vmatpush1.bf16.msra.mxu0 %v9002
        %10362 = vmatprep.subr.bf16.mxu0 %v9007
        %10363 = vmatpush1.bf16.msra.mxu0 %v9006
        %10364 = vmatprep.subr.bf16.mxu0 %v9011
        %10365 = vmatpush1.bf16.msra.mxu0 %v9010
        %10366 = vmatprep.subr.bf16.mxu0 %v9015
        %10367 = vmatpush1.bf16.msra.mxu0 %v9014
        %10368 = vmatprep.subr.bf16.mxu0 %v9019
        %10369 = vmatpush1.bf16.msra.mxu0 %v9018
        %10370 = vmatprep.subr.bf16.mxu0 %v9023
        %10371 = vmatpush1.bf16.msra.mxu0 %v9022
        %10372 = vmatprep.subr.bf16.mxu0 %v9027
        %10373 = vmatpush1.bf16.msra.mxu0 %v9026
        %10374 = vmatprep.subr.bf16.mxu0 %v9031
        %10375 = vmatpush1.bf16.msra.mxu0 %v9030
        %10376 = vmatprep.subr.bf16.mxu0 %v9035
        %10377 = vmatpush1.bf16.msra.mxu0 %v9034
        %10378 = vmatprep.subr.bf16.mxu0 %v9039
        %10379 = vmatpush1.bf16.msra.mxu0 %v9038
        %10380 = vmatprep.subr.bf16.mxu0 %v9043
        %10381 = vmatpush1.bf16.msra.mxu0 %v9042
        %10382 = vmatprep.subr.bf16.mxu0 %v9047
        %10383 = vmatpush1.bf16.msra.mxu0 %v9046
        %10384 = vmatprep.mubr.bf16.mxu0 %v6899
        %10385 = vmatmul.mubr.bf16.gmra.mrb[0].mxu0 %v6898
        %v10386 = vpop.f32.mrb[0].mxu0
        %v10387 = vadd.f32 %v7439, %v10386
        %v10388 = vpop.f32.mrb[0].mxu0
        %v10389 = vadd.f32 %v7443, %v10388
        %v10390 = vpop.f32.mrb[0].mxu0
        %v10391 = vadd.f32 %v7439, %v10390
        %v10392 = vpop.f32.mrb[0].mxu0
        %v10393 = vadd.f32 %v7443, %v10392
        %10394 = vdwg.mxu0
        %10395 = vmatprep.subr.bf16.mxu0 %v9051
        %10396 = vmatpush1.bf16.msra.mxu0 %v9050
        %10397 = vmatprep.subr.bf16.mxu0 %v9055
        %10398 = vmatpush1.bf16.msra.mxu0 %v9054
        %10399 = vmatprep.subr.bf16.mxu0 %v9059
        %10400 = vmatpush1.bf16.msra.mxu0 %v9058
        %10401 = vmatprep.subr.bf16.mxu0 %v9063
        %10402 = vmatpush1.bf16.msra.mxu0 %v9062
        %10403 = vmatprep.subr.bf16.mxu0 %v9067
        %10404 = vmatpush1.bf16.msra.mxu0 %v9066
        %10405 = vmatprep.subr.bf16.mxu0 %v9071
        %10406 = vmatpush1.bf16.msra.mxu0 %v9070
        %10407 = vmatprep.subr.bf16.mxu0 %v9075
        %10408 = vmatpush1.bf16.msra.mxu0 %v9074
        %10409 = vmatprep.subr.bf16.mxu0 %v9079
        %10410 = vmatpush1.bf16.msra.mxu0 %v9078
        %10411 = vmatprep.subr.bf16.mxu0 %v9083
        %10412 = vmatpush1.bf16.msra.mxu0 %v9082
        %10413 = vmatprep.subr.bf16.mxu0 %v9087
        %10414 = vmatpush1.bf16.msra.mxu0 %v9086
        %10415 = vmatprep.subr.bf16.mxu0 %v9091
        %10416 = vmatpush1.bf16.msra.mxu0 %v9090
        %10417 = vmatprep.subr.bf16.mxu0 %v9095
        %10418 = vmatpush1.bf16.msra.mxu0 %v9094
        %10419 = vmatprep.subr.bf16.mxu0 %v9099
        %10420 = vmatpush1.bf16.msra.mxu0 %v9098
        %10421 = vmatprep.subr.bf16.mxu0 %v9103
        %10422 = vmatpush1.bf16.msra.mxu0 %v9102
        %10423 = vmatprep.subr.bf16.mxu0 %v9107
        %10424 = vmatpush1.bf16.msra.mxu0 %v9106
        %10425 = vmatprep.subr.bf16.mxu0 %v9111
        %10426 = vmatpush1.bf16.msra.mxu0 %v9110
        %10427 = vmatprep.mubr.bf16.mxu0 %v6901
        %10428 = vmatmul.mubr.bf16.gmra.mrb[0].mxu0 %v6900
        %v10429 = vpop.f32.mrb[0].mxu0
        %v10430 = vadd.f32 %v10387, %v10429
        %v10431 = vpop.f32.mrb[0].mxu0
        %v10432 = vadd.f32 %v10389, %v10431
        %v10433 = vpop.f32.mrb[0].mxu0
        %v10434 = vadd.f32 %v10391, %v10433
        %v10435 = vpop.f32.mrb[0].mxu0
        %v10436 = vadd.f32 %v10393, %v10435
        %10437 = vdwg.mxu0
        %10438 = vmatprep.subr.bf16.mxu0 %v9115
        %10439 = vmatpush1.bf16.msra.mxu0 %v9114
        %10440 = vmatprep.subr.bf16.mxu0 %v9119
        %10441 = vmatpush1.bf16.msra.mxu0 %v9118
        %10442 = vmatprep.subr.bf16.mxu0 %v9123
        %10443 = vmatpush1.bf16.msra.mxu0 %v9122
        %10444 = vmatprep.subr.bf16.mxu0 %v9127
        %10445 = vmatpush1.bf16.msra.mxu0 %v9126
        %10446 = vmatprep.subr.bf16.mxu0 %v9131
        %10447 = vmatpush1.bf16.msra.mxu0 %v9130
        %10448 = vmatprep.subr.bf16.mxu0 %v9135
        %10449 = vmatpush1.bf16.msra.mxu0 %v9134
        %10450 = vmatprep.subr.bf16.mxu0 %v9139
        %10451 = vmatpush1.bf16.msra.mxu0 %v9138
        %10452 = vmatprep.subr.bf16.mxu0 %v9143
        %10453 = vmatpush1.bf16.msra.mxu0 %v9142
        %10454 = vmatprep.subr.bf16.mxu0 %v9147
        %10455 = vmatpush1.bf16.msra.mxu0 %v9146
        %10456 = vmatprep.subr.bf16.mxu0 %v9151
        %10457 = vmatpush1.bf16.msra.mxu0 %v9150
        %10458 = vmatprep.subr.bf16.mxu0 %v9155
        %10459 = vmatpush1.bf16.msra.mxu0 %v9154
        %10460 = vmatprep.subr.bf16.mxu0 %v9159
        %10461 = vmatpush1.bf16.msra.mxu0 %v9158
        %10462 = vmatprep.subr.bf16.mxu0 %v9163
        %10463 = vmatpush1.bf16.msra.mxu0 %v9162
        %10464 = vmatprep.subr.bf16.mxu0 %v9167
        %10465 = vmatpush1.bf16.msra.mxu0 %v9166
        %10466 = vmatprep.subr.bf16.mxu0 %v9171
        %10467 = vmatpush1.bf16.msra.mxu0 %v9170
        %10468 = vmatprep.subr.bf16.mxu0 %v9175
        %10469 = vmatpush1.bf16.msra.mxu0 %v9174
        %10470 = vmatprep.mubr.bf16.mxu0 %v6903
        %10471 = vmatmul.mubr.bf16.gmra.mrb[0].mxu0 %v6902
        %v10472 = vpop.f32.mrb[0].mxu0
        %v10473 = vadd.f32 %v10430, %v10472
        %v10474 = vpop.f32.mrb[0].mxu0
        %v10475 = vadd.f32 %v10432, %v10474
        %v10476 = vpop.f32.mrb[0].mxu0
        %v10477 = vadd.f32 %v10434, %v10476
        %v10478 = vpop.f32.mrb[0].mxu0
        %v10479 = vadd.f32 %v10436, %v10478
        %10480 = vdwg.mxu0
        %10481 = vmatprep.subr.bf16.mxu0 %v9179
        %10482 = vmatpush1.bf16.msra.mxu0 %v9178
        %10483 = vmatprep.subr.bf16.mxu0 %v9183
        %10484 = vmatpush1.bf16.msra.mxu0 %v9182
        %10485 = vmatprep.subr.bf16.mxu0 %v9187
        %10486 = vmatpush1.bf16.msra.mxu0 %v9186
        %10487 = vmatprep.subr.bf16.mxu0 %v9191
        %10488 = vmatpush1.bf16.msra.mxu0 %v9190
        %10489 = vmatprep.subr.bf16.mxu0 %v9195
        %10490 = vmatpush1.bf16.msra.mxu0 %v9194
        %10491 = vmatprep.subr.bf16.mxu0 %v9199
        %10492 = vmatpush1.bf16.msra.mxu0 %v9198
        %10493 = vmatprep.subr.bf16.mxu0 %v9203
        %10494 = vmatpush1.bf16.msra.mxu0 %v9202
        %10495 = vmatprep.subr.bf16.mxu0 %v9207
        %10496 = vmatpush1.bf16.msra.mxu0 %v9206
        %10497 = vmatprep.subr.bf16.mxu0 %v9211
        %10498 = vmatpush1.bf16.msra.mxu0 %v9210
        %10499 = vmatprep.subr.bf16.mxu0 %v9215
        %10500 = vmatpush1.bf16.msra.mxu0 %v9214
        %10501 = vmatprep.subr.bf16.mxu0 %v9219
        %10502 = vmatpush1.bf16.msra.mxu0 %v9218
        %10503 = vmatprep.subr.bf16.mxu0 %v9223
        %10504 = vmatpush1.bf16.msra.mxu0 %v9222
        %10505 = vmatprep.subr.bf16.mxu0 %v9227
        %10506 = vmatpush1.bf16.msra.mxu0 %v9226
        %10507 = vmatprep.subr.bf16.mxu0 %v9231
        %10508 = vmatpush1.bf16.msra.mxu0 %v9230
        %10509 = vmatprep.subr.bf16.mxu0 %v9235
        %10510 = vmatpush1.bf16.msra.mxu0 %v9234
        %10511 = vmatprep.subr.bf16.mxu0 %v9239
        %10512 = vmatpush1.bf16.msra.mxu0 %v9238
        %10513 = vmatprep.mubr.bf16.mxu0 %v6905
        %10514 = vmatmul.mubr.bf16.gmra.mrb[0].mxu0 %v6904
        %v10515 = vpop.f32.mrb[0].mxu0
        %v10516 = vadd.f32 %v10473, %v10515
        %v10517 = vpop.f32.mrb[0].mxu0
        %v10518 = vadd.f32 %v10475, %v10517
        %v10519 = vpop.f32.mrb[0].mxu0
        %v10520 = vadd.f32 %v10477, %v10519
        %v10521 = vpop.f32.mrb[0].mxu0
        %v10522 = vadd.f32 %v10479, %v10521
        %10523 = vdwg.mxu0
        %10524 = vmatprep.subr.bf16.mxu0 %v9243
        %10525 = vmatpush1.bf16.msra.mxu0 %v9242
        %10526 = vmatprep.subr.bf16.mxu0 %v9247
        %10527 = vmatpush1.bf16.msra.mxu0 %v9246
        %10528 = vmatprep.subr.bf16.mxu0 %v9251
        %10529 = vmatpush1.bf16.msra.mxu0 %v9250
        %10530 = vmatprep.subr.bf16.mxu0 %v9255
        %10531 = vmatpush1.bf16.msra.mxu0 %v9254
        %10532 = vmatprep.subr.bf16.mxu0 %v9259
        %10533 = vmatpush1.bf16.msra.mxu0 %v9258
        %10534 = vmatprep.subr.bf16.mxu0 %v9263
        %10535 = vmatpush1.bf16.msra.mxu0 %v9262
        %10536 = vmatprep.subr.bf16.mxu0 %v9267
        %10537 = vmatpush1.bf16.msra.mxu0 %v9266
        %10538 = vmatprep.subr.bf16.mxu0 %v9271
        %10539 = vmatpush1.bf16.msra.mxu0 %v9270
        %10540 = vmatprep.subr.bf16.mxu0 %v9275
        %10541 = vmatpush1.bf16.msra.mxu0 %v9274
        %10542 = vmatprep.subr.bf16.mxu0 %v9279
        %10543 = vmatpush1.bf16.msra.mxu0 %v9278
        %10544 = vmatprep.subr.bf16.mxu0 %v9283
        %10545 = vmatpush1.bf16.msra.mxu0 %v9282
        %10546 = vmatprep.subr.bf16.mxu0 %v9287
        %10547 = vmatpush1.bf16.msra.mxu0 %v9286
        %10548 = vmatprep.subr.bf16.mxu0 %v9291
        %10549 = vmatpush1.bf16.msra.mxu0 %v9290
        %10550 = vmatprep.subr.bf16.mxu0 %v9295
        %10551 = vmatpush1.bf16.msra.mxu0 %v9294
        %10552 = vmatprep.subr.bf16.mxu0 %v9299
        %10553 = vmatpush1.bf16.msra.mxu0 %v9298
        %10554 = vmatprep.subr.bf16.mxu0 %v9303
        %10555 = vmatpush1.bf16.msra.mxu0 %v9302
        %10556 = vmatprep.mubr.bf16.mxu0 %v6907
        %10557 = vmatmul.mubr.bf16.gmra.mrb[0].mxu0 %v6906
        %v10558 = vpop.f32.mrb[0].mxu0
        %v10559 = vadd.f32 %v10516, %v10558
        %v10560 = vpop.f32.mrb[0].mxu0
        %v10561 = vadd.f32 %v10518, %v10560
        %v10562 = vpop.f32.mrb[0].mxu0
        %v10563 = vadd.f32 %v10520, %v10562
        %v10564 = vpop.f32.mrb[0].mxu0
        %v10565 = vadd.f32 %v10522, %v10564
        %10566 = vdwg.mxu0
        %10567 = vmatprep.subr.bf16.mxu0 %v9307
        %10568 = vmatpush1.bf16.msra.mxu0 %v9306
        %10569 = vmatprep.subr.bf16.mxu0 %v9311
        %10570 = vmatpush1.bf16.msra.mxu0 %v9310
        %10571 = vmatprep.subr.bf16.mxu0 %v9315
        %10572 = vmatpush1.bf16.msra.mxu0 %v9314
        %10573 = vmatprep.subr.bf16.mxu0 %v9319
        %10574 = vmatpush1.bf16.msra.mxu0 %v9318
        %10575 = vmatprep.subr.bf16.mxu0 %v9323
        %10576 = vmatpush1.bf16.msra.mxu0 %v9322
        %10577 = vmatprep.subr.bf16.mxu0 %v9327
        %10578 = vmatpush1.bf16.msra.mxu0 %v9326
        %10579 = vmatprep.subr.bf16.mxu0 %v9331
        %10580 = vmatpush1.bf16.msra.mxu0 %v9330
        %10581 = vmatprep.subr.bf16.mxu0 %v9335
        %10582 = vmatpush1.bf16.msra.mxu0 %v9334
        %10583 = vmatprep.subr.bf16.mxu0 %v9339
        %10584 = vmatpush1.bf16.msra.mxu0 %v9338
        %10585 = vmatprep.subr.bf16.mxu0 %v9343
        %10586 = vmatpush1.bf16.msra.mxu0 %v9342
        %10587 = vmatprep.subr.bf16.mxu0 %v9347
        %10588 = vmatpush1.bf16.msra.mxu0 %v9346
        %10589 = vmatprep.subr.bf16.mxu0 %v9351
        %10590 = vmatpush1.bf16.msra.mxu0 %v9350
        %10591 = vmatprep.subr.bf16.mxu0 %v9355
        %10592 = vmatpush1.bf16.msra.mxu0 %v9354
        %10593 = vmatprep.subr.bf16.mxu0 %v9359
        %10594 = vmatpush1.bf16.msra.mxu0 %v9358
        %10595 = vmatprep.subr.bf16.mxu0 %v9363
        %10596 = vmatpush1.bf16.msra.mxu0 %v9362
        %10597 = vmatprep.subr.bf16.mxu0 %v9367
        %10598 = vmatpush1.bf16.msra.mxu0 %v9366
        %10599 = vmatprep.mubr.bf16.mxu0 %v6909
        %10600 = vmatmul.mubr.bf16.gmra.mrb[0].mxu0 %v6908
        %v10601 = vpop.f32.mrb[0].mxu0
        %v10602 = vadd.f32 %v10559, %v10601
        %v10603 = vpop.f32.mrb[0].mxu0
        %v10604 = vadd.f32 %v10561, %v10603
        %v10605 = vpop.f32.mrb[0].mxu0
        %v10606 = vadd.f32 %v10563, %v10605
        %v10607 = vpop.f32.mrb[0].mxu0
        %v10608 = vadd.f32 %v10565, %v10607
        %10609 = vdwg.mxu0
        %10610 = vmatprep.subr.bf16.mxu0 %v9371
        %10611 = vmatpush1.bf16.msra.mxu0 %v9370
        %10612 = vmatprep.subr.bf16.mxu0 %v9375
        %10613 = vmatpush1.bf16.msra.mxu0 %v9374
        %10614 = vmatprep.subr.bf16.mxu0 %v9379
        %10615 = vmatpush1.bf16.msra.mxu0 %v9378
        %10616 = vmatprep.subr.bf16.mxu0 %v9383
        %10617 = vmatpush1.bf16.msra.mxu0 %v9382
        %10618 = vmatprep.subr.bf16.mxu0 %v9387
        %10619 = vmatpush1.bf16.msra.mxu0 %v9386
        %10620 = vmatprep.subr.bf16.mxu0 %v9391
        %10621 = vmatpush1.bf16.msra.mxu0 %v9390
        %10622 = vmatprep.subr.bf16.mxu0 %v9395
        %10623 = vmatpush1.bf16.msra.mxu0 %v9394
        %10624 = vmatprep.subr.bf16.mxu0 %v9399
        %10625 = vmatpush1.bf16.msra.mxu0 %v9398
        %10626 = vmatprep.subr.bf16.mxu0 %v9403
        %10627 = vmatpush1.bf16.msra.mxu0 %v9402
        %10628 = vmatprep.subr.bf16.mxu0 %v9407
        %10629 = vmatpush1.bf16.msra.mxu0 %v9406
        %10630 = vmatprep.subr.bf16.mxu0 %v9411
        %10631 = vmatpush1.bf16.msra.mxu0 %v9410
        %10632 = vmatprep.subr.bf16.mxu0 %v9415
        %10633 = vmatpush1.bf16.msra.mxu0 %v9414
        %10634 = vmatprep.subr.bf16.mxu0 %v9419
        %10635 = vmatpush1.bf16.msra.mxu0 %v9418
        %10636 = vmatprep.subr.bf16.mxu0 %v9423
        %10637 = vmatpush1.bf16.msra.mxu0 %v9422
        %10638 = vmatprep.subr.bf16.mxu0 %v9427
        %10639 = vmatpush1.bf16.msra.mxu0 %v9426
        %10640 = vmatprep.subr.bf16.mxu0 %v9431
        %10641 = vmatpush1.bf16.msra.mxu0 %v9430
        %10642 = vmatprep.mubr.bf16.mxu0 %v6911
        %10643 = vmatmul.mubr.bf16.gmra.mrb[0].mxu0 %v6910
        %v10644 = vpop.f32.mrb[0].mxu0
        %v10645 = vadd.f32 %v10602, %v10644
        %v10646 = vpop.f32.mrb[0].mxu0
        %v10647 = vadd.f32 %v10604, %v10646
        %v10648 = vpop.f32.mrb[0].mxu0
        %v10649 = vadd.f32 %v10606, %v10648
        %v10650 = vpop.f32.mrb[0].mxu0
        %v10651 = vadd.f32 %v10608, %v10650
        %10652 = vdwg.mxu0
        %10653 = vmatprep.subr.bf16.mxu0 %v9435
        %10654 = vmatpush1.bf16.msra.mxu0 %v9434
        %10655 = vmatprep.subr.bf16.mxu0 %v9439
        %10656 = vmatpush1.bf16.msra.mxu0 %v9438
        %10657 = vmatprep.subr.bf16.mxu0 %v9443
        %10658 = vmatpush1.bf16.msra.mxu0 %v9442
        %10659 = vmatprep.subr.bf16.mxu0 %v9447
        %10660 = vmatpush1.bf16.msra.mxu0 %v9446
        %10661 = vmatprep.subr.bf16.mxu0 %v9451
        %10662 = vmatpush1.bf16.msra.mxu0 %v9450
        %10663 = vmatprep.subr.bf16.mxu0 %v9455
        %10664 = vmatpush1.bf16.msra.mxu0 %v9454
        %10665 = vmatprep.subr.bf16.mxu0 %v9459
        %10666 = vmatpush1.bf16.msra.mxu0 %v9458
        %10667 = vmatprep.subr.bf16.mxu0 %v9463
        %10668 = vmatpush1.bf16.msra.mxu0 %v9462
        %10669 = vmatprep.subr.bf16.mxu0 %v9467
        %10670 = vmatpush1.bf16.msra.mxu0 %v9466
        %10671 = vmatprep.subr.bf16.mxu0 %v9471
        %10672 = vmatpush1.bf16.msra.mxu0 %v9470
        %10673 = vmatprep.subr.bf16.mxu0 %v9475
        %10674 = vmatpush1.bf16.msra.mxu0 %v9474
        %10675 = vmatprep.subr.bf16.mxu0 %v9479
        %10676 = vmatpush1.bf16.msra.mxu0 %v9478
        %10677 = vmatprep.subr.bf16.mxu0 %v9483
        %10678 = vmatpush1.bf16.msra.mxu0 %v9482
        %10679 = vmatprep.subr.bf16.mxu0 %v9487
        %10680 = vmatpush1.bf16.msra.mxu0 %v9486
        %10681 = vmatprep.subr.bf16.mxu0 %v9491
        %10682 = vmatpush1.bf16.msra.mxu0 %v9490
        %10683 = vmatprep.subr.bf16.mxu0 %v9495
        %10684 = vmatpush1.bf16.msra.mxu0 %v9494
        %10685 = vmatprep.mubr.bf16.mxu0 %v6913
        %10686 = vmatmul.mubr.bf16.gmra.mrb[0].mxu0 %v6912
        %v10687 = vpop.f32.mrb[0].mxu0
        %v10688 = vadd.f32 %v10645, %v10687
        %v10689 = vpop.f32.mrb[0].mxu0
        %v10690 = vadd.f32 %v10647, %v10689
        %v10691 = vpop.f32.mrb[0].mxu0
        %v10692 = vadd.f32 %v10649, %v10691
        %v10693 = vpop.f32.mrb[0].mxu0
        %v10694 = vadd.f32 %v10651, %v10693
        %10695 = vdwg.mxu0
        %v10696 = vadd.f32 %v10344, %v3010
        %v10697 = vadd.f32 %v10346, %v3011
        %v10698 = vadd.f32 %v10688, %v3012
        %v10699 = vadd.f32 %v10690, %v3013
        %v10700 = vadd.f32 %v10348, %v3014
        %v10701 = vadd.f32 %v10350, %v3015
        %v10702 = vadd.f32 %v10692, %v3016
        %v10703 = vadd.f32 %v10694, %v3017
        %v10704 = vld [vmem:[#allocation26] sm:$0xf]
        %v10705 = vld [vmem:[#allocation28] sm:$0xf]
        %v10706 = vadd.f32 %v10696, %v10697
        %v10707 = vadd.f32 %v10706, %v10698
        %v10708 = vadd.f32 %v10707, %v10699
        %10709 = vadd.xlane.f32.xlu0 %v10708
        %v10710 = vpop.xlane.xlu0 %10709
        %v10711 = vadd.f32 %v10700, %v10701
        %v10712 = vadd.f32 %v10711, %v10702
        %v10713 = vadd.f32 %v10712, %v10703
        %10714 = vadd.xlane.f32.xlu0 %v10713
        %v10715 = vpop.xlane.xlu0 %10714
        %v10716 = vmul.f32 %v10710, %v2917
        %v10717 = vmul.f32 %v10715, %v2917
        %v10718 = vsub.f32 %v10696, %v10716
        %v10719 = vsub.f32 %v10697, %v10716
        %v10720 = vsub.f32 %v10698, %v10716
        %v10721 = vsub.f32 %v10699, %v10716
        %v10722 = vsub.f32 %v10700, %v10717
        %v10723 = vsub.f32 %v10701, %v10717
        %v10724 = vsub.f32 %v10702, %v10717
        %v10725 = vsub.f32 %v10703, %v10717
        %v10726 = vmul.f32 %v10718, %v10718
        %v10727 = vmul.f32 %v10719, %v10719
        %v10728 = vmul.f32 %v10720, %v10720
        %v10729 = vmul.f32 %v10721, %v10721
        %v10730 = vmul.f32 %v10722, %v10722
        %v10731 = vmul.f32 %v10723, %v10723
        %v10732 = vmul.f32 %v10724, %v10724
        %v10733 = vmul.f32 %v10725, %v10725
        %v10734 = vadd.f32 %v10726, %v10727
        %v10735 = vadd.f32 %v10734, %v10728
        %v10736 = vadd.f32 %v10735, %v10729
        %10737 = vadd.xlane.f32.xlu0 %v10736
        %v10738 = vpop.xlane.xlu0 %10737
        %v10739 = vadd.f32 %v10730, %v10731
        %v10740 = vadd.f32 %v10739, %v10732
        %v10741 = vadd.f32 %v10740, %v10733
        %10742 = vadd.xlane.f32.xlu0 %v10741
        %v10743 = vpop.xlane.xlu0 %10742
        %v10744 = vmul.f32 %v10738, %v2917
        %v10745 = vmul.f32 %v10743, %v2917
        %v10746 = vadd.f32 %v10744, 1e-05
        %v10747 = vadd.f32 %v10745, 1e-05
        %v10748 = vrsqrt.pop %v10746
        %v10749 = vrsqrt.pop %v10747
        %v10750 = vmul.f32 %v10718, %v10748
        %v10751 = vmul.f32 %v10719, %v10748
        %v10752 = vmul.f32 %v10720, %v10748
        %v10753 = vmul.f32 %v10721, %v10748
        %v10754 = vmul.f32 %v10722, %v10749
        %v10755 = vmul.f32 %v10723, %v10749
        %v10756 = vmul.f32 %v10724, %v10749
        %v10757 = vmul.f32 %v10725, %v10749
        %v10759 = vlaneseq
        %v10760 = vshrl.u32 %v10759, 7
        %v10761 = vsub.s32 0, %v10760
        %v10762 = vrot.slane %v10704, %v10761
        %v10763 = vlaneseq
        %v10764 = vshrl.u32 %v10763, 7
        %v10765 = vsub.s32 1, %v10764
        %v10766 = vrot.slane %v10704, %v10765
        %v10767 = vlaneseq
        %v10768 = vshrl.u32 %v10767, 7
        %v10769 = vsub.s32 2, %v10768
        %v10770 = vrot.slane %v10704, %v10769
        %v10771 = vlaneseq
        %v10772 = vshrl.u32 %v10771, 7
        %v10773 = vsub.s32 3, %v10772
        %v10774 = vrot.slane %v10704, %v10773
        %v10779 = vmul.f32 %v10750, %v10762
        %v10780 = vmul.f32 %v10751, %v10766
        %v10781 = vmul.f32 %v10752, %v10770
        %v10782 = vmul.f32 %v10753, %v10774
        %v10783 = vmul.f32 %v10754, %v10762
        %v10784 = vmul.f32 %v10755, %v10766
        %v10785 = vmul.f32 %v10756, %v10770
        %v10786 = vmul.f32 %v10757, %v10774
        %v10788 = vlaneseq
        %v10789 = vshrl.u32 %v10788, 7
        %v10790 = vsub.s32 0, %v10789
        %v10791 = vrot.slane %v10705, %v10790
        %v10792 = vlaneseq
        %v10793 = vshrl.u32 %v10792, 7
        %v10794 = vsub.s32 1, %v10793
        %v10795 = vrot.slane %v10705, %v10794
        %v10796 = vlaneseq
        %v10797 = vshrl.u32 %v10796, 7
        %v10798 = vsub.s32 2, %v10797
        %v10799 = vrot.slane %v10705, %v10798
        %v10800 = vlaneseq
        %v10801 = vshrl.u32 %v10800, 7
        %v10802 = vsub.s32 3, %v10801
        %v10803 = vrot.slane %v10705, %v10802
        %v10808 = vadd.f32 %v10779, %v10791
        %v10809 = vadd.f32 %v10780, %v10795
        %v10810 = vadd.f32 %v10781, %v10799
        %v10811 = vadd.f32 %v10782, %v10803
        %v10812 = vadd.f32 %v10783, %v10791
        %v10813 = vadd.f32 %v10784, %v10795
        %v10814 = vadd.f32 %v10785, %v10799
        %v10815 = vadd.f32 %v10786, %v10803
        %10816 = vst [vmem:[%s734] sm:$0xff] %v10808
        %10817 = vst [vmem:[%s734 + $0x8] sm:$0xff] %v10809
        %10818 = vst [vmem:[%s734 + $0x10] sm:$0xff] %v10810
        %10819 = vst [vmem:[%s734 + $0x18] sm:$0xff] %v10811
        %10820 = vst [vmem:[%s734 + $0x20] sm:$0xff] %v10812
        %10821 = vst [vmem:[%s734 + $0x28] sm:$0xff] %v10813
        %10822 = vst [vmem:[%s734 + $0x30] sm:$0xff] %v10814
        %10823 = vst [vmem:[%s734 + $0x38] sm:$0xff] %v10815
        %s10824 = sand.u32 %s388, 1
        %s10825 = scalar_lea.sflag [#allocation7], %s10824
        %s10826 = sand.u32 %s388, 1
        %s10827 = smul.addr %s10826, 64
        %s10828 = scalar_lea.vmem [#allocation29], %s10827
        // Predicated region
        $region145: #{tpu_custom_call.1} parent=79 // pred_check
          %p10829 = pneg %p398
        $region146: #{tpu_custom_call.1} parent=79 // pred_check_branch
          %10831 = sbr.rel (%p10829) target = $region148
        $region147: #{tpu_custom_call.1} parent=79 // pred_region
          %s10832 = smul.u32 2, %s46
          %s10834 = ssub.s32 1024, 1024
          %10835 = vsyncadd %s10825, %s10834
          %s10836 = smul.addr %s10832, 4
          %s10837 = smul.addr %s45, 8
          %s10838 = sadd.s32 %s10836, %s10837
          %s10839 = smul.addr %s10838, 128
          %s10840 = scalar_lea.hbm %s15, %s10839
          %s10841 = sshll.u32 %s10828, 4
          %s10842 = int_to_ptr.vmem [resolvable:$true] %s10841
          %10847 = dma.vmem_to_hbm [thread:$0]  %s10842, 1024, %s10840, %s10825, 512, 512, 32
        $region148: #{tpu_custom_call.1} parent=79 // pred_fallthru
          _
      $region80: #{tpu_custom_call.1} parent=5 // pred_fallthru
        _
      %p10848 = scmp.le.s32.totalorder 2, %s36
      // Predicated region
      $region149: #{tpu_custom_call.1} parent=5 // pred_check
        %p10849 = pneg %p10848
      $region150: #{tpu_custom_call.1} parent=5 // pred_check_branch
        %10851 = sbr.rel (%p10849) target = $region152
      $region151: #{tpu_custom_call.1} parent=5 // pred_region
        %s10852 = ssub.s32 %s36, 2
        // Predicated region
        $region153: #{tpu_custom_call.1} parent=151 // pred_check
          %p10853 = pneg %p404
        $region154: #{tpu_custom_call.1} parent=151 // pred_check_branch
          %10855 = sbr.rel (%p10853) target = $region156
        $region155: #{tpu_custom_call.1} parent=151 // pred_region
          %s10856 = sand.u32 %s389, 1
          %s10857 = scalar_lea.sflag [#allocation7], %s10856
          %s10858 = sand.u32 %s389, 1
          %s10859 = smul.addr %s10858, 64
          %s10860 = scalar_lea.vmem [#allocation29], %s10859
          %10861 = dma.done %s10857, 1024
        $region156: #{tpu_custom_call.1} parent=151 // pred_fallthru
          _
      $region152: #{tpu_custom_call.1} parent=5 // pred_fallthru
        _
    $region6: #{tpu_custom_call.1} parent=1 // loop_footer
      %s40 = sadd.s32 1, %s36
    $region7: #{tpu_custom_call.1} parent=1 // loop_footer_branch
      %35 = sbr.rel target = $region3
    $region8: #{tpu_custom_call.1} parent=1 // loop_exit
      _
    %10862 = vsyncpa [#allocation6], 1
    %s10863 = scalar_lea.sflag [#allocation6], 1
    %10864 = vsyncpa %s10863, 1
    %10865 = vsyncpa [#allocation9], 1
    %s10866 = scalar_lea.sflag [#allocation9], 1
    %10867 = vsyncpa %s10866, 1
    %10868 = vsyncpa [#allocation12], 1
    %10869 = vsyncpa [#allocation15], 1
    %10870 = vsyncpa [#allocation18], 1
    %10871 = vsyncpa [#allocation21], 1
    %10872 = vsyncpa [#allocation24], 1
    %10873 = vsyncpa [#allocation27], 1
    %10874 = vsyncpa [#allocation7], 1
    %s10875 = scalar_lea.sflag [#allocation7], 1
    %10876 = vsyncpa %s10875, 1

</llo_original>
